<compile_context>
chip_gen: v7x
topology: tpu7x:2x2x1
jax: 0.10.0
libtpu: 0.0.40
codegen_flags: <defaults>
</compile_context>

<pallas_src>
import functools
import math

import jax
import jax.numpy as jnp
from jax import lax
from jax.experimental import pallas as pl
from jax.experimental.pallas import tpu as pltpu

# ---------------- small config (scaled-down version of the module) ----------
E = 32                     # embedding_size (512 in the original)
H = 4                      # num_heads      (8 in the original)
DH = E // H                # head dim
FF = 4 * E                 # forward_expansion * embedding_size
NUM_ENC = 2                # num_encoder_layers (3 in the original)
NUM_DEC = 2                # num_decoder_layers (3 in the original)
SRC_VOCAB = 30             # len(receptors.vocab)
TRG_VOCAB = 40             # len(ligands.vocab)
MAX_LEN = 64               # max_len (1001 in the original)
SRC_PAD_IDX = 1
NEG_INF = -1e9             # additive-mask value (stands in for float('-inf'))
VOCAB_PAD = 128            # fc_out lane-padded width (logits sliced to TRG_VOCAB)


# --------------------- in-kernel helpers (traced, no launches) ---------------

def _mm(a, b):
    """MXU matmul with bf16 operands, f32 accumulation."""
    return jnp.dot(a.astype(jnp.bfloat16), b.astype(jnp.bfloat16),
                   preferred_element_type=jnp.float32)


def _ln(x, g, b):
    """LayerNorm over last dim, eps=1e-5 (PyTorch default), f32 math."""
    x = x.astype(jnp.float32)
    mu = jnp.mean(x, axis=-1, keepdims=True)
    var = jnp.mean(jnp.square(x - mu), axis=-1, keepdims=True)
    return (x - mu) * lax.rsqrt(var + 1e-5) * g + b


def _mha(xq, xkv, wqkv_t, bqkv, wo_t, bo, bias, *, nh, dh, is_self):
    """PyTorch nn.MultiheadAttention for one batch element, fully in-VMEM.

    xq: (Lq, E), xkv: (Lk, E); wqkv_t: (E, 3E) (= torch in_proj_weight.T);
    bias: additive f32 broadcastable to (nh, Lq, Lk), or None.

    Heads are processed as a batched (nh, L, dh) matmul; the head concat is a
    transpose+reshape and the out-projection is a single full-depth matmul.
    """
    e = nh * dh
    scale = 1.0 / math.sqrt(dh)
    if is_self:
        qkv = _mm(xq, wqkv_t) + bqkv                       # (Lq, 3E)
        q, k, v = qkv[:, :e], qkv[:, e:2 * e], qkv[:, 2 * e:]
        lk = xq.shape[0]
    else:
        q = _mm(xq, wqkv_t[:, :e]) + bqkv[:, :e]           # (Lq, E)
        kv = _mm(xkv, wqkv_t[:, e:]) + bqkv[:, e:]         # (Lk, 2E)
        k, v = kv[:, :e], kv[:, e:]
        lk = xkv.shape[0]
    lq = xq.shape[0]

    # head-major layout: (nh, L, dh)
    qh = q.reshape(lq, nh, dh).transpose(1, 0, 2)
    kh = k.reshape(lk, nh, dh).transpose(1, 0, 2)
    vh = v.reshape(lk, nh, dh).transpose(1, 0, 2)

    # batched score matmul (single dot_general over all heads)
    s = jnp.einsum('hqd,hkd->hqk',
                   qh.astype(jnp.bfloat16), kh.astype(jnp.bfloat16),
                   preferred_element_type=jnp.float32) * scale   # (nh, Lq, Lk)
    if bias is not None:
        s = s + bias
    s = s - jnp.max(s, axis=-1, keepdims=True)
    p = jnp.exp(s)
    p = p * pl.reciprocal(jnp.sum(p, axis=-1, keepdims=True), approx=True)

    oh = jnp.einsum('hqk,hkd->hqd',
                    p.astype(jnp.bfloat16), vh.astype(jnp.bfloat16),
                    preferred_element_type=jnp.float32)          # (nh, Lq, dh)
    o = oh.transpose(1, 0, 2).reshape(lq, e)                     # head concat
    return _mm(o, wo_t) + bo                                     # 1 full-depth out-proj


# ---------------------------- fused stack kernels ----------------------------

def _encoder_stack_kernel(src_ids_ref, x_ref,
                          wqkv_ref, bqkv_ref, wo_ref, bo_ref,
                          ln1g_ref, ln1b_ref,
                          w1_ref, b1_ref, w2_ref, b2_ref,
                          ln2g_ref, ln2b_ref,
                          encg_ref, encb_ref,
                          o_ref, x_scr, *, nh, dh):
    layer = pl.program_id(1)
    n_layers = pl.num_programs(1)

    @pl.when(layer == 0)
    def _():
        x_scr[...] = x_ref[0].astype(jnp.float32)

    x = x_scr[...]                                  # (S, E) resident across layers

    # src key-padding bias, built in-kernel from int32 ids (free VPU ops)
    ids = src_ids_ref[0]                            # (1, S) int32
    pad_bias = jnp.where(ids == SRC_PAD_IDX, NEG_INF, 0.0).astype(jnp.float32)
    pad_bias = pad_bias[None]                       # (1, 1, S) -> bcast over (nh, S, S)

    attn = _mha(x, x, wqkv_ref[0], bqkv_ref[0], wo_ref[0], bo_ref[0],
                pad_bias, nh=nh, dh=dh, is_self=True)
    y = _ln(x + attn, ln1g_ref[0], ln1b_ref[0])
    hdn = jnp.maximum(_mm(y, w1_ref[0]) + b1_ref[0], 0.0)
    ff = _mm(hdn, w2_ref[0]) + b2_ref[0]
    y = _ln(y + ff, ln2g_ref[0], ln2b_ref[0])
    x_scr[...] = y

    @pl.when(layer == n_layers - 1)
    def _():
        # encoder-stack final LayerNorm fused into the last layer step
        o_ref[0] = _ln(y, encg_ref[...], encb_ref[...]).astype(o_ref.dtype)


def _decoder_stack_kernel(y_ref, mem_ref,
                          wq1_ref, bq1_ref, wo1_ref, bo1_ref, ln1g_ref, ln1b_ref,
                          wq2_ref, bq2_ref, wo2_ref, bo2_ref, ln2g_ref, ln2b_ref,
                          w1_ref, b1_ref, w2_ref, b2_ref, ln3g_ref, ln3b_ref,
                          decg_ref, decb_ref, fcw_ref, fcb_ref,
                          o_ref, y_scr, *, nh, dh):
    layer = pl.program_id(1)
    n_layers = pl.num_programs(1)

    @pl.when(layer == 0)
    def _():
        y_scr[...] = y_ref[0].astype(jnp.float32)

    y = y_scr[...]                                  # (T, E) resident across layers
    mem = mem_ref[0].astype(jnp.float32)            # (S, E), already final-norm'd

    # causal (subsequent) mask built in-kernel, no HBM mask tensor
    t = y.shape[0]
    row = lax.broadcasted_iota(jnp.int32, (t, t), 0)
    col = lax.broadcasted_iota(jnp.int32, (t, t), 1)
    causal = jnp.where(row >= col, 0.0, NEG_INF).astype(jnp.float32)[None]  # (1,T,T)

    a1 = _mha(y, y, wq1_ref[0], bq1_ref[0], wo1_ref[0], bo1_ref[0],
              causal, nh=nh, dh=dh, is_self=True)
    y1 = _ln(y + a1, ln1g_ref[0], ln1b_ref[0])
    # memory_key_padding_mask is None in the original forward -> no cross mask
    a2 = _mha(y1, mem, wq2_ref[0], bq2_ref[0], wo2_ref[0], bo2_ref[0],
              None, nh=nh, dh=dh, is_self=False)
    y2 = _ln(y1 + a2, ln2g_ref[0], ln2b_ref[0])
    hdn = jnp.maximum(_mm(y2, w1_ref[0]) + b1_ref[0], 0.0)
    ff = _mm(hdn, w2_ref[0]) + b2_ref[0]
    y3 = _ln(y2 + ff, ln3g_ref[0], ln3b_ref[0])
    y_scr[...] = y3

    @pl.when(layer == n_layers - 1)
    def _():
        # decoder-stack final LayerNorm + fc_out fused; lane-dense (T, 128) store
        yo = _ln(y3, decg_ref[...], decb_ref[...])
        o_ref[0] = (_mm(yo, fcw_ref[...]) + fcb_ref[...]).astype(o_ref.dtype)


# --------------------------- pallas_call wrappers ----------------------------

def _stacked_spec(arr):
    """Per-layer stacked param (L, a, b): block (1, a, b) selected by layer axis."""
    return pl.BlockSpec((1,) + arr.shape[1:], lambda b, l: (l, 0, 0))


def _rep_spec(arr):
    """Replicated (grid-invariant) param: full-shape block, constant index."""
    zeros = (0,) * arr.ndim
    return pl.BlockSpec(arr.shape, lambda b, l: zeros)


def run_encoder_stack(prep, x, src_ids):
    n, s, e = x.shape
    ep = prep["enc"]
    stacked = (ep["wqkv"], ep["bqkv"], ep["wo"], ep["bo"],
               ep["ln1g"], ep["ln1b"],
               ep["w1"], ep["b1"], ep["w2"], ep["b2"],
               ep["ln2g"], ep["ln2b"])
    reps = (prep["enc_norm_g"], prep["enc_norm_b"])
    in_specs = ([pl.BlockSpec((1, 1, s), lambda b, l: (b, 0, 0)),     # src ids
                 pl.BlockSpec((1, s, e), lambda b, l: (b, 0, 0))]     # embedded src
                + [_stacked_spec(a) for a in stacked]
                + [_rep_spec(a) for a in reps])
    return pl.pallas_call(
        functools.partial(_encoder_stack_kernel, nh=H, dh=DH),
        out_shape=jax.ShapeDtypeStruct((n, s, e), jnp.float32),
        grid=(n, NUM_ENC),
        in_specs=in_specs,
        out_specs=pl.BlockSpec((1, s, e), lambda b, l: (b, 0, 0)),
        scratch_shapes=[pltpu.VMEM((s, e), jnp.float32)],
        compiler_params=pltpu.CompilerParams(
            dimension_semantics=("parallel", "arbitrary")),
    )(src_ids, x, *stacked, *reps)


def run_decoder_stack(prep, y, mem):
    n, t, e = y.shape
    s = mem.shape[1]
    dp = prep["dec"]
    stacked = (dp["wq1"], dp["bq1"], dp["wo1"], dp["bo1"], dp["ln1g"], dp["ln1b"],
               dp["wq2"], dp["bq2"], dp["wo2"], dp["bo2"], dp["ln2g"], dp["ln2b"],
               dp["w1"], dp["b1"], dp["w2"], dp["b2"], dp["ln3g"], dp["ln3b"])
    reps = (prep["dec_norm_g"], prep["dec_norm_b"],
            prep["fc_w_pad"], prep["fc_b_pad"])
    in_specs = ([pl.BlockSpec((1, t, e), lambda b, l: (b, 0, 0)),     # embedded trg
                 pl.BlockSpec((1, s, e), lambda b, l: (b, 0, 0))]     # encoder memory
                + [_stacked_spec(a) for a in stacked]
                + [_rep_spec(a) for a in reps])
    return pl.pallas_call(
        functools.partial(_decoder_stack_kernel, nh=H, dh=DH),
        out_shape=jax.ShapeDtypeStruct((n, t, VOCAB_PAD), jnp.float32),
        grid=(n, NUM_DEC),
        in_specs=in_specs,
        out_specs=pl.BlockSpec((1, t, VOCAB_PAD), lambda b, l: (b, 0, 0)),
        scratch_shapes=[pltpu.VMEM((t, e), jnp.float32)],
        compiler_params=pltpu.CompilerParams(
            dimension_semantics=("parallel", "arbitrary")),
    )(y, mem, *stacked, *reps)


# ------------------------- model (glue around kernels) ----------------------

def transformer_forward(prep, src, trg):
    """src: (S, N) int32, trg: (T, N) int32  ->  (T, N, TRG_VOCAB) float32."""
    s, n = src.shape
    t, _ = trg.shape

    embed_src = prep["src_word_emb"][src] + prep["src_pos_emb"][:s][:, None, :]
    embed_trg = prep["trg_word_emb"][trg] + prep["trg_pos_emb"][:t][:, None, :]

    # internal batch-first layout (N, L, E)
    x = embed_src.transpose(1, 0, 2)
    y = embed_trg.transpose(1, 0, 2)
    src_ids = src.T[:, None, :].astype(jnp.int32)        # (N, 1, S) token ids

    mem = run_encoder_stack(prep, x, src_ids)             # (N, S, E), final LN applied
    logits_pad = run_decoder_stack(prep, y, mem)          # (N, T, VOCAB_PAD)
    return logits_pad[:, :, :TRG_VOCAB].transpose(1, 0, 2)  # (T, N, V)


# ------------------------------ parameter init -------------------------------

def init_params(key):
    """Raw parameters in PyTorch layout (Linear weights are (out, in))."""
    keys = iter(jax.random.split(key, 128))

    def nrm(shape, std=0.02):
        return (std * jax.random.normal(next(keys), shape)).astype(jnp.float32)

    zeros = lambda *s: jnp.zeros(s, jnp.float32)
    ones = lambda *s: jnp.ones(s, jnp.float32)

    def mha_p():
        return dict(in_proj_w=nrm((3 * E, E)), in_proj_b=zeros(3 * E),
                    out_proj_w=nrm((E, E)), out_proj_b=zeros(E))

    def enc_layer_p():
        return dict(self_attn=mha_p(),
                    lin1_w=nrm((FF, E)), lin1_b=zeros(FF),
                    lin2_w=nrm((E, FF)), lin2_b=zeros(E),
                    ln1_g=ones(E), ln1_b=zeros(E),
                    ln2_g=ones(E), ln2_b=zeros(E))

    def dec_layer_p():
        return dict(self_attn=mha_p(), cross_attn=mha_p(),
                    lin1_w=nrm((FF, E)), lin1_b=zeros(FF),
                    lin2_w=nrm((E, FF)), lin2_b=zeros(E),
                    ln1_g=ones(E), ln1_b=zeros(E),
                    ln2_g=ones(E), ln2_b=zeros(E),
                    ln3_g=ones(E), ln3_b=zeros(E))

    return dict(
        src_word_emb=nrm((SRC_VOCAB, E)),
        src_pos_emb=nrm((MAX_LEN, E)),
        trg_word_emb=nrm((TRG_VOCAB, E)),
        trg_pos_emb=nrm((MAX_LEN, E)),
        enc_layers=[enc_layer_p() for _ in range(NUM_ENC)],
        dec_layers=[dec_layer_p() for _ in range(NUM_DEC)],
        enc_norm_g=ones(E), enc_norm_b=zeros(E),
        dec_norm_g=ones(E), dec_norm_b=zeros(E),
        fc_out_w=nrm((TRG_VOCAB, E)), fc_out_b=zeros(TRG_VOCAB),
    )


def prepare_params(params):
    """One-time host-side re-layout: per-layer stacking, transposes, reshapes,
    fc_out lane-padding.  Done once, NOT per forward call."""
    e = E
    enc_layers, dec_layers = params["enc_layers"], params["dec_layers"]

    def stk(layers, fn):
        return jnp.stack([fn(lp) for lp in layers])

    enc = dict(
        wqkv=stk(enc_layers, lambda lp: lp["self_attn"]["in_proj_w"].T),        # (L,E,3E)
        bqkv=stk(enc_layers, lambda lp: lp["self_attn"]["in_proj_b"].reshape(1, 3 * e)),
        wo=stk(enc_layers, lambda lp: lp["self_attn"]["out_proj_w"].T),
        bo=stk(enc_layers, lambda lp: lp["self_attn"]["out_proj_b"].reshape(1, e)),
        ln1g=stk(enc_layers, lambda lp: lp["ln1_g"].reshape(1, e)),
        ln1b=stk(enc_layers, lambda lp: lp["ln1_b"].reshape(1, e)),
        w1=stk(enc_layers, lambda lp: lp["lin1_w"].T),
        b1=stk(enc_layers, lambda lp: lp["lin1_b"].reshape(1, FF)),
        w2=stk(enc_layers, lambda lp: lp["lin2_w"].T),
        b2=stk(enc_layers, lambda lp: lp["lin2_b"].reshape(1, e)),
        ln2g=stk(enc_layers, lambda lp: lp["ln2_g"].reshape(1, e)),
        ln2b=stk(enc_layers, lambda lp: lp["ln2_b"].reshape(1, e)),
    )
    dec = dict(
        wq1=stk(dec_layers, lambda lp: lp["self_attn"]["in_proj_w"].T),
        bq1=stk(dec_layers, lambda lp: lp["self_attn"]["in_proj_b"].reshape(1, 3 * e)),
        wo1=stk(dec_layers, lambda lp: lp["self_attn"]["out_proj_w"].T),
        bo1=stk(dec_layers, lambda lp: lp["self_attn"]["out_proj_b"].reshape(1, e)),
        ln1g=stk(dec_layers, lambda lp: lp["ln1_g"].reshape(1, e)),
        ln1b=stk(dec_layers, lambda lp: lp["ln1_b"].reshape(1, e)),
        wq2=stk(dec_layers, lambda lp: lp["cross_attn"]["in_proj_w"].T),
        bq2=stk(dec_layers, lambda lp: lp["cross_attn"]["in_proj_b"].reshape(1, 3 * e)),
        wo2=stk(dec_layers, lambda lp: lp["cross_attn"]["out_proj_w"].T),
        bo2=stk(dec_layers, lambda lp: lp["cross_attn"]["out_proj_b"].reshape(1, e)),
        ln2g=stk(dec_layers, lambda lp: lp["ln2_g"].reshape(1, e)),
        ln2b=stk(dec_layers, lambda lp: lp["ln2_b"].reshape(1, e)),
        w1=stk(dec_layers, lambda lp: lp["lin1_w"].T),
        b1=stk(dec_layers, lambda lp: lp["lin1_b"].reshape(1, FF)),
        w2=stk(dec_layers, lambda lp: lp["lin2_w"].T),
        b2=stk(dec_layers, lambda lp: lp["lin2_b"].reshape(1, e)),
        ln3g=stk(dec_layers, lambda lp: lp["ln3_g"].reshape(1, e)),
        ln3b=stk(dec_layers, lambda lp: lp["ln3_b"].reshape(1, e)),
    )
    fc_w_pad = jnp.zeros((e, VOCAB_PAD), jnp.float32).at[:, :TRG_VOCAB].set(
        params["fc_out_w"].T)
    fc_b_pad = jnp.zeros((1, VOCAB_PAD), jnp.float32).at[:, :TRG_VOCAB].set(
        params["fc_out_b"])
    return dict(
        src_word_emb=params["src_word_emb"], src_pos_emb=params["src_pos_emb"],
        trg_word_emb=params["trg_word_emb"], trg_pos_emb=params["trg_pos_emb"],
        enc=enc, dec=dec,
        enc_norm_g=params["enc_norm_g"].reshape(1, e),
        enc_norm_b=params["enc_norm_b"].reshape(1, e),
        dec_norm_g=params["dec_norm_g"].reshape(1, e),
        dec_norm_b=params["dec_norm_b"].reshape(1, e),
        fc_w_pad=fc_w_pad, fc_b_pad=fc_b_pad,
    )


# ----------------------------------- main ------------------------------------

if __name__ == "__main__":
    key = jax.random.PRNGKey(0)
    pkey, skey, tkey = jax.random.split(key, 3)
    params = init_params(pkey)
    prep = prepare_params(params)       # one-time weight re-layout

    S, T, N = 10, 8, 2
    src = jax.random.randint(skey, (S, N), 2, SRC_VOCAB, dtype=jnp.int32)
    src = src.at[7:, 1].set(SRC_PAD_IDX)   # trailing pads to exercise src padding mask
    trg = jax.random.randint(tkey, (T, N), 2, TRG_VOCAB, dtype=jnp.int32)

    fwd = jax.jit(transformer_forward)
    out = jax.block_until_ready(fwd(prep, src, trg))

    assert out.shape == (T, N, TRG_VOCAB), out.shape
    assert out.dtype == jnp.float32
    assert bool(jnp.all(jnp.isfinite(out)))
    print("KERNEL_OK")
</pallas_src>

<mosaic_0001>
module attributes {stable_mosaic.version = 11 : i64} {
  func.func @_encoder_stack_kernel(%arg0: i32, %arg1: i32, %arg2: memref<1x1x10xi32, #tpu.memory_space<vmem>>, %arg3: memref<1x10x32xf32, #tpu.memory_space<vmem>>, %arg4: memref<1x32x96xf32, #tpu.memory_space<vmem>>, %arg5: memref<1x1x96xf32, #tpu.memory_space<vmem>>, %arg6: memref<1x32x32xf32, #tpu.memory_space<vmem>>, %arg7: memref<1x1x32xf32, #tpu.memory_space<vmem>>, %arg8: memref<1x1x32xf32, #tpu.memory_space<vmem>>, %arg9: memref<1x1x32xf32, #tpu.memory_space<vmem>>, %arg10: memref<1x32x128xf32, #tpu.memory_space<vmem>>, %arg11: memref<1x1x128xf32, #tpu.memory_space<vmem>>, %arg12: memref<1x128x32xf32, #tpu.memory_space<vmem>>, %arg13: memref<1x1x32xf32, #tpu.memory_space<vmem>>, %arg14: memref<1x1x32xf32, #tpu.memory_space<vmem>>, %arg15: memref<1x1x32xf32, #tpu.memory_space<vmem>>, %arg16: memref<1x32xf32, #tpu.memory_space<vmem>>, %arg17: memref<1x32xf32, #tpu.memory_space<vmem>>, %arg18: memref<1x10x32xf32, #tpu.memory_space<vmem>>, %arg19: memref<10x32xf32, #tpu.memory_space<vmem>>) attributes {dimension_semantics = [#tpu.dimension_semantics<parallel>, #tpu.dimension_semantics<arbitrary>], iteration_bounds = array<i64: 2, 2>, scalar_prefetch = 0 : i64, scratch_operands = 1 : i64, tpu.core_type = #tpu.core_type<tc>, window_params = [{transform_indices = @transform_0, window_bounds = array<i64: 1, 1, 10>}, {transform_indices = @transform_1, window_bounds = array<i64: 1, 10, 32>}, {transform_indices = @transform_2, window_bounds = array<i64: 1, 32, 96>}, {transform_indices = @transform_3, window_bounds = array<i64: 1, 1, 96>}, {transform_indices = @transform_4, window_bounds = array<i64: 1, 32, 32>}, {transform_indices = @transform_5, window_bounds = array<i64: 1, 1, 32>}, {transform_indices = @transform_6, window_bounds = array<i64: 1, 1, 32>}, {transform_indices = @transform_7, window_bounds = array<i64: 1, 1, 32>}, {transform_indices = @transform_8, window_bounds = array<i64: 1, 32, 128>}, {transform_indices = @transform_9, window_bounds = array<i64: 1, 1, 128>}, {transform_indices = @transform_10, window_bounds = array<i64: 1, 128, 32>}, {transform_indices = @transform_11, window_bounds = array<i64: 1, 1, 32>}, {transform_indices = @transform_12, window_bounds = array<i64: 1, 1, 32>}, {transform_indices = @transform_13, window_bounds = array<i64: 1, 1, 32>}, {pipeline_mode = #tpu.pipeline_mode<synchronous>, transform_indices = @transform_14, window_bounds = array<i64: 1, 32>}, {pipeline_mode = #tpu.pipeline_mode<synchronous>, transform_indices = @transform_15, window_bounds = array<i64: 1, 32>}, {transform_indices = @transform_16, window_bounds = array<i64: 1, 10, 32>}]} {
    %c0_i32 = arith.constant 0 : i32
    %0 = arith.cmpi eq, %arg1, %c0_i32 : i32
    %1 = arith.extui %0 : i1 to i32
    %c0_i32_0 = arith.constant 0 : i32
    %2 = arith.cmpi ne, %1, %c0_i32_0 : i32
    scf.if %2 {
      %c0_66 = arith.constant 0 : index
      %c0_67 = arith.constant 0 : index
      %c0_68 = arith.constant 0 : index
      %139 = vector.load %arg3[%c0_66, %c0_67, %c0_68] : memref<1x10x32xf32, #tpu.memory_space<vmem>>, vector<1x10x32xf32>
      %140 = vector.shape_cast %139 : vector<1x10x32xf32> to vector<10x32xf32>
      %c0_69 = arith.constant 0 : index
      %c0_70 = arith.constant 0 : index
      %141 = vector.load %arg19[%c0_69, %c0_70] : memref<10x32xf32, #tpu.memory_space<vmem>>, vector<10x32xf32>
      tpu.vector_store %arg19[%c0_69, %c0_70], %140 {strides = array<i32>} : memref<10x32xf32, #tpu.memory_space<vmem>>, vector<10x32xf32>,
    } else {
    }
    %c0 = arith.constant 0 : index
    %c0_1 = arith.constant 0 : index
    %3 = vector.load %arg19[%c0, %c0_1] : memref<10x32xf32, #tpu.memory_space<vmem>>, vector<10x32xf32>
    %c0_2 = arith.constant 0 : index
    %c0_3 = arith.constant 0 : index
    %c0_4 = arith.constant 0 : index
    %4 = vector.load %arg2[%c0_2, %c0_3, %c0_4] : memref<1x1x10xi32, #tpu.memory_space<vmem>>, vector<1x1x10xi32>
    %5 = vector.shape_cast %4 : vector<1x1x10xi32> to vector<1x10xi32>
    %c1_i32 = arith.constant 1 : i32
    %6 = vector.broadcast %c1_i32 : i32 to vector<1x10xi32>
    %7 = arith.cmpi eq, %5, %6 : vector<1x10xi32>
    %cst = arith.constant -1.000000e+09 : f32
    %cst_5 = arith.constant 0.000000e+00 : f32
    %8 = vector.broadcast %cst : f32 to vector<1x10xf32>
    %9 = vector.broadcast %cst_5 : f32 to vector<1x10xf32>
    %10 = arith.select %7, %8, %9 : vector<1x10xi1>, vector<1x10xf32>
    %11 = vector.shape_cast %10 : vector<1x10xf32> to vector<1x1x10xf32>
    %c0_6 = arith.constant 0 : index
    %c0_7 = arith.constant 0 : index
    %c0_8 = arith.constant 0 : index
    %12 = vector.load %arg4[%c0_6, %c0_7, %c0_8] : memref<1x32x96xf32, #tpu.memory_space<vmem>>, vector<1x32x96xf32>
    %13 = vector.shape_cast %12 : vector<1x32x96xf32> to vector<32x96xf32>
    %c0_9 = arith.constant 0 : index
    %c0_10 = arith.constant 0 : index
    %c0_11 = arith.constant 0 : index
    %14 = vector.load %arg5[%c0_9, %c0_10, %c0_11] : memref<1x1x96xf32, #tpu.memory_space<vmem>>, vector<1x1x96xf32>
    %15 = vector.shape_cast %14 : vector<1x1x96xf32> to vector<1x96xf32>
    %c0_12 = arith.constant 0 : index
    %c0_13 = arith.constant 0 : index
    %c0_14 = arith.constant 0 : index
    %16 = vector.load %arg6[%c0_12, %c0_13, %c0_14] : memref<1x32x32xf32, #tpu.memory_space<vmem>>, vector<1x32x32xf32>
    %17 = vector.shape_cast %16 : vector<1x32x32xf32> to vector<32x32xf32>
    %c0_15 = arith.constant 0 : index
    %c0_16 = arith.constant 0 : index
    %c0_17 = arith.constant 0 : index
    %18 = vector.load %arg7[%c0_15, %c0_16, %c0_17] : memref<1x1x32xf32, #tpu.memory_space<vmem>>, vector<1x1x32xf32>
    %19 = vector.shape_cast %18 : vector<1x1x32xf32> to vector<1x32xf32>
    %20 = arith.truncf %3 : vector<10x32xf32> to vector<10x32xbf16>
    %21 = arith.truncf %13 : vector<32x96xf32> to vector<32x96xbf16>
    %cst_18 = arith.constant dense<0.000000e+00> : vector<10x96xf32>
    %22 = tpu.matmul %20, %21, %cst_18 {dimension_numbers = #tpu.dot_dimension_numbers<[1], [0], [0], [1], [0, 0, 1, 1], [], []>} : vector<10x32xbf16>, vector<32x96xbf16>, vector<10x96xf32> -> vector<10x96xf32>
    %23 = vector.broadcast %15 : vector<1x96xf32> to vector<10x96xf32>
    %24 = arith.addf %22, %23 : vector<10x96xf32>
    %25 = vector.extract_strided_slice %24 {offsets = [0, 0], sizes = [10, 32], strides = [1, 1]} : vector<10x96xf32> to vector<10x32xf32>
    %26 = vector.extract_strided_slice %24 {offsets = [0, 32], sizes = [10, 32], strides = [1, 1]} : vector<10x96xf32> to vector<10x32xf32>
    %27 = vector.extract_strided_slice %24 {offsets = [0, 64], sizes = [10, 32], strides = [1, 1]} : vector<10x96xf32> to vector<10x32xf32>
    %28 = vector.shape_cast %25 : vector<10x32xf32> to vector<10x4x8xf32>
    %29 = tpu.transpose %28, [1, 0, 2] : vector<10x4x8xf32> -> vector<4x10x8xf32>
    %30 = vector.shape_cast %26 : vector<10x32xf32> to vector<10x4x8xf32>
    %31 = tpu.transpose %30, [1, 0, 2] : vector<10x4x8xf32> -> vector<4x10x8xf32>
    %32 = vector.shape_cast %27 : vector<10x32xf32> to vector<10x4x8xf32>
    %33 = tpu.transpose %32, [1, 0, 2] : vector<10x4x8xf32> -> vector<4x10x8xf32>
    %34 = arith.truncf %29 : vector<4x10x8xf32> to vector<4x10x8xbf16>
    %35 = arith.truncf %31 : vector<4x10x8xf32> to vector<4x10x8xbf16>
    "tpu.trace_start"() <{level = 10 : i32, message = "hqd,hkd->hqk"}> : () -> ()
    %cst_19 = arith.constant dense<0.000000e+00> : vector<4x10x10xf32>
    %36 = tpu.matmul %34, %35, %cst_19 {dimension_numbers = #tpu.dot_dimension_numbers<[2], [2], [1], [1], [0, 0, 0, 1, 1, 1], [0], [0]>} : vector<4x10x8xbf16>, vector<4x10x8xbf16>, vector<4x10x10xf32> -> vector<4x10x10xf32>
    "tpu.trace_stop"() : () -> ()
    %cst_20 = arith.constant 0.353553385 : f32
    %37 = vector.broadcast %cst_20 : f32 to vector<4x10x10xf32>
    %38 = arith.mulf %36, %37 : vector<4x10x10xf32>
    %39 = vector.broadcast %11 : vector<1x1x10xf32> to vector<4x10x10xf32>
    %40 = arith.addf %38, %39 : vector<4x10x10xf32>
    %cst_21 = arith.constant dense<0xFF800000> : vector<4x10xf32>
    %41 = vector.multi_reduction <maximumf>, %40, %cst_21 [2] : vector<4x10x10xf32> to vector<4x10xf32>
    %42 = vector.shape_cast %41 : vector<4x10xf32> to vector<4x10x1xf32>
    %43 = vector.broadcast %42 : vector<4x10x1xf32> to vector<4x10x10xf32>
    %44 = arith.subf %40, %43 : vector<4x10x10xf32>
    %45 = math.exp %44 : vector<4x10x10xf32>
    %cst_22 = arith.constant dense<0.000000e+00> : vector<4x10xf32>
    %46 = vector.multi_reduction <add>, %45, %cst_22 [2] : vector<4x10x10xf32> to vector<4x10xf32>
    %47 = vector.shape_cast %46 : vector<4x10xf32> to vector<4x10x1xf32>
    %48 = tpu.reciprocal %47 {approx = true} : vector<4x10x1xf32> -> vector<4x10x1xf32>
    %49 = vector.broadcast %48 : vector<4x10x1xf32> to vector<4x10x10xf32>
    %50 = arith.mulf %45, %49 : vector<4x10x10xf32>
    %51 = arith.truncf %50 : vector<4x10x10xf32> to vector<4x10x10xbf16>
    %52 = arith.truncf %33 : vector<4x10x8xf32> to vector<4x10x8xbf16>
    "tpu.trace_start"() <{level = 10 : i32, message = "hqk,hkd->hqd"}> : () -> ()
    %cst_23 = arith.constant dense<0.000000e+00> : vector<4x10x8xf32>
    %53 = tpu.matmul %51, %52, %cst_23 {dimension_numbers = #tpu.dot_dimension_numbers<[2], [1], [1], [2], [0, 0, 0, 1, 1, 2], [0], [0]>} : vector<4x10x10xbf16>, vector<4x10x8xbf16>, vector<4x10x8xf32> -> vector<4x10x8xf32>
    "tpu.trace_stop"() : () -> ()
    %54 = tpu.transpose %53, [1, 0, 2] : vector<4x10x8xf32> -> vector<10x4x8xf32>
    %55 = vector.shape_cast %54 : vector<10x4x8xf32> to vector<10x32xf32>
    %56 = arith.truncf %55 : vector<10x32xf32> to vector<10x32xbf16>
    %57 = arith.truncf %17 : vector<32x32xf32> to vector<32x32xbf16>
    %cst_24 = arith.constant dense<0.000000e+00> : vector<10x32xf32>
    %58 = tpu.matmul %56, %57, %cst_24 {dimension_numbers = #tpu.dot_dimension_numbers<[1], [0], [0], [1], [0, 0, 1, 1], [], []>} : vector<10x32xbf16>, vector<32x32xbf16>, vector<10x32xf32> -> vector<10x32xf32>
    %59 = vector.broadcast %19 : vector<1x32xf32> to vector<10x32xf32>
    %60 = arith.addf %58, %59 : vector<10x32xf32>
    %61 = arith.addf %3, %60 : vector<10x32xf32>
    %c0_25 = arith.constant 0 : index
    %c0_26 = arith.constant 0 : index
    %c0_27 = arith.constant 0 : index
    %62 = vector.load %arg8[%c0_25, %c0_26, %c0_27] : memref<1x1x32xf32, #tpu.memory_space<vmem>>, vector<1x1x32xf32>
    %63 = vector.shape_cast %62 : vector<1x1x32xf32> to vector<1x32xf32>
    %c0_28 = arith.constant 0 : index
    %c0_29 = arith.constant 0 : index
    %c0_30 = arith.constant 0 : index
    %64 = vector.load %arg9[%c0_28, %c0_29, %c0_30] : memref<1x1x32xf32, #tpu.memory_space<vmem>>, vector<1x1x32xf32>
    %65 = vector.shape_cast %64 : vector<1x1x32xf32> to vector<1x32xf32>
    %cst_31 = arith.constant dense<0.000000e+00> : vector<10xf32>
    %66 = vector.multi_reduction <add>, %61, %cst_31 [1] : vector<10x32xf32> to vector<10xf32>
    %67 = vector.shape_cast %66 : vector<10xf32> to vector<10x1xf32>
    %cst_32 = arith.constant 3.200000e+01 : f32
    %68 = vector.broadcast %cst_32 : f32 to vector<10x1xf32>
    %69 = arith.divf %67, %68 : vector<10x1xf32>
    %70 = vector.broadcast %69 : vector<10x1xf32> to vector<10x32xf32>
    %71 = arith.subf %61, %70 : vector<10x32xf32>
    %72 = arith.mulf %71, %71 : vector<10x32xf32>
    %cst_33 = arith.constant dense<0.000000e+00> : vector<10xf32>
    %73 = vector.multi_reduction <add>, %72, %cst_33 [1] : vector<10x32xf32> to vector<10xf32>
    %74 = vector.shape_cast %73 : vector<10xf32> to vector<10x1xf32>
    %cst_34 = arith.constant 3.200000e+01 : f32
    %75 = vector.broadcast %cst_34 : f32 to vector<10x1xf32>
    %76 = arith.divf %74, %75 : vector<10x1xf32>
    %77 = vector.broadcast %69 : vector<10x1xf32> to vector<10x32xf32>
    %78 = arith.subf %61, %77 : vector<10x32xf32>
    %cst_35 = arith.constant 9.99999974E-6 : f32
    %79 = vector.broadcast %cst_35 : f32 to vector<10x1xf32>
    %80 = arith.addf %76, %79 : vector<10x1xf32>
    %81 = math.rsqrt %80 : vector<10x1xf32>
    %82 = vector.broadcast %81 : vector<10x1xf32> to vector<10x32xf32>
    %83 = arith.mulf %78, %82 : vector<10x32xf32>
    %84 = vector.broadcast %63 : vector<1x32xf32> to vector<10x32xf32>
    %85 = arith.mulf %83, %84 : vector<10x32xf32>
    %86 = vector.broadcast %65 : vector<1x32xf32> to vector<10x32xf32>
    %87 = arith.addf %85, %86 : vector<10x32xf32>
    %c0_36 = arith.constant 0 : index
    %c0_37 = arith.constant 0 : index
    %c0_38 = arith.constant 0 : index
    %88 = vector.load %arg10[%c0_36, %c0_37, %c0_38] : memref<1x32x128xf32, #tpu.memory_space<vmem>>, vector<1x32x128xf32>
    %89 = vector.shape_cast %88 : vector<1x32x128xf32> to vector<32x128xf32>
    %90 = arith.truncf %87 : vector<10x32xf32> to vector<10x32xbf16>
    %91 = arith.truncf %89 : vector<32x128xf32> to vector<32x128xbf16>
    %cst_39 = arith.constant dense<0.000000e+00> : vector<10x128xf32>
    %92 = tpu.matmul %90, %91, %cst_39 {dimension_numbers = #tpu.dot_dimension_numbers<[1], [0], [0], [1], [0, 0, 1, 1], [], []>} : vector<10x32xbf16>, vector<32x128xbf16>, vector<10x128xf32> -> vector<10x128xf32>
    %c0_40 = arith.constant 0 : index
    %c0_41 = arith.constant 0 : index
    %c0_42 = arith.constant 0 : index
    %93 = vector.load %arg11[%c0_40, %c0_41, %c0_42] : memref<1x1x128xf32, #tpu.memory_space<vmem>>, vector<1x1x128xf32>
    %94 = vector.shape_cast %93 : vector<1x1x128xf32> to vector<1x128xf32>
    %95 = vector.broadcast %94 : vector<1x128xf32> to vector<10x128xf32>
    %96 = arith.addf %92, %95 : vector<10x128xf32>
    %cst_43 = arith.constant 0.000000e+00 : f32
    %97 = vector.broadcast %cst_43 : f32 to vector<10x128xf32>
    %98 = arith.maximumf %96, %97 : vector<10x128xf32>
    %c0_44 = arith.constant 0 : index
    %c0_45 = arith.constant 0 : index
    %c0_46 = arith.constant 0 : index
    %99 = vector.load %arg12[%c0_44, %c0_45, %c0_46] : memref<1x128x32xf32, #tpu.memory_space<vmem>>, vector<1x128x32xf32>
    %100 = vector.shape_cast %99 : vector<1x128x32xf32> to vector<128x32xf32>
    %101 = arith.truncf %98 : vector<10x128xf32> to vector<10x128xbf16>
    %102 = arith.truncf %100 : vector<128x32xf32> to vector<128x32xbf16>
    %cst_47 = arith.constant dense<0.000000e+00> : vector<10x32xf32>
    %103 = tpu.matmul %101, %102, %cst_47 {dimension_numbers = #tpu.dot_dimension_numbers<[1], [0], [0], [1], [0, 0, 1, 1], [], []>} : vector<10x128xbf16>, vector<128x32xbf16>, vector<10x32xf32> -> vector<10x32xf32>
    %c0_48 = arith.constant 0 : index
    %c0_49 = arith.constant 0 : index
    %c0_50 = arith.constant 0 : index
    %104 = vector.load %arg13[%c0_48, %c0_49, %c0_50] : memref<1x1x32xf32, #tpu.memory_space<vmem>>, vector<1x1x32xf32>
    %105 = vector.shape_cast %104 : vector<1x1x32xf32> to vector<1x32xf32>
    %106 = vector.broadcast %105 : vector<1x32xf32> to vector<10x32xf32>
    %107 = arith.addf %103, %106 : vector<10x32xf32>
    %108 = arith.addf %87, %107 : vector<10x32xf32>
    %c0_51 = arith.constant 0 : index
    %c0_52 = arith.constant 0 : index
    %c0_53 = arith.constant 0 : index
    %109 = vector.load %arg14[%c0_51, %c0_52, %c0_53] : memref<1x1x32xf32, #tpu.memory_space<vmem>>, vector<1x1x32xf32>
    %110 = vector.shape_cast %109 : vector<1x1x32xf32> to vector<1x32xf32>
    %c0_54 = arith.constant 0 : index
    %c0_55 = arith.constant 0 : index
    %c0_56 = arith.constant 0 : index
    %111 = vector.load %arg15[%c0_54, %c0_55, %c0_56] : memref<1x1x32xf32, #tpu.memory_space<vmem>>, vector<1x1x32xf32>
    %112 = vector.shape_cast %111 : vector<1x1x32xf32> to vector<1x32xf32>
    %cst_57 = arith.constant dense<0.000000e+00> : vector<10xf32>
    %113 = vector.multi_reduction <add>, %108, %cst_57 [1] : vector<10x32xf32> to vector<10xf32>
    %114 = vector.shape_cast %113 : vector<10xf32> to vector<10x1xf32>
    %cst_58 = arith.constant 3.200000e+01 : f32
    %115 = vector.broadcast %cst_58 : f32 to vector<10x1xf32>
    %116 = arith.divf %114, %115 : vector<10x1xf32>
    %117 = vector.broadcast %116 : vector<10x1xf32> to vector<10x32xf32>
    %118 = arith.subf %108, %117 : vector<10x32xf32>
    %119 = arith.mulf %118, %118 : vector<10x32xf32>
    %cst_59 = arith.constant dense<0.000000e+00> : vector<10xf32>
    %120 = vector.multi_reduction <add>, %119, %cst_59 [1] : vector<10x32xf32> to vector<10xf32>
    %121 = vector.shape_cast %120 : vector<10xf32> to vector<10x1xf32>
    %cst_60 = arith.constant 3.200000e+01 : f32
    %122 = vector.broadcast %cst_60 : f32 to vector<10x1xf32>
    %123 = arith.divf %121, %122 : vector<10x1xf32>
    %124 = vector.broadcast %116 : vector<10x1xf32> to vector<10x32xf32>
    %125 = arith.subf %108, %124 : vector<10x32xf32>
    %cst_61 = arith.constant 9.99999974E-6 : f32
    %126 = vector.broadcast %cst_61 : f32 to vector<10x1xf32>
    %127 = arith.addf %123, %126 : vector<10x1xf32>
    %128 = math.rsqrt %127 : vector<10x1xf32>
    %129 = vector.broadcast %128 : vector<10x1xf32> to vector<10x32xf32>
    %130 = arith.mulf %125, %129 : vector<10x32xf32>
    %131 = vector.broadcast %110 : vector<1x32xf32> to vector<10x32xf32>
    %132 = arith.mulf %130, %131 : vector<10x32xf32>
    %133 = vector.broadcast %112 : vector<1x32xf32> to vector<10x32xf32>
    %134 = arith.addf %132, %133 : vector<10x32xf32>
    %c0_62 = arith.constant 0 : index
    %c0_63 = arith.constant 0 : index
    %135 = vector.load %arg19[%c0_62, %c0_63] : memref<10x32xf32, #tpu.memory_space<vmem>>, vector<10x32xf32>
    tpu.vector_store %arg19[%c0_62, %c0_63], %134 {strides = array<i32>} : memref<10x32xf32, #tpu.memory_space<vmem>>, vector<10x32xf32>,
    %c1_i32_64 = arith.constant 1 : i32
    %136 = arith.cmpi eq, %arg1, %c1_i32_64 : i32
    %137 = arith.extui %136 : i1 to i32
    %c0_i32_65 = arith.constant 0 : i32
    %138 = arith.cmpi ne, %137, %c0_i32_65 : i32
    scf.if %138 {
      %c0_66 = arith.constant 0 : index
      %c0_67 = arith.constant 0 : index
      %139 = vector.load %arg16[%c0_66, %c0_67] : memref<1x32xf32, #tpu.memory_space<vmem>>, vector<1x32xf32>
      %c0_68 = arith.constant 0 : index
      %c0_69 = arith.constant 0 : index
      %140 = vector.load %arg17[%c0_68, %c0_69] : memref<1x32xf32, #tpu.memory_space<vmem>>, vector<1x32xf32>
      %cst_70 = arith.constant dense<0.000000e+00> : vector<10xf32>
      %141 = vector.multi_reduction <add>, %134, %cst_70 [1] : vector<10x32xf32> to vector<10xf32>
      %142 = vector.shape_cast %141 : vector<10xf32> to vector<10x1xf32>
      %cst_71 = arith.constant 3.200000e+01 : f32
      %143 = vector.broadcast %cst_71 : f32 to vector<10x1xf32>
      %144 = arith.divf %142, %143 : vector<10x1xf32>
      %145 = vector.broadcast %144 : vector<10x1xf32> to vector<10x32xf32>
      %146 = arith.subf %134, %145 : vector<10x32xf32>
      %147 = arith.mulf %146, %146 : vector<10x32xf32>
      %cst_72 = arith.constant dense<0.000000e+00> : vector<10xf32>
      %148 = vector.multi_reduction <add>, %147, %cst_72 [1] : vector<10x32xf32> to vector<10xf32>
      %149 = vector.shape_cast %148 : vector<10xf32> to vector<10x1xf32>
      %cst_73 = arith.constant 3.200000e+01 : f32
      %150 = vector.broadcast %cst_73 : f32 to vector<10x1xf32>
      %151 = arith.divf %149, %150 : vector<10x1xf32>
      %152 = vector.broadcast %144 : vector<10x1xf32> to vector<10x32xf32>
      %153 = arith.subf %134, %152 : vector<10x32xf32>
      %cst_74 = arith.constant 9.99999974E-6 : f32
      %154 = vector.broadcast %cst_74 : f32 to vector<10x1xf32>
      %155 = arith.addf %151, %154 : vector<10x1xf32>
      %156 = math.rsqrt %155 : vector<10x1xf32>
      %157 = vector.broadcast %156 : vector<10x1xf32> to vector<10x32xf32>
      %158 = arith.mulf %153, %157 : vector<10x32xf32>
      %159 = vector.broadcast %139 : vector<1x32xf32> to vector<10x32xf32>
      %160 = arith.mulf %158, %159 : vector<10x32xf32>
      %161 = vector.broadcast %140 : vector<1x32xf32> to vector<10x32xf32>
      %162 = arith.addf %160, %161 : vector<10x32xf32>
      %c0_75 = arith.constant 0 : index
      %c0_76 = arith.constant 0 : index
      %c0_77 = arith.constant 0 : index
      %163 = vector.load %arg18[%c0_75, %c0_76, %c0_77] : memref<1x10x32xf32, #tpu.memory_space<vmem>>, vector<1x10x32xf32>
      %164 = vector.shape_cast %163 : vector<1x10x32xf32> to vector<10x32xf32>
      %165 = vector.shape_cast %162 : vector<10x32xf32> to vector<1x10x32xf32>
      tpu.vector_store %arg18[%c0_75, %c0_76, %c0_77], %165 {strides = array<i32>} : memref<1x10x32xf32, #tpu.memory_space<vmem>>, vector<1x10x32xf32>,
    } else {
    }
    return
  }
  func.func @transform_0(%arg0: i32, %arg1: i32) -> (i32, i32, i32) {
    %c0_i32 = arith.constant 0 : i32
    %c0_i32_0 = arith.constant 0 : i32
    %c0_i32_1 = arith.constant 0 : i32
    return %arg0, %c0_i32, %c0_i32_0 : i32, i32, i32
  }
  func.func @transform_1(%arg0: i32, %arg1: i32) -> (i32, i32, i32) {
    %c0_i32 = arith.constant 0 : i32
    %c0_i32_0 = arith.constant 0 : i32
    %c0_i32_1 = arith.constant 0 : i32
    return %arg0, %c0_i32, %c0_i32_0 : i32, i32, i32
  }
  func.func @transform_2(%arg0: i32, %arg1: i32) -> (i32, i32, i32) {
    %c0_i32 = arith.constant 0 : i32
    %c0_i32_0 = arith.constant 0 : i32
    %c0_i32_1 = arith.constant 0 : i32
    return %arg1, %c0_i32, %c0_i32_0 : i32, i32, i32
  }
  func.func @transform_3(%arg0: i32, %arg1: i32) -> (i32, i32, i32) {
    %c0_i32 = arith.constant 0 : i32
    %c0_i32_0 = arith.constant 0 : i32
    %c0_i32_1 = arith.constant 0 : i32
    return %arg1, %c0_i32, %c0_i32_0 : i32, i32, i32
  }
  func.func @transform_4(%arg0: i32, %arg1: i32) -> (i32, i32, i32) {
    %c0_i32 = arith.constant 0 : i32
    %c0_i32_0 = arith.constant 0 : i32
    %c0_i32_1 = arith.constant 0 : i32
    return %arg1, %c0_i32, %c0_i32_0 : i32, i32, i32
  }
  func.func @transform_5(%arg0: i32, %arg1: i32) -> (i32, i32, i32) {
    %c0_i32 = arith.constant 0 : i32
    %c0_i32_0 = arith.constant 0 : i32
    %c0_i32_1 = arith.constant 0 : i32
    return %arg1, %c0_i32, %c0_i32_0 : i32, i32, i32
  }
  func.func @transform_6(%arg0: i32, %arg1: i32) -> (i32, i32, i32) {
    %c0_i32 = arith.constant 0 : i32
    %c0_i32_0 = arith.constant 0 : i32
    %c0_i32_1 = arith.constant 0 : i32
    return %arg1, %c0_i32, %c0_i32_0 : i32, i32, i32
  }
  func.func @transform_7(%arg0: i32, %arg1: i32) -> (i32, i32, i32) {
    %c0_i32 = arith.constant 0 : i32
    %c0_i32_0 = arith.constant 0 : i32
    %c0_i32_1 = arith.constant 0 : i32
    return %arg1, %c0_i32, %c0_i32_0 : i32, i32, i32
  }
  func.func @transform_8(%arg0: i32, %arg1: i32) -> (i32, i32, i32) {
    %c0_i32 = arith.constant 0 : i32
    %c0_i32_0 = arith.constant 0 : i32
    %c0_i32_1 = arith.constant 0 : i32
    return %arg1, %c0_i32, %c0_i32_0 : i32, i32, i32
  }
  func.func @transform_9(%arg0: i32, %arg1: i32) -> (i32, i32, i32) {
    %c0_i32 = arith.constant 0 : i32
    %c0_i32_0 = arith.constant 0 : i32
    %c0_i32_1 = arith.constant 0 : i32
    return %arg1, %c0_i32, %c0_i32_0 : i32, i32, i32
  }
  func.func @transform_10(%arg0: i32, %arg1: i32) -> (i32, i32, i32) {
    %c0_i32 = arith.constant 0 : i32
    %c0_i32_0 = arith.constant 0 : i32
    %c0_i32_1 = arith.constant 0 : i32
    return %arg1, %c0_i32, %c0_i32_0 : i32, i32, i32
  }
  func.func @transform_11(%arg0: i32, %arg1: i32) -> (i32, i32, i32) {
    %c0_i32 = arith.constant 0 : i32
    %c0_i32_0 = arith.constant 0 : i32
    %c0_i32_1 = arith.constant 0 : i32
    return %arg1, %c0_i32, %c0_i32_0 : i32, i32, i32
  }
  func.func @transform_12(%arg0: i32, %arg1: i32) -> (i32, i32, i32) {
    %c0_i32 = arith.constant 0 : i32
    %c0_i32_0 = arith.constant 0 : i32
    %c0_i32_1 = arith.constant 0 : i32
    return %arg1, %c0_i32, %c0_i32_0 : i32, i32, i32
  }
  func.func @transform_13(%arg0: i32, %arg1: i32) -> (i32, i32, i32) {
    %c0_i32 = arith.constant 0 : i32
    %c0_i32_0 = arith.constant 0 : i32
    %c0_i32_1 = arith.constant 0 : i32
    return %arg1, %c0_i32, %c0_i32_0 : i32, i32, i32
  }
  func.func @transform_14(%arg0: i32, %arg1: i32) -> (i32, i32) {
    %c0_i32 = arith.constant 0 : i32
    %c0_i32_0 = arith.constant 0 : i32
    %c0_i32_1 = arith.constant 0 : i32
    return %c0_i32, %c0_i32_0 : i32, i32
  }
  func.func @transform_15(%arg0: i32, %arg1: i32) -> (i32, i32) {
    %c0_i32 = arith.constant 0 : i32
    %c0_i32_0 = arith.constant 0 : i32
    %c0_i32_1 = arith.constant 0 : i32
    return %c0_i32, %c0_i32_0 : i32, i32
  }
  func.func @transform_16(%arg0: i32, %arg1: i32) -> (i32, i32, i32) {
    %c0_i32 = arith.constant 0 : i32
    %c0_i32_0 = arith.constant 0 : i32
    %c0_i32_1 = arith.constant 0 : i32
    return %arg0, %c0_i32, %c0_i32_0 : i32, i32, i32
  }
}

module attributes {stable_mosaic.version = 11 : i64} {
  func.func @_decoder_stack_kernel(%arg0: i32, %arg1: i32, %arg2: memref<1x8x32xf32, #tpu.memory_space<vmem>>, %arg3: memref<1x10x32xf32, #tpu.memory_space<vmem>>, %arg4: memref<1x32x96xf32, #tpu.memory_space<vmem>>, %arg5: memref<1x1x96xf32, #tpu.memory_space<vmem>>, %arg6: memref<1x32x32xf32, #tpu.memory_space<vmem>>, %arg7: memref<1x1x32xf32, #tpu.memory_space<vmem>>, %arg8: memref<1x1x32xf32, #tpu.memory_space<vmem>>, %arg9: memref<1x1x32xf32, #tpu.memory_space<vmem>>, %arg10: memref<1x32x96xf32, #tpu.memory_space<vmem>>, %arg11: memref<1x1x96xf32, #tpu.memory_space<vmem>>, %arg12: memref<1x32x32xf32, #tpu.memory_space<vmem>>, %arg13: memref<1x1x32xf32, #tpu.memory_space<vmem>>, %arg14: memref<1x1x32xf32, #tpu.memory_space<vmem>>, %arg15: memref<1x1x32xf32, #tpu.memory_space<vmem>>, %arg16: memref<1x32x128xf32, #tpu.memory_space<vmem>>, %arg17: memref<1x1x128xf32, #tpu.memory_space<vmem>>, %arg18: memref<1x128x32xf32, #tpu.memory_space<vmem>>, %arg19: memref<1x1x32xf32, #tpu.memory_space<vmem>>, %arg20: memref<1x1x32xf32, #tpu.memory_space<vmem>>, %arg21: memref<1x1x32xf32, #tpu.memory_space<vmem>>, %arg22: memref<1x32xf32, #tpu.memory_space<vmem>>, %arg23: memref<1x32xf32, #tpu.memory_space<vmem>>, %arg24: memref<32x128xf32, #tpu.memory_space<vmem>>, %arg25: memref<1x128xf32, #tpu.memory_space<vmem>>, %arg26: memref<1x8x128xf32, #tpu.memory_space<vmem>>, %arg27: memref<8x32xf32, #tpu.memory_space<vmem>>) attributes {dimension_semantics = [#tpu.dimension_semantics<parallel>, #tpu.dimension_semantics<arbitrary>], iteration_bounds = array<i64: 2, 2>, scalar_prefetch = 0 : i64, scratch_operands = 1 : i64, tpu.core_type = #tpu.core_type<tc>, window_params = [{transform_indices = @transform_0, window_bounds = array<i64: 1, 8, 32>}, {transform_indices = @transform_1, window_bounds = array<i64: 1, 10, 32>}, {transform_indices = @transform_2, window_bounds = array<i64: 1, 32, 96>}, {transform_indices = @transform_3, window_bounds = array<i64: 1, 1, 96>}, {transform_indices = @transform_4, window_bounds = array<i64: 1, 32, 32>}, {transform_indices = @transform_5, window_bounds = array<i64: 1, 1, 32>}, {transform_indices = @transform_6, window_bounds = array<i64: 1, 1, 32>}, {transform_indices = @transform_7, window_bounds = array<i64: 1, 1, 32>}, {transform_indices = @transform_8, window_bounds = array<i64: 1, 32, 96>}, {transform_indices = @transform_9, window_bounds = array<i64: 1, 1, 96>}, {transform_indices = @transform_10, window_bounds = array<i64: 1, 32, 32>}, {transform_indices = @transform_11, window_bounds = array<i64: 1, 1, 32>}, {transform_indices = @transform_12, window_bounds = array<i64: 1, 1, 32>}, {transform_indices = @transform_13, window_bounds = array<i64: 1, 1, 32>}, {transform_indices = @transform_14, window_bounds = array<i64: 1, 32, 128>}, {transform_indices = @transform_15, window_bounds = array<i64: 1, 1, 128>}, {transform_indices = @transform_16, window_bounds = array<i64: 1, 128, 32>}, {transform_indices = @transform_17, window_bounds = array<i64: 1, 1, 32>}, {transform_indices = @transform_18, window_bounds = array<i64: 1, 1, 32>}, {transform_indices = @transform_19, window_bounds = array<i64: 1, 1, 32>}, {pipeline_mode = #tpu.pipeline_mode<synchronous>, transform_indices = @transform_20, window_bounds = array<i64: 1, 32>}, {pipeline_mode = #tpu.pipeline_mode<synchronous>, transform_indices = @transform_21, window_bounds = array<i64: 1, 32>}, {pipeline_mode = #tpu.pipeline_mode<synchronous>, transform_indices = @transform_22, window_bounds = array<i64: 32, 128>}, {pipeline_mode = #tpu.pipeline_mode<synchronous>, transform_indices = @transform_23, window_bounds = array<i64: 1, 128>}, {transform_indices = @transform_24, window_bounds = array<i64: 1, 8, 128>}]} {
    %c0_i32 = arith.constant 0 : i32
    %0 = arith.cmpi eq, %arg1, %c0_i32 : i32
    %1 = arith.extui %0 : i1 to i32
    %c0_i32_0 = arith.constant 0 : i32
    %2 = arith.cmpi ne, %1, %c0_i32_0 : i32
    scf.if %2 {
      %c0_96 = arith.constant 0 : index
      %c0_97 = arith.constant 0 : index
      %c0_98 = arith.constant 0 : index
      %222 = vector.load %arg2[%c0_96, %c0_97, %c0_98] : memref<1x8x32xf32, #tpu.memory_space<vmem>>, vector<1x8x32xf32>
      %223 = vector.shape_cast %222 : vector<1x8x32xf32> to vector<8x32xf32>
      %c0_99 = arith.constant 0 : index
      %c0_100 = arith.constant 0 : index
      %224 = vector.load %arg27[%c0_99, %c0_100] : memref<8x32xf32, #tpu.memory_space<vmem>>, vector<8x32xf32>
      tpu.vector_store %arg27[%c0_99, %c0_100], %223 {strides = array<i32>} : memref<8x32xf32, #tpu.memory_space<vmem>>, vector<8x32xf32>,
    } else {
    }
    %c0 = arith.constant 0 : index
    %c0_1 = arith.constant 0 : index
    %3 = vector.load %arg27[%c0, %c0_1] : memref<8x32xf32, #tpu.memory_space<vmem>>, vector<8x32xf32>
    %c0_2 = arith.constant 0 : index
    %c0_3 = arith.constant 0 : index
    %c0_4 = arith.constant 0 : index
    %4 = vector.load %arg3[%c0_2, %c0_3, %c0_4] : memref<1x10x32xf32, #tpu.memory_space<vmem>>, vector<1x10x32xf32>
    %5 = vector.shape_cast %4 : vector<1x10x32xf32> to vector<10x32xf32>
    %6 = tpu.iota {dimensions = array<i32: 0>} : vector<8x8xi32>
    %7 = tpu.iota {dimensions = array<i32: 1>} : vector<8x8xi32>
    %8 = arith.cmpi sge, %6, %7 : vector<8x8xi32>
    %cst = arith.constant 0.000000e+00 : f32
    %cst_5 = arith.constant -1.000000e+09 : f32
    %9 = vector.broadcast %cst : f32 to vector<8x8xf32>
    %10 = vector.broadcast %cst_5 : f32 to vector<8x8xf32>
    %11 = arith.select %8, %9, %10 : vector<8x8xi1>, vector<8x8xf32>
    %12 = vector.shape_cast %11 : vector<8x8xf32> to vector<1x8x8xf32>
    %c0_6 = arith.constant 0 : index
    %c0_7 = arith.constant 0 : index
    %c0_8 = arith.constant 0 : index
    %13 = vector.load %arg4[%c0_6, %c0_7, %c0_8] : memref<1x32x96xf32, #tpu.memory_space<vmem>>, vector<1x32x96xf32>
    %14 = vector.shape_cast %13 : vector<1x32x96xf32> to vector<32x96xf32>
    %c0_9 = arith.constant 0 : index
    %c0_10 = arith.constant 0 : index
    %c0_11 = arith.constant 0 : index
    %15 = vector.load %arg5[%c0_9, %c0_10, %c0_11] : memref<1x1x96xf32, #tpu.memory_space<vmem>>, vector<1x1x96xf32>
    %16 = vector.shape_cast %15 : vector<1x1x96xf32> to vector<1x96xf32>
    %c0_12 = arith.constant 0 : index
    %c0_13 = arith.constant 0 : index
    %c0_14 = arith.constant 0 : index
    %17 = vector.load %arg6[%c0_12, %c0_13, %c0_14] : memref<1x32x32xf32, #tpu.memory_space<vmem>>, vector<1x32x32xf32>
    %18 = vector.shape_cast %17 : vector<1x32x32xf32> to vector<32x32xf32>
    %c0_15 = arith.constant 0 : index
    %c0_16 = arith.constant 0 : index
    %c0_17 = arith.constant 0 : index
    %19 = vector.load %arg7[%c0_15, %c0_16, %c0_17] : memref<1x1x32xf32, #tpu.memory_space<vmem>>, vector<1x1x32xf32>
    %20 = vector.shape_cast %19 : vector<1x1x32xf32> to vector<1x32xf32>
    %21 = arith.truncf %3 : vector<8x32xf32> to vector<8x32xbf16>
    %22 = arith.truncf %14 : vector<32x96xf32> to vector<32x96xbf16>
    %cst_18 = arith.constant dense<0.000000e+00> : vector<8x96xf32>
    %23 = tpu.matmul %21, %22, %cst_18 {dimension_numbers = #tpu.dot_dimension_numbers<[1], [0], [0], [1], [0, 0, 1, 1], [], []>} : vector<8x32xbf16>, vector<32x96xbf16>, vector<8x96xf32> -> vector<8x96xf32>
    %24 = vector.broadcast %16 : vector<1x96xf32> to vector<8x96xf32>
    %25 = arith.addf %23, %24 : vector<8x96xf32>
    %26 = vector.extract_strided_slice %25 {offsets = [0, 0], sizes = [8, 32], strides = [1, 1]} : vector<8x96xf32> to vector<8x32xf32>
    %27 = vector.extract_strided_slice %25 {offsets = [0, 32], sizes = [8, 32], strides = [1, 1]} : vector<8x96xf32> to vector<8x32xf32>
    %28 = vector.extract_strided_slice %25 {offsets = [0, 64], sizes = [8, 32], strides = [1, 1]} : vector<8x96xf32> to vector<8x32xf32>
    %29 = vector.shape_cast %26 : vector<8x32xf32> to vector<8x4x8xf32>
    %30 = tpu.transpose %29, [1, 0, 2] : vector<8x4x8xf32> -> vector<4x8x8xf32>
    %31 = vector.shape_cast %27 : vector<8x32xf32> to vector<8x4x8xf32>
    %32 = tpu.transpose %31, [1, 0, 2] : vector<8x4x8xf32> -> vector<4x8x8xf32>
    %33 = vector.shape_cast %28 : vector<8x32xf32> to vector<8x4x8xf32>
    %34 = tpu.transpose %33, [1, 0, 2] : vector<8x4x8xf32> -> vector<4x8x8xf32>
    %35 = arith.truncf %30 : vector<4x8x8xf32> to vector<4x8x8xbf16>
    %36 = arith.truncf %32 : vector<4x8x8xf32> to vector<4x8x8xbf16>
    "tpu.trace_start"() <{level = 10 : i32, message = "hqd,hkd->hqk"}> : () -> ()
    %cst_19 = arith.constant dense<0.000000e+00> : vector<4x8x8xf32>
    %37 = tpu.matmul %35, %36, %cst_19 {dimension_numbers = #tpu.dot_dimension_numbers<[2], [2], [1], [1], [0, 0, 0, 1, 1, 1], [0], [0]>} : vector<4x8x8xbf16>, vector<4x8x8xbf16>, vector<4x8x8xf32> -> vector<4x8x8xf32>
    "tpu.trace_stop"() : () -> ()
    %cst_20 = arith.constant 0.353553385 : f32
    %38 = vector.broadcast %cst_20 : f32 to vector<4x8x8xf32>
    %39 = arith.mulf %37, %38 : vector<4x8x8xf32>
    %40 = vector.broadcast %12 : vector<1x8x8xf32> to vector<4x8x8xf32>
    %41 = arith.addf %39, %40 : vector<4x8x8xf32>
    %cst_21 = arith.constant dense<0xFF800000> : vector<4x8xf32>
    %42 = vector.multi_reduction <maximumf>, %41, %cst_21 [2] : vector<4x8x8xf32> to vector<4x8xf32>
    %43 = vector.shape_cast %42 : vector<4x8xf32> to vector<4x8x1xf32>
    %44 = vector.broadcast %43 : vector<4x8x1xf32> to vector<4x8x8xf32>
    %45 = arith.subf %41, %44 : vector<4x8x8xf32>
    %46 = math.exp %45 : vector<4x8x8xf32>
    %cst_22 = arith.constant dense<0.000000e+00> : vector<4x8xf32>
    %47 = vector.multi_reduction <add>, %46, %cst_22 [2] : vector<4x8x8xf32> to vector<4x8xf32>
    %48 = vector.shape_cast %47 : vector<4x8xf32> to vector<4x8x1xf32>
    %49 = tpu.reciprocal %48 {approx = true} : vector<4x8x1xf32> -> vector<4x8x1xf32>
    %50 = vector.broadcast %49 : vector<4x8x1xf32> to vector<4x8x8xf32>
    %51 = arith.mulf %46, %50 : vector<4x8x8xf32>
    %52 = arith.truncf %51 : vector<4x8x8xf32> to vector<4x8x8xbf16>
    %53 = arith.truncf %34 : vector<4x8x8xf32> to vector<4x8x8xbf16>
    "tpu.trace_start"() <{level = 10 : i32, message = "hqk,hkd->hqd"}> : () -> ()
    %cst_23 = arith.constant dense<0.000000e+00> : vector<4x8x8xf32>
    %54 = tpu.matmul %52, %53, %cst_23 {dimension_numbers = #tpu.dot_dimension_numbers<[2], [1], [1], [2], [0, 0, 0, 1, 1, 2], [0], [0]>} : vector<4x8x8xbf16>, vector<4x8x8xbf16>, vector<4x8x8xf32> -> vector<4x8x8xf32>
    "tpu.trace_stop"() : () -> ()
    %55 = tpu.transpose %54, [1, 0, 2] : vector<4x8x8xf32> -> vector<8x4x8xf32>
    %56 = vector.shape_cast %55 : vector<8x4x8xf32> to vector<8x32xf32>
    %57 = arith.truncf %56 : vector<8x32xf32> to vector<8x32xbf16>
    %58 = arith.truncf %18 : vector<32x32xf32> to vector<32x32xbf16>
    %cst_24 = arith.constant dense<0.000000e+00> : vector<8x32xf32>
    %59 = tpu.matmul %57, %58, %cst_24 {dimension_numbers = #tpu.dot_dimension_numbers<[1], [0], [0], [1], [0, 0, 1, 1], [], []>} : vector<8x32xbf16>, vector<32x32xbf16>, vector<8x32xf32> -> vector<8x32xf32>
    %60 = vector.broadcast %20 : vector<1x32xf32> to vector<8x32xf32>
    %61 = arith.addf %59, %60 : vector<8x32xf32>
    %62 = arith.addf %3, %61 : vector<8x32xf32>
    %c0_25 = arith.constant 0 : index
    %c0_26 = arith.constant 0 : index
    %c0_27 = arith.constant 0 : index
    %63 = vector.load %arg8[%c0_25, %c0_26, %c0_27] : memref<1x1x32xf32, #tpu.memory_space<vmem>>, vector<1x1x32xf32>
    %64 = vector.shape_cast %63 : vector<1x1x32xf32> to vector<1x32xf32>
    %c0_28 = arith.constant 0 : index
    %c0_29 = arith.constant 0 : index
    %c0_30 = arith.constant 0 : index
    %65 = vector.load %arg9[%c0_28, %c0_29, %c0_30] : memref<1x1x32xf32, #tpu.memory_space<vmem>>, vector<1x1x32xf32>
    %66 = vector.shape_cast %65 : vector<1x1x32xf32> to vector<1x32xf32>
    %cst_31 = arith.constant dense<0.000000e+00> : vector<8xf32>
    %67 = vector.multi_reduction <add>, %62, %cst_31 [1] : vector<8x32xf32> to vector<8xf32>
    %68 = vector.shape_cast %67 : vector<8xf32> to vector<8x1xf32>
    %cst_32 = arith.constant 3.200000e+01 : f32
    %69 = vector.broadcast %cst_32 : f32 to vector<8x1xf32>
    %70 = arith.divf %68, %69 : vector<8x1xf32>
    %71 = vector.broadcast %70 : vector<8x1xf32> to vector<8x32xf32>
    %72 = arith.subf %62, %71 : vector<8x32xf32>
    %73 = arith.mulf %72, %72 : vector<8x32xf32>
    %cst_33 = arith.constant dense<0.000000e+00> : vector<8xf32>
    %74 = vector.multi_reduction <add>, %73, %cst_33 [1] : vector<8x32xf32> to vector<8xf32>
    %75 = vector.shape_cast %74 : vector<8xf32> to vector<8x1xf32>
    %cst_34 = arith.constant 3.200000e+01 : f32
    %76 = vector.broadcast %cst_34 : f32 to vector<8x1xf32>
    %77 = arith.divf %75, %76 : vector<8x1xf32>
    %78 = vector.broadcast %70 : vector<8x1xf32> to vector<8x32xf32>
    %79 = arith.subf %62, %78 : vector<8x32xf32>
    %cst_35 = arith.constant 9.99999974E-6 : f32
    %80 = vector.broadcast %cst_35 : f32 to vector<8x1xf32>
    %81 = arith.addf %77, %80 : vector<8x1xf32>
    %82 = math.rsqrt %81 : vector<8x1xf32>
    %83 = vector.broadcast %82 : vector<8x1xf32> to vector<8x32xf32>
    %84 = arith.mulf %79, %83 : vector<8x32xf32>
    %85 = vector.broadcast %64 : vector<1x32xf32> to vector<8x32xf32>
    %86 = arith.mulf %84, %85 : vector<8x32xf32>
    %87 = vector.broadcast %66 : vector<1x32xf32> to vector<8x32xf32>
    %88 = arith.addf %86, %87 : vector<8x32xf32>
    %c0_36 = arith.constant 0 : index
    %c0_37 = arith.constant 0 : index
    %c0_38 = arith.constant 0 : index
    %89 = vector.load %arg10[%c0_36, %c0_37, %c0_38] : memref<1x32x96xf32, #tpu.memory_space<vmem>>, vector<1x32x96xf32>
    %90 = vector.shape_cast %89 : vector<1x32x96xf32> to vector<32x96xf32>
    %c0_39 = arith.constant 0 : index
    %c0_40 = arith.constant 0 : index
    %c0_41 = arith.constant 0 : index
    %91 = vector.load %arg11[%c0_39, %c0_40, %c0_41] : memref<1x1x96xf32, #tpu.memory_space<vmem>>, vector<1x1x96xf32>
    %92 = vector.shape_cast %91 : vector<1x1x96xf32> to vector<1x96xf32>
    %c0_42 = arith.constant 0 : index
    %c0_43 = arith.constant 0 : index
    %c0_44 = arith.constant 0 : index
    %93 = vector.load %arg12[%c0_42, %c0_43, %c0_44] : memref<1x32x32xf32, #tpu.memory_space<vmem>>, vector<1x32x32xf32>
    %94 = vector.shape_cast %93 : vector<1x32x32xf32> to vector<32x32xf32>
    %c0_45 = arith.constant 0 : index
    %c0_46 = arith.constant 0 : index
    %c0_47 = arith.constant 0 : index
    %95 = vector.load %arg13[%c0_45, %c0_46, %c0_47] : memref<1x1x32xf32, #tpu.memory_space<vmem>>, vector<1x1x32xf32>
    %96 = vector.shape_cast %95 : vector<1x1x32xf32> to vector<1x32xf32>
    %97 = vector.extract_strided_slice %90 {offsets = [0, 0], sizes = [32, 32], strides = [1, 1]} : vector<32x96xf32> to vector<32x32xf32>
    %98 = arith.truncf %88 : vector<8x32xf32> to vector<8x32xbf16>
    %99 = arith.truncf %97 : vector<32x32xf32> to vector<32x32xbf16>
    %cst_48 = arith.constant dense<0.000000e+00> : vector<8x32xf32>
    %100 = tpu.matmul %98, %99, %cst_48 {dimension_numbers = #tpu.dot_dimension_numbers<[1], [0], [0], [1], [0, 0, 1, 1], [], []>} : vector<8x32xbf16>, vector<32x32xbf16>, vector<8x32xf32> -> vector<8x32xf32>
    %101 = vector.extract_strided_slice %92 {offsets = [0, 0], sizes = [1, 32], strides = [1, 1]} : vector<1x96xf32> to vector<1x32xf32>
    %102 = vector.broadcast %101 : vector<1x32xf32> to vector<8x32xf32>
    %103 = arith.addf %100, %102 : vector<8x32xf32>
    %104 = vector.extract_strided_slice %90 {offsets = [0, 32], sizes = [32, 64], strides = [1, 1]} : vector<32x96xf32> to vector<32x64xf32>
    %105 = arith.truncf %5 : vector<10x32xf32> to vector<10x32xbf16>
    %106 = arith.truncf %104 : vector<32x64xf32> to vector<32x64xbf16>
    %cst_49 = arith.constant dense<0.000000e+00> : vector<10x64xf32>
    %107 = tpu.matmul %105, %106, %cst_49 {dimension_numbers = #tpu.dot_dimension_numbers<[1], [0], [0], [1], [0, 0, 1, 1], [], []>} : vector<10x32xbf16>, vector<32x64xbf16>, vector<10x64xf32> -> vector<10x64xf32>
    %108 = vector.extract_strided_slice %92 {offsets = [0, 32], sizes = [1, 64], strides = [1, 1]} : vector<1x96xf32> to vector<1x64xf32>
    %109 = vector.broadcast %108 : vector<1x64xf32> to vector<10x64xf32>
    %110 = arith.addf %107, %109 : vector<10x64xf32>
    %111 = vector.extract_strided_slice %110 {offsets = [0, 0], sizes = [10, 32], strides = [1, 1]} : vector<10x64xf32> to vector<10x32xf32>
    %112 = vector.extract_strided_slice %110 {offsets = [0, 32], sizes = [10, 32], strides = [1, 1]} : vector<10x64xf32> to vector<10x32xf32>
    %113 = vector.shape_cast %103 : vector<8x32xf32> to vector<8x4x8xf32>
    %114 = tpu.transpose %113, [1, 0, 2] : vector<8x4x8xf32> -> vector<4x8x8xf32>
    %115 = vector.shape_cast %111 : vector<10x32xf32> to vector<10x4x8xf32>
    %116 = tpu.transpose %115, [1, 0, 2] : vector<10x4x8xf32> -> vector<4x10x8xf32>
    %117 = vector.shape_cast %112 : vector<10x32xf32> to vector<10x4x8xf32>
    %118 = tpu.transpose %117, [1, 0, 2] : vector<10x4x8xf32> -> vector<4x10x8xf32>
    %119 = arith.truncf %114 : vector<4x8x8xf32> to vector<4x8x8xbf16>
    %120 = arith.truncf %116 : vector<4x10x8xf32> to vector<4x10x8xbf16>
    "tpu.trace_start"() <{level = 10 : i32, message = "hqd,hkd->hqk"}> : () -> ()
    %cst_50 = arith.constant dense<0.000000e+00> : vector<4x8x10xf32>
    %121 = tpu.matmul %119, %120, %cst_50 {dimension_numbers = #tpu.dot_dimension_numbers<[2], [2], [1], [1], [0, 0, 0, 1, 1, 1], [0], [0]>} : vector<4x8x8xbf16>, vector<4x10x8xbf16>, vector<4x8x10xf32> -> vector<4x8x10xf32>
    "tpu.trace_stop"() : () -> ()
    %cst_51 = arith.constant 0.353553385 : f32
    %122 = vector.broadcast %cst_51 : f32 to vector<4x8x10xf32>
    %123 = arith.mulf %121, %122 : vector<4x8x10xf32>
    %cst_52 = arith.constant dense<0xFF800000> : vector<4x8xf32>
    %124 = vector.multi_reduction <maximumf>, %123, %cst_52 [2] : vector<4x8x10xf32> to vector<4x8xf32>
    %125 = vector.shape_cast %124 : vector<4x8xf32> to vector<4x8x1xf32>
    %126 = vector.broadcast %125 : vector<4x8x1xf32> to vector<4x8x10xf32>
    %127 = arith.subf %123, %126 : vector<4x8x10xf32>
    %128 = math.exp %127 : vector<4x8x10xf32>
    %cst_53 = arith.constant dense<0.000000e+00> : vector<4x8xf32>
    %129 = vector.multi_reduction <add>, %128, %cst_53 [2] : vector<4x8x10xf32> to vector<4x8xf32>
    %130 = vector.shape_cast %129 : vector<4x8xf32> to vector<4x8x1xf32>
    %131 = tpu.reciprocal %130 {approx = true} : vector<4x8x1xf32> -> vector<4x8x1xf32>
    %132 = vector.broadcast %131 : vector<4x8x1xf32> to vector<4x8x10xf32>
    %133 = arith.mulf %128, %132 : vector<4x8x10xf32>
    %134 = arith.truncf %133 : vector<4x8x10xf32> to vector<4x8x10xbf16>
    %135 = arith.truncf %118 : vector<4x10x8xf32> to vector<4x10x8xbf16>
    "tpu.trace_start"() <{level = 10 : i32, message = "hqk,hkd->hqd"}> : () -> ()
    %cst_54 = arith.constant dense<0.000000e+00> : vector<4x8x8xf32>
    %136 = tpu.matmul %134, %135, %cst_54 {dimension_numbers = #tpu.dot_dimension_numbers<[2], [1], [1], [2], [0, 0, 0, 1, 1, 2], [0], [0]>} : vector<4x8x10xbf16>, vector<4x10x8xbf16>, vector<4x8x8xf32> -> vector<4x8x8xf32>
    "tpu.trace_stop"() : () -> ()
    %137 = tpu.transpose %136, [1, 0, 2] : vector<4x8x8xf32> -> vector<8x4x8xf32>
    %138 = vector.shape_cast %137 : vector<8x4x8xf32> to vector<8x32xf32>
    %139 = arith.truncf %138 : vector<8x32xf32> to vector<8x32xbf16>
    %140 = arith.truncf %94 : vector<32x32xf32> to vector<32x32xbf16>
    %cst_55 = arith.constant dense<0.000000e+00> : vector<8x32xf32>
    %141 = tpu.matmul %139, %140, %cst_55 {dimension_numbers = #tpu.dot_dimension_numbers<[1], [0], [0], [1], [0, 0, 1, 1], [], []>} : vector<8x32xbf16>, vector<32x32xbf16>, vector<8x32xf32> -> vector<8x32xf32>
    %142 = vector.broadcast %96 : vector<1x32xf32> to vector<8x32xf32>
    %143 = arith.addf %141, %142 : vector<8x32xf32>
    %144 = arith.addf %88, %143 : vector<8x32xf32>
    %c0_56 = arith.constant 0 : index
    %c0_57 = arith.constant 0 : index
    %c0_58 = arith.constant 0 : index
    %145 = vector.load %arg14[%c0_56, %c0_57, %c0_58] : memref<1x1x32xf32, #tpu.memory_space<vmem>>, vector<1x1x32xf32>
    %146 = vector.shape_cast %145 : vector<1x1x32xf32> to vector<1x32xf32>
    %c0_59 = arith.constant 0 : index
    %c0_60 = arith.constant 0 : index
    %c0_61 = arith.constant 0 : index
    %147 = vector.load %arg15[%c0_59, %c0_60, %c0_61] : memref<1x1x32xf32, #tpu.memory_space<vmem>>, vector<1x1x32xf32>
    %148 = vector.shape_cast %147 : vector<1x1x32xf32> to vector<1x32xf32>
    %cst_62 = arith.constant dense<0.000000e+00> : vector<8xf32>
    %149 = vector.multi_reduction <add>, %144, %cst_62 [1] : vector<8x32xf32> to vector<8xf32>
    %150 = vector.shape_cast %149 : vector<8xf32> to vector<8x1xf32>
    %cst_63 = arith.constant 3.200000e+01 : f32
    %151 = vector.broadcast %cst_63 : f32 to vector<8x1xf32>
    %152 = arith.divf %150, %151 : vector<8x1xf32>
    %153 = vector.broadcast %152 : vector<8x1xf32> to vector<8x32xf32>
    %154 = arith.subf %144, %153 : vector<8x32xf32>
    %155 = arith.mulf %154, %154 : vector<8x32xf32>
    %cst_64 = arith.constant dense<0.000000e+00> : vector<8xf32>
    %156 = vector.multi_reduction <add>, %155, %cst_64 [1] : vector<8x32xf32> to vector<8xf32>
    %157 = vector.shape_cast %156 : vector<8xf32> to vector<8x1xf32>
    %cst_65 = arith.constant 3.200000e+01 : f32
    %158 = vector.broadcast %cst_65 : f32 to vector<8x1xf32>
    %159 = arith.divf %157, %158 : vector<8x1xf32>
    %160 = vector.broadcast %152 : vector<8x1xf32> to vector<8x32xf32>
    %161 = arith.subf %144, %160 : vector<8x32xf32>
    %cst_66 = arith.constant 9.99999974E-6 : f32
    %162 = vector.broadcast %cst_66 : f32 to vector<8x1xf32>
    %163 = arith.addf %159, %162 : vector<8x1xf32>
    %164 = math.rsqrt %163 : vector<8x1xf32>
    %165 = vector.broadcast %164 : vector<8x1xf32> to vector<8x32xf32>
    %166 = arith.mulf %161, %165 : vector<8x32xf32>
    %167 = vector.broadcast %146 : vector<1x32xf32> to vector<8x32xf32>
    %168 = arith.mulf %166, %167 : vector<8x32xf32>
    %169 = vector.broadcast %148 : vector<1x32xf32> to vector<8x32xf32>
    %170 = arith.addf %168, %169 : vector<8x32xf32>
    %c0_67 = arith.constant 0 : index
    %c0_68 = arith.constant 0 : index
    %c0_69 = arith.constant 0 : index
    %171 = vector.load %arg16[%c0_67, %c0_68, %c0_69] : memref<1x32x128xf32, #tpu.memory_space<vmem>>, vector<1x32x128xf32>
    %172 = vector.shape_cast %171 : vector<1x32x128xf32> to vector<32x128xf32>
    %173 = arith.truncf %170 : vector<8x32xf32> to vector<8x32xbf16>
    %174 = arith.truncf %172 : vector<32x128xf32> to vector<32x128xbf16>
    %cst_70 = arith.constant dense<0.000000e+00> : vector<8x128xf32>
    %175 = tpu.matmul %173, %174, %cst_70 {dimension_numbers = #tpu.dot_dimension_numbers<[1], [0], [0], [1], [0, 0, 1, 1], [], []>} : vector<8x32xbf16>, vector<32x128xbf16>, vector<8x128xf32> -> vector<8x128xf32>
    %c0_71 = arith.constant 0 : index
    %c0_72 = arith.constant 0 : index
    %c0_73 = arith.constant 0 : index
    %176 = vector.load %arg17[%c0_71, %c0_72, %c0_73] : memref<1x1x128xf32, #tpu.memory_space<vmem>>, vector<1x1x128xf32>
    %177 = vector.shape_cast %176 : vector<1x1x128xf32> to vector<1x128xf32>
    %178 = vector.broadcast %177 : vector<1x128xf32> to vector<8x128xf32>
    %179 = arith.addf %175, %178 : vector<8x128xf32>
    %cst_74 = arith.constant 0.000000e+00 : f32
    %180 = vector.broadcast %cst_74 : f32 to vector<8x128xf32>
    %181 = arith.maximumf %179, %180 : vector<8x128xf32>
    %c0_75 = arith.constant 0 : index
    %c0_76 = arith.constant 0 : index
    %c0_77 = arith.constant 0 : index
    %182 = vector.load %arg18[%c0_75, %c0_76, %c0_77] : memref<1x128x32xf32, #tpu.memory_space<vmem>>, vector<1x128x32xf32>
    %183 = vector.shape_cast %182 : vector<1x128x32xf32> to vector<128x32xf32>
    %184 = arith.truncf %181 : vector<8x128xf32> to vector<8x128xbf16>
    %185 = arith.truncf %183 : vector<128x32xf32> to vector<128x32xbf16>
    %cst_78 = arith.constant dense<0.000000e+00> : vector<8x32xf32>
    %186 = tpu.matmul %184, %185, %cst_78 {dimension_numbers = #tpu.dot_dimension_numbers<[1], [0], [0], [1], [0, 0, 1, 1], [], []>} : vector<8x128xbf16>, vector<128x32xbf16>, vector<8x32xf32> -> vector<8x32xf32>
    %c0_79 = arith.constant 0 : index
    %c0_80 = arith.constant 0 : index
    %c0_81 = arith.constant 0 : index
    %187 = vector.load %arg19[%c0_79, %c0_80, %c0_81] : memref<1x1x32xf32, #tpu.memory_space<vmem>>, vector<1x1x32xf32>
    %188 = vector.shape_cast %187 : vector<1x1x32xf32> to vector<1x32xf32>
    %189 = vector.broadcast %188 : vector<1x32xf32> to vector<8x32xf32>
    %190 = arith.addf %186, %189 : vector<8x32xf32>
    %191 = arith.addf %170, %190 : vector<8x32xf32>
    %c0_82 = arith.constant 0 : index
    %c0_83 = arith.constant 0 : index
    %c0_84 = arith.constant 0 : index
    %192 = vector.load %arg20[%c0_82, %c0_83, %c0_84] : memref<1x1x32xf32, #tpu.memory_space<vmem>>, vector<1x1x32xf32>
    %193 = vector.shape_cast %192 : vector<1x1x32xf32> to vector<1x32xf32>
    %c0_85 = arith.constant 0 : index
    %c0_86 = arith.constant 0 : index
    %c0_87 = arith.constant 0 : index
    %194 = vector.load %arg21[%c0_85, %c0_86, %c0_87] : memref<1x1x32xf32, #tpu.memory_space<vmem>>, vector<1x1x32xf32>
    %195 = vector.shape_cast %194 : vector<1x1x32xf32> to vector<1x32xf32>
    %cst_88 = arith.constant dense<0.000000e+00> : vector<8xf32>
    %196 = vector.multi_reduction <add>, %191, %cst_88 [1] : vector<8x32xf32> to vector<8xf32>
    %197 = vector.shape_cast %196 : vector<8xf32> to vector<8x1xf32>
    %cst_89 = arith.constant 3.200000e+01 : f32
    %198 = vector.broadcast %cst_89 : f32 to vector<8x1xf32>
    %199 = arith.divf %197, %198 : vector<8x1xf32>
    %200 = vector.broadcast %199 : vector<8x1xf32> to vector<8x32xf32>
    %201 = arith.subf %191, %200 : vector<8x32xf32>
    %202 = arith.mulf %201, %201 : vector<8x32xf32>
    %cst_90 = arith.constant dense<0.000000e+00> : vector<8xf32>
    %203 = vector.multi_reduction <add>, %202, %cst_90 [1] : vector<8x32xf32> to vector<8xf32>
    %204 = vector.shape_cast %203 : vector<8xf32> to vector<8x1xf32>
    %cst_91 = arith.constant 3.200000e+01 : f32
    %205 = vector.broadcast %cst_91 : f32 to vector<8x1xf32>
    %206 = arith.divf %204, %205 : vector<8x1xf32>
    %207 = vector.broadcast %199 : vector<8x1xf32> to vector<8x32xf32>
    %208 = arith.subf %191, %207 : vector<8x32xf32>
    %cst_92 = arith.constant 9.99999974E-6 : f32
    %209 = vector.broadcast %cst_92 : f32 to vector<8x1xf32>
    %210 = arith.addf %206, %209 : vector<8x1xf32>
    %211 = math.rsqrt %210 : vector<8x1xf32>
    %212 = vector.broadcast %211 : vector<8x1xf32> to vector<8x32xf32>
    %213 = arith.mulf %208, %212 : vector<8x32xf32>
    %214 = vector.broadcast %193 : vector<1x32xf32> to vector<8x32xf32>
    %215 = arith.mulf %213, %214 : vector<8x32xf32>
    %216 = vector.broadcast %195 : vector<1x32xf32> to vector<8x32xf32>
    %217 = arith.addf %215, %216 : vector<8x32xf32>
    %c0_93 = arith.constant 0 : index
    %c0_94 = arith.constant 0 : index
    %218 = vector.load %arg27[%c0_93, %c0_94] : memref<8x32xf32, #tpu.memory_space<vmem>>, vector<8x32xf32>
    tpu.vector_store %arg27[%c0_93, %c0_94], %217 {strides = array<i32>} : memref<8x32xf32, #tpu.memory_space<vmem>>, vector<8x32xf32>,
    %c1_i32 = arith.constant 1 : i32
    %219 = arith.cmpi eq, %arg1, %c1_i32 : i32
    %220 = arith.extui %219 : i1 to i32
    %c0_i32_95 = arith.constant 0 : i32
    %221 = arith.cmpi ne, %220, %c0_i32_95 : i32
    scf.if %221 {
      %c0_96 = arith.constant 0 : index
      %c0_97 = arith.constant 0 : index
      %222 = vector.load %arg22[%c0_96, %c0_97] : memref<1x32xf32, #tpu.memory_space<vmem>>, vector<1x32xf32>
      %c0_98 = arith.constant 0 : index
      %c0_99 = arith.constant 0 : index
      %223 = vector.load %arg23[%c0_98, %c0_99] : memref<1x32xf32, #tpu.memory_space<vmem>>, vector<1x32xf32>
      %cst_100 = arith.constant dense<0.000000e+00> : vector<8xf32>
      %224 = vector.multi_reduction <add>, %217, %cst_100 [1] : vector<8x32xf32> to vector<8xf32>
      %225 = vector.shape_cast %224 : vector<8xf32> to vector<8x1xf32>
      %cst_101 = arith.constant 3.200000e+01 : f32
      %226 = vector.broadcast %cst_101 : f32 to vector<8x1xf32>
      %227 = arith.divf %225, %226 : vector<8x1xf32>
      %228 = vector.broadcast %227 : vector<8x1xf32> to vector<8x32xf32>
      %229 = arith.subf %217, %228 : vector<8x32xf32>
      %230 = arith.mulf %229, %229 : vector<8x32xf32>
      %cst_102 = arith.constant dense<0.000000e+00> : vector<8xf32>
      %231 = vector.multi_reduction <add>, %230, %cst_102 [1] : vector<8x32xf32> to vector<8xf32>
      %232 = vector.shape_cast %231 : vector<8xf32> to vector<8x1xf32>
      %cst_103 = arith.constant 3.200000e+01 : f32
      %233 = vector.broadcast %cst_103 : f32 to vector<8x1xf32>
      %234 = arith.divf %232, %233 : vector<8x1xf32>
      %235 = vector.broadcast %227 : vector<8x1xf32> to vector<8x32xf32>
      %236 = arith.subf %217, %235 : vector<8x32xf32>
      %cst_104 = arith.constant 9.99999974E-6 : f32
      %237 = vector.broadcast %cst_104 : f32 to vector<8x1xf32>
      %238 = arith.addf %234, %237 : vector<8x1xf32>
      %239 = math.rsqrt %238 : vector<8x1xf32>
      %240 = vector.broadcast %239 : vector<8x1xf32> to vector<8x32xf32>
      %241 = arith.mulf %236, %240 : vector<8x32xf32>
      %242 = vector.broadcast %222 : vector<1x32xf32> to vector<8x32xf32>
      %243 = arith.mulf %241, %242 : vector<8x32xf32>
      %244 = vector.broadcast %223 : vector<1x32xf32> to vector<8x32xf32>
      %245 = arith.addf %243, %244 : vector<8x32xf32>
      %c0_105 = arith.constant 0 : index
      %c0_106 = arith.constant 0 : index
      %246 = vector.load %arg24[%c0_105, %c0_106] : memref<32x128xf32, #tpu.memory_space<vmem>>, vector<32x128xf32>
      %247 = arith.truncf %245 : vector<8x32xf32> to vector<8x32xbf16>
      %248 = arith.truncf %246 : vector<32x128xf32> to vector<32x128xbf16>
      %cst_107 = arith.constant dense<0.000000e+00> : vector<8x128xf32>
      %249 = tpu.matmul %247, %248, %cst_107 {dimension_numbers = #tpu.dot_dimension_numbers<[1], [0], [0], [1], [0, 0, 1, 1], [], []>} : vector<8x32xbf16>, vector<32x128xbf16>, vector<8x128xf32> -> vector<8x128xf32>
      %c0_108 = arith.constant 0 : index
      %c0_109 = arith.constant 0 : index
      %250 = vector.load %arg25[%c0_108, %c0_109] : memref<1x128xf32, #tpu.memory_space<vmem>>, vector<1x128xf32>
      %251 = vector.broadcast %250 : vector<1x128xf32> to vector<8x128xf32>
      %252 = arith.addf %249, %251 : vector<8x128xf32>
      %c0_110 = arith.constant 0 : index
      %c0_111 = arith.constant 0 : index
      %c0_112 = arith.constant 0 : index
      %253 = vector.load %arg26[%c0_110, %c0_111, %c0_112] : memref<1x8x128xf32, #tpu.memory_space<vmem>>, vector<1x8x128xf32>
      %254 = vector.shape_cast %253 : vector<1x8x128xf32> to vector<8x128xf32>
      %255 = vector.shape_cast %252 : vector<8x128xf32> to vector<1x8x128xf32>
      tpu.vector_store %arg26[%c0_110, %c0_111, %c0_112], %255 {strides = array<i32>} : memref<1x8x128xf32, #tpu.memory_space<vmem>>, vector<1x8x128xf32>,
    } else {
    }
    return
  }
  func.func @transform_0(%arg0: i32, %arg1: i32) -> (i32, i32, i32) {
    %c0_i32 = arith.constant 0 : i32
    %c0_i32_0 = arith.constant 0 : i32
    %c0_i32_1 = arith.constant 0 : i32
    return %arg0, %c0_i32, %c0_i32_0 : i32, i32, i32
  }
  func.func @transform_1(%arg0: i32, %arg1: i32) -> (i32, i32, i32) {
    %c0_i32 = arith.constant 0 : i32
    %c0_i32_0 = arith.constant 0 : i32
    %c0_i32_1 = arith.constant 0 : i32
    return %arg0, %c0_i32, %c0_i32_0 : i32, i32, i32
  }
  func.func @transform_2(%arg0: i32, %arg1: i32) -> (i32, i32, i32) {
    %c0_i32 = arith.constant 0 : i32
    %c0_i32_0 = arith.constant 0 : i32
    %c0_i32_1 = arith.constant 0 : i32
    return %arg1, %c0_i32, %c0_i32_0 : i32, i32, i32
  }
  func.func @transform_3(%arg0: i32, %arg1: i32) -> (i32, i32, i32) {
    %c0_i32 = arith.constant 0 : i32
    %c0_i32_0 = arith.constant 0 : i32
    %c0_i32_1 = arith.constant 0 : i32
    return %arg1, %c0_i32, %c0_i32_0 : i32, i32, i32
  }
  func.func @transform_4(%arg0: i32, %arg1: i32) -> (i32, i32, i32) {
    %c0_i32 = arith.constant 0 : i32
    %c0_i32_0 = arith.constant 0 : i32
    %c0_i32_1 = arith.constant 0 : i32
    return %arg1, %c0_i32, %c0_i32_0 : i32, i32, i32
  }
  func.func @transform_5(%arg0: i32, %arg1: i32) -> (i32, i32, i32) {
    %c0_i32 = arith.constant 0 : i32
    %c0_i32_0 = arith.constant 0 : i32
    %c0_i32_1 = arith.constant 0 : i32
    return %arg1, %c0_i32, %c0_i32_0 : i32, i32, i32
  }
  func.func @transform_6(%arg0: i32, %arg1: i32) -> (i32, i32, i32) {
    %c0_i32 = arith.constant 0 : i32
    %c0_i32_0 = arith.constant 0 : i32
    %c0_i32_1 = arith.constant 0 : i32
    return %arg1, %c0_i32, %c0_i32_0 : i32, i32, i32
  }
  func.func @transform_7(%arg0: i32, %arg1: i32) -> (i32, i32, i32) {
    %c0_i32 = arith.constant 0 : i32
    %c0_i32_0 = arith.constant 0 : i32
    %c0_i32_1 = arith.constant 0 : i32
    return %arg1, %c0_i32, %c0_i32_0 : i32, i32, i32
  }
  func.func @transform_8(%arg0: i32, %arg1: i32) -> (i32, i32, i32) {
    %c0_i32 = arith.constant 0 : i32
    %c0_i32_0 = arith.constant 0 : i32
    %c0_i32_1 = arith.constant 0 : i32
    return %arg1, %c0_i32, %c0_i32_0 : i32, i32, i32
  }
  func.func @transform_9(%arg0: i32, %arg1: i32) -> (i32, i32, i32) {
    %c0_i32 = arith.constant 0 : i32
    %c0_i32_0 = arith.constant 0 : i32
    %c0_i32_1 = arith.constant 0 : i32
    return %arg1, %c0_i32, %c0_i32_0 : i32, i32, i32
  }
  func.func @transform_10(%arg0: i32, %arg1: i32) -> (i32, i32, i32) {
    %c0_i32 = arith.constant 0 : i32
    %c0_i32_0 = arith.constant 0 : i32
    %c0_i32_1 = arith.constant 0 : i32
    return %arg1, %c0_i32, %c0_i32_0 : i32, i32, i32
  }
  func.func @transform_11(%arg0: i32, %arg1: i32) -> (i32, i32, i32) {
    %c0_i32 = arith.constant 0 : i32
    %c0_i32_0 = arith.constant 0 : i32
    %c0_i32_1 = arith.constant 0 : i32
    return %arg1, %c0_i32, %c0_i32_0 : i32, i32, i32
  }
  func.func @transform_12(%arg0: i32, %arg1: i32) -> (i32, i32, i32) {
    %c0_i32 = arith.constant 0 : i32
    %c0_i32_0 = arith.constant 0 : i32
    %c0_i32_1 = arith.constant 0 : i32
    return %arg1, %c0_i32, %c0_i32_0 : i32, i32, i32
  }
  func.func @transform_13(%arg0: i32, %arg1: i32) -> (i32, i32, i32) {
    %c0_i32 = arith.constant 0 : i32
    %c0_i32_0 = arith.constant 0 : i32
    %c0_i32_1 = arith.constant 0 : i32
    return %arg1, %c0_i32, %c0_i32_0 : i32, i32, i32
  }
  func.func @transform_14(%arg0: i32, %arg1: i32) -> (i32, i32, i32) {
    %c0_i32 = arith.constant 0 : i32
    %c0_i32_0 = arith.constant 0 : i32
    %c0_i32_1 = arith.constant 0 : i32
    return %arg1, %c0_i32, %c0_i32_0 : i32, i32, i32
  }
  func.func @transform_15(%arg0: i32, %arg1: i32) -> (i32, i32, i32) {
    %c0_i32 = arith.constant 0 : i32
    %c0_i32_0 = arith.constant 0 : i32
    %c0_i32_1 = arith.constant 0 : i32
    return %arg1, %c0_i32, %c0_i32_0 : i32, i32, i32
  }
  func.func @transform_16(%arg0: i32, %arg1: i32) -> (i32, i32, i32) {
    %c0_i32 = arith.constant 0 : i32
    %c0_i32_0 = arith.constant 0 : i32
    %c0_i32_1 = arith.constant 0 : i32
    return %arg1, %c0_i32, %c0_i32_0 : i32, i32, i32
  }
  func.func @transform_17(%arg0: i32, %arg1: i32) -> (i32, i32, i32) {
    %c0_i32 = arith.constant 0 : i32
    %c0_i32_0 = arith.constant 0 : i32
    %c0_i32_1 = arith.constant 0 : i32
    return %arg1, %c0_i32, %c0_i32_0 : i32, i32, i32
  }
  func.func @transform_18(%arg0: i32, %arg1: i32) -> (i32, i32, i32) {
    %c0_i32 = arith.constant 0 : i32
    %c0_i32_0 = arith.constant 0 : i32
    %c0_i32_1 = arith.constant 0 : i32
    return %arg1, %c0_i32, %c0_i32_0 : i32, i32, i32
  }
  func.func @transform_19(%arg0: i32, %arg1: i32) -> (i32, i32, i32) {
    %c0_i32 = arith.constant 0 : i32
    %c0_i32_0 = arith.constant 0 : i32
    %c0_i32_1 = arith.constant 0 : i32
    return %arg1, %c0_i32, %c0_i32_0 : i32, i32, i32
  }
  func.func @transform_20(%arg0: i32, %arg1: i32) -> (i32, i32) {
    %c0_i32 = arith.constant 0 : i32
    %c0_i32_0 = arith.constant 0 : i32
    %c0_i32_1 = arith.constant 0 : i32
    return %c0_i32, %c0_i32_0 : i32, i32
  }
  func.func @transform_21(%arg0: i32, %arg1: i32) -> (i32, i32) {
    %c0_i32 = arith.constant 0 : i32
    %c0_i32_0 = arith.constant 0 : i32
    %c0_i32_1 = arith.constant 0 : i32
    return %c0_i32, %c0_i32_0 : i32, i32
  }
  func.func @transform_22(%arg0: i32, %arg1: i32) -> (i32, i32) {
    %c0_i32 = arith.constant 0 : i32
    %c0_i32_0 = arith.constant 0 : i32
    %c0_i32_1 = arith.constant 0 : i32
    return %c0_i32, %c0_i32_0 : i32, i32
  }
  func.func @transform_23(%arg0: i32, %arg1: i32) -> (i32, i32) {
    %c0_i32 = arith.constant 0 : i32
    %c0_i32_0 = arith.constant 0 : i32
    %c0_i32_1 = arith.constant 0 : i32
    return %c0_i32, %c0_i32_0 : i32, i32
  }
  func.func @transform_24(%arg0: i32, %arg1: i32) -> (i32, i32, i32) {
    %c0_i32 = arith.constant 0 : i32
    %c0_i32_0 = arith.constant 0 : i32
    %c0_i32_1 = arith.constant 0 : i32
    return %arg0, %c0_i32, %c0_i32_0 : i32, i32, i32
  }
}

</mosaic_0001>

<llo_original>
// kernel: transformer_forward.2
$region0: #{transformer_forward.2}
  #allocation0 [shape = 'u32[]', space=smem, size = 0x4, offset = 0x4, fixed_abs, tag = 'smem constant byte address 0x4 - core index']
  #allocation1 [shape = 'u32[144,128]{1,0:T(1,128)}', space=vmem, size = 0x12000, scoped, tag = 'internal scratch']
  #allocation2 [shape = 'f32[10,32]{1,0:T(8,128)}', space=vmem, size = 0x2000, scoped, tag = 'scratch operand']
  %s0 = inlined_call_operand.vmem [shape: s32[2,1,10], index: 0, kind: input, shape index: {}]
  %s1 = inlined_call_operand.vmem [shape: f32[2,10,32], index: 1, kind: input, shape index: {}]
  %s2 = inlined_call_operand.vmem [shape: f32[2,32,96], index: 2, kind: input, shape index: {}]
  %s3 = inlined_call_operand.vmem [shape: f32[2,1,96], index: 3, kind: input, shape index: {}]
  %s4 = inlined_call_operand.vmem [shape: f32[2,32,32], index: 4, kind: input, shape index: {}]
  %s5 = inlined_call_operand.vmem [shape: f32[2,1,32], index: 5, kind: input, shape index: {}]
  %s6 = inlined_call_operand.vmem [shape: f32[2,1,32], index: 6, kind: input, shape index: {}]
  %s7 = inlined_call_operand.vmem [shape: f32[2,1,32], index: 7, kind: input, shape index: {}]
  %s8 = inlined_call_operand.vmem [shape: f32[2,32,128], index: 8, kind: input, shape index: {}]
  %s9 = inlined_call_operand.vmem [shape: f32[2,1,128], index: 9, kind: input, shape index: {}]
  %s10 = inlined_call_operand.vmem [shape: f32[2,128,32], index: 10, kind: input, shape index: {}]
  %s11 = inlined_call_operand.vmem [shape: f32[2,1,32], index: 11, kind: input, shape index: {}]
  %s12 = inlined_call_operand.vmem [shape: f32[2,1,32], index: 12, kind: input, shape index: {}]
  %s13 = inlined_call_operand.vmem [shape: f32[2,1,32], index: 13, kind: input, shape index: {}]
  %s14 = inlined_call_operand.vmem [shape: f32[1,32], index: 14, kind: input, shape index: {}]
  %s15 = inlined_call_operand.vmem [shape: f32[1,32], index: 15, kind: input, shape index: {}]
  %s16 = inlined_call_operand.vmem [shape: f32[2,10,32], index: 16, kind: output, shape index: {}]
  %s17 = sld [smem:[#allocation0]]
  $region105: #{transformer_forward.2} parent=0
    _
  %s19 = ssub.s32 1, %s17
  %s20 = scalar_select 0, %s19, %s17
  loop: start=0, step=1, limit=6
  $region2: #{transformer_forward.2} parent=0 // loop_pre_header
    _
  $region3: #{transformer_forward.2} parent=0 // loop_header
    %s22 = sphi 0, %s26
    %p23 = scmp.ge.s32.totalorder %s22, 6
    %s29 = sphi 0, %s41
    %s30 = sphi 0, %s37
    %s31 = sphi 0, %s29
    %s32 = sphi 0, %s30
    %s33 = sphi 0, %s31
    %s34 = sphi 0, %s32
    %s44 = sphi 0, %s46
    %s47 = sphi 0, %s44
    %s48 = sphi 0, %s47
    %s64 = sphi 0, %s48
    %s70 = sphi 0, %s72
    %s73 = sphi 0, %s70
    %s74 = sphi 0, %s73
    %s90 = sphi 0, %s74
    %s96 = sphi 0, %s98
    %s99 = sphi 0, %s96
    %s100 = sphi 0, %s99
    %s116 = sphi 0, %s100
    %s122 = sphi 0, %s124
    %s125 = sphi 0, %s122
    %s126 = sphi 0, %s125
    %s142 = sphi 0, %s126
    %s148 = sphi 0, %s150
    %s151 = sphi 0, %s148
    %s152 = sphi 0, %s151
    %s168 = sphi 0, %s152
    %s174 = sphi 0, %s176
    %s177 = sphi 0, %s174
    %s178 = sphi 0, %s177
    %s194 = sphi 0, %s178
    %s200 = sphi 0, %s202
    %s203 = sphi 0, %s200
    %s204 = sphi 0, %s203
    %s220 = sphi 0, %s204
    %s226 = sphi 0, %s228
    %s229 = sphi 0, %s226
    %s230 = sphi 0, %s229
    %s246 = sphi 0, %s230
    %s252 = sphi 0, %s254
    %s255 = sphi 0, %s252
    %s256 = sphi 0, %s255
    %s272 = sphi 0, %s256
    %s278 = sphi 0, %s280
    %s281 = sphi 0, %s278
    %s282 = sphi 0, %s281
    %s298 = sphi 0, %s282
    %s304 = sphi 0, %s306
    %s307 = sphi 0, %s304
    %s308 = sphi 0, %s307
    %s324 = sphi 0, %s308
    %s330 = sphi 0, %s332
    %s333 = sphi 0, %s330
    %s334 = sphi 0, %s333
    %s350 = sphi 0, %s334
    %s356 = sphi 0, %s358
    %s359 = sphi 0, %s356
    %s360 = sphi 0, %s359
    %s376 = sphi 0, %s360
    %s382 = sphi 0, %s384
    %s385 = sphi 0, %s382
    %s386 = sphi 0, %s385
    %s402 = sphi 0, %s386
    %s406 = sphi 0, %s406
    %s408 = sphi 0, %s406
    %s409 = sphi 0, %s408
    %s423 = sphi 0, %s409
    %s427 = sphi 0, %s427
    %s429 = sphi 0, %s427
    %s430 = sphi 0, %s429
    %s444 = sphi 0, %s430
    %s450 = sphi 0, %s452
    %s453 = sphi 0, %s450
    %s454 = sphi 0, %s453
    %s470 = sphi 0, %s454
  $region4: #{transformer_forward.2} parent=0 // loop_header_branch
    %25 = sbr.rel (%p23) target = $region8
  $region5: #{transformer_forward.2} parent=0 // loop_body
    %s27 = ssub.s32 %s22, 1
    %s28 = ssub.s32 %s22, 2
    %s35 = sadd.s32 1, %s30
    %p36 = scmp.ge.s32.totalorder %s35, 2
    %s37 = scalar_select %p36, 0, %s35
    %s38 = sadd.s32 1, %s29
    %s39 = scalar_select %p36, %s38, %s29
    %p40 = scmp.ge.s32.totalorder %s39, 2
    %s41 = scalar_select %p40, 0, %s39
    %s42 = ssub.s32 %s29, %s41
    %p43 = scmp.eq.s32.totalorder %s42, 0
    %s45 = sadd.s32 %s44, 1
    %s46 = scalar_select %p43, %s44, %s45
    %p49 = pneg %p43
    %p50 = scmp.eq.s32.totalorder %s22, 3
    %p51 = por %p49, %p50
    %p52 = scmp.ne.s32.totalorder %s44, %s47
    %p53 = scmp.eq.s32.totalorder %s22, 0
    %p54 = por %p52, %p53
    %p55 = scmp.ne.s32.totalorder %s44, %s47
    %p56 = scmp.eq.s32.totalorder %s27, 3
    %p57 = por %p55, %p56
    %p58 = scmp.ne.s32.totalorder %s47, %s48
    %p59 = scmp.eq.s32.totalorder %s27, 0
    %p60 = por %p58, %p59
    %p61 = scmp.ne.s32.totalorder %s47, %s48
    %p62 = scmp.eq.s32.totalorder %s28, 3
    %p63 = por %p61, %p62
    %p65 = scmp.ne.s32.totalorder %s48, %s64
    %p66 = scmp.eq.s32.totalorder %s28, 0
    %p67 = por %p65, %p66
    %s68 = ssub.s32 %s29, %s41
    %p69 = scmp.eq.s32.totalorder %s68, 0
    %s71 = sadd.s32 %s70, 1
    %s72 = scalar_select %p69, %s70, %s71
    %p75 = pneg %p69
    %p76 = scmp.eq.s32.totalorder %s22, 3
    %p77 = por %p75, %p76
    %p78 = scmp.ne.s32.totalorder %s70, %s73
    %p79 = scmp.eq.s32.totalorder %s22, 0
    %p80 = por %p78, %p79
    %p81 = scmp.ne.s32.totalorder %s70, %s73
    %p82 = scmp.eq.s32.totalorder %s27, 3
    %p83 = por %p81, %p82
    %p84 = scmp.ne.s32.totalorder %s73, %s74
    %p85 = scmp.eq.s32.totalorder %s27, 0
    %p86 = por %p84, %p85
    %p87 = scmp.ne.s32.totalorder %s73, %s74
    %p88 = scmp.eq.s32.totalorder %s28, 3
    %p89 = por %p87, %p88
    %p91 = scmp.ne.s32.totalorder %s74, %s90
    %p92 = scmp.eq.s32.totalorder %s28, 0
    %p93 = por %p91, %p92
    %s94 = ssub.s32 %s30, %s37
    %p95 = scmp.eq.s32.totalorder %s94, 0
    %s97 = sadd.s32 %s96, 1
    %s98 = scalar_select %p95, %s96, %s97
    %p101 = pneg %p95
    %p102 = scmp.eq.s32.totalorder %s22, 3
    %p103 = por %p101, %p102
    %p104 = scmp.ne.s32.totalorder %s96, %s99
    %p105 = scmp.eq.s32.totalorder %s22, 0
    %p106 = por %p104, %p105
    %p107 = scmp.ne.s32.totalorder %s96, %s99
    %p108 = scmp.eq.s32.totalorder %s27, 3
    %p109 = por %p107, %p108
    %p110 = scmp.ne.s32.totalorder %s99, %s100
    %p111 = scmp.eq.s32.totalorder %s27, 0
    %p112 = por %p110, %p111
    %p113 = scmp.ne.s32.totalorder %s99, %s100
    %p114 = scmp.eq.s32.totalorder %s28, 3
    %p115 = por %p113, %p114
    %p117 = scmp.ne.s32.totalorder %s100, %s116
    %p118 = scmp.eq.s32.totalorder %s28, 0
    %p119 = por %p117, %p118
    %s120 = ssub.s32 %s30, %s37
    %p121 = scmp.eq.s32.totalorder %s120, 0
    %s123 = sadd.s32 %s122, 1
    %s124 = scalar_select %p121, %s122, %s123
    %p127 = pneg %p121
    %p128 = scmp.eq.s32.totalorder %s22, 3
    %p129 = por %p127, %p128
    %p130 = scmp.ne.s32.totalorder %s122, %s125
    %p131 = scmp.eq.s32.totalorder %s22, 0
    %p132 = por %p130, %p131
    %p133 = scmp.ne.s32.totalorder %s122, %s125
    %p134 = scmp.eq.s32.totalorder %s27, 3
    %p135 = por %p133, %p134
    %p136 = scmp.ne.s32.totalorder %s125, %s126
    %p137 = scmp.eq.s32.totalorder %s27, 0
    %p138 = por %p136, %p137
    %p139 = scmp.ne.s32.totalorder %s125, %s126
    %p140 = scmp.eq.s32.totalorder %s28, 3
    %p141 = por %p139, %p140
    %p143 = scmp.ne.s32.totalorder %s126, %s142
    %p144 = scmp.eq.s32.totalorder %s28, 0
    %p145 = por %p143, %p144
    %s146 = ssub.s32 %s30, %s37
    %p147 = scmp.eq.s32.totalorder %s146, 0
    %s149 = sadd.s32 %s148, 1
    %s150 = scalar_select %p147, %s148, %s149
    %p153 = pneg %p147
    %p154 = scmp.eq.s32.totalorder %s22, 3
    %p155 = por %p153, %p154
    %p156 = scmp.ne.s32.totalorder %s148, %s151
    %p157 = scmp.eq.s32.totalorder %s22, 0
    %p158 = por %p156, %p157
    %p159 = scmp.ne.s32.totalorder %s148, %s151
    %p160 = scmp.eq.s32.totalorder %s27, 3
    %p161 = por %p159, %p160
    %p162 = scmp.ne.s32.totalorder %s151, %s152
    %p163 = scmp.eq.s32.totalorder %s27, 0
    %p164 = por %p162, %p163
    %p165 = scmp.ne.s32.totalorder %s151, %s152
    %p166 = scmp.eq.s32.totalorder %s28, 3
    %p167 = por %p165, %p166
    %p169 = scmp.ne.s32.totalorder %s152, %s168
    %p170 = scmp.eq.s32.totalorder %s28, 0
    %p171 = por %p169, %p170
    %s172 = ssub.s32 %s30, %s37
    %p173 = scmp.eq.s32.totalorder %s172, 0
    %s175 = sadd.s32 %s174, 1
    %s176 = scalar_select %p173, %s174, %s175
    %p179 = pneg %p173
    %p180 = scmp.eq.s32.totalorder %s22, 3
    %p181 = por %p179, %p180
    %p182 = scmp.ne.s32.totalorder %s174, %s177
    %p183 = scmp.eq.s32.totalorder %s22, 0
    %p184 = por %p182, %p183
    %p185 = scmp.ne.s32.totalorder %s174, %s177
    %p186 = scmp.eq.s32.totalorder %s27, 3
    %p187 = por %p185, %p186
    %p188 = scmp.ne.s32.totalorder %s177, %s178
    %p189 = scmp.eq.s32.totalorder %s27, 0
    %p190 = por %p188, %p189
    %p191 = scmp.ne.s32.totalorder %s177, %s178
    %p192 = scmp.eq.s32.totalorder %s28, 3
    %p193 = por %p191, %p192
    %p195 = scmp.ne.s32.totalorder %s178, %s194
    %p196 = scmp.eq.s32.totalorder %s28, 0
    %p197 = por %p195, %p196
    %s198 = ssub.s32 %s30, %s37
    %p199 = scmp.eq.s32.totalorder %s198, 0
    %s201 = sadd.s32 %s200, 1
    %s202 = scalar_select %p199, %s200, %s201
    %p205 = pneg %p199
    %p206 = scmp.eq.s32.totalorder %s22, 3
    %p207 = por %p205, %p206
    %p208 = scmp.ne.s32.totalorder %s200, %s203
    %p209 = scmp.eq.s32.totalorder %s22, 0
    %p210 = por %p208, %p209
    %p211 = scmp.ne.s32.totalorder %s200, %s203
    %p212 = scmp.eq.s32.totalorder %s27, 3
    %p213 = por %p211, %p212
    %p214 = scmp.ne.s32.totalorder %s203, %s204
    %p215 = scmp.eq.s32.totalorder %s27, 0
    %p216 = por %p214, %p215
    %p217 = scmp.ne.s32.totalorder %s203, %s204
    %p218 = scmp.eq.s32.totalorder %s28, 3
    %p219 = por %p217, %p218
    %p221 = scmp.ne.s32.totalorder %s204, %s220
    %p222 = scmp.eq.s32.totalorder %s28, 0
    %p223 = por %p221, %p222
    %s224 = ssub.s32 %s30, %s37
    %p225 = scmp.eq.s32.totalorder %s224, 0
    %s227 = sadd.s32 %s226, 1
    %s228 = scalar_select %p225, %s226, %s227
    %p231 = pneg %p225
    %p232 = scmp.eq.s32.totalorder %s22, 3
    %p233 = por %p231, %p232
    %p234 = scmp.ne.s32.totalorder %s226, %s229
    %p235 = scmp.eq.s32.totalorder %s22, 0
    %p236 = por %p234, %p235
    %p237 = scmp.ne.s32.totalorder %s226, %s229
    %p238 = scmp.eq.s32.totalorder %s27, 3
    %p239 = por %p237, %p238
    %p240 = scmp.ne.s32.totalorder %s229, %s230
    %p241 = scmp.eq.s32.totalorder %s27, 0
    %p242 = por %p240, %p241
    %p243 = scmp.ne.s32.totalorder %s229, %s230
    %p244 = scmp.eq.s32.totalorder %s28, 3
    %p245 = por %p243, %p244
    %p247 = scmp.ne.s32.totalorder %s230, %s246
    %p248 = scmp.eq.s32.totalorder %s28, 0
    %p249 = por %p247, %p248
    %s250 = ssub.s32 %s30, %s37
    %p251 = scmp.eq.s32.totalorder %s250, 0
    %s253 = sadd.s32 %s252, 1
    %s254 = scalar_select %p251, %s252, %s253
    %p257 = pneg %p251
    %p258 = scmp.eq.s32.totalorder %s22, 3
    %p259 = por %p257, %p258
    %p260 = scmp.ne.s32.totalorder %s252, %s255
    %p261 = scmp.eq.s32.totalorder %s22, 0
    %p262 = por %p260, %p261
    %p263 = scmp.ne.s32.totalorder %s252, %s255
    %p264 = scmp.eq.s32.totalorder %s27, 3
    %p265 = por %p263, %p264
    %p266 = scmp.ne.s32.totalorder %s255, %s256
    %p267 = scmp.eq.s32.totalorder %s27, 0
    %p268 = por %p266, %p267
    %p269 = scmp.ne.s32.totalorder %s255, %s256
    %p270 = scmp.eq.s32.totalorder %s28, 3
    %p271 = por %p269, %p270
    %p273 = scmp.ne.s32.totalorder %s256, %s272
    %p274 = scmp.eq.s32.totalorder %s28, 0
    %p275 = por %p273, %p274
    %s276 = ssub.s32 %s30, %s37
    %p277 = scmp.eq.s32.totalorder %s276, 0
    %s279 = sadd.s32 %s278, 1
    %s280 = scalar_select %p277, %s278, %s279
    %p283 = pneg %p277
    %p284 = scmp.eq.s32.totalorder %s22, 3
    %p285 = por %p283, %p284
    %p286 = scmp.ne.s32.totalorder %s278, %s281
    %p287 = scmp.eq.s32.totalorder %s22, 0
    %p288 = por %p286, %p287
    %p289 = scmp.ne.s32.totalorder %s278, %s281
    %p290 = scmp.eq.s32.totalorder %s27, 3
    %p291 = por %p289, %p290
    %p292 = scmp.ne.s32.totalorder %s281, %s282
    %p293 = scmp.eq.s32.totalorder %s27, 0
    %p294 = por %p292, %p293
    %p295 = scmp.ne.s32.totalorder %s281, %s282
    %p296 = scmp.eq.s32.totalorder %s28, 3
    %p297 = por %p295, %p296
    %p299 = scmp.ne.s32.totalorder %s282, %s298
    %p300 = scmp.eq.s32.totalorder %s28, 0
    %p301 = por %p299, %p300
    %s302 = ssub.s32 %s30, %s37
    %p303 = scmp.eq.s32.totalorder %s302, 0
    %s305 = sadd.s32 %s304, 1
    %s306 = scalar_select %p303, %s304, %s305
    %p309 = pneg %p303
    %p310 = scmp.eq.s32.totalorder %s22, 3
    %p311 = por %p309, %p310
    %p312 = scmp.ne.s32.totalorder %s304, %s307
    %p313 = scmp.eq.s32.totalorder %s22, 0
    %p314 = por %p312, %p313
    %p315 = scmp.ne.s32.totalorder %s304, %s307
    %p316 = scmp.eq.s32.totalorder %s27, 3
    %p317 = por %p315, %p316
    %p318 = scmp.ne.s32.totalorder %s307, %s308
    %p319 = scmp.eq.s32.totalorder %s27, 0
    %p320 = por %p318, %p319
    %p321 = scmp.ne.s32.totalorder %s307, %s308
    %p322 = scmp.eq.s32.totalorder %s28, 3
    %p323 = por %p321, %p322
    %p325 = scmp.ne.s32.totalorder %s308, %s324
    %p326 = scmp.eq.s32.totalorder %s28, 0
    %p327 = por %p325, %p326
    %s328 = ssub.s32 %s30, %s37
    %p329 = scmp.eq.s32.totalorder %s328, 0
    %s331 = sadd.s32 %s330, 1
    %s332 = scalar_select %p329, %s330, %s331
    %p335 = pneg %p329
    %p336 = scmp.eq.s32.totalorder %s22, 3
    %p337 = por %p335, %p336
    %p338 = scmp.ne.s32.totalorder %s330, %s333
    %p339 = scmp.eq.s32.totalorder %s22, 0
    %p340 = por %p338, %p339
    %p341 = scmp.ne.s32.totalorder %s330, %s333
    %p342 = scmp.eq.s32.totalorder %s27, 3
    %p343 = por %p341, %p342
    %p344 = scmp.ne.s32.totalorder %s333, %s334
    %p345 = scmp.eq.s32.totalorder %s27, 0
    %p346 = por %p344, %p345
    %p347 = scmp.ne.s32.totalorder %s333, %s334
    %p348 = scmp.eq.s32.totalorder %s28, 3
    %p349 = por %p347, %p348
    %p351 = scmp.ne.s32.totalorder %s334, %s350
    %p352 = scmp.eq.s32.totalorder %s28, 0
    %p353 = por %p351, %p352
    %s354 = ssub.s32 %s30, %s37
    %p355 = scmp.eq.s32.totalorder %s354, 0
    %s357 = sadd.s32 %s356, 1
    %s358 = scalar_select %p355, %s356, %s357
    %p361 = pneg %p355
    %p362 = scmp.eq.s32.totalorder %s22, 3
    %p363 = por %p361, %p362
    %p364 = scmp.ne.s32.totalorder %s356, %s359
    %p365 = scmp.eq.s32.totalorder %s22, 0
    %p366 = por %p364, %p365
    %p367 = scmp.ne.s32.totalorder %s356, %s359
    %p368 = scmp.eq.s32.totalorder %s27, 3
    %p369 = por %p367, %p368
    %p370 = scmp.ne.s32.totalorder %s359, %s360
    %p371 = scmp.eq.s32.totalorder %s27, 0
    %p372 = por %p370, %p371
    %p373 = scmp.ne.s32.totalorder %s359, %s360
    %p374 = scmp.eq.s32.totalorder %s28, 3
    %p375 = por %p373, %p374
    %p377 = scmp.ne.s32.totalorder %s360, %s376
    %p378 = scmp.eq.s32.totalorder %s28, 0
    %p379 = por %p377, %p378
    %s380 = ssub.s32 %s30, %s37
    %p381 = scmp.eq.s32.totalorder %s380, 0
    %s383 = sadd.s32 %s382, 1
    %s384 = scalar_select %p381, %s382, %s383
    %p387 = pneg %p381
    %p388 = scmp.eq.s32.totalorder %s22, 3
    %p389 = por %p387, %p388
    %p390 = scmp.ne.s32.totalorder %s382, %s385
    %p391 = scmp.eq.s32.totalorder %s22, 0
    %p392 = por %p390, %p391
    %p393 = scmp.ne.s32.totalorder %s382, %s385
    %p394 = scmp.eq.s32.totalorder %s27, 3
    %p395 = por %p393, %p394
    %p396 = scmp.ne.s32.totalorder %s385, %s386
    %p397 = scmp.eq.s32.totalorder %s27, 0
    %p398 = por %p396, %p397
    %p399 = scmp.ne.s32.totalorder %s385, %s386
    %p400 = scmp.eq.s32.totalorder %s28, 3
    %p401 = por %p399, %p400
    %p403 = scmp.ne.s32.totalorder %s386, %s402
    %p404 = scmp.eq.s32.totalorder %s28, 0
    %p405 = por %p403, %p404
    %s407 = sadd.s32 %s406, 1
    %p410 = scmp.eq.s32.totalorder %s22, 3
    %p411 = scmp.ne.s32.totalorder %s406, %s408
    %p412 = scmp.eq.s32.totalorder %s22, 0
    %p413 = por %p411, %p412
    %p414 = scmp.ne.s32.totalorder %s406, %s408
    %p415 = scmp.eq.s32.totalorder %s27, 3
    %p416 = por %p414, %p415
    %p417 = scmp.ne.s32.totalorder %s408, %s409
    %p418 = scmp.eq.s32.totalorder %s27, 0
    %p419 = por %p417, %p418
    %p420 = scmp.ne.s32.totalorder %s408, %s409
    %p421 = scmp.eq.s32.totalorder %s28, 3
    %p422 = por %p420, %p421
    %p424 = scmp.ne.s32.totalorder %s409, %s423
    %p425 = scmp.eq.s32.totalorder %s28, 0
    %p426 = por %p424, %p425
    %s428 = sadd.s32 %s427, 1
    %p431 = scmp.eq.s32.totalorder %s22, 3
    %p432 = scmp.ne.s32.totalorder %s427, %s429
    %p433 = scmp.eq.s32.totalorder %s22, 0
    %p434 = por %p432, %p433
    %p435 = scmp.ne.s32.totalorder %s427, %s429
    %p436 = scmp.eq.s32.totalorder %s27, 3
    %p437 = por %p435, %p436
    %p438 = scmp.ne.s32.totalorder %s429, %s430
    %p439 = scmp.eq.s32.totalorder %s27, 0
    %p440 = por %p438, %p439
    %p441 = scmp.ne.s32.totalorder %s429, %s430
    %p442 = scmp.eq.s32.totalorder %s28, 3
    %p443 = por %p441, %p442
    %p445 = scmp.ne.s32.totalorder %s430, %s444
    %p446 = scmp.eq.s32.totalorder %s28, 0
    %p447 = por %p445, %p446
    %s448 = ssub.s32 %s29, %s41
    %p449 = scmp.eq.s32.totalorder %s448, 0
    %s451 = sadd.s32 %s450, 1
    %s452 = scalar_select %p449, %s450, %s451
    %p455 = pneg %p449
    %p456 = scmp.eq.s32.totalorder %s22, 3
    %p457 = por %p455, %p456
    %p458 = scmp.ne.s32.totalorder %s450, %s453
    %p459 = scmp.eq.s32.totalorder %s22, 0
    %p460 = por %p458, %p459
    %p461 = scmp.ne.s32.totalorder %s450, %s453
    %p462 = scmp.eq.s32.totalorder %s27, 3
    %p463 = por %p461, %p462
    %p464 = scmp.ne.s32.totalorder %s453, %s454
    %p465 = scmp.eq.s32.totalorder %s27, 0
    %p466 = por %p464, %p465
    %p467 = scmp.ne.s32.totalorder %s453, %s454
    %p468 = scmp.eq.s32.totalorder %s28, 3
    %p469 = por %p467, %p468
    %p471 = scmp.ne.s32.totalorder %s454, %s470
    %p472 = scmp.eq.s32.totalorder %s28, 0
    %p473 = por %p471, %p472
    %p474 = scmp.le.s32.totalorder 1, %s22
    %p475 = scmp.lt.s32.totalorder %s22, 5
    %p476 = pnand %p474, %p475
    %p477 = pneg %p476
    // Predicated region
    $region9: #{transformer_forward.2} parent=5 // pred_check
      _
    $region10: #{transformer_forward.2} parent=5 // pred_check_branch
      %479 = sbr.rel (%p476) target = $region12
    $region11: #{transformer_forward.2} parent=5 // pred_region
      %s480 = ssub.s32 %s22, 1
      // Predicated region
      $region13: #{transformer_forward.2} parent=11 // pred_check
        %p481 = pneg %p419
      $region14: #{transformer_forward.2} parent=11 // pred_check_branch
        %483 = sbr.rel (%p481) target = $region16
      $region15: #{transformer_forward.2} parent=11 // pred_region
        _
      $region16: #{transformer_forward.2} parent=11 // pred_fallthru
        _
      // Predicated region
      $region17: #{transformer_forward.2} parent=11 // pred_check
        %p484 = pneg %p440
      $region18: #{transformer_forward.2} parent=11 // pred_check_branch
        %486 = sbr.rel (%p484) target = $region20
      $region19: #{transformer_forward.2} parent=11 // pred_region
        _
      $region20: #{transformer_forward.2} parent=11 // pred_fallthru
        _
    $region12: #{transformer_forward.2} parent=5 // pred_fallthru
      _
    %p487 = scmp.lt.s32.totalorder %s22, 4
    // Predicated region
    $region21: #{transformer_forward.2} parent=5 // pred_check
      %p488 = pneg %p487
    $region22: #{transformer_forward.2} parent=5 // pred_check_branch
      %490 = sbr.rel (%p488) target = $region24
    $region23: #{transformer_forward.2} parent=5 // pred_region
      // Predicated region
      $region25: #{transformer_forward.2} parent=23 // pred_check
        %p491 = pneg %p54
      $region26: #{transformer_forward.2} parent=23 // pred_check_branch
        %493 = sbr.rel (%p491) target = $region28
      $region27: #{transformer_forward.2} parent=23 // pred_region
        %p494 = scmp.lt.s32.totalorder %s29, 1
        %s495 = scalar_select %p494, %s29, 1
        %s496 = scalar_lea.vmem %s0, %s495
      $region28: #{transformer_forward.2} parent=23 // pred_fallthru
        _
      // Predicated region
      $region29: #{transformer_forward.2} parent=23 // pred_check
        %p497 = pneg %p80
      $region30: #{transformer_forward.2} parent=23 // pred_check_branch
        %499 = sbr.rel (%p497) target = $region32
      $region31: #{transformer_forward.2} parent=23 // pred_region
        %p500 = scmp.lt.s32.totalorder %s29, 1
        %s501 = scalar_select %p500, %s29, 1
        %s502 = smul.addr %s501, 2
        %s503 = smul.addr %s502, 8
        %s504 = scalar_lea.vmem %s1, %s503
      $region32: #{transformer_forward.2} parent=23 // pred_fallthru
        _
      // Predicated region
      $region33: #{transformer_forward.2} parent=23 // pred_check
        %p505 = pneg %p106
      $region34: #{transformer_forward.2} parent=23 // pred_check_branch
        %507 = sbr.rel (%p505) target = $region36
      $region35: #{transformer_forward.2} parent=23 // pred_region
        %p508 = scmp.lt.s32.totalorder %s30, 1
        %s509 = scalar_select %p508, %s30, 1
        %s510 = smul.addr %s509, 4
        %s511 = smul.addr %s510, 8
        %s512 = scalar_lea.vmem %s2, %s511
      $region36: #{transformer_forward.2} parent=23 // pred_fallthru
        _
      // Predicated region
      $region37: #{transformer_forward.2} parent=23 // pred_check
        %p513 = pneg %p132
      $region38: #{transformer_forward.2} parent=23 // pred_check_branch
        %515 = sbr.rel (%p513) target = $region40
      $region39: #{transformer_forward.2} parent=23 // pred_region
        %p516 = scmp.lt.s32.totalorder %s30, 1
        %s517 = scalar_select %p516, %s30, 1
        %s518 = scalar_lea.vmem %s3, %s517
      $region40: #{transformer_forward.2} parent=23 // pred_fallthru
        _
      // Predicated region
      $region41: #{transformer_forward.2} parent=23 // pred_check
        %p519 = pneg %p158
      $region42: #{transformer_forward.2} parent=23 // pred_check_branch
        %521 = sbr.rel (%p519) target = $region44
      $region43: #{transformer_forward.2} parent=23 // pred_region
        %p522 = scmp.lt.s32.totalorder %s30, 1
        %s523 = scalar_select %p522, %s30, 1
        %s524 = smul.addr %s523, 4
        %s525 = smul.addr %s524, 8
        %s526 = scalar_lea.vmem %s4, %s525
      $region44: #{transformer_forward.2} parent=23 // pred_fallthru
        _
      // Predicated region
      $region45: #{transformer_forward.2} parent=23 // pred_check
        %p527 = pneg %p184
      $region46: #{transformer_forward.2} parent=23 // pred_check_branch
        %529 = sbr.rel (%p527) target = $region48
      $region47: #{transformer_forward.2} parent=23 // pred_region
        %p530 = scmp.lt.s32.totalorder %s30, 1
        %s531 = scalar_select %p530, %s30, 1
        %s532 = scalar_lea.vmem %s5, %s531
      $region48: #{transformer_forward.2} parent=23 // pred_fallthru
        _
      // Predicated region
      $region49: #{transformer_forward.2} parent=23 // pred_check
        %p533 = pneg %p210
      $region50: #{transformer_forward.2} parent=23 // pred_check_branch
        %535 = sbr.rel (%p533) target = $region52
      $region51: #{transformer_forward.2} parent=23 // pred_region
        %p536 = scmp.lt.s32.totalorder %s30, 1
        %s537 = scalar_select %p536, %s30, 1
        %s538 = scalar_lea.vmem %s6, %s537
      $region52: #{transformer_forward.2} parent=23 // pred_fallthru
        _
      // Predicated region
      $region53: #{transformer_forward.2} parent=23 // pred_check
        %p539 = pneg %p236
      $region54: #{transformer_forward.2} parent=23 // pred_check_branch
        %541 = sbr.rel (%p539) target = $region56
      $region55: #{transformer_forward.2} parent=23 // pred_region
        %p542 = scmp.lt.s32.totalorder %s30, 1
        %s543 = scalar_select %p542, %s30, 1
        %s544 = scalar_lea.vmem %s7, %s543
      $region56: #{transformer_forward.2} parent=23 // pred_fallthru
        _
      // Predicated region
      $region57: #{transformer_forward.2} parent=23 // pred_check
        %p545 = pneg %p262
      $region58: #{transformer_forward.2} parent=23 // pred_check_branch
        %547 = sbr.rel (%p545) target = $region60
      $region59: #{transformer_forward.2} parent=23 // pred_region
        %p548 = scmp.lt.s32.totalorder %s30, 1
        %s549 = scalar_select %p548, %s30, 1
        %s550 = smul.addr %s549, 4
        %s551 = smul.addr %s550, 8
        %s552 = scalar_lea.vmem %s8, %s551
      $region60: #{transformer_forward.2} parent=23 // pred_fallthru
        _
      // Predicated region
      $region61: #{transformer_forward.2} parent=23 // pred_check
        %p553 = pneg %p288
      $region62: #{transformer_forward.2} parent=23 // pred_check_branch
        %555 = sbr.rel (%p553) target = $region64
      $region63: #{transformer_forward.2} parent=23 // pred_region
        %p556 = scmp.lt.s32.totalorder %s30, 1
        %s557 = scalar_select %p556, %s30, 1
        %s558 = scalar_lea.vmem %s9, %s557
      $region64: #{transformer_forward.2} parent=23 // pred_fallthru
        _
      // Predicated region
      $region65: #{transformer_forward.2} parent=23 // pred_check
        %p559 = pneg %p314
      $region66: #{transformer_forward.2} parent=23 // pred_check_branch
        %561 = sbr.rel (%p559) target = $region68
      $region67: #{transformer_forward.2} parent=23 // pred_region
        %p562 = scmp.lt.s32.totalorder %s30, 1
        %s563 = scalar_select %p562, %s30, 1
        %s564 = smul.addr %s563, 16
        %s565 = smul.addr %s564, 8
        %s566 = scalar_lea.vmem %s10, %s565
      $region68: #{transformer_forward.2} parent=23 // pred_fallthru
        _
      // Predicated region
      $region69: #{transformer_forward.2} parent=23 // pred_check
        %p567 = pneg %p340
      $region70: #{transformer_forward.2} parent=23 // pred_check_branch
        %569 = sbr.rel (%p567) target = $region72
      $region71: #{transformer_forward.2} parent=23 // pred_region
        %p570 = scmp.lt.s32.totalorder %s30, 1
        %s571 = scalar_select %p570, %s30, 1
        %s572 = scalar_lea.vmem %s11, %s571
      $region72: #{transformer_forward.2} parent=23 // pred_fallthru
        _
      // Predicated region
      $region73: #{transformer_forward.2} parent=23 // pred_check
        %p573 = pneg %p366
      $region74: #{transformer_forward.2} parent=23 // pred_check_branch
        %575 = sbr.rel (%p573) target = $region76
      $region75: #{transformer_forward.2} parent=23 // pred_region
        %p576 = scmp.lt.s32.totalorder %s30, 1
        %s577 = scalar_select %p576, %s30, 1
        %s578 = scalar_lea.vmem %s12, %s577
      $region76: #{transformer_forward.2} parent=23 // pred_fallthru
        _
      // Predicated region
      $region77: #{transformer_forward.2} parent=23 // pred_check
        %p579 = pneg %p392
      $region78: #{transformer_forward.2} parent=23 // pred_check_branch
        %581 = sbr.rel (%p579) target = $region80
      $region79: #{transformer_forward.2} parent=23 // pred_region
        %p582 = scmp.lt.s32.totalorder %s30, 1
        %s583 = scalar_select %p582, %s30, 1
        %s584 = scalar_lea.vmem %s13, %s583
      $region80: #{transformer_forward.2} parent=23 // pred_fallthru
        _
    $region24: #{transformer_forward.2} parent=5 // pred_fallthru
      _
    %p585 = scmp.le.s32.totalorder 1, %s22
    %p586 = scmp.lt.s32.totalorder %s22, 5
    %p587 = pnand %p585, %p586
    %p588 = pneg %p587
    // Predicated region
    $region81: #{transformer_forward.2} parent=5 // pred_check
      _
    $region82: #{transformer_forward.2} parent=5 // pred_check_branch
      %590 = sbr.rel (%p587) target = $region84
    $region83: #{transformer_forward.2} parent=5 // pred_region
      %s591 = ssub.s32 %s22, 1
      %p592 = scmp.lt.s32.totalorder %s31, 1
      %s593 = scalar_select %p592, %s31, 1
      %s594 = scalar_lea.vmem %s0, %s593
      %p595 = pneg %p60
      %p596 = pneg %p57
      %p597 = scmp.lt.s32.totalorder %s31, 1
      %s598 = scalar_select %p597, %s31, 1
      %s599 = smul.addr %s598, 2
      %s600 = smul.addr %s599, 8
      %s601 = scalar_lea.vmem %s1, %s600
      %p602 = pneg %p86
      %p603 = pneg %p83
      %p604 = scmp.lt.s32.totalorder %s32, 1
      %s605 = scalar_select %p604, %s32, 1
      %s606 = smul.addr %s605, 4
      %s607 = smul.addr %s606, 8
      %s608 = scalar_lea.vmem %s2, %s607
      %p609 = pneg %p112
      %p610 = pneg %p109
      %p611 = scmp.lt.s32.totalorder %s32, 1
      %s612 = scalar_select %p611, %s32, 1
      %s613 = scalar_lea.vmem %s3, %s612
      %p614 = pneg %p138
      %p615 = pneg %p135
      %p616 = scmp.lt.s32.totalorder %s32, 1
      %s617 = scalar_select %p616, %s32, 1
      %s618 = smul.addr %s617, 4
      %s619 = smul.addr %s618, 8
      %s620 = scalar_lea.vmem %s4, %s619
      %p621 = pneg %p164
      %p622 = pneg %p161
      %p623 = scmp.lt.s32.totalorder %s32, 1
      %s624 = scalar_select %p623, %s32, 1
      %s625 = scalar_lea.vmem %s5, %s624
      %p626 = pneg %p190
      %p627 = pneg %p187
      %p628 = scmp.lt.s32.totalorder %s32, 1
      %s629 = scalar_select %p628, %s32, 1
      %s630 = scalar_lea.vmem %s6, %s629
      %p631 = pneg %p216
      %p632 = pneg %p213
      %p633 = scmp.lt.s32.totalorder %s32, 1
      %s634 = scalar_select %p633, %s32, 1
      %s635 = scalar_lea.vmem %s7, %s634
      %p636 = pneg %p242
      %p637 = pneg %p239
      %p638 = scmp.lt.s32.totalorder %s32, 1
      %s639 = scalar_select %p638, %s32, 1
      %s640 = smul.addr %s639, 4
      %s641 = smul.addr %s640, 8
      %s642 = scalar_lea.vmem %s8, %s641
      %p643 = pneg %p268
      %p644 = pneg %p265
      %p645 = scmp.lt.s32.totalorder %s32, 1
      %s646 = scalar_select %p645, %s32, 1
      %s647 = scalar_lea.vmem %s9, %s646
      %p648 = pneg %p294
      %p649 = pneg %p291
      %p650 = scmp.lt.s32.totalorder %s32, 1
      %s651 = scalar_select %p650, %s32, 1
      %s652 = smul.addr %s651, 16
      %s653 = smul.addr %s652, 8
      %s654 = scalar_lea.vmem %s10, %s653
      %p655 = pneg %p320
      %p656 = pneg %p317
      %p657 = scmp.lt.s32.totalorder %s32, 1
      %s658 = scalar_select %p657, %s32, 1
      %s659 = scalar_lea.vmem %s11, %s658
      %p660 = pneg %p346
      %p661 = pneg %p343
      %p662 = scmp.lt.s32.totalorder %s32, 1
      %s663 = scalar_select %p662, %s32, 1
      %s664 = scalar_lea.vmem %s12, %s663
      %p665 = pneg %p372
      %p666 = pneg %p369
      %p667 = scmp.lt.s32.totalorder %s32, 1
      %s668 = scalar_select %p667, %s32, 1
      %s669 = scalar_lea.vmem %s13, %s668
      %p670 = pneg %p398
      %p671 = pneg %p395
      %p672 = pneg %p419
      %p673 = pneg %p416
      %p674 = pneg %p440
      %p675 = pneg %p437
      %p676 = pneg %p466
      %p677 = pneg %p463
      %p678 = scmp.lt.s32.totalorder %s31, 1
      %s679 = scalar_select %p678, %s31, 1
      %s680 = smul.addr %s679, 2
      %s681 = smul.addr %s680, 8
      %s682 = scalar_lea.vmem %s16, %s681
      %p683 = scmp.lt.s32.totalorder %s31, 1
      %s684 = scalar_select %p683, %s31, 1
      %s685 = scalar_lea.vmem %s0, %s684
      %p686 = scmp.lt.s32.totalorder %s31, 1
      %s687 = scalar_select %p686, %s31, 1
      %s688 = smul.addr %s687, 2
      %s689 = smul.addr %s688, 8
      %s690 = scalar_lea.vmem %s1, %s689
      %p691 = scmp.lt.s32.totalorder %s32, 1
      %s692 = scalar_select %p691, %s32, 1
      %s693 = smul.addr %s692, 4
      %s694 = smul.addr %s693, 8
      %s695 = scalar_lea.vmem %s2, %s694
      %p696 = scmp.lt.s32.totalorder %s32, 1
      %s697 = scalar_select %p696, %s32, 1
      %s698 = scalar_lea.vmem %s3, %s697
      %p699 = scmp.lt.s32.totalorder %s32, 1
      %s700 = scalar_select %p699, %s32, 1
      %s701 = smul.addr %s700, 4
      %s702 = smul.addr %s701, 8
      %s703 = scalar_lea.vmem %s4, %s702
      %p704 = scmp.lt.s32.totalorder %s32, 1
      %s705 = scalar_select %p704, %s32, 1
      %s706 = scalar_lea.vmem %s5, %s705
      %p707 = scmp.lt.s32.totalorder %s32, 1
      %s708 = scalar_select %p707, %s32, 1
      %s709 = scalar_lea.vmem %s6, %s708
      %p710 = scmp.lt.s32.totalorder %s32, 1
      %s711 = scalar_select %p710, %s32, 1
      %s712 = scalar_lea.vmem %s7, %s711
      %p713 = scmp.lt.s32.totalorder %s32, 1
      %s714 = scalar_select %p713, %s32, 1
      %s715 = smul.addr %s714, 4
      %s716 = smul.addr %s715, 8
      %s717 = scalar_lea.vmem %s8, %s716
      %p718 = scmp.lt.s32.totalorder %s32, 1
      %s719 = scalar_select %p718, %s32, 1
      %s720 = scalar_lea.vmem %s9, %s719
      %p721 = scmp.lt.s32.totalorder %s32, 1
      %s722 = scalar_select %p721, %s32, 1
      %s723 = smul.addr %s722, 16
      %s724 = smul.addr %s723, 8
      %s725 = scalar_lea.vmem %s10, %s724
      %p726 = scmp.lt.s32.totalorder %s32, 1
      %s727 = scalar_select %p726, %s32, 1
      %s728 = scalar_lea.vmem %s11, %s727
      %p729 = scmp.lt.s32.totalorder %s32, 1
      %s730 = scalar_select %p729, %s32, 1
      %s731 = scalar_lea.vmem %s12, %s730
      %p732 = scmp.lt.s32.totalorder %s32, 1
      %s733 = scalar_select %p732, %s32, 1
      %s734 = scalar_lea.vmem %s13, %s733
      %p735 = scmp.lt.s32.totalorder %s31, 1
      %s736 = scalar_select %p735, %s31, 1
      %s737 = smul.addr %s736, 2
      %s738 = smul.addr %s737, 8
      %s739 = scalar_lea.vmem %s16, %s738
      %p741 = scmp.eq.s32.totalorder %s32, 0
      // Predicated region
      $region85: #{transformer_forward.2} parent=83 // pred_check
        %p742 = pneg %p741
      $region86: #{transformer_forward.2} parent=83 // pred_check_branch
        %744 = sbr.rel (%p742) target = $region88
      $region87: #{transformer_forward.2} parent=83 // pred_region
        %v745 = vld [vmem:[%s690] sm:$0xff]
        %v746 = vld [vmem:[%s690 + $0x8] sm:$0x3]
        %vm747 = vcmask 261120
        %748 = vst.msk [vmem:[#allocation2] sm:$0xff] %vm747, %v745
        %vm749 = vcmask 254976
        %750 = vst.msk [vmem:[#allocation2 + $0x8] sm:$0x3] %vm749, %v746
      $region88: #{transformer_forward.2} parent=83 // pred_fallthru
        _
      %v751 = vld [vmem:[#allocation2] sm:$0xff]
      %v752 = vld [vmem:[#allocation2 + $0x8] sm:$0x3]
      %v753 = vld [vmem:[%s685] sm:$0x1]
      %vm754 = vcmp.eq.s32.totalorder %v753, 1
      %v755 = vsel %vm754, -1e+09, 0.0
      %v756 = vld [vmem:[%s695] sm:$0xff]
      %v757 = vld [vmem:[%s695 + $0x8] sm:$0xff]
      %v758 = vld [vmem:[%s695 + $0x10] sm:$0xff]
      %v759 = vld [vmem:[%s695 + $0x18] sm:$0xff]
      %v760 = vld [vmem:[%s698] sm:$0x1]
      %v761 = vld [vmem:[%s703] sm:$0xff]
      %v762 = vld [vmem:[%s703 + $0x8] sm:$0xff]
      %v763 = vld [vmem:[%s703 + $0x10] sm:$0xff]
      %v764 = vld [vmem:[%s703 + $0x18] sm:$0xff]
      %v765 = vld [vmem:[%s706] sm:$0x1]
      %v766 = vpack.c.bf16 %v752, %v751
      %v767 = vpack.c.bf16 %v757, %v756
      %v768 = vpack.c.bf16 %v759, %v758
      %v770 = vlaneseq
      %v771 = vshrl.u32 %v770, 7
      %v772 = vsub.s32 0, %v771
      %v773 = vrot.slane %v760, %v772
      %vm775 = vcmask 261120
      %v777 = vsel %vm775, %v766, 0
      %779 = vmatprep.subr.bf16.mxu0 0
      %780 = vmatpush1.bf16.msra.mxu0 %v767
      %781 = vmatprep.subr.bf16.mxu0 0
      %782 = vmatpush1.bf16.msra.mxu0 %v768
      %783 = vmatprep.subr.bf16.mxu0 0
      %784 = vmatpush1.bf16.msra.mxu0 0
      %785 = vmatprep.subr.bf16.mxu0 0
      %786 = vmatpush1.bf16.msra.mxu0 0
      %787 = vmatprep.subr.bf16.mxu0 0
      %788 = vmatpush1.bf16.msra.mxu0 0
      %789 = vmatprep.subr.bf16.mxu0 0
      %790 = vmatpush1.bf16.msra.mxu0 0
      %791 = vmatprep.subr.bf16.mxu0 0
      %792 = vmatpush1.bf16.msra.mxu0 0
      %793 = vmatprep.subr.bf16.mxu0 0
      %794 = vmatpush1.bf16.msra.mxu0 0
      %795 = vmatprep.subr.bf16.mxu0 0
      %796 = vmatpush1.bf16.msra.mxu0 0
      %797 = vmatprep.subr.bf16.mxu0 0
      %798 = vmatpush1.bf16.msra.mxu0 0
      %799 = vmatprep.subr.bf16.mxu0 0
      %800 = vmatpush1.bf16.msra.mxu0 0
      %801 = vmatprep.subr.bf16.mxu0 0
      %802 = vmatpush1.bf16.msra.mxu0 0
      %803 = vmatprep.subr.bf16.mxu0 0
      %804 = vmatpush1.bf16.msra.mxu0 0
      %805 = vmatprep.subr.bf16.mxu0 0
      %806 = vmatpush1.bf16.msra.mxu0 0
      %807 = vmatprep.subr.bf16.mxu0 0
      %808 = vmatpush1.bf16.msra.mxu0 0
      %809 = vmatprep.subr.bf16.mxu0 0
      %810 = vmatpush1.bf16.msra.mxu0 0
      %811 = vmatprep.mubr.bf16.mxu0 0
      %812 = vmatmul.mubr.bf16.gmra.mrb[0].mxu0 %v777
      %v813 = vpop.f32.mrb[0].mxu0
      %v814 = vadd.f32 %v773, %v813
      %v815 = vpop.f32.mrb[0].mxu0
      %v816 = vpop.f32.mrb[0].mxu0
      %v817 = vadd.f32 %v773, %v816
      %v818 = vpop.f32.mrb[0].mxu0
      %819 = vdwg.mxu0
      %822 = vrot.lane.b32.xlu0 %v814, 120
      %v823 = vpop.permute.xlu0 %822
      %824 = vrot.lane.b32.xlu0 %v817, 120
      %v825 = vpop.permute.xlu0 %824
      %828 = vrot.lane.b32.xlu0 %v814, 112
      %v829 = vpop.permute.xlu0 %828
      %830 = vrot.lane.b32.xlu0 %v817, 112
      %v831 = vpop.permute.xlu0 %830
      %834 = vrot.lane.b32.xlu0 %v814, 104
      %v835 = vpop.permute.xlu0 %834
      %836 = vrot.lane.b32.xlu0 %v817, 104
      %v837 = vpop.permute.xlu0 %836
      %v840 = vcombine.low %v814, %v829
      %v841 = vcombine.high %v814, %v829
      %v843 = vunpack.c.l.s4 1983009808
      %v844 = vunpack.c.0.s8 %v843
      %v845 = vlaneseq
      %v846 = vshrl.u32 %v845, 7
      %v847 = vsub.s32 %v844, %v846
      %v848 = vrot.slane %v840, %v847
      %v850 = vunpack.c.l.s4 1983009808
      %v851 = vunpack.c.0.s8 %v850
      %v852 = vlaneseq
      %v853 = vshrl.u32 %v852, 7
      %v854 = vsub.s32 %v851, %v853
      %v855 = vrot.slane %v841, %v854
      %v856 = vcombine.low %v823, %v835
      %v857 = vcombine.high %v823, %v835
      %v859 = vunpack.c.l.s4 1983009808
      %v860 = vunpack.c.0.s8 %v859
      %v861 = vlaneseq
      %v862 = vshrl.u32 %v861, 7
      %v863 = vsub.s32 %v860, %v862
      %v864 = vrot.slane %v856, %v863
      %v866 = vunpack.c.l.s4 1983009808
      %v867 = vunpack.c.0.s8 %v866
      %v868 = vlaneseq
      %v869 = vshrl.u32 %v868, 7
      %v870 = vsub.s32 %v867, %v869
      %v871 = vrot.slane %v857, %v870
      %v872 = vcombine.low %v848, %v864
      %v873 = vcombine.high %v848, %v864
      %v875 = vunpack.c.l.s4 1934713408
      %v876 = vunpack.c.0.s8 %v875
      %v877 = vlaneseq
      %v878 = vshrl.u32 %v877, 7
      %v879 = vsub.s32 %v876, %v878
      %v880 = vrot.slane %v872, %v879
      %v882 = vunpack.c.l.s4 1934713408
      %v883 = vunpack.c.0.s8 %v882
      %v884 = vlaneseq
      %v885 = vshrl.u32 %v884, 7
      %v886 = vsub.s32 %v883, %v885
      %v887 = vrot.slane %v873, %v886
      %v888 = vcombine.low %v855, %v871
      %v889 = vcombine.high %v855, %v871
      %v891 = vunpack.c.l.s4 1934713408
      %v892 = vunpack.c.0.s8 %v891
      %v893 = vlaneseq
      %v894 = vshrl.u32 %v893, 7
      %v895 = vsub.s32 %v892, %v894
      %v896 = vrot.slane %v888, %v895
      %v898 = vunpack.c.l.s4 1934713408
      %v899 = vunpack.c.0.s8 %v898
      %v900 = vlaneseq
      %v901 = vshrl.u32 %v900, 7
      %v902 = vsub.s32 %v899, %v901
      %v903 = vrot.slane %v889, %v902
      %v904 = vcombine.high %v880, 0.0
      %v905 = vcombine.high %v887, 0.0
      %v906 = vcombine.high %v896, 0.0
      %v907 = vcombine.high %v903, 0.0
      %v908 = vcombine.low %v817, %v831
      %v910 = vunpack.c.l.s4 1983009808
      %v911 = vunpack.c.0.s8 %v910
      %v912 = vlaneseq
      %v913 = vshrl.u32 %v912, 7
      %v914 = vsub.s32 %v911, %v913
      %v915 = vrot.slane %v908, %v914
      %v916 = vcombine.low %v825, %v837
      %v918 = vunpack.c.l.s4 1983009808
      %v919 = vunpack.c.0.s8 %v918
      %v920 = vlaneseq
      %v921 = vshrl.u32 %v920, 7
      %v922 = vsub.s32 %v919, %v921
      %v923 = vrot.slane %v916, %v922
      %v924 = vcombine.low %v915, %v923
      %v926 = vunpack.c.l.s4 1934713408
      %v927 = vunpack.c.0.s8 %v926
      %v928 = vlaneseq
      %v929 = vshrl.u32 %v928, 7
      %v930 = vsub.s32 %v927, %v929
      %v931 = vrot.slane %v924, %v930
      %v932 = vcombine.low %v880, %v887
      %v934 = vunpack.c.l.s4 1983009808
      %v935 = vunpack.c.0.s8 %v934
      %v936 = vlaneseq
      %v937 = vshrl.u32 %v936, 7
      %v938 = vsub.s32 %v935, %v937
      %v939 = vrot.slane %v932, %v938
      %v940 = vcombine.low %v904, %v905
      %v942 = vunpack.c.l.s4 1983009808
      %v943 = vunpack.c.0.s8 %v942
      %v944 = vlaneseq
      %v945 = vshrl.u32 %v944, 7
      %v946 = vsub.s32 %v943, %v945
      %v947 = vrot.slane %v940, %v946
      %v948 = vcombine.low %v896, %v903
      %v950 = vunpack.c.l.s4 1983009808
      %v951 = vunpack.c.0.s8 %v950
      %v952 = vlaneseq
      %v953 = vshrl.u32 %v952, 7
      %v954 = vsub.s32 %v951, %v953
      %v955 = vrot.slane %v948, %v954
      %v956 = vcombine.low %v906, %v907
      %v958 = vunpack.c.l.s4 1983009808
      %v959 = vunpack.c.0.s8 %v958
      %v960 = vlaneseq
      %v961 = vshrl.u32 %v960, 7
      %v962 = vsub.s32 %v959, %v961
      %v963 = vrot.slane %v956, %v962
      %v964 = vcombine.low %v939, %v947
      %v965 = vcombine.high %v939, %v947
      %v967 = vunpack.c.l.s4 1934713408
      %v968 = vunpack.c.0.s8 %v967
      %v969 = vlaneseq
      %v970 = vshrl.u32 %v969, 7
      %v971 = vsub.s32 %v968, %v970
      %v972 = vrot.slane %v964, %v971
      %v974 = vunpack.c.l.s4 1934713408
      %v975 = vunpack.c.0.s8 %v974
      %v976 = vlaneseq
      %v977 = vshrl.u32 %v976, 7
      %v978 = vsub.s32 %v975, %v977
      %v979 = vrot.slane %v965, %v978
      %v980 = vcombine.low %v955, %v963
      %v981 = vcombine.high %v955, %v963
      %v983 = vunpack.c.l.s4 1934713408
      %v984 = vunpack.c.0.s8 %v983
      %v985 = vlaneseq
      %v986 = vshrl.u32 %v985, 7
      %v987 = vsub.s32 %v984, %v986
      %v988 = vrot.slane %v980, %v987
      %v990 = vunpack.c.l.s4 1934713408
      %v991 = vunpack.c.0.s8 %v990
      %v992 = vlaneseq
      %v993 = vshrl.u32 %v992, 7
      %v994 = vsub.s32 %v991, %v993
      %v995 = vrot.slane %v981, %v994
      %v996 = vcombine.low %v972, %v988
      %v997 = vcombine.high %v972, %v988
      %v998 = vcombine.low %v979, %v995
      %v999 = vcombine.high %v979, %v995
      %v1001 = vunpack.c.l.s4 1983009808
      %v1002 = vunpack.c.0.s8 %v1001
      %v1003 = vlaneseq
      %v1004 = vshrl.u32 %v1003, 7
      %v1005 = vsub.s32 %v1002, %v1004
      %v1006 = vrot.slane %v931, %v1005
      %v1007 = vcombine.high %v931, 0.0
      %v1009 = vunpack.c.l.s4 1983009808
      %v1010 = vunpack.c.0.s8 %v1009
      %v1011 = vlaneseq
      %v1012 = vshrl.u32 %v1011, 7
      %v1013 = vsub.s32 %v1010, %v1012
      %v1014 = vrot.slane %v1007, %v1013
      %v1015 = vcombine.low %v1006, %v1014
      %v1016 = vcombine.high %v1006, %v1014
      %v1018 = vunpack.c.l.s4 1934713408
      %v1019 = vunpack.c.0.s8 %v1018
      %v1020 = vlaneseq
      %v1021 = vshrl.u32 %v1020, 7
      %v1022 = vsub.s32 %v1019, %v1021
      %v1023 = vrot.slane %v1015, %v1022
      %v1025 = vunpack.c.l.s4 1934713408
      %v1026 = vunpack.c.0.s8 %v1025
      %v1027 = vlaneseq
      %v1028 = vshrl.u32 %v1027, 7
      %v1029 = vsub.s32 %v1026, %v1028
      %v1030 = vrot.slane %v1016, %v1029
      %v1031 = vcombine.high %v1023, 0.0
      %v1032 = vcombine.high %v1030, 0.0
      %1033 = vrot.lane.b32.xlu0 %v814, 96
      %v1034 = vpop.permute.xlu0 %1033
      %1035 = vrot.lane.b32.xlu0 %v817, 96
      %v1036 = vpop.permute.xlu0 %1035
      %1037 = vrot.lane.b32.xlu0 %v823, 96
      %v1038 = vpop.permute.xlu0 %1037
      %1039 = vrot.lane.b32.xlu0 %v825, 96
      %v1040 = vpop.permute.xlu0 %1039
      %1041 = vrot.lane.b32.xlu0 %v829, 96
      %v1042 = vpop.permute.xlu0 %1041
      %1043 = vrot.lane.b32.xlu0 %v831, 96
      %v1044 = vpop.permute.xlu0 %1043
      %1045 = vrot.lane.b32.xlu0 %v835, 96
      %v1046 = vpop.permute.xlu0 %1045
      %1047 = vrot.lane.b32.xlu0 %v837, 96
      %v1048 = vpop.permute.xlu0 %1047
      %v1057 = vcombine.low %v1034, %v1042
      %v1058 = vcombine.high %v1034, %v1042
      %v1060 = vunpack.c.l.s4 1983009808
      %v1061 = vunpack.c.0.s8 %v1060
      %v1062 = vlaneseq
      %v1063 = vshrl.u32 %v1062, 7
      %v1064 = vsub.s32 %v1061, %v1063
      %v1065 = vrot.slane %v1057, %v1064
      %v1067 = vunpack.c.l.s4 1983009808
      %v1068 = vunpack.c.0.s8 %v1067
      %v1069 = vlaneseq
      %v1070 = vshrl.u32 %v1069, 7
      %v1071 = vsub.s32 %v1068, %v1070
      %v1072 = vrot.slane %v1058, %v1071
      %v1073 = vcombine.low %v1038, %v1046
      %v1074 = vcombine.high %v1038, %v1046
      %v1076 = vunpack.c.l.s4 1983009808
      %v1077 = vunpack.c.0.s8 %v1076
      %v1078 = vlaneseq
      %v1079 = vshrl.u32 %v1078, 7
      %v1080 = vsub.s32 %v1077, %v1079
      %v1081 = vrot.slane %v1073, %v1080
      %v1083 = vunpack.c.l.s4 1983009808
      %v1084 = vunpack.c.0.s8 %v1083
      %v1085 = vlaneseq
      %v1086 = vshrl.u32 %v1085, 7
      %v1087 = vsub.s32 %v1084, %v1086
      %v1088 = vrot.slane %v1074, %v1087
      %v1089 = vcombine.low %v1065, %v1081
      %v1090 = vcombine.high %v1065, %v1081
      %v1092 = vunpack.c.l.s4 1934713408
      %v1093 = vunpack.c.0.s8 %v1092
      %v1094 = vlaneseq
      %v1095 = vshrl.u32 %v1094, 7
      %v1096 = vsub.s32 %v1093, %v1095
      %v1097 = vrot.slane %v1089, %v1096
      %v1099 = vunpack.c.l.s4 1934713408
      %v1100 = vunpack.c.0.s8 %v1099
      %v1101 = vlaneseq
      %v1102 = vshrl.u32 %v1101, 7
      %v1103 = vsub.s32 %v1100, %v1102
      %v1104 = vrot.slane %v1090, %v1103
      %v1105 = vcombine.low %v1072, %v1088
      %v1106 = vcombine.high %v1072, %v1088
      %v1108 = vunpack.c.l.s4 1934713408
      %v1109 = vunpack.c.0.s8 %v1108
      %v1110 = vlaneseq
      %v1111 = vshrl.u32 %v1110, 7
      %v1112 = vsub.s32 %v1109, %v1111
      %v1113 = vrot.slane %v1105, %v1112
      %v1115 = vunpack.c.l.s4 1934713408
      %v1116 = vunpack.c.0.s8 %v1115
      %v1117 = vlaneseq
      %v1118 = vshrl.u32 %v1117, 7
      %v1119 = vsub.s32 %v1116, %v1118
      %v1120 = vrot.slane %v1106, %v1119
      %v1121 = vcombine.high %v1097, 0.0
      %v1122 = vcombine.high %v1104, 0.0
      %v1123 = vcombine.high %v1113, 0.0
      %v1124 = vcombine.high %v1120, 0.0
      %v1125 = vcombine.low %v1036, %v1044
      %v1127 = vunpack.c.l.s4 1983009808
      %v1128 = vunpack.c.0.s8 %v1127
      %v1129 = vlaneseq
      %v1130 = vshrl.u32 %v1129, 7
      %v1131 = vsub.s32 %v1128, %v1130
      %v1132 = vrot.slane %v1125, %v1131
      %v1133 = vcombine.low %v1040, %v1048
      %v1135 = vunpack.c.l.s4 1983009808
      %v1136 = vunpack.c.0.s8 %v1135
      %v1137 = vlaneseq
      %v1138 = vshrl.u32 %v1137, 7
      %v1139 = vsub.s32 %v1136, %v1138
      %v1140 = vrot.slane %v1133, %v1139
      %v1141 = vcombine.low %v1132, %v1140
      %v1143 = vunpack.c.l.s4 1934713408
      %v1144 = vunpack.c.0.s8 %v1143
      %v1145 = vlaneseq
      %v1146 = vshrl.u32 %v1145, 7
      %v1147 = vsub.s32 %v1144, %v1146
      %v1148 = vrot.slane %v1141, %v1147
      %v1149 = vcombine.low %v1097, %v1104
      %v1151 = vunpack.c.l.s4 1983009808
      %v1152 = vunpack.c.0.s8 %v1151
      %v1153 = vlaneseq
      %v1154 = vshrl.u32 %v1153, 7
      %v1155 = vsub.s32 %v1152, %v1154
      %v1156 = vrot.slane %v1149, %v1155
      %v1157 = vcombine.low %v1121, %v1122
      %v1159 = vunpack.c.l.s4 1983009808
      %v1160 = vunpack.c.0.s8 %v1159
      %v1161 = vlaneseq
      %v1162 = vshrl.u32 %v1161, 7
      %v1163 = vsub.s32 %v1160, %v1162
      %v1164 = vrot.slane %v1157, %v1163
      %v1165 = vcombine.low %v1113, %v1120
      %v1167 = vunpack.c.l.s4 1983009808
      %v1168 = vunpack.c.0.s8 %v1167
      %v1169 = vlaneseq
      %v1170 = vshrl.u32 %v1169, 7
      %v1171 = vsub.s32 %v1168, %v1170
      %v1172 = vrot.slane %v1165, %v1171
      %v1173 = vcombine.low %v1123, %v1124
      %v1175 = vunpack.c.l.s4 1983009808
      %v1176 = vunpack.c.0.s8 %v1175
      %v1177 = vlaneseq
      %v1178 = vshrl.u32 %v1177, 7
      %v1179 = vsub.s32 %v1176, %v1178
      %v1180 = vrot.slane %v1173, %v1179
      %v1181 = vcombine.low %v1156, %v1164
      %v1182 = vcombine.high %v1156, %v1164
      %v1184 = vunpack.c.l.s4 1934713408
      %v1185 = vunpack.c.0.s8 %v1184
      %v1186 = vlaneseq
      %v1187 = vshrl.u32 %v1186, 7
      %v1188 = vsub.s32 %v1185, %v1187
      %v1189 = vrot.slane %v1181, %v1188
      %v1191 = vunpack.c.l.s4 1934713408
      %v1192 = vunpack.c.0.s8 %v1191
      %v1193 = vlaneseq
      %v1194 = vshrl.u32 %v1193, 7
      %v1195 = vsub.s32 %v1192, %v1194
      %v1196 = vrot.slane %v1182, %v1195
      %v1197 = vcombine.low %v1172, %v1180
      %v1198 = vcombine.high %v1172, %v1180
      %v1200 = vunpack.c.l.s4 1934713408
      %v1201 = vunpack.c.0.s8 %v1200
      %v1202 = vlaneseq
      %v1203 = vshrl.u32 %v1202, 7
      %v1204 = vsub.s32 %v1201, %v1203
      %v1205 = vrot.slane %v1197, %v1204
      %v1207 = vunpack.c.l.s4 1934713408
      %v1208 = vunpack.c.0.s8 %v1207
      %v1209 = vlaneseq
      %v1210 = vshrl.u32 %v1209, 7
      %v1211 = vsub.s32 %v1208, %v1210
      %v1212 = vrot.slane %v1198, %v1211
      %v1213 = vcombine.low %v1189, %v1205
      %v1214 = vcombine.high %v1189, %v1205
      %v1215 = vcombine.low %v1196, %v1212
      %v1216 = vcombine.high %v1196, %v1212
      %v1218 = vunpack.c.l.s4 1983009808
      %v1219 = vunpack.c.0.s8 %v1218
      %v1220 = vlaneseq
      %v1221 = vshrl.u32 %v1220, 7
      %v1222 = vsub.s32 %v1219, %v1221
      %v1223 = vrot.slane %v1148, %v1222
      %v1224 = vcombine.high %v1148, 0.0
      %v1226 = vunpack.c.l.s4 1983009808
      %v1227 = vunpack.c.0.s8 %v1226
      %v1228 = vlaneseq
      %v1229 = vshrl.u32 %v1228, 7
      %v1230 = vsub.s32 %v1227, %v1229
      %v1231 = vrot.slane %v1224, %v1230
      %v1232 = vcombine.low %v1223, %v1231
      %v1233 = vcombine.high %v1223, %v1231
      %v1235 = vunpack.c.l.s4 1934713408
      %v1236 = vunpack.c.0.s8 %v1235
      %v1237 = vlaneseq
      %v1238 = vshrl.u32 %v1237, 7
      %v1239 = vsub.s32 %v1236, %v1238
      %v1240 = vrot.slane %v1232, %v1239
      %v1242 = vunpack.c.l.s4 1934713408
      %v1243 = vunpack.c.0.s8 %v1242
      %v1244 = vlaneseq
      %v1245 = vshrl.u32 %v1244, 7
      %v1246 = vsub.s32 %v1243, %v1245
      %v1247 = vrot.slane %v1233, %v1246
      %v1248 = vcombine.high %v1240, 0.0
      %v1249 = vcombine.high %v1247, 0.0
      %1250 = vrot.lane.b32.xlu0 %v814, 64
      %v1251 = vpop.permute.xlu0 %1250
      %1252 = vrot.lane.b32.xlu0 %v817, 64
      %v1253 = vpop.permute.xlu0 %1252
      %1254 = vrot.lane.b32.xlu0 %v823, 64
      %v1255 = vpop.permute.xlu0 %1254
      %1256 = vrot.lane.b32.xlu0 %v825, 64
      %v1257 = vpop.permute.xlu0 %1256
      %1258 = vrot.lane.b32.xlu0 %v829, 64
      %v1259 = vpop.permute.xlu0 %1258
      %1260 = vrot.lane.b32.xlu0 %v831, 64
      %v1261 = vpop.permute.xlu0 %1260
      %1262 = vrot.lane.b32.xlu0 %v835, 64
      %v1263 = vpop.permute.xlu0 %1262
      %1264 = vrot.lane.b32.xlu0 %v837, 64
      %v1265 = vpop.permute.xlu0 %1264
      %v1274 = vcombine.low %v1251, %v1259
      %v1275 = vcombine.high %v1251, %v1259
      %v1277 = vunpack.c.l.s4 1983009808
      %v1278 = vunpack.c.0.s8 %v1277
      %v1279 = vlaneseq
      %v1280 = vshrl.u32 %v1279, 7
      %v1281 = vsub.s32 %v1278, %v1280
      %v1282 = vrot.slane %v1274, %v1281
      %v1284 = vunpack.c.l.s4 1983009808
      %v1285 = vunpack.c.0.s8 %v1284
      %v1286 = vlaneseq
      %v1287 = vshrl.u32 %v1286, 7
      %v1288 = vsub.s32 %v1285, %v1287
      %v1289 = vrot.slane %v1275, %v1288
      %v1290 = vcombine.low %v1255, %v1263
      %v1291 = vcombine.high %v1255, %v1263
      %v1293 = vunpack.c.l.s4 1983009808
      %v1294 = vunpack.c.0.s8 %v1293
      %v1295 = vlaneseq
      %v1296 = vshrl.u32 %v1295, 7
      %v1297 = vsub.s32 %v1294, %v1296
      %v1298 = vrot.slane %v1290, %v1297
      %v1300 = vunpack.c.l.s4 1983009808
      %v1301 = vunpack.c.0.s8 %v1300
      %v1302 = vlaneseq
      %v1303 = vshrl.u32 %v1302, 7
      %v1304 = vsub.s32 %v1301, %v1303
      %v1305 = vrot.slane %v1291, %v1304
      %v1306 = vcombine.low %v1282, %v1298
      %v1307 = vcombine.high %v1282, %v1298
      %v1309 = vunpack.c.l.s4 1934713408
      %v1310 = vunpack.c.0.s8 %v1309
      %v1311 = vlaneseq
      %v1312 = vshrl.u32 %v1311, 7
      %v1313 = vsub.s32 %v1310, %v1312
      %v1314 = vrot.slane %v1306, %v1313
      %v1316 = vunpack.c.l.s4 1934713408
      %v1317 = vunpack.c.0.s8 %v1316
      %v1318 = vlaneseq
      %v1319 = vshrl.u32 %v1318, 7
      %v1320 = vsub.s32 %v1317, %v1319
      %v1321 = vrot.slane %v1307, %v1320
      %v1322 = vcombine.low %v1289, %v1305
      %v1323 = vcombine.high %v1289, %v1305
      %v1325 = vunpack.c.l.s4 1934713408
      %v1326 = vunpack.c.0.s8 %v1325
      %v1327 = vlaneseq
      %v1328 = vshrl.u32 %v1327, 7
      %v1329 = vsub.s32 %v1326, %v1328
      %v1330 = vrot.slane %v1322, %v1329
      %v1332 = vunpack.c.l.s4 1934713408
      %v1333 = vunpack.c.0.s8 %v1332
      %v1334 = vlaneseq
      %v1335 = vshrl.u32 %v1334, 7
      %v1336 = vsub.s32 %v1333, %v1335
      %v1337 = vrot.slane %v1323, %v1336
      %v1338 = vcombine.high %v1314, 0.0
      %v1339 = vcombine.high %v1321, 0.0
      %v1340 = vcombine.high %v1330, 0.0
      %v1341 = vcombine.high %v1337, 0.0
      %v1342 = vcombine.low %v1253, %v1261
      %v1344 = vunpack.c.l.s4 1983009808
      %v1345 = vunpack.c.0.s8 %v1344
      %v1346 = vlaneseq
      %v1347 = vshrl.u32 %v1346, 7
      %v1348 = vsub.s32 %v1345, %v1347
      %v1349 = vrot.slane %v1342, %v1348
      %v1350 = vcombine.low %v1257, %v1265
      %v1352 = vunpack.c.l.s4 1983009808
      %v1353 = vunpack.c.0.s8 %v1352
      %v1354 = vlaneseq
      %v1355 = vshrl.u32 %v1354, 7
      %v1356 = vsub.s32 %v1353, %v1355
      %v1357 = vrot.slane %v1350, %v1356
      %v1358 = vcombine.low %v1349, %v1357
      %v1360 = vunpack.c.l.s4 1934713408
      %v1361 = vunpack.c.0.s8 %v1360
      %v1362 = vlaneseq
      %v1363 = vshrl.u32 %v1362, 7
      %v1364 = vsub.s32 %v1361, %v1363
      %v1365 = vrot.slane %v1358, %v1364
      %v1366 = vcombine.low %v1314, %v1321
      %v1368 = vunpack.c.l.s4 1983009808
      %v1369 = vunpack.c.0.s8 %v1368
      %v1370 = vlaneseq
      %v1371 = vshrl.u32 %v1370, 7
      %v1372 = vsub.s32 %v1369, %v1371
      %v1373 = vrot.slane %v1366, %v1372
      %v1374 = vcombine.low %v1338, %v1339
      %v1376 = vunpack.c.l.s4 1983009808
      %v1377 = vunpack.c.0.s8 %v1376
      %v1378 = vlaneseq
      %v1379 = vshrl.u32 %v1378, 7
      %v1380 = vsub.s32 %v1377, %v1379
      %v1381 = vrot.slane %v1374, %v1380
      %v1382 = vcombine.low %v1330, %v1337
      %v1384 = vunpack.c.l.s4 1983009808
      %v1385 = vunpack.c.0.s8 %v1384
      %v1386 = vlaneseq
      %v1387 = vshrl.u32 %v1386, 7
      %v1388 = vsub.s32 %v1385, %v1387
      %v1389 = vrot.slane %v1382, %v1388
      %v1390 = vcombine.low %v1340, %v1341
      %v1392 = vunpack.c.l.s4 1983009808
      %v1393 = vunpack.c.0.s8 %v1392
      %v1394 = vlaneseq
      %v1395 = vshrl.u32 %v1394, 7
      %v1396 = vsub.s32 %v1393, %v1395
      %v1397 = vrot.slane %v1390, %v1396
      %v1398 = vcombine.low %v1373, %v1381
      %v1399 = vcombine.high %v1373, %v1381
      %v1401 = vunpack.c.l.s4 1934713408
      %v1402 = vunpack.c.0.s8 %v1401
      %v1403 = vlaneseq
      %v1404 = vshrl.u32 %v1403, 7
      %v1405 = vsub.s32 %v1402, %v1404
      %v1406 = vrot.slane %v1398, %v1405
      %v1408 = vunpack.c.l.s4 1934713408
      %v1409 = vunpack.c.0.s8 %v1408
      %v1410 = vlaneseq
      %v1411 = vshrl.u32 %v1410, 7
      %v1412 = vsub.s32 %v1409, %v1411
      %v1413 = vrot.slane %v1399, %v1412
      %v1414 = vcombine.low %v1389, %v1397
      %v1415 = vcombine.high %v1389, %v1397
      %v1417 = vunpack.c.l.s4 1934713408
      %v1418 = vunpack.c.0.s8 %v1417
      %v1419 = vlaneseq
      %v1420 = vshrl.u32 %v1419, 7
      %v1421 = vsub.s32 %v1418, %v1420
      %v1422 = vrot.slane %v1414, %v1421
      %v1424 = vunpack.c.l.s4 1934713408
      %v1425 = vunpack.c.0.s8 %v1424
      %v1426 = vlaneseq
      %v1427 = vshrl.u32 %v1426, 7
      %v1428 = vsub.s32 %v1425, %v1427
      %v1429 = vrot.slane %v1415, %v1428
      %v1430 = vcombine.low %v1406, %v1422
      %v1431 = vcombine.high %v1406, %v1422
      %v1432 = vcombine.low %v1413, %v1429
      %v1433 = vcombine.high %v1413, %v1429
      %v1435 = vunpack.c.l.s4 1983009808
      %v1436 = vunpack.c.0.s8 %v1435
      %v1437 = vlaneseq
      %v1438 = vshrl.u32 %v1437, 7
      %v1439 = vsub.s32 %v1436, %v1438
      %v1440 = vrot.slane %v1365, %v1439
      %v1441 = vcombine.high %v1365, 0.0
      %v1443 = vunpack.c.l.s4 1983009808
      %v1444 = vunpack.c.0.s8 %v1443
      %v1445 = vlaneseq
      %v1446 = vshrl.u32 %v1445, 7
      %v1447 = vsub.s32 %v1444, %v1446
      %v1448 = vrot.slane %v1441, %v1447
      %v1449 = vcombine.low %v1440, %v1448
      %v1450 = vcombine.high %v1440, %v1448
      %v1452 = vunpack.c.l.s4 1934713408
      %v1453 = vunpack.c.0.s8 %v1452
      %v1454 = vlaneseq
      %v1455 = vshrl.u32 %v1454, 7
      %v1456 = vsub.s32 %v1453, %v1455
      %v1457 = vrot.slane %v1449, %v1456
      %v1459 = vunpack.c.l.s4 1934713408
      %v1460 = vunpack.c.0.s8 %v1459
      %v1461 = vlaneseq
      %v1462 = vshrl.u32 %v1461, 7
      %v1463 = vsub.s32 %v1460, %v1462
      %v1464 = vrot.slane %v1450, %v1463
      %v1465 = vcombine.high %v1457, 0.0
      %v1466 = vcombine.high %v1464, 0.0
      %v1467 = vpack.c.bf16 %v1023, %v996
      %v1468 = vpack.c.bf16 %v1031, %v997
      %v1469 = vpack.c.bf16 %v1030, %v998
      %v1470 = vpack.c.bf16 %v1032, %v999
      %v1471 = vpack.c.bf16 %v1240, %v1213
      %v1472 = vpack.c.bf16 %v1248, %v1214
      %v1473 = vpack.c.bf16 %v1247, %v1215
      %v1474 = vpack.c.bf16 %v1249, %v1216
      %vm1475 = vcmask 64512
      %v1477 = vsel %vm1475, %v1467, 0
      %v1480 = vsel %vm1475, %v1471, 0
      %1482 = vmatprep.subr.bf16.mxu0 0
      %1483 = vmatpush1.bf16.xpose.msra.mxu0 %v1480
      %1484 = vmatprep.subr.bf16.mxu0 0
      %1485 = vmatpush1.bf16.xpose.msra.mxu0 0
      %1486 = vmatprep.subr.bf16.mxu0 0
      %1487 = vmatpush1.bf16.xpose.msra.mxu0 0
      %1488 = vmatprep.subr.bf16.mxu0 0
      %1489 = vmatpush1.bf16.xpose.msra.mxu0 0
      %1490 = vmatprep.subr.bf16.mxu0 0
      %1491 = vmatpush1.bf16.xpose.msra.mxu0 0
      %1492 = vmatprep.subr.bf16.mxu0 0
      %1493 = vmatpush1.bf16.xpose.msra.mxu0 0
      %1494 = vmatprep.subr.bf16.mxu0 0
      %1495 = vmatpush1.bf16.xpose.msra.mxu0 0
      %1496 = vmatprep.subr.bf16.mxu0 0
      %1497 = vmatpush1.bf16.xpose.msra.mxu0 0
      %1498 = vmatprep.subr.bf16.mxu0 0
      %1499 = vmatpush1.bf16.xpose.msra.mxu0 0
      %1500 = vmatprep.subr.bf16.mxu0 0
      %1501 = vmatpush1.bf16.xpose.msra.mxu0 0
      %1502 = vmatprep.subr.bf16.mxu0 0
      %1503 = vmatpush1.bf16.xpose.msra.mxu0 0
      %1504 = vmatprep.subr.bf16.mxu0 0
      %1505 = vmatpush1.bf16.xpose.msra.mxu0 0
      %1506 = vmatprep.subr.bf16.mxu0 0
      %1507 = vmatpush1.bf16.xpose.msra.mxu0 0
      %1508 = vmatprep.subr.bf16.mxu0 0
      %1509 = vmatpush1.bf16.xpose.msra.mxu0 0
      %1510 = vmatprep.subr.bf16.mxu0 0
      %1511 = vmatpush1.bf16.xpose.msra.mxu0 0
      %1512 = vmatprep.subr.bf16.mxu0 0
      %1513 = vmatpush1.bf16.xpose.msra.mxu0 0
      %1514 = vmatprep.mubr.bf16.mxu0 0
      %1515 = vmatmul.mubr.bf16.gmra.mrb[0].mxu0 %v1477
      %v1516 = vpop.f32.mrb[0].mxu0
      %v1517 = vadd.f32 0.0, %v1516
      %v1518 = vpop.f32.mrb[0].mxu0
      %v1519 = vpop.f32.mrb[0].mxu0
      %v1520 = vadd.f32 0.0, %v1519
      %v1521 = vpop.f32.mrb[0].mxu0
      %1522 = vdwg.mxu0
      %v1524 = vsel %vm1475, %v1468, 0
      %v1527 = vsel %vm1475, %v1472, 0
      %1529 = vmatprep.subr.bf16.mxu0 0
      %1530 = vmatpush1.bf16.xpose.msra.mxu0 %v1527
      %1531 = vmatprep.subr.bf16.mxu0 0
      %1532 = vmatpush1.bf16.xpose.msra.mxu0 0
      %1533 = vmatprep.subr.bf16.mxu0 0
      %1534 = vmatpush1.bf16.xpose.msra.mxu0 0
      %1535 = vmatprep.subr.bf16.mxu0 0
      %1536 = vmatpush1.bf16.xpose.msra.mxu0 0
      %1537 = vmatprep.subr.bf16.mxu0 0
      %1538 = vmatpush1.bf16.xpose.msra.mxu0 0
      %1539 = vmatprep.subr.bf16.mxu0 0
      %1540 = vmatpush1.bf16.xpose.msra.mxu0 0
      %1541 = vmatprep.subr.bf16.mxu0 0
      %1542 = vmatpush1.bf16.xpose.msra.mxu0 0
      %1543 = vmatprep.subr.bf16.mxu0 0
      %1544 = vmatpush1.bf16.xpose.msra.mxu0 0
      %1545 = vmatprep.subr.bf16.mxu0 0
      %1546 = vmatpush1.bf16.xpose.msra.mxu0 0
      %1547 = vmatprep.subr.bf16.mxu0 0
      %1548 = vmatpush1.bf16.xpose.msra.mxu0 0
      %1549 = vmatprep.subr.bf16.mxu0 0
      %1550 = vmatpush1.bf16.xpose.msra.mxu0 0
      %1551 = vmatprep.subr.bf16.mxu0 0
      %1552 = vmatpush1.bf16.xpose.msra.mxu0 0
      %1553 = vmatprep.subr.bf16.mxu0 0
      %1554 = vmatpush1.bf16.xpose.msra.mxu0 0
      %1555 = vmatprep.subr.bf16.mxu0 0
      %1556 = vmatpush1.bf16.xpose.msra.mxu0 0
      %1557 = vmatprep.subr.bf16.mxu0 0
      %1558 = vmatpush1.bf16.xpose.msra.mxu0 0
      %1559 = vmatprep.subr.bf16.mxu0 0
      %1560 = vmatpush1.bf16.xpose.msra.mxu0 0
      %1561 = vmatprep.mubr.bf16.mxu0 0
      %1562 = vmatmul.mubr.bf16.gmra.mrb[0].mxu0 %v1524
      %v1563 = vpop.f32.mrb[0].mxu0
      %v1564 = vadd.f32 0.0, %v1563
      %v1565 = vpop.f32.mrb[0].mxu0
      %v1566 = vpop.f32.mrb[0].mxu0
      %v1567 = vadd.f32 0.0, %v1566
      %v1568 = vpop.f32.mrb[0].mxu0
      %1569 = vdwg.mxu0
      %v1571 = vsel %vm1475, %v1469, 0
      %v1574 = vsel %vm1475, %v1473, 0
      %1576 = vmatprep.subr.bf16.mxu0 0
      %1577 = vmatpush1.bf16.xpose.msra.mxu0 %v1574
      %1578 = vmatprep.subr.bf16.mxu0 0
      %1579 = vmatpush1.bf16.xpose.msra.mxu0 0
      %1580 = vmatprep.subr.bf16.mxu0 0
      %1581 = vmatpush1.bf16.xpose.msra.mxu0 0
      %1582 = vmatprep.subr.bf16.mxu0 0
      %1583 = vmatpush1.bf16.xpose.msra.mxu0 0
      %1584 = vmatprep.subr.bf16.mxu0 0
      %1585 = vmatpush1.bf16.xpose.msra.mxu0 0
      %1586 = vmatprep.subr.bf16.mxu0 0
      %1587 = vmatpush1.bf16.xpose.msra.mxu0 0
      %1588 = vmatprep.subr.bf16.mxu0 0
      %1589 = vmatpush1.bf16.xpose.msra.mxu0 0
      %1590 = vmatprep.subr.bf16.mxu0 0
      %1591 = vmatpush1.bf16.xpose.msra.mxu0 0
      %1592 = vmatprep.subr.bf16.mxu0 0
      %1593 = vmatpush1.bf16.xpose.msra.mxu0 0
      %1594 = vmatprep.subr.bf16.mxu0 0
      %1595 = vmatpush1.bf16.xpose.msra.mxu0 0
      %1596 = vmatprep.subr.bf16.mxu0 0
      %1597 = vmatpush1.bf16.xpose.msra.mxu0 0
      %1598 = vmatprep.subr.bf16.mxu0 0
      %1599 = vmatpush1.bf16.xpose.msra.mxu0 0
      %1600 = vmatprep.subr.bf16.mxu0 0
      %1601 = vmatpush1.bf16.xpose.msra.mxu0 0
      %1602 = vmatprep.subr.bf16.mxu0 0
      %1603 = vmatpush1.bf16.xpose.msra.mxu0 0
      %1604 = vmatprep.subr.bf16.mxu0 0
      %1605 = vmatpush1.bf16.xpose.msra.mxu0 0
      %1606 = vmatprep.subr.bf16.mxu0 0
      %1607 = vmatpush1.bf16.xpose.msra.mxu0 0
      %1608 = vmatprep.mubr.bf16.mxu0 0
      %1609 = vmatmul.mubr.bf16.gmra.mrb[0].mxu0 %v1571
      %v1610 = vpop.f32.mrb[0].mxu0
      %v1611 = vadd.f32 0.0, %v1610
      %v1612 = vpop.f32.mrb[0].mxu0
      %v1613 = vpop.f32.mrb[0].mxu0
      %v1614 = vadd.f32 0.0, %v1613
      %v1615 = vpop.f32.mrb[0].mxu0
      %1616 = vdwg.mxu0
      %v1618 = vsel %vm1475, %v1470, 0
      %v1621 = vsel %vm1475, %v1474, 0
      %1623 = vmatprep.subr.bf16.mxu0 0
      %1624 = vmatpush1.bf16.xpose.msra.mxu0 %v1621
      %1625 = vmatprep.subr.bf16.mxu0 0
      %1626 = vmatpush1.bf16.xpose.msra.mxu0 0
      %1627 = vmatprep.subr.bf16.mxu0 0
      %1628 = vmatpush1.bf16.xpose.msra.mxu0 0
      %1629 = vmatprep.subr.bf16.mxu0 0
      %1630 = vmatpush1.bf16.xpose.msra.mxu0 0
      %1631 = vmatprep.subr.bf16.mxu0 0
      %1632 = vmatpush1.bf16.xpose.msra.mxu0 0
      %1633 = vmatprep.subr.bf16.mxu0 0
      %1634 = vmatpush1.bf16.xpose.msra.mxu0 0
      %1635 = vmatprep.subr.bf16.mxu0 0
      %1636 = vmatpush1.bf16.xpose.msra.mxu0 0
      %1637 = vmatprep.subr.bf16.mxu0 0
      %1638 = vmatpush1.bf16.xpose.msra.mxu0 0
      %1639 = vmatprep.subr.bf16.mxu0 0
      %1640 = vmatpush1.bf16.xpose.msra.mxu0 0
      %1641 = vmatprep.subr.bf16.mxu0 0
      %1642 = vmatpush1.bf16.xpose.msra.mxu0 0
      %1643 = vmatprep.subr.bf16.mxu0 0
      %1644 = vmatpush1.bf16.xpose.msra.mxu0 0
      %1645 = vmatprep.subr.bf16.mxu0 0
      %1646 = vmatpush1.bf16.xpose.msra.mxu0 0
      %1647 = vmatprep.subr.bf16.mxu0 0
      %1648 = vmatpush1.bf16.xpose.msra.mxu0 0
      %1649 = vmatprep.subr.bf16.mxu0 0
      %1650 = vmatpush1.bf16.xpose.msra.mxu0 0
      %1651 = vmatprep.subr.bf16.mxu0 0
      %1652 = vmatpush1.bf16.xpose.msra.mxu0 0
      %1653 = vmatprep.subr.bf16.mxu0 0
      %1654 = vmatpush1.bf16.xpose.msra.mxu0 0
      %1655 = vmatprep.mubr.bf16.mxu0 0
      %1656 = vmatmul.mubr.bf16.gmra.mrb[0].mxu0 %v1618
      %v1657 = vpop.f32.mrb[0].mxu0
      %v1658 = vadd.f32 0.0, %v1657
      %v1659 = vpop.f32.mrb[0].mxu0
      %v1660 = vpop.f32.mrb[0].mxu0
      %v1661 = vadd.f32 0.0, %v1660
      %v1662 = vpop.f32.mrb[0].mxu0
      %1663 = vdwg.mxu0
      %v1664 = vmul.f32 %v1517, 0.35355338
      %v1665 = vmul.f32 %v1520, 0.35355338
      %v1666 = vmul.f32 %v1564, 0.35355338
      %v1667 = vmul.f32 %v1567, 0.35355338
      %v1668 = vmul.f32 %v1611, 0.35355338
      %v1669 = vmul.f32 %v1614, 0.35355338
      %v1670 = vmul.f32 %v1658, 0.35355338
      %v1671 = vmul.f32 %v1661, 0.35355338
      %v1673 = vlaneseq
      %v1674 = vshrl.u32 %v1673, 7
      %v1675 = vsub.s32 0, %v1674
      %v1676 = vrot.slane %v755, %v1675
      %v1678 = vadd.f32 %v1664, %v1676
      %v1679 = vadd.f32 %v1665, %v1676
      %v1680 = vadd.f32 %v1666, %v1676
      %v1681 = vadd.f32 %v1667, %v1676
      %v1682 = vadd.f32 %v1668, %v1676
      %v1683 = vadd.f32 %v1669, %v1676
      %v1684 = vadd.f32 %v1670, %v1676
      %v1685 = vadd.f32 %v1671, %v1676
      %vm1686 = vcmask 80896
      %v1687 = vsel %vm1686, %v1678, -inf
      %1688 = vmax.xlane.f32.xlu0 %v1687
      %v1689 = vpop.xlane.xlu0 %1688
      %vm1690 = vcmask 74752
      %v1691 = vsel %vm1690, %v1679, -inf
      %1692 = vmax.xlane.f32.xlu0 %v1691
      %v1693 = vpop.xlane.xlu0 %1692
      %v1694 = vsel %vm1686, %v1680, -inf
      %1695 = vmax.xlane.f32.xlu0 %v1694
      %v1696 = vpop.xlane.xlu0 %1695
      %v1697 = vsel %vm1690, %v1681, -inf
      %1698 = vmax.xlane.f32.xlu0 %v1697
      %v1699 = vpop.xlane.xlu0 %1698
      %v1700 = vsel %vm1686, %v1682, -inf
      %1701 = vmax.xlane.f32.xlu0 %v1700
      %v1702 = vpop.xlane.xlu0 %1701
      %v1703 = vsel %vm1690, %v1683, -inf
      %1704 = vmax.xlane.f32.xlu0 %v1703
      %v1705 = vpop.xlane.xlu0 %1704
      %v1706 = vsel %vm1686, %v1684, -inf
      %1707 = vmax.xlane.f32.xlu0 %v1706
      %v1708 = vpop.xlane.xlu0 %1707
      %v1709 = vsel %vm1690, %v1685, -inf
      %1710 = vmax.xlane.f32.xlu0 %v1709
      %v1711 = vpop.xlane.xlu0 %1710
      %v1712 = vsub.f32 %v1678, %v1689
      %v1713 = vsub.f32 %v1679, %v1693
      %v1714 = vsub.f32 %v1680, %v1696
      %v1715 = vsub.f32 %v1681, %v1699
      %v1716 = vsub.f32 %v1682, %v1702
      %v1717 = vsub.f32 %v1683, %v1705
      %v1718 = vsub.f32 %v1684, %v1708
      %v1719 = vsub.f32 %v1685, %v1711
      %v1720 = vmul.f32 %v1712, 1.442695
      %v1721 = vpow.pop %v1720
      %v1722 = vmul.f32 %v1713, 1.442695
      %v1723 = vpow.pop %v1722
      %v1724 = vmul.f32 %v1714, 1.442695
      %v1725 = vpow.pop %v1724
      %v1726 = vmul.f32 %v1715, 1.442695
      %v1727 = vpow.pop %v1726
      %v1728 = vmul.f32 %v1716, 1.442695
      %v1729 = vpow.pop %v1728
      %v1730 = vmul.f32 %v1717, 1.442695
      %v1731 = vpow.pop %v1730
      %v1732 = vmul.f32 %v1718, 1.442695
      %v1733 = vpow.pop %v1732
      %v1734 = vmul.f32 %v1719, 1.442695
      %v1735 = vpow.pop %v1734
      %v1736 = vsel %vm1686, %v1721, 0.0
      %1737 = vadd.xlane.f32.xlu0 %v1736
      %v1738 = vpop.xlane.xlu0 %1737
      %v1739 = vsel %vm1690, %v1723, 0.0
      %1740 = vadd.xlane.f32.xlu0 %v1739
      %v1741 = vpop.xlane.xlu0 %1740
      %v1742 = vsel %vm1686, %v1725, 0.0
      %1743 = vadd.xlane.f32.xlu0 %v1742
      %v1744 = vpop.xlane.xlu0 %1743
      %v1745 = vsel %vm1690, %v1727, 0.0
      %1746 = vadd.xlane.f32.xlu0 %v1745
      %v1747 = vpop.xlane.xlu0 %1746
      %v1748 = vsel %vm1686, %v1729, 0.0
      %1749 = vadd.xlane.f32.xlu0 %v1748
      %v1750 = vpop.xlane.xlu0 %1749
      %v1751 = vsel %vm1690, %v1731, 0.0
      %1752 = vadd.xlane.f32.xlu0 %v1751
      %v1753 = vpop.xlane.xlu0 %1752
      %v1754 = vsel %vm1686, %v1733, 0.0
      %1755 = vadd.xlane.f32.xlu0 %v1754
      %v1756 = vpop.xlane.xlu0 %1755
      %v1757 = vsel %vm1690, %v1735, 0.0
      %1758 = vadd.xlane.f32.xlu0 %v1757
      %v1759 = vpop.xlane.xlu0 %1758
      %v1760 = vrcp.pop %v1738
      %v1761 = vrcp.pop %v1741
      %v1762 = vrcp.pop %v1744
      %v1763 = vrcp.pop %v1747
      %v1764 = vrcp.pop %v1750
      %v1765 = vrcp.pop %v1753
      %v1766 = vrcp.pop %v1756
      %v1767 = vrcp.pop %v1759
      %v1768 = vmul.f32 %v1721, %v1760
      %v1769 = vmul.f32 %v1723, %v1761
      %v1770 = vmul.f32 %v1725, %v1762
      %v1771 = vmul.f32 %v1727, %v1763
      %v1772 = vmul.f32 %v1729, %v1764
      %v1773 = vmul.f32 %v1731, %v1765
      %v1774 = vmul.f32 %v1733, %v1766
      %v1775 = vmul.f32 %v1735, %v1767
      %v1776 = vpack.c.bf16 %v1769, %v1768
      %v1777 = vpack.c.bf16 %v1771, %v1770
      %v1778 = vpack.c.bf16 %v1773, %v1772
      %v1779 = vpack.c.bf16 %v1775, %v1774
      %v1780 = vpack.c.bf16 %v1457, %v1430
      %v1781 = vpack.c.bf16 %v1465, %v1431
      %v1782 = vpack.c.bf16 %v1464, %v1432
      %v1783 = vpack.c.bf16 %v1466, %v1433
      %v1785 = vsel %vm1686, %v1776, 0
      %vm1787 = vcmask 1044480
      %v1789 = vsel %vm1787, %v1780, 0
      %1791 = vmatprep.subr.bf16.mxu0 0
      %1792 = vmatpush1.bf16.msra.mxu0 %v1789
      %1793 = vmatprep.subr.bf16.mxu0 0
      %1794 = vmatpush1.bf16.msra.mxu0 0
      %1795 = vmatprep.subr.bf16.mxu0 0
      %1796 = vmatpush1.bf16.msra.mxu0 0
      %1797 = vmatprep.subr.bf16.mxu0 0
      %1798 = vmatpush1.bf16.msra.mxu0 0
      %1799 = vmatprep.subr.bf16.mxu0 0
      %1800 = vmatpush1.bf16.msra.mxu0 0
      %1801 = vmatprep.subr.bf16.mxu0 0
      %1802 = vmatpush1.bf16.msra.mxu0 0
      %1803 = vmatprep.subr.bf16.mxu0 0
      %1804 = vmatpush1.bf16.msra.mxu0 0
      %1805 = vmatprep.subr.bf16.mxu0 0
      %1806 = vmatpush1.bf16.msra.mxu0 0
      %1807 = vmatprep.subr.bf16.mxu0 0
      %1808 = vmatpush1.bf16.msra.mxu0 0
      %1809 = vmatprep.subr.bf16.mxu0 0
      %1810 = vmatpush1.bf16.msra.mxu0 0
      %1811 = vmatprep.subr.bf16.mxu0 0
      %1812 = vmatpush1.bf16.msra.mxu0 0
      %1813 = vmatprep.subr.bf16.mxu0 0
      %1814 = vmatpush1.bf16.msra.mxu0 0
      %1815 = vmatprep.subr.bf16.mxu0 0
      %1816 = vmatpush1.bf16.msra.mxu0 0
      %1817 = vmatprep.subr.bf16.mxu0 0
      %1818 = vmatpush1.bf16.msra.mxu0 0
      %1819 = vmatprep.subr.bf16.mxu0 0
      %1820 = vmatpush1.bf16.msra.mxu0 0
      %1821 = vmatprep.subr.bf16.mxu0 0
      %1822 = vmatpush1.bf16.msra.mxu0 0
      %1823 = vmatprep.mubr.bf16.mxu0 0
      %1824 = vmatmul.mubr.bf16.gmra.mrb[0].mxu0 %v1785
      %v1825 = vpop.f32.mrb[0].mxu0
      %v1826 = vadd.f32 0.0, %v1825
      %v1827 = vpop.f32.mrb[0].mxu0
      %v1828 = vpop.f32.mrb[0].mxu0
      %v1829 = vadd.f32 0.0, %v1828
      %v1830 = vpop.f32.mrb[0].mxu0
      %1831 = vdwg.mxu0
      %v1833 = vsel %vm1686, %v1777, 0
      %v1836 = vsel %vm1787, %v1781, 0
      %1838 = vmatprep.subr.bf16.mxu0 0
      %1839 = vmatpush1.bf16.msra.mxu0 %v1836
      %1840 = vmatprep.subr.bf16.mxu0 0
      %1841 = vmatpush1.bf16.msra.mxu0 0
      %1842 = vmatprep.subr.bf16.mxu0 0
      %1843 = vmatpush1.bf16.msra.mxu0 0
      %1844 = vmatprep.subr.bf16.mxu0 0
      %1845 = vmatpush1.bf16.msra.mxu0 0
      %1846 = vmatprep.subr.bf16.mxu0 0
      %1847 = vmatpush1.bf16.msra.mxu0 0
      %1848 = vmatprep.subr.bf16.mxu0 0
      %1849 = vmatpush1.bf16.msra.mxu0 0
      %1850 = vmatprep.subr.bf16.mxu0 0
      %1851 = vmatpush1.bf16.msra.mxu0 0
      %1852 = vmatprep.subr.bf16.mxu0 0
      %1853 = vmatpush1.bf16.msra.mxu0 0
      %1854 = vmatprep.subr.bf16.mxu0 0
      %1855 = vmatpush1.bf16.msra.mxu0 0
      %1856 = vmatprep.subr.bf16.mxu0 0
      %1857 = vmatpush1.bf16.msra.mxu0 0
      %1858 = vmatprep.subr.bf16.mxu0 0
      %1859 = vmatpush1.bf16.msra.mxu0 0
      %1860 = vmatprep.subr.bf16.mxu0 0
      %1861 = vmatpush1.bf16.msra.mxu0 0
      %1862 = vmatprep.subr.bf16.mxu0 0
      %1863 = vmatpush1.bf16.msra.mxu0 0
      %1864 = vmatprep.subr.bf16.mxu0 0
      %1865 = vmatpush1.bf16.msra.mxu0 0
      %1866 = vmatprep.subr.bf16.mxu0 0
      %1867 = vmatpush1.bf16.msra.mxu0 0
      %1868 = vmatprep.subr.bf16.mxu0 0
      %1869 = vmatpush1.bf16.msra.mxu0 0
      %1870 = vmatprep.mubr.bf16.mxu0 0
      %1871 = vmatmul.mubr.bf16.gmra.mrb[0].mxu0 %v1833
      %v1872 = vpop.f32.mrb[0].mxu0
      %v1873 = vadd.f32 0.0, %v1872
      %v1874 = vpop.f32.mrb[0].mxu0
      %v1875 = vpop.f32.mrb[0].mxu0
      %v1876 = vadd.f32 0.0, %v1875
      %v1877 = vpop.f32.mrb[0].mxu0
      %1878 = vdwg.mxu0
      %v1880 = vsel %vm1686, %v1778, 0
      %v1883 = vsel %vm1787, %v1782, 0
      %1885 = vmatprep.subr.bf16.mxu0 0
      %1886 = vmatpush1.bf16.msra.mxu0 %v1883
      %1887 = vmatprep.subr.bf16.mxu0 0
      %1888 = vmatpush1.bf16.msra.mxu0 0
      %1889 = vmatprep.subr.bf16.mxu0 0
      %1890 = vmatpush1.bf16.msra.mxu0 0
      %1891 = vmatprep.subr.bf16.mxu0 0
      %1892 = vmatpush1.bf16.msra.mxu0 0
      %1893 = vmatprep.subr.bf16.mxu0 0
      %1894 = vmatpush1.bf16.msra.mxu0 0
      %1895 = vmatprep.subr.bf16.mxu0 0
      %1896 = vmatpush1.bf16.msra.mxu0 0
      %1897 = vmatprep.subr.bf16.mxu0 0
      %1898 = vmatpush1.bf16.msra.mxu0 0
      %1899 = vmatprep.subr.bf16.mxu0 0
      %1900 = vmatpush1.bf16.msra.mxu0 0
      %1901 = vmatprep.subr.bf16.mxu0 0
      %1902 = vmatpush1.bf16.msra.mxu0 0
      %1903 = vmatprep.subr.bf16.mxu0 0
      %1904 = vmatpush1.bf16.msra.mxu0 0
      %1905 = vmatprep.subr.bf16.mxu0 0
      %1906 = vmatpush1.bf16.msra.mxu0 0
      %1907 = vmatprep.subr.bf16.mxu0 0
      %1908 = vmatpush1.bf16.msra.mxu0 0
      %1909 = vmatprep.subr.bf16.mxu0 0
      %1910 = vmatpush1.bf16.msra.mxu0 0
      %1911 = vmatprep.subr.bf16.mxu0 0
      %1912 = vmatpush1.bf16.msra.mxu0 0
      %1913 = vmatprep.subr.bf16.mxu0 0
      %1914 = vmatpush1.bf16.msra.mxu0 0
      %1915 = vmatprep.subr.bf16.mxu0 0
      %1916 = vmatpush1.bf16.msra.mxu0 0
      %1917 = vmatprep.mubr.bf16.mxu0 0
      %1918 = vmatmul.mubr.bf16.gmra.mrb[0].mxu0 %v1880
      %v1919 = vpop.f32.mrb[0].mxu0
      %v1920 = vadd.f32 0.0, %v1919
      %v1921 = vpop.f32.mrb[0].mxu0
      %v1922 = vpop.f32.mrb[0].mxu0
      %v1923 = vadd.f32 0.0, %v1922
      %v1924 = vpop.f32.mrb[0].mxu0
      %1925 = vdwg.mxu0
      %v1927 = vsel %vm1686, %v1779, 0
      %v1930 = vsel %vm1787, %v1783, 0
      %1932 = vmatprep.subr.bf16.mxu0 0
      %1933 = vmatpush1.bf16.msra.mxu0 %v1930
      %1934 = vmatprep.subr.bf16.mxu0 0
      %1935 = vmatpush1.bf16.msra.mxu0 0
      %1936 = vmatprep.subr.bf16.mxu0 0
      %1937 = vmatpush1.bf16.msra.mxu0 0
      %1938 = vmatprep.subr.bf16.mxu0 0
      %1939 = vmatpush1.bf16.msra.mxu0 0
      %1940 = vmatprep.subr.bf16.mxu0 0
      %1941 = vmatpush1.bf16.msra.mxu0 0
      %1942 = vmatprep.subr.bf16.mxu0 0
      %1943 = vmatpush1.bf16.msra.mxu0 0
      %1944 = vmatprep.subr.bf16.mxu0 0
      %1945 = vmatpush1.bf16.msra.mxu0 0
      %1946 = vmatprep.subr.bf16.mxu0 0
      %1947 = vmatpush1.bf16.msra.mxu0 0
      %1948 = vmatprep.subr.bf16.mxu0 0
      %1949 = vmatpush1.bf16.msra.mxu0 0
      %1950 = vmatprep.subr.bf16.mxu0 0
      %1951 = vmatpush1.bf16.msra.mxu0 0
      %1952 = vmatprep.subr.bf16.mxu0 0
      %1953 = vmatpush1.bf16.msra.mxu0 0
      %1954 = vmatprep.subr.bf16.mxu0 0
      %1955 = vmatpush1.bf16.msra.mxu0 0
      %1956 = vmatprep.subr.bf16.mxu0 0
      %1957 = vmatpush1.bf16.msra.mxu0 0
      %1958 = vmatprep.subr.bf16.mxu0 0
      %1959 = vmatpush1.bf16.msra.mxu0 0
      %1960 = vmatprep.subr.bf16.mxu0 0
      %1961 = vmatpush1.bf16.msra.mxu0 0
      %1962 = vmatprep.subr.bf16.mxu0 0
      %1963 = vmatpush1.bf16.msra.mxu0 0
      %1964 = vmatprep.mubr.bf16.mxu0 0
      %1965 = vmatmul.mubr.bf16.gmra.mrb[0].mxu0 %v1927
      %v1966 = vpop.f32.mrb[0].mxu0
      %v1967 = vadd.f32 0.0, %v1966
      %v1968 = vpop.f32.mrb[0].mxu0
      %v1969 = vpop.f32.mrb[0].mxu0
      %v1970 = vadd.f32 0.0, %v1969
      %v1971 = vpop.f32.mrb[0].mxu0
      %1972 = vdwg.mxu0
      %v1973 = vcombine.low %v1826, %v1920
      %v1974 = vcombine.high %v1826, %v1920
      %v1976 = vunpack.c.l.s4 1983009808
      %v1977 = vunpack.c.0.s8 %v1976
      %v1978 = vlaneseq
      %v1979 = vshrl.u32 %v1978, 7
      %v1980 = vsub.s32 %v1977, %v1979
      %v1981 = vrot.slane %v1973, %v1980
      %v1983 = vunpack.c.l.s4 1983009808
      %v1984 = vunpack.c.0.s8 %v1983
      %v1985 = vlaneseq
      %v1986 = vshrl.u32 %v1985, 7
      %v1987 = vsub.s32 %v1984, %v1986
      %v1988 = vrot.slane %v1974, %v1987
      %v1989 = vcombine.low %v1873, %v1967
      %v1990 = vcombine.high %v1873, %v1967
      %v1992 = vunpack.c.l.s4 1983009808
      %v1993 = vunpack.c.0.s8 %v1992
      %v1994 = vlaneseq
      %v1995 = vshrl.u32 %v1994, 7
      %v1996 = vsub.s32 %v1993, %v1995
      %v1997 = vrot.slane %v1989, %v1996
      %v1999 = vunpack.c.l.s4 1983009808
      %v2000 = vunpack.c.0.s8 %v1999
      %v2001 = vlaneseq
      %v2002 = vshrl.u32 %v2001, 7
      %v2003 = vsub.s32 %v2000, %v2002
      %v2004 = vrot.slane %v1990, %v2003
      %v2005 = vcombine.low %v1981, %v1997
      %v2006 = vcombine.high %v1981, %v1997
      %v2008 = vunpack.c.l.s4 1934713408
      %v2009 = vunpack.c.0.s8 %v2008
      %v2010 = vlaneseq
      %v2011 = vshrl.u32 %v2010, 7
      %v2012 = vsub.s32 %v2009, %v2011
      %v2013 = vrot.slane %v2005, %v2012
      %v2015 = vunpack.c.l.s4 1934713408
      %v2016 = vunpack.c.0.s8 %v2015
      %v2017 = vlaneseq
      %v2018 = vshrl.u32 %v2017, 7
      %v2019 = vsub.s32 %v2016, %v2018
      %v2020 = vrot.slane %v2006, %v2019
      %v2021 = vcombine.low %v1988, %v2004
      %v2022 = vcombine.high %v1988, %v2004
      %v2024 = vunpack.c.l.s4 1934713408
      %v2025 = vunpack.c.0.s8 %v2024
      %v2026 = vlaneseq
      %v2027 = vshrl.u32 %v2026, 7
      %v2028 = vsub.s32 %v2025, %v2027
      %v2029 = vrot.slane %v2021, %v2028
      %v2031 = vunpack.c.l.s4 1934713408
      %v2032 = vunpack.c.0.s8 %v2031
      %v2033 = vlaneseq
      %v2034 = vshrl.u32 %v2033, 7
      %v2035 = vsub.s32 %v2032, %v2034
      %v2036 = vrot.slane %v2022, %v2035
      %v2037 = vcombine.high %v2013, 0.0
      %v2038 = vcombine.high %v2020, 0.0
      %v2039 = vcombine.high %v2029, 0.0
      %v2040 = vcombine.high %v2036, 0.0
      %v2041 = vcombine.low %v1829, %v1923
      %v2043 = vunpack.c.l.s4 1983009808
      %v2044 = vunpack.c.0.s8 %v2043
      %v2045 = vlaneseq
      %v2046 = vshrl.u32 %v2045, 7
      %v2047 = vsub.s32 %v2044, %v2046
      %v2048 = vrot.slane %v2041, %v2047
      %v2049 = vcombine.low %v1876, %v1970
      %v2051 = vunpack.c.l.s4 1983009808
      %v2052 = vunpack.c.0.s8 %v2051
      %v2053 = vlaneseq
      %v2054 = vshrl.u32 %v2053, 7
      %v2055 = vsub.s32 %v2052, %v2054
      %v2056 = vrot.slane %v2049, %v2055
      %v2057 = vcombine.low %v2048, %v2056
      %v2059 = vunpack.c.l.s4 1934713408
      %v2060 = vunpack.c.0.s8 %v2059
      %v2061 = vlaneseq
      %v2062 = vshrl.u32 %v2061, 7
      %v2063 = vsub.s32 %v2060, %v2062
      %v2064 = vrot.slane %v2057, %v2063
      %v2065 = vcombine.low %v2013, %v2020
      %v2067 = vunpack.c.l.s4 1983009808
      %v2068 = vunpack.c.0.s8 %v2067
      %v2069 = vlaneseq
      %v2070 = vshrl.u32 %v2069, 7
      %v2071 = vsub.s32 %v2068, %v2070
      %v2072 = vrot.slane %v2065, %v2071
      %v2073 = vcombine.low %v2037, %v2038
      %v2075 = vunpack.c.l.s4 1983009808
      %v2076 = vunpack.c.0.s8 %v2075
      %v2077 = vlaneseq
      %v2078 = vshrl.u32 %v2077, 7
      %v2079 = vsub.s32 %v2076, %v2078
      %v2080 = vrot.slane %v2073, %v2079
      %v2081 = vcombine.low %v2029, %v2036
      %v2083 = vunpack.c.l.s4 1983009808
      %v2084 = vunpack.c.0.s8 %v2083
      %v2085 = vlaneseq
      %v2086 = vshrl.u32 %v2085, 7
      %v2087 = vsub.s32 %v2084, %v2086
      %v2088 = vrot.slane %v2081, %v2087
      %v2089 = vcombine.low %v2039, %v2040
      %v2091 = vunpack.c.l.s4 1983009808
      %v2092 = vunpack.c.0.s8 %v2091
      %v2093 = vlaneseq
      %v2094 = vshrl.u32 %v2093, 7
      %v2095 = vsub.s32 %v2092, %v2094
      %v2096 = vrot.slane %v2089, %v2095
      %v2097 = vcombine.low %v2072, %v2080
      %v2098 = vcombine.high %v2072, %v2080
      %v2100 = vunpack.c.l.s4 1934713408
      %v2101 = vunpack.c.0.s8 %v2100
      %v2102 = vlaneseq
      %v2103 = vshrl.u32 %v2102, 7
      %v2104 = vsub.s32 %v2101, %v2103
      %v2105 = vrot.slane %v2097, %v2104
      %v2107 = vunpack.c.l.s4 1934713408
      %v2108 = vunpack.c.0.s8 %v2107
      %v2109 = vlaneseq
      %v2110 = vshrl.u32 %v2109, 7
      %v2111 = vsub.s32 %v2108, %v2110
      %v2112 = vrot.slane %v2098, %v2111
      %v2113 = vcombine.low %v2088, %v2096
      %v2114 = vcombine.high %v2088, %v2096
      %v2116 = vunpack.c.l.s4 1934713408
      %v2117 = vunpack.c.0.s8 %v2116
      %v2118 = vlaneseq
      %v2119 = vshrl.u32 %v2118, 7
      %v2120 = vsub.s32 %v2117, %v2119
      %v2121 = vrot.slane %v2113, %v2120
      %v2123 = vunpack.c.l.s4 1934713408
      %v2124 = vunpack.c.0.s8 %v2123
      %v2125 = vlaneseq
      %v2126 = vshrl.u32 %v2125, 7
      %v2127 = vsub.s32 %v2124, %v2126
      %v2128 = vrot.slane %v2114, %v2127
      %v2129 = vcombine.low %v2105, %v2121
      %v2130 = vcombine.high %v2105, %v2121
      %v2131 = vcombine.low %v2112, %v2128
      %v2132 = vcombine.high %v2112, %v2128
      %v2134 = vunpack.c.l.s4 1983009808
      %v2135 = vunpack.c.0.s8 %v2134
      %v2136 = vlaneseq
      %v2137 = vshrl.u32 %v2136, 7
      %v2138 = vsub.s32 %v2135, %v2137
      %v2139 = vrot.slane %v2064, %v2138
      %v2140 = vcombine.high %v2064, 0.0
      %v2142 = vunpack.c.l.s4 1983009808
      %v2143 = vunpack.c.0.s8 %v2142
      %v2144 = vlaneseq
      %v2145 = vshrl.u32 %v2144, 7
      %v2146 = vsub.s32 %v2143, %v2145
      %v2147 = vrot.slane %v2140, %v2146
      %v2148 = vcombine.low %v2139, %v2147
      %v2149 = vcombine.high %v2139, %v2147
      %v2151 = vunpack.c.l.s4 1934713408
      %v2152 = vunpack.c.0.s8 %v2151
      %v2153 = vlaneseq
      %v2154 = vshrl.u32 %v2153, 7
      %v2155 = vsub.s32 %v2152, %v2154
      %v2156 = vrot.slane %v2148, %v2155
      %v2158 = vunpack.c.l.s4 1934713408
      %v2159 = vunpack.c.0.s8 %v2158
      %v2160 = vlaneseq
      %v2161 = vshrl.u32 %v2160, 7
      %v2162 = vsub.s32 %v2159, %v2161
      %v2163 = vrot.slane %v2149, %v2162
      %v2164 = vcombine.high %v2156, 0.0
      %v2165 = vcombine.high %v2163, 0.0
      %2168 = vrot.lane.b32.xlu0 %v2130, 8
      %v2169 = vpop.permute.xlu0 %2168
      %2170 = vrot.lane.b32.xlu0 %v2164, 8
      %v2171 = vpop.permute.xlu0 %2170
      %2176 = vrot.lane.b32.xlu0 %v2131, 16
      %v2177 = vpop.permute.xlu0 %2176
      %2178 = vrot.lane.b32.xlu0 %v2163, 16
      %v2179 = vpop.permute.xlu0 %2178
      %2184 = vrot.lane.b32.xlu0 %v2132, 24
      %v2185 = vpop.permute.xlu0 %2184
      %2186 = vrot.lane.b32.xlu0 %v2165, 24
      %v2187 = vpop.permute.xlu0 %2186
      %v2190 = vsel %vm1475, %v2129, %v2169
      %v2191 = vsel %vm1475, %v2156, %v2171
      %vm2192 = vcmask 130048
      %v2193 = vsel %vm2192, %v2190, %v2177
      %v2194 = vsel %vm2192, %v2191, %v2179
      %vm2195 = vcmask 195584
      %v2196 = vsel %vm2195, %v2193, %v2185
      %v2197 = vsel %vm2195, %v2194, %v2187
      %v2198 = vpack.c.bf16 %v2197, %v2196
      %v2199 = vpack.c.bf16 %v762, %v761
      %v2200 = vpack.c.bf16 %v764, %v763
      %v2202 = vlaneseq
      %v2203 = vshrl.u32 %v2202, 7
      %v2204 = vsub.s32 0, %v2203
      %v2205 = vrot.slane %v765, %v2204
      %v2208 = vsel %vm775, %v2198, 0
      %2210 = vmatprep.subr.bf16.mxu0 0
      %2211 = vmatpush1.bf16.msra.mxu0 %v2199
      %2212 = vmatprep.subr.bf16.mxu0 0
      %2213 = vmatpush1.bf16.msra.mxu0 %v2200
      %2214 = vmatprep.subr.bf16.mxu0 0
      %2215 = vmatpush1.bf16.msra.mxu0 0
      %2216 = vmatprep.subr.bf16.mxu0 0
      %2217 = vmatpush1.bf16.msra.mxu0 0
      %2218 = vmatprep.subr.bf16.mxu0 0
      %2219 = vmatpush1.bf16.msra.mxu0 0
      %2220 = vmatprep.subr.bf16.mxu0 0
      %2221 = vmatpush1.bf16.msra.mxu0 0
      %2222 = vmatprep.subr.bf16.mxu0 0
      %2223 = vmatpush1.bf16.msra.mxu0 0
      %2224 = vmatprep.subr.bf16.mxu0 0
      %2225 = vmatpush1.bf16.msra.mxu0 0
      %2226 = vmatprep.subr.bf16.mxu0 0
      %2227 = vmatpush1.bf16.msra.mxu0 0
      %2228 = vmatprep.subr.bf16.mxu0 0
      %2229 = vmatpush1.bf16.msra.mxu0 0
      %2230 = vmatprep.subr.bf16.mxu0 0
      %2231 = vmatpush1.bf16.msra.mxu0 0
      %2232 = vmatprep.subr.bf16.mxu0 0
      %2233 = vmatpush1.bf16.msra.mxu0 0
      %2234 = vmatprep.subr.bf16.mxu0 0
      %2235 = vmatpush1.bf16.msra.mxu0 0
      %2236 = vmatprep.subr.bf16.mxu0 0
      %2237 = vmatpush1.bf16.msra.mxu0 0
      %2238 = vmatprep.subr.bf16.mxu0 0
      %2239 = vmatpush1.bf16.msra.mxu0 0
      %2240 = vmatprep.subr.bf16.mxu0 0
      %2241 = vmatpush1.bf16.msra.mxu0 0
      %2242 = vmatprep.mubr.bf16.mxu0 0
      %2243 = vmatmul.mubr.bf16.gmra.mrb[0].mxu0 %v2208
      %v2244 = vpop.f32.mrb[0].mxu0
      %v2245 = vadd.f32 %v2205, %v2244
      %v2246 = vpop.f32.mrb[0].mxu0
      %v2247 = vpop.f32.mrb[0].mxu0
      %v2248 = vadd.f32 %v2205, %v2247
      %v2249 = vpop.f32.mrb[0].mxu0
      %2250 = vdwg.mxu0
      %v2251 = vadd.f32 %v751, %v2245
      %v2252 = vadd.f32 %v752, %v2248
      %v2253 = vld [vmem:[%s709] sm:$0x1]
      %v2254 = vld [vmem:[%s712] sm:$0x1]
      %v2255 = vsel %vm775, %v2251, 0.0
      %2256 = vadd.xlane.f32.xlu0 %v2255
      %v2257 = vpop.xlane.xlu0 %2256
      %vm2258 = vcmask 254976
      %v2259 = vsel %vm2258, %v2252, 0.0
      %2260 = vadd.xlane.f32.xlu0 %v2259
      %v2261 = vpop.xlane.xlu0 %2260
      %v2262 = vrcp.pop 32.0
      %v2263 = vmul.f32 %v2257, %v2262
      %v2264 = vmul.f32 %v2261, %v2262
      %v2265 = vsub.f32 %v2251, %v2263
      %v2266 = vsub.f32 %v2252, %v2264
      %v2267 = vmul.f32 %v2265, %v2265
      %v2268 = vmul.f32 %v2266, %v2266
      %v2269 = vsel %vm775, %v2267, 0.0
      %2270 = vadd.xlane.f32.xlu0 %v2269
      %v2271 = vpop.xlane.xlu0 %2270
      %v2272 = vsel %vm2258, %v2268, 0.0
      %2273 = vadd.xlane.f32.xlu0 %v2272
      %v2274 = vpop.xlane.xlu0 %2273
      %v2275 = vmul.f32 %v2271, %v2262
      %v2276 = vmul.f32 %v2274, %v2262
      %v2277 = vadd.f32 %v2275, 1e-05
      %v2278 = vadd.f32 %v2276, 1e-05
      %v2279 = vrsqrt.pop %v2277
      %v2280 = vrsqrt.pop %v2278
      %v2281 = vmul.f32 %v2265, %v2279
      %v2282 = vmul.f32 %v2266, %v2280
      %v2284 = vlaneseq
      %v2285 = vshrl.u32 %v2284, 7
      %v2286 = vsub.s32 0, %v2285
      %v2287 = vrot.slane %v2253, %v2286
      %v2289 = vmul.f32 %v2281, %v2287
      %v2290 = vmul.f32 %v2282, %v2287
      %v2292 = vlaneseq
      %v2293 = vshrl.u32 %v2292, 7
      %v2294 = vsub.s32 0, %v2293
      %v2295 = vrot.slane %v2254, %v2294
      %v2297 = vadd.f32 %v2289, %v2295
      %v2298 = vadd.f32 %v2290, %v2295
      %v2299 = vld [vmem:[%s717] sm:$0xff]
      %v2300 = vld [vmem:[%s717 + $0x8] sm:$0xff]
      %v2301 = vld [vmem:[%s717 + $0x10] sm:$0xff]
      %v2302 = vld [vmem:[%s717 + $0x18] sm:$0xff]
      %v2303 = vpack.c.bf16 %v2298, %v2297
      %v2304 = vpack.c.bf16 %v2300, %v2299
      %v2305 = vpack.c.bf16 %v2302, %v2301
      %v2306 = vld [vmem:[%s720] sm:$0x1]
      %v2308 = vlaneseq
      %v2309 = vshrl.u32 %v2308, 7
      %v2310 = vsub.s32 0, %v2309
      %v2311 = vrot.slane %v2306, %v2310
      %v2314 = vsel %vm775, %v2303, 0
      %2316 = vmatprep.subr.bf16.mxu0 0
      %2317 = vmatpush1.bf16.msra.mxu0 %v2304
      %2318 = vmatprep.subr.bf16.mxu0 0
      %2319 = vmatpush1.bf16.msra.mxu0 %v2305
      %2320 = vmatprep.subr.bf16.mxu0 0
      %2321 = vmatpush1.bf16.msra.mxu0 0
      %2322 = vmatprep.subr.bf16.mxu0 0
      %2323 = vmatpush1.bf16.msra.mxu0 0
      %2324 = vmatprep.subr.bf16.mxu0 0
      %2325 = vmatpush1.bf16.msra.mxu0 0
      %2326 = vmatprep.subr.bf16.mxu0 0
      %2327 = vmatpush1.bf16.msra.mxu0 0
      %2328 = vmatprep.subr.bf16.mxu0 0
      %2329 = vmatpush1.bf16.msra.mxu0 0
      %2330 = vmatprep.subr.bf16.mxu0 0
      %2331 = vmatpush1.bf16.msra.mxu0 0
      %2332 = vmatprep.subr.bf16.mxu0 0
      %2333 = vmatpush1.bf16.msra.mxu0 0
      %2334 = vmatprep.subr.bf16.mxu0 0
      %2335 = vmatpush1.bf16.msra.mxu0 0
      %2336 = vmatprep.subr.bf16.mxu0 0
      %2337 = vmatpush1.bf16.msra.mxu0 0
      %2338 = vmatprep.subr.bf16.mxu0 0
      %2339 = vmatpush1.bf16.msra.mxu0 0
      %2340 = vmatprep.subr.bf16.mxu0 0
      %2341 = vmatpush1.bf16.msra.mxu0 0
      %2342 = vmatprep.subr.bf16.mxu0 0
      %2343 = vmatpush1.bf16.msra.mxu0 0
      %2344 = vmatprep.subr.bf16.mxu0 0
      %2345 = vmatpush1.bf16.msra.mxu0 0
      %2346 = vmatprep.subr.bf16.mxu0 0
      %2347 = vmatpush1.bf16.msra.mxu0 0
      %2348 = vmatprep.mubr.bf16.mxu0 0
      %2349 = vmatmul.mubr.bf16.gmra.mrb[0].mxu0 %v2314
      %v2350 = vpop.f32.mrb[0].mxu0
      %v2351 = vadd.f32 %v2311, %v2350
      %v2352 = vpop.f32.mrb[0].mxu0
      %v2353 = vpop.f32.mrb[0].mxu0
      %v2354 = vadd.f32 %v2311, %v2353
      %v2355 = vpop.f32.mrb[0].mxu0
      %2356 = vdwg.mxu0
      %v2357 = vmax.f32 %v2351, 0.0
      %v2358 = vmax.f32 %v2354, 0.0
      %v2359 = vld [vmem:[%s725] sm:$0xff]
      %v2360 = vld [vmem:[%s725 + $0x8] sm:$0xff]
      %v2361 = vld [vmem:[%s725 + $0x10] sm:$0xff]
      %v2362 = vld [vmem:[%s725 + $0x18] sm:$0xff]
      %v2363 = vld [vmem:[%s725 + $0x20] sm:$0xff]
      %v2364 = vld [vmem:[%s725 + $0x28] sm:$0xff]
      %v2365 = vld [vmem:[%s725 + $0x30] sm:$0xff]
      %v2366 = vld [vmem:[%s725 + $0x38] sm:$0xff]
      %v2367 = vld [vmem:[%s725 + $0x40] sm:$0xff]
      %v2368 = vld [vmem:[%s725 + $0x48] sm:$0xff]
      %v2369 = vld [vmem:[%s725 + $0x50] sm:$0xff]
      %v2370 = vld [vmem:[%s725 + $0x58] sm:$0xff]
      %v2371 = vld [vmem:[%s725 + $0x60] sm:$0xff]
      %v2372 = vld [vmem:[%s725 + $0x68] sm:$0xff]
      %v2373 = vld [vmem:[%s725 + $0x70] sm:$0xff]
      %v2374 = vld [vmem:[%s725 + $0x78] sm:$0xff]
      %v2375 = vpack.c.bf16 %v2358, %v2357
      %v2376 = vpack.c.bf16 %v2360, %v2359
      %v2377 = vpack.c.bf16 %v2362, %v2361
      %v2378 = vpack.c.bf16 %v2364, %v2363
      %v2379 = vpack.c.bf16 %v2366, %v2365
      %v2380 = vpack.c.bf16 %v2368, %v2367
      %v2381 = vpack.c.bf16 %v2370, %v2369
      %v2382 = vpack.c.bf16 %v2372, %v2371
      %v2383 = vpack.c.bf16 %v2374, %v2373
      %v2384 = vld [vmem:[%s728] sm:$0x1]
      %v2386 = vlaneseq
      %v2387 = vshrl.u32 %v2386, 7
      %v2388 = vsub.s32 0, %v2387
      %v2389 = vrot.slane %v2384, %v2388
      %2391 = vmatprep.subr.bf16.mxu0 0
      %2392 = vmatpush1.bf16.msra.mxu0 %v2376
      %2393 = vmatprep.subr.bf16.mxu0 0
      %2394 = vmatpush1.bf16.msra.mxu0 %v2377
      %2395 = vmatprep.subr.bf16.mxu0 0
      %2396 = vmatpush1.bf16.msra.mxu0 %v2378
      %2397 = vmatprep.subr.bf16.mxu0 0
      %2398 = vmatpush1.bf16.msra.mxu0 %v2379
      %2399 = vmatprep.subr.bf16.mxu0 0
      %2400 = vmatpush1.bf16.msra.mxu0 %v2380
      %2401 = vmatprep.subr.bf16.mxu0 0
      %2402 = vmatpush1.bf16.msra.mxu0 %v2381
      %2403 = vmatprep.subr.bf16.mxu0 0
      %2404 = vmatpush1.bf16.msra.mxu0 %v2382
      %2405 = vmatprep.subr.bf16.mxu0 0
      %2406 = vmatpush1.bf16.msra.mxu0 %v2383
      %2407 = vmatprep.subr.bf16.mxu0 0
      %2408 = vmatpush1.bf16.msra.mxu0 0
      %2409 = vmatprep.subr.bf16.mxu0 0
      %2410 = vmatpush1.bf16.msra.mxu0 0
      %2411 = vmatprep.subr.bf16.mxu0 0
      %2412 = vmatpush1.bf16.msra.mxu0 0
      %2413 = vmatprep.subr.bf16.mxu0 0
      %2414 = vmatpush1.bf16.msra.mxu0 0
      %2415 = vmatprep.subr.bf16.mxu0 0
      %2416 = vmatpush1.bf16.msra.mxu0 0
      %2417 = vmatprep.subr.bf16.mxu0 0
      %2418 = vmatpush1.bf16.msra.mxu0 0
      %2419 = vmatprep.subr.bf16.mxu0 0
      %2420 = vmatpush1.bf16.msra.mxu0 0
      %2421 = vmatprep.subr.bf16.mxu0 0
      %2422 = vmatpush1.bf16.msra.mxu0 0
      %2423 = vmatprep.mubr.bf16.mxu0 0
      %2424 = vmatmul.mubr.bf16.gmra.mrb[0].mxu0 %v2375
      %v2425 = vpop.f32.mrb[0].mxu0
      %v2426 = vadd.f32 %v2389, %v2425
      %v2427 = vpop.f32.mrb[0].mxu0
      %v2428 = vpop.f32.mrb[0].mxu0
      %v2429 = vadd.f32 %v2389, %v2428
      %v2430 = vpop.f32.mrb[0].mxu0
      %2431 = vdwg.mxu0
      %v2432 = vadd.f32 %v2297, %v2426
      %v2433 = vadd.f32 %v2298, %v2429
      %v2434 = vld [vmem:[%s731] sm:$0x1]
      %v2435 = vld [vmem:[%s734] sm:$0x1]
      %v2436 = vsel %vm775, %v2432, 0.0
      %2437 = vadd.xlane.f32.xlu0 %v2436
      %v2438 = vpop.xlane.xlu0 %2437
      %v2439 = vsel %vm2258, %v2433, 0.0
      %2440 = vadd.xlane.f32.xlu0 %v2439
      %v2441 = vpop.xlane.xlu0 %2440
      %v2442 = vmul.f32 %v2438, %v2262
      %v2443 = vmul.f32 %v2441, %v2262
      %v2444 = vsub.f32 %v2432, %v2442
      %v2445 = vsub.f32 %v2433, %v2443
      %v2446 = vmul.f32 %v2444, %v2444
      %v2447 = vmul.f32 %v2445, %v2445
      %v2448 = vsel %vm775, %v2446, 0.0
      %2449 = vadd.xlane.f32.xlu0 %v2448
      %v2450 = vpop.xlane.xlu0 %2449
      %v2451 = vsel %vm2258, %v2447, 0.0
      %2452 = vadd.xlane.f32.xlu0 %v2451
      %v2453 = vpop.xlane.xlu0 %2452
      %v2454 = vmul.f32 %v2450, %v2262
      %v2455 = vmul.f32 %v2453, %v2262
      %v2456 = vadd.f32 %v2454, 1e-05
      %v2457 = vadd.f32 %v2455, 1e-05
      %v2458 = vrsqrt.pop %v2456
      %v2459 = vrsqrt.pop %v2457
      %v2460 = vmul.f32 %v2444, %v2458
      %v2461 = vmul.f32 %v2445, %v2459
      %v2463 = vlaneseq
      %v2464 = vshrl.u32 %v2463, 7
      %v2465 = vsub.s32 0, %v2464
      %v2466 = vrot.slane %v2434, %v2465
      %v2468 = vmul.f32 %v2460, %v2466
      %v2469 = vmul.f32 %v2461, %v2466
      %v2471 = vlaneseq
      %v2472 = vshrl.u32 %v2471, 7
      %v2473 = vsub.s32 0, %v2472
      %v2474 = vrot.slane %v2435, %v2473
      %v2476 = vadd.f32 %v2468, %v2474
      %v2477 = vadd.f32 %v2469, %v2474
      %2478 = vst.msk [vmem:[#allocation2] sm:$0xff] %vm775, %v2476
      %2479 = vst.msk [vmem:[#allocation2 + $0x8] sm:$0x3] %vm2258, %v2477
      %p2480 = scmp.eq.s32.totalorder %s32, 1
      // Predicated region
      $region89: #{transformer_forward.2} parent=83 // pred_check
        %p2481 = pneg %p2480
      $region90: #{transformer_forward.2} parent=83 // pred_check_branch
        %2483 = sbr.rel (%p2481) target = $region92
      $region91: #{transformer_forward.2} parent=83 // pred_region
        %v2484 = vld [vmem:[%s14] sm:$0x1]
        %v2485 = vld [vmem:[%s15] sm:$0x1]
        %v2486 = vsel %vm775, %v2476, 0.0
        %2487 = vadd.xlane.f32.xlu0 %v2486
        %v2488 = vpop.xlane.xlu0 %2487
        %v2489 = vsel %vm2258, %v2477, 0.0
        %2490 = vadd.xlane.f32.xlu0 %v2489
        %v2491 = vpop.xlane.xlu0 %2490
        %v2492 = vmul.f32 %v2488, %v2262
        %v2493 = vmul.f32 %v2491, %v2262
        %v2494 = vsub.f32 %v2476, %v2492
        %v2495 = vsub.f32 %v2477, %v2493
        %v2496 = vmul.f32 %v2494, %v2494
        %v2497 = vmul.f32 %v2495, %v2495
        %v2498 = vsel %vm775, %v2496, 0.0
        %2499 = vadd.xlane.f32.xlu0 %v2498
        %v2500 = vpop.xlane.xlu0 %2499
        %v2501 = vsel %vm2258, %v2497, 0.0
        %2502 = vadd.xlane.f32.xlu0 %v2501
        %v2503 = vpop.xlane.xlu0 %2502
        %v2504 = vmul.f32 %v2500, %v2262
        %v2505 = vmul.f32 %v2503, %v2262
        %v2506 = vadd.f32 %v2504, 1e-05
        %v2507 = vadd.f32 %v2505, 1e-05
        %v2508 = vrsqrt.pop %v2506
        %v2509 = vrsqrt.pop %v2507
        %v2510 = vmul.f32 %v2494, %v2508
        %v2511 = vmul.f32 %v2495, %v2509
        %v2513 = vlaneseq
        %v2514 = vshrl.u32 %v2513, 7
        %v2515 = vsub.s32 0, %v2514
        %v2516 = vrot.slane %v2484, %v2515
        %v2518 = vmul.f32 %v2510, %v2516
        %v2519 = vmul.f32 %v2511, %v2516
        %v2521 = vlaneseq
        %v2522 = vshrl.u32 %v2521, 7
        %v2523 = vsub.s32 0, %v2522
        %v2524 = vrot.slane %v2485, %v2523
        %v2526 = vadd.f32 %v2518, %v2524
        %v2527 = vadd.f32 %v2519, %v2524
        %2528 = vst.msk [vmem:[%s739] sm:$0xff] %vm775, %v2526
        %2529 = vst.msk [vmem:[%s739 + $0x8] sm:$0x3] %vm2258, %v2527
      $region92: #{transformer_forward.2} parent=83 // pred_fallthru
        _
      %p2530 = scmp.lt.s32.totalorder %s31, 1
      %s2531 = scalar_select %p2530, %s31, 1
      %s2532 = smul.addr %s2531, 2
      %s2533 = smul.addr %s2532, 8
      %s2534 = scalar_lea.vmem %s16, %s2533
      // Predicated region
      $region93: #{transformer_forward.2} parent=83 // pred_check
        %p2535 = pneg %p463
      $region94: #{transformer_forward.2} parent=83 // pred_check_branch
        %2537 = sbr.rel (%p2535) target = $region96
      $region95: #{transformer_forward.2} parent=83 // pred_region
        _
      $region96: #{transformer_forward.2} parent=83 // pred_fallthru
        _
    $region84: #{transformer_forward.2} parent=5 // pred_fallthru
      _
    %p2538 = scmp.le.s32.totalorder 2, %s22
    // Predicated region
    $region97: #{transformer_forward.2} parent=5 // pred_check
      %p2539 = pneg %p2538
    $region98: #{transformer_forward.2} parent=5 // pred_check_branch
      %2541 = sbr.rel (%p2539) target = $region100
    $region99: #{transformer_forward.2} parent=5 // pred_region
      %s2542 = ssub.s32 %s22, 2
      // Predicated region
      $region101: #{transformer_forward.2} parent=99 // pred_check
        %p2543 = pneg %p469
      $region102: #{transformer_forward.2} parent=99 // pred_check_branch
        %2545 = sbr.rel (%p2543) target = $region104
      $region103: #{transformer_forward.2} parent=99 // pred_region
        %p2546 = scmp.lt.s32.totalorder %s33, 1
        %s2547 = scalar_select %p2546, %s33, 1
        %s2548 = smul.addr %s2547, 2
        %s2549 = smul.addr %s2548, 8
        %s2550 = scalar_lea.vmem %s16, %s2549
      $region104: #{transformer_forward.2} parent=99 // pred_fallthru
        _
    $region100: #{transformer_forward.2} parent=5 // pred_fallthru
      _
  $region6: #{transformer_forward.2} parent=0 // loop_footer
    %s26 = sadd.s32 1, %s22
  $region7: #{transformer_forward.2} parent=0 // loop_footer_branch
    %21 = sbr.rel target = $region3
  $region8: #{transformer_forward.2} parent=0 // loop_exit
    _

// kernel: transformer_forward.3
$region0: #{transformer_forward.3}
  #allocation0 [shape = 'u32[]', space=smem, size = 0x4, offset = 0x4, fixed_abs, tag = 'smem constant byte address 0x4 - core index']
  #allocation1 [shape = 'u32[144,128]{1,0:T(1,128)}', space=vmem, size = 0x12000, scoped, tag = 'internal scratch']
  #allocation2 [shape = 'f32[8,32]{1,0:T(8,128)}', space=vmem, size = 0x1000, scoped, tag = 'scratch operand']
  %s0 = inlined_call_operand.vmem [shape: f32[2,8,32], index: 0, kind: input, shape index: {}]
  %s1 = inlined_call_operand.vmem [shape: f32[2,10,32], index: 1, kind: input, shape index: {}]
  %s2 = inlined_call_operand.vmem [shape: f32[2,32,96], index: 2, kind: input, shape index: {}]
  %s3 = inlined_call_operand.vmem [shape: f32[2,1,96], index: 3, kind: input, shape index: {}]
  %s4 = inlined_call_operand.vmem [shape: f32[2,32,32], index: 4, kind: input, shape index: {}]
  %s5 = inlined_call_operand.vmem [shape: f32[2,1,32], index: 5, kind: input, shape index: {}]
  %s6 = inlined_call_operand.vmem [shape: f32[2,1,32], index: 6, kind: input, shape index: {}]
  %s7 = inlined_call_operand.vmem [shape: f32[2,1,32], index: 7, kind: input, shape index: {}]
  %s8 = inlined_call_operand.vmem [shape: f32[2,32,96], index: 8, kind: input, shape index: {}]
  %s9 = inlined_call_operand.vmem [shape: f32[2,1,96], index: 9, kind: input, shape index: {}]
  %s10 = inlined_call_operand.vmem [shape: f32[2,32,32], index: 10, kind: input, shape index: {}]
  %s11 = inlined_call_operand.vmem [shape: f32[2,1,32], index: 11, kind: input, shape index: {}]
  %s12 = inlined_call_operand.vmem [shape: f32[2,1,32], index: 12, kind: input, shape index: {}]
  %s13 = inlined_call_operand.vmem [shape: f32[2,1,32], index: 13, kind: input, shape index: {}]
  %s14 = inlined_call_operand.vmem [shape: f32[2,32,128], index: 14, kind: input, shape index: {}]
  %s15 = inlined_call_operand.vmem [shape: f32[2,1,128], index: 15, kind: input, shape index: {}]
  %s16 = inlined_call_operand.vmem [shape: f32[2,128,32], index: 16, kind: input, shape index: {}]
  %s17 = inlined_call_operand.vmem [shape: f32[2,1,32], index: 17, kind: input, shape index: {}]
  %s18 = inlined_call_operand.vmem [shape: f32[2,1,32], index: 18, kind: input, shape index: {}]
  %s19 = inlined_call_operand.vmem [shape: f32[2,1,32], index: 19, kind: input, shape index: {}]
  %s20 = inlined_call_operand.vmem [shape: f32[1,32], index: 20, kind: input, shape index: {}]
  %s21 = inlined_call_operand.vmem [shape: f32[1,32], index: 21, kind: input, shape index: {}]
  %s22 = inlined_call_operand.vmem [shape: f32[32,128], index: 22, kind: input, shape index: {}]
  %s23 = inlined_call_operand.vmem [shape: f32[1,128], index: 23, kind: input, shape index: {}]
  %s24 = inlined_call_operand.vmem [shape: f32[2,8,128], index: 24, kind: output, shape index: {}]
  %s25 = sld [smem:[#allocation0]]
  $region137: #{transformer_forward.3} parent=0
    _
  %s27 = ssub.s32 1, %s25
  %s28 = scalar_select 0, %s27, %s25
  loop: start=0, step=1, limit=6
  $region2: #{transformer_forward.3} parent=0 // loop_pre_header
    _
  $region3: #{transformer_forward.3} parent=0 // loop_header
    %s30 = sphi 0, %s34
    %p31 = scmp.ge.s32.totalorder %s30, 6
    %s37 = sphi 0, %s49
    %s38 = sphi 0, %s45
    %s39 = sphi 0, %s37
    %s40 = sphi 0, %s38
    %s41 = sphi 0, %s39
    %s42 = sphi 0, %s40
    %s52 = sphi 0, %s54
    %s55 = sphi 0, %s52
    %s56 = sphi 0, %s55
    %s72 = sphi 0, %s56
    %s78 = sphi 0, %s80
    %s81 = sphi 0, %s78
    %s82 = sphi 0, %s81
    %s98 = sphi 0, %s82
    %s104 = sphi 0, %s106
    %s107 = sphi 0, %s104
    %s108 = sphi 0, %s107
    %s124 = sphi 0, %s108
    %s130 = sphi 0, %s132
    %s133 = sphi 0, %s130
    %s134 = sphi 0, %s133
    %s150 = sphi 0, %s134
    %s156 = sphi 0, %s158
    %s159 = sphi 0, %s156
    %s160 = sphi 0, %s159
    %s176 = sphi 0, %s160
    %s182 = sphi 0, %s184
    %s185 = sphi 0, %s182
    %s186 = sphi 0, %s185
    %s202 = sphi 0, %s186
    %s208 = sphi 0, %s210
    %s211 = sphi 0, %s208
    %s212 = sphi 0, %s211
    %s228 = sphi 0, %s212
    %s234 = sphi 0, %s236
    %s237 = sphi 0, %s234
    %s238 = sphi 0, %s237
    %s254 = sphi 0, %s238
    %s260 = sphi 0, %s262
    %s263 = sphi 0, %s260
    %s264 = sphi 0, %s263
    %s280 = sphi 0, %s264
    %s286 = sphi 0, %s288
    %s289 = sphi 0, %s286
    %s290 = sphi 0, %s289
    %s306 = sphi 0, %s290
    %s312 = sphi 0, %s314
    %s315 = sphi 0, %s312
    %s316 = sphi 0, %s315
    %s332 = sphi 0, %s316
    %s338 = sphi 0, %s340
    %s341 = sphi 0, %s338
    %s342 = sphi 0, %s341
    %s358 = sphi 0, %s342
    %s364 = sphi 0, %s366
    %s367 = sphi 0, %s364
    %s368 = sphi 0, %s367
    %s384 = sphi 0, %s368
    %s390 = sphi 0, %s392
    %s393 = sphi 0, %s390
    %s394 = sphi 0, %s393
    %s410 = sphi 0, %s394
    %s416 = sphi 0, %s418
    %s419 = sphi 0, %s416
    %s420 = sphi 0, %s419
    %s436 = sphi 0, %s420
    %s442 = sphi 0, %s444
    %s445 = sphi 0, %s442
    %s446 = sphi 0, %s445
    %s462 = sphi 0, %s446
    %s468 = sphi 0, %s470
    %s471 = sphi 0, %s468
    %s472 = sphi 0, %s471
    %s488 = sphi 0, %s472
    %s494 = sphi 0, %s496
    %s497 = sphi 0, %s494
    %s498 = sphi 0, %s497
    %s514 = sphi 0, %s498
    %s520 = sphi 0, %s522
    %s523 = sphi 0, %s520
    %s524 = sphi 0, %s523
    %s540 = sphi 0, %s524
    %s546 = sphi 0, %s548
    %s549 = sphi 0, %s546
    %s550 = sphi 0, %s549
    %s566 = sphi 0, %s550
    %s570 = sphi 0, %s570
    %s572 = sphi 0, %s570
    %s573 = sphi 0, %s572
    %s587 = sphi 0, %s573
    %s591 = sphi 0, %s591
    %s593 = sphi 0, %s591
    %s594 = sphi 0, %s593
    %s608 = sphi 0, %s594
    %s612 = sphi 0, %s612
    %s614 = sphi 0, %s612
    %s615 = sphi 0, %s614
    %s629 = sphi 0, %s615
    %s633 = sphi 0, %s633
    %s635 = sphi 0, %s633
    %s636 = sphi 0, %s635
    %s650 = sphi 0, %s636
    %s656 = sphi 0, %s658
    %s659 = sphi 0, %s656
    %s660 = sphi 0, %s659
    %s676 = sphi 0, %s660
  $region4: #{transformer_forward.3} parent=0 // loop_header_branch
    %33 = sbr.rel (%p31) target = $region8
  $region5: #{transformer_forward.3} parent=0 // loop_body
    %s35 = ssub.s32 %s30, 1
    %s36 = ssub.s32 %s30, 2
    %s43 = sadd.s32 1, %s38
    %p44 = scmp.ge.s32.totalorder %s43, 2
    %s45 = scalar_select %p44, 0, %s43
    %s46 = sadd.s32 1, %s37
    %s47 = scalar_select %p44, %s46, %s37
    %p48 = scmp.ge.s32.totalorder %s47, 2
    %s49 = scalar_select %p48, 0, %s47
    %s50 = ssub.s32 %s37, %s49
    %p51 = scmp.eq.s32.totalorder %s50, 0
    %s53 = sadd.s32 %s52, 1
    %s54 = scalar_select %p51, %s52, %s53
    %p57 = pneg %p51
    %p58 = scmp.eq.s32.totalorder %s30, 3
    %p59 = por %p57, %p58
    %p60 = scmp.ne.s32.totalorder %s52, %s55
    %p61 = scmp.eq.s32.totalorder %s30, 0
    %p62 = por %p60, %p61
    %p63 = scmp.ne.s32.totalorder %s52, %s55
    %p64 = scmp.eq.s32.totalorder %s35, 3
    %p65 = por %p63, %p64
    %p66 = scmp.ne.s32.totalorder %s55, %s56
    %p67 = scmp.eq.s32.totalorder %s35, 0
    %p68 = por %p66, %p67
    %p69 = scmp.ne.s32.totalorder %s55, %s56
    %p70 = scmp.eq.s32.totalorder %s36, 3
    %p71 = por %p69, %p70
    %p73 = scmp.ne.s32.totalorder %s56, %s72
    %p74 = scmp.eq.s32.totalorder %s36, 0
    %p75 = por %p73, %p74
    %s76 = ssub.s32 %s37, %s49
    %p77 = scmp.eq.s32.totalorder %s76, 0
    %s79 = sadd.s32 %s78, 1
    %s80 = scalar_select %p77, %s78, %s79
    %p83 = pneg %p77
    %p84 = scmp.eq.s32.totalorder %s30, 3
    %p85 = por %p83, %p84
    %p86 = scmp.ne.s32.totalorder %s78, %s81
    %p87 = scmp.eq.s32.totalorder %s30, 0
    %p88 = por %p86, %p87
    %p89 = scmp.ne.s32.totalorder %s78, %s81
    %p90 = scmp.eq.s32.totalorder %s35, 3
    %p91 = por %p89, %p90
    %p92 = scmp.ne.s32.totalorder %s81, %s82
    %p93 = scmp.eq.s32.totalorder %s35, 0
    %p94 = por %p92, %p93
    %p95 = scmp.ne.s32.totalorder %s81, %s82
    %p96 = scmp.eq.s32.totalorder %s36, 3
    %p97 = por %p95, %p96
    %p99 = scmp.ne.s32.totalorder %s82, %s98
    %p100 = scmp.eq.s32.totalorder %s36, 0
    %p101 = por %p99, %p100
    %s102 = ssub.s32 %s38, %s45
    %p103 = scmp.eq.s32.totalorder %s102, 0
    %s105 = sadd.s32 %s104, 1
    %s106 = scalar_select %p103, %s104, %s105
    %p109 = pneg %p103
    %p110 = scmp.eq.s32.totalorder %s30, 3
    %p111 = por %p109, %p110
    %p112 = scmp.ne.s32.totalorder %s104, %s107
    %p113 = scmp.eq.s32.totalorder %s30, 0
    %p114 = por %p112, %p113
    %p115 = scmp.ne.s32.totalorder %s104, %s107
    %p116 = scmp.eq.s32.totalorder %s35, 3
    %p117 = por %p115, %p116
    %p118 = scmp.ne.s32.totalorder %s107, %s108
    %p119 = scmp.eq.s32.totalorder %s35, 0
    %p120 = por %p118, %p119
    %p121 = scmp.ne.s32.totalorder %s107, %s108
    %p122 = scmp.eq.s32.totalorder %s36, 3
    %p123 = por %p121, %p122
    %p125 = scmp.ne.s32.totalorder %s108, %s124
    %p126 = scmp.eq.s32.totalorder %s36, 0
    %p127 = por %p125, %p126
    %s128 = ssub.s32 %s38, %s45
    %p129 = scmp.eq.s32.totalorder %s128, 0
    %s131 = sadd.s32 %s130, 1
    %s132 = scalar_select %p129, %s130, %s131
    %p135 = pneg %p129
    %p136 = scmp.eq.s32.totalorder %s30, 3
    %p137 = por %p135, %p136
    %p138 = scmp.ne.s32.totalorder %s130, %s133
    %p139 = scmp.eq.s32.totalorder %s30, 0
    %p140 = por %p138, %p139
    %p141 = scmp.ne.s32.totalorder %s130, %s133
    %p142 = scmp.eq.s32.totalorder %s35, 3
    %p143 = por %p141, %p142
    %p144 = scmp.ne.s32.totalorder %s133, %s134
    %p145 = scmp.eq.s32.totalorder %s35, 0
    %p146 = por %p144, %p145
    %p147 = scmp.ne.s32.totalorder %s133, %s134
    %p148 = scmp.eq.s32.totalorder %s36, 3
    %p149 = por %p147, %p148
    %p151 = scmp.ne.s32.totalorder %s134, %s150
    %p152 = scmp.eq.s32.totalorder %s36, 0
    %p153 = por %p151, %p152
    %s154 = ssub.s32 %s38, %s45
    %p155 = scmp.eq.s32.totalorder %s154, 0
    %s157 = sadd.s32 %s156, 1
    %s158 = scalar_select %p155, %s156, %s157
    %p161 = pneg %p155
    %p162 = scmp.eq.s32.totalorder %s30, 3
    %p163 = por %p161, %p162
    %p164 = scmp.ne.s32.totalorder %s156, %s159
    %p165 = scmp.eq.s32.totalorder %s30, 0
    %p166 = por %p164, %p165
    %p167 = scmp.ne.s32.totalorder %s156, %s159
    %p168 = scmp.eq.s32.totalorder %s35, 3
    %p169 = por %p167, %p168
    %p170 = scmp.ne.s32.totalorder %s159, %s160
    %p171 = scmp.eq.s32.totalorder %s35, 0
    %p172 = por %p170, %p171
    %p173 = scmp.ne.s32.totalorder %s159, %s160
    %p174 = scmp.eq.s32.totalorder %s36, 3
    %p175 = por %p173, %p174
    %p177 = scmp.ne.s32.totalorder %s160, %s176
    %p178 = scmp.eq.s32.totalorder %s36, 0
    %p179 = por %p177, %p178
    %s180 = ssub.s32 %s38, %s45
    %p181 = scmp.eq.s32.totalorder %s180, 0
    %s183 = sadd.s32 %s182, 1
    %s184 = scalar_select %p181, %s182, %s183
    %p187 = pneg %p181
    %p188 = scmp.eq.s32.totalorder %s30, 3
    %p189 = por %p187, %p188
    %p190 = scmp.ne.s32.totalorder %s182, %s185
    %p191 = scmp.eq.s32.totalorder %s30, 0
    %p192 = por %p190, %p191
    %p193 = scmp.ne.s32.totalorder %s182, %s185
    %p194 = scmp.eq.s32.totalorder %s35, 3
    %p195 = por %p193, %p194
    %p196 = scmp.ne.s32.totalorder %s185, %s186
    %p197 = scmp.eq.s32.totalorder %s35, 0
    %p198 = por %p196, %p197
    %p199 = scmp.ne.s32.totalorder %s185, %s186
    %p200 = scmp.eq.s32.totalorder %s36, 3
    %p201 = por %p199, %p200
    %p203 = scmp.ne.s32.totalorder %s186, %s202
    %p204 = scmp.eq.s32.totalorder %s36, 0
    %p205 = por %p203, %p204
    %s206 = ssub.s32 %s38, %s45
    %p207 = scmp.eq.s32.totalorder %s206, 0
    %s209 = sadd.s32 %s208, 1
    %s210 = scalar_select %p207, %s208, %s209
    %p213 = pneg %p207
    %p214 = scmp.eq.s32.totalorder %s30, 3
    %p215 = por %p213, %p214
    %p216 = scmp.ne.s32.totalorder %s208, %s211
    %p217 = scmp.eq.s32.totalorder %s30, 0
    %p218 = por %p216, %p217
    %p219 = scmp.ne.s32.totalorder %s208, %s211
    %p220 = scmp.eq.s32.totalorder %s35, 3
    %p221 = por %p219, %p220
    %p222 = scmp.ne.s32.totalorder %s211, %s212
    %p223 = scmp.eq.s32.totalorder %s35, 0
    %p224 = por %p222, %p223
    %p225 = scmp.ne.s32.totalorder %s211, %s212
    %p226 = scmp.eq.s32.totalorder %s36, 3
    %p227 = por %p225, %p226
    %p229 = scmp.ne.s32.totalorder %s212, %s228
    %p230 = scmp.eq.s32.totalorder %s36, 0
    %p231 = por %p229, %p230
    %s232 = ssub.s32 %s38, %s45
    %p233 = scmp.eq.s32.totalorder %s232, 0
    %s235 = sadd.s32 %s234, 1
    %s236 = scalar_select %p233, %s234, %s235
    %p239 = pneg %p233
    %p240 = scmp.eq.s32.totalorder %s30, 3
    %p241 = por %p239, %p240
    %p242 = scmp.ne.s32.totalorder %s234, %s237
    %p243 = scmp.eq.s32.totalorder %s30, 0
    %p244 = por %p242, %p243
    %p245 = scmp.ne.s32.totalorder %s234, %s237
    %p246 = scmp.eq.s32.totalorder %s35, 3
    %p247 = por %p245, %p246
    %p248 = scmp.ne.s32.totalorder %s237, %s238
    %p249 = scmp.eq.s32.totalorder %s35, 0
    %p250 = por %p248, %p249
    %p251 = scmp.ne.s32.totalorder %s237, %s238
    %p252 = scmp.eq.s32.totalorder %s36, 3
    %p253 = por %p251, %p252
    %p255 = scmp.ne.s32.totalorder %s238, %s254
    %p256 = scmp.eq.s32.totalorder %s36, 0
    %p257 = por %p255, %p256
    %s258 = ssub.s32 %s38, %s45
    %p259 = scmp.eq.s32.totalorder %s258, 0
    %s261 = sadd.s32 %s260, 1
    %s262 = scalar_select %p259, %s260, %s261
    %p265 = pneg %p259
    %p266 = scmp.eq.s32.totalorder %s30, 3
    %p267 = por %p265, %p266
    %p268 = scmp.ne.s32.totalorder %s260, %s263
    %p269 = scmp.eq.s32.totalorder %s30, 0
    %p270 = por %p268, %p269
    %p271 = scmp.ne.s32.totalorder %s260, %s263
    %p272 = scmp.eq.s32.totalorder %s35, 3
    %p273 = por %p271, %p272
    %p274 = scmp.ne.s32.totalorder %s263, %s264
    %p275 = scmp.eq.s32.totalorder %s35, 0
    %p276 = por %p274, %p275
    %p277 = scmp.ne.s32.totalorder %s263, %s264
    %p278 = scmp.eq.s32.totalorder %s36, 3
    %p279 = por %p277, %p278
    %p281 = scmp.ne.s32.totalorder %s264, %s280
    %p282 = scmp.eq.s32.totalorder %s36, 0
    %p283 = por %p281, %p282
    %s284 = ssub.s32 %s38, %s45
    %p285 = scmp.eq.s32.totalorder %s284, 0
    %s287 = sadd.s32 %s286, 1
    %s288 = scalar_select %p285, %s286, %s287
    %p291 = pneg %p285
    %p292 = scmp.eq.s32.totalorder %s30, 3
    %p293 = por %p291, %p292
    %p294 = scmp.ne.s32.totalorder %s286, %s289
    %p295 = scmp.eq.s32.totalorder %s30, 0
    %p296 = por %p294, %p295
    %p297 = scmp.ne.s32.totalorder %s286, %s289
    %p298 = scmp.eq.s32.totalorder %s35, 3
    %p299 = por %p297, %p298
    %p300 = scmp.ne.s32.totalorder %s289, %s290
    %p301 = scmp.eq.s32.totalorder %s35, 0
    %p302 = por %p300, %p301
    %p303 = scmp.ne.s32.totalorder %s289, %s290
    %p304 = scmp.eq.s32.totalorder %s36, 3
    %p305 = por %p303, %p304
    %p307 = scmp.ne.s32.totalorder %s290, %s306
    %p308 = scmp.eq.s32.totalorder %s36, 0
    %p309 = por %p307, %p308
    %s310 = ssub.s32 %s38, %s45
    %p311 = scmp.eq.s32.totalorder %s310, 0
    %s313 = sadd.s32 %s312, 1
    %s314 = scalar_select %p311, %s312, %s313
    %p317 = pneg %p311
    %p318 = scmp.eq.s32.totalorder %s30, 3
    %p319 = por %p317, %p318
    %p320 = scmp.ne.s32.totalorder %s312, %s315
    %p321 = scmp.eq.s32.totalorder %s30, 0
    %p322 = por %p320, %p321
    %p323 = scmp.ne.s32.totalorder %s312, %s315
    %p324 = scmp.eq.s32.totalorder %s35, 3
    %p325 = por %p323, %p324
    %p326 = scmp.ne.s32.totalorder %s315, %s316
    %p327 = scmp.eq.s32.totalorder %s35, 0
    %p328 = por %p326, %p327
    %p329 = scmp.ne.s32.totalorder %s315, %s316
    %p330 = scmp.eq.s32.totalorder %s36, 3
    %p331 = por %p329, %p330
    %p333 = scmp.ne.s32.totalorder %s316, %s332
    %p334 = scmp.eq.s32.totalorder %s36, 0
    %p335 = por %p333, %p334
    %s336 = ssub.s32 %s38, %s45
    %p337 = scmp.eq.s32.totalorder %s336, 0
    %s339 = sadd.s32 %s338, 1
    %s340 = scalar_select %p337, %s338, %s339
    %p343 = pneg %p337
    %p344 = scmp.eq.s32.totalorder %s30, 3
    %p345 = por %p343, %p344
    %p346 = scmp.ne.s32.totalorder %s338, %s341
    %p347 = scmp.eq.s32.totalorder %s30, 0
    %p348 = por %p346, %p347
    %p349 = scmp.ne.s32.totalorder %s338, %s341
    %p350 = scmp.eq.s32.totalorder %s35, 3
    %p351 = por %p349, %p350
    %p352 = scmp.ne.s32.totalorder %s341, %s342
    %p353 = scmp.eq.s32.totalorder %s35, 0
    %p354 = por %p352, %p353
    %p355 = scmp.ne.s32.totalorder %s341, %s342
    %p356 = scmp.eq.s32.totalorder %s36, 3
    %p357 = por %p355, %p356
    %p359 = scmp.ne.s32.totalorder %s342, %s358
    %p360 = scmp.eq.s32.totalorder %s36, 0
    %p361 = por %p359, %p360
    %s362 = ssub.s32 %s38, %s45
    %p363 = scmp.eq.s32.totalorder %s362, 0
    %s365 = sadd.s32 %s364, 1
    %s366 = scalar_select %p363, %s364, %s365
    %p369 = pneg %p363
    %p370 = scmp.eq.s32.totalorder %s30, 3
    %p371 = por %p369, %p370
    %p372 = scmp.ne.s32.totalorder %s364, %s367
    %p373 = scmp.eq.s32.totalorder %s30, 0
    %p374 = por %p372, %p373
    %p375 = scmp.ne.s32.totalorder %s364, %s367
    %p376 = scmp.eq.s32.totalorder %s35, 3
    %p377 = por %p375, %p376
    %p378 = scmp.ne.s32.totalorder %s367, %s368
    %p379 = scmp.eq.s32.totalorder %s35, 0
    %p380 = por %p378, %p379
    %p381 = scmp.ne.s32.totalorder %s367, %s368
    %p382 = scmp.eq.s32.totalorder %s36, 3
    %p383 = por %p381, %p382
    %p385 = scmp.ne.s32.totalorder %s368, %s384
    %p386 = scmp.eq.s32.totalorder %s36, 0
    %p387 = por %p385, %p386
    %s388 = ssub.s32 %s38, %s45
    %p389 = scmp.eq.s32.totalorder %s388, 0
    %s391 = sadd.s32 %s390, 1
    %s392 = scalar_select %p389, %s390, %s391
    %p395 = pneg %p389
    %p396 = scmp.eq.s32.totalorder %s30, 3
    %p397 = por %p395, %p396
    %p398 = scmp.ne.s32.totalorder %s390, %s393
    %p399 = scmp.eq.s32.totalorder %s30, 0
    %p400 = por %p398, %p399
    %p401 = scmp.ne.s32.totalorder %s390, %s393
    %p402 = scmp.eq.s32.totalorder %s35, 3
    %p403 = por %p401, %p402
    %p404 = scmp.ne.s32.totalorder %s393, %s394
    %p405 = scmp.eq.s32.totalorder %s35, 0
    %p406 = por %p404, %p405
    %p407 = scmp.ne.s32.totalorder %s393, %s394
    %p408 = scmp.eq.s32.totalorder %s36, 3
    %p409 = por %p407, %p408
    %p411 = scmp.ne.s32.totalorder %s394, %s410
    %p412 = scmp.eq.s32.totalorder %s36, 0
    %p413 = por %p411, %p412
    %s414 = ssub.s32 %s38, %s45
    %p415 = scmp.eq.s32.totalorder %s414, 0
    %s417 = sadd.s32 %s416, 1
    %s418 = scalar_select %p415, %s416, %s417
    %p421 = pneg %p415
    %p422 = scmp.eq.s32.totalorder %s30, 3
    %p423 = por %p421, %p422
    %p424 = scmp.ne.s32.totalorder %s416, %s419
    %p425 = scmp.eq.s32.totalorder %s30, 0
    %p426 = por %p424, %p425
    %p427 = scmp.ne.s32.totalorder %s416, %s419
    %p428 = scmp.eq.s32.totalorder %s35, 3
    %p429 = por %p427, %p428
    %p430 = scmp.ne.s32.totalorder %s419, %s420
    %p431 = scmp.eq.s32.totalorder %s35, 0
    %p432 = por %p430, %p431
    %p433 = scmp.ne.s32.totalorder %s419, %s420
    %p434 = scmp.eq.s32.totalorder %s36, 3
    %p435 = por %p433, %p434
    %p437 = scmp.ne.s32.totalorder %s420, %s436
    %p438 = scmp.eq.s32.totalorder %s36, 0
    %p439 = por %p437, %p438
    %s440 = ssub.s32 %s38, %s45
    %p441 = scmp.eq.s32.totalorder %s440, 0
    %s443 = sadd.s32 %s442, 1
    %s444 = scalar_select %p441, %s442, %s443
    %p447 = pneg %p441
    %p448 = scmp.eq.s32.totalorder %s30, 3
    %p449 = por %p447, %p448
    %p450 = scmp.ne.s32.totalorder %s442, %s445
    %p451 = scmp.eq.s32.totalorder %s30, 0
    %p452 = por %p450, %p451
    %p453 = scmp.ne.s32.totalorder %s442, %s445
    %p454 = scmp.eq.s32.totalorder %s35, 3
    %p455 = por %p453, %p454
    %p456 = scmp.ne.s32.totalorder %s445, %s446
    %p457 = scmp.eq.s32.totalorder %s35, 0
    %p458 = por %p456, %p457
    %p459 = scmp.ne.s32.totalorder %s445, %s446
    %p460 = scmp.eq.s32.totalorder %s36, 3
    %p461 = por %p459, %p460
    %p463 = scmp.ne.s32.totalorder %s446, %s462
    %p464 = scmp.eq.s32.totalorder %s36, 0
    %p465 = por %p463, %p464
    %s466 = ssub.s32 %s38, %s45
    %p467 = scmp.eq.s32.totalorder %s466, 0
    %s469 = sadd.s32 %s468, 1
    %s470 = scalar_select %p467, %s468, %s469
    %p473 = pneg %p467
    %p474 = scmp.eq.s32.totalorder %s30, 3
    %p475 = por %p473, %p474
    %p476 = scmp.ne.s32.totalorder %s468, %s471
    %p477 = scmp.eq.s32.totalorder %s30, 0
    %p478 = por %p476, %p477
    %p479 = scmp.ne.s32.totalorder %s468, %s471
    %p480 = scmp.eq.s32.totalorder %s35, 3
    %p481 = por %p479, %p480
    %p482 = scmp.ne.s32.totalorder %s471, %s472
    %p483 = scmp.eq.s32.totalorder %s35, 0
    %p484 = por %p482, %p483
    %p485 = scmp.ne.s32.totalorder %s471, %s472
    %p486 = scmp.eq.s32.totalorder %s36, 3
    %p487 = por %p485, %p486
    %p489 = scmp.ne.s32.totalorder %s472, %s488
    %p490 = scmp.eq.s32.totalorder %s36, 0
    %p491 = por %p489, %p490
    %s492 = ssub.s32 %s38, %s45
    %p493 = scmp.eq.s32.totalorder %s492, 0
    %s495 = sadd.s32 %s494, 1
    %s496 = scalar_select %p493, %s494, %s495
    %p499 = pneg %p493
    %p500 = scmp.eq.s32.totalorder %s30, 3
    %p501 = por %p499, %p500
    %p502 = scmp.ne.s32.totalorder %s494, %s497
    %p503 = scmp.eq.s32.totalorder %s30, 0
    %p504 = por %p502, %p503
    %p505 = scmp.ne.s32.totalorder %s494, %s497
    %p506 = scmp.eq.s32.totalorder %s35, 3
    %p507 = por %p505, %p506
    %p508 = scmp.ne.s32.totalorder %s497, %s498
    %p509 = scmp.eq.s32.totalorder %s35, 0
    %p510 = por %p508, %p509
    %p511 = scmp.ne.s32.totalorder %s497, %s498
    %p512 = scmp.eq.s32.totalorder %s36, 3
    %p513 = por %p511, %p512
    %p515 = scmp.ne.s32.totalorder %s498, %s514
    %p516 = scmp.eq.s32.totalorder %s36, 0
    %p517 = por %p515, %p516
    %s518 = ssub.s32 %s38, %s45
    %p519 = scmp.eq.s32.totalorder %s518, 0
    %s521 = sadd.s32 %s520, 1
    %s522 = scalar_select %p519, %s520, %s521
    %p525 = pneg %p519
    %p526 = scmp.eq.s32.totalorder %s30, 3
    %p527 = por %p525, %p526
    %p528 = scmp.ne.s32.totalorder %s520, %s523
    %p529 = scmp.eq.s32.totalorder %s30, 0
    %p530 = por %p528, %p529
    %p531 = scmp.ne.s32.totalorder %s520, %s523
    %p532 = scmp.eq.s32.totalorder %s35, 3
    %p533 = por %p531, %p532
    %p534 = scmp.ne.s32.totalorder %s523, %s524
    %p535 = scmp.eq.s32.totalorder %s35, 0
    %p536 = por %p534, %p535
    %p537 = scmp.ne.s32.totalorder %s523, %s524
    %p538 = scmp.eq.s32.totalorder %s36, 3
    %p539 = por %p537, %p538
    %p541 = scmp.ne.s32.totalorder %s524, %s540
    %p542 = scmp.eq.s32.totalorder %s36, 0
    %p543 = por %p541, %p542
    %s544 = ssub.s32 %s38, %s45
    %p545 = scmp.eq.s32.totalorder %s544, 0
    %s547 = sadd.s32 %s546, 1
    %s548 = scalar_select %p545, %s546, %s547
    %p551 = pneg %p545
    %p552 = scmp.eq.s32.totalorder %s30, 3
    %p553 = por %p551, %p552
    %p554 = scmp.ne.s32.totalorder %s546, %s549
    %p555 = scmp.eq.s32.totalorder %s30, 0
    %p556 = por %p554, %p555
    %p557 = scmp.ne.s32.totalorder %s546, %s549
    %p558 = scmp.eq.s32.totalorder %s35, 3
    %p559 = por %p557, %p558
    %p560 = scmp.ne.s32.totalorder %s549, %s550
    %p561 = scmp.eq.s32.totalorder %s35, 0
    %p562 = por %p560, %p561
    %p563 = scmp.ne.s32.totalorder %s549, %s550
    %p564 = scmp.eq.s32.totalorder %s36, 3
    %p565 = por %p563, %p564
    %p567 = scmp.ne.s32.totalorder %s550, %s566
    %p568 = scmp.eq.s32.totalorder %s36, 0
    %p569 = por %p567, %p568
    %s571 = sadd.s32 %s570, 1
    %p574 = scmp.eq.s32.totalorder %s30, 3
    %p575 = scmp.ne.s32.totalorder %s570, %s572
    %p576 = scmp.eq.s32.totalorder %s30, 0
    %p577 = por %p575, %p576
    %p578 = scmp.ne.s32.totalorder %s570, %s572
    %p579 = scmp.eq.s32.totalorder %s35, 3
    %p580 = por %p578, %p579
    %p581 = scmp.ne.s32.totalorder %s572, %s573
    %p582 = scmp.eq.s32.totalorder %s35, 0
    %p583 = por %p581, %p582
    %p584 = scmp.ne.s32.totalorder %s572, %s573
    %p585 = scmp.eq.s32.totalorder %s36, 3
    %p586 = por %p584, %p585
    %p588 = scmp.ne.s32.totalorder %s573, %s587
    %p589 = scmp.eq.s32.totalorder %s36, 0
    %p590 = por %p588, %p589
    %s592 = sadd.s32 %s591, 1
    %p595 = scmp.eq.s32.totalorder %s30, 3
    %p596 = scmp.ne.s32.totalorder %s591, %s593
    %p597 = scmp.eq.s32.totalorder %s30, 0
    %p598 = por %p596, %p597
    %p599 = scmp.ne.s32.totalorder %s591, %s593
    %p600 = scmp.eq.s32.totalorder %s35, 3
    %p601 = por %p599, %p600
    %p602 = scmp.ne.s32.totalorder %s593, %s594
    %p603 = scmp.eq.s32.totalorder %s35, 0
    %p604 = por %p602, %p603
    %p605 = scmp.ne.s32.totalorder %s593, %s594
    %p606 = scmp.eq.s32.totalorder %s36, 3
    %p607 = por %p605, %p606
    %p609 = scmp.ne.s32.totalorder %s594, %s608
    %p610 = scmp.eq.s32.totalorder %s36, 0
    %p611 = por %p609, %p610
    %s613 = sadd.s32 %s612, 1
    %p616 = scmp.eq.s32.totalorder %s30, 3
    %p617 = scmp.ne.s32.totalorder %s612, %s614
    %p618 = scmp.eq.s32.totalorder %s30, 0
    %p619 = por %p617, %p618
    %p620 = scmp.ne.s32.totalorder %s612, %s614
    %p621 = scmp.eq.s32.totalorder %s35, 3
    %p622 = por %p620, %p621
    %p623 = scmp.ne.s32.totalorder %s614, %s615
    %p624 = scmp.eq.s32.totalorder %s35, 0
    %p625 = por %p623, %p624
    %p626 = scmp.ne.s32.totalorder %s614, %s615
    %p627 = scmp.eq.s32.totalorder %s36, 3
    %p628 = por %p626, %p627
    %p630 = scmp.ne.s32.totalorder %s615, %s629
    %p631 = scmp.eq.s32.totalorder %s36, 0
    %p632 = por %p630, %p631
    %s634 = sadd.s32 %s633, 1
    %p637 = scmp.eq.s32.totalorder %s30, 3
    %p638 = scmp.ne.s32.totalorder %s633, %s635
    %p639 = scmp.eq.s32.totalorder %s30, 0
    %p640 = por %p638, %p639
    %p641 = scmp.ne.s32.totalorder %s633, %s635
    %p642 = scmp.eq.s32.totalorder %s35, 3
    %p643 = por %p641, %p642
    %p644 = scmp.ne.s32.totalorder %s635, %s636
    %p645 = scmp.eq.s32.totalorder %s35, 0
    %p646 = por %p644, %p645
    %p647 = scmp.ne.s32.totalorder %s635, %s636
    %p648 = scmp.eq.s32.totalorder %s36, 3
    %p649 = por %p647, %p648
    %p651 = scmp.ne.s32.totalorder %s636, %s650
    %p652 = scmp.eq.s32.totalorder %s36, 0
    %p653 = por %p651, %p652
    %s654 = ssub.s32 %s37, %s49
    %p655 = scmp.eq.s32.totalorder %s654, 0
    %s657 = sadd.s32 %s656, 1
    %s658 = scalar_select %p655, %s656, %s657
    %p661 = pneg %p655
    %p662 = scmp.eq.s32.totalorder %s30, 3
    %p663 = por %p661, %p662
    %p664 = scmp.ne.s32.totalorder %s656, %s659
    %p665 = scmp.eq.s32.totalorder %s30, 0
    %p666 = por %p664, %p665
    %p667 = scmp.ne.s32.totalorder %s656, %s659
    %p668 = scmp.eq.s32.totalorder %s35, 3
    %p669 = por %p667, %p668
    %p670 = scmp.ne.s32.totalorder %s659, %s660
    %p671 = scmp.eq.s32.totalorder %s35, 0
    %p672 = por %p670, %p671
    %p673 = scmp.ne.s32.totalorder %s659, %s660
    %p674 = scmp.eq.s32.totalorder %s36, 3
    %p675 = por %p673, %p674
    %p677 = scmp.ne.s32.totalorder %s660, %s676
    %p678 = scmp.eq.s32.totalorder %s36, 0
    %p679 = por %p677, %p678
    %p680 = scmp.le.s32.totalorder 1, %s30
    %p681 = scmp.lt.s32.totalorder %s30, 5
    %p682 = pnand %p680, %p681
    %p683 = pneg %p682
    // Predicated region
    $region9: #{transformer_forward.3} parent=5 // pred_check
      _
    $region10: #{transformer_forward.3} parent=5 // pred_check_branch
      %685 = sbr.rel (%p682) target = $region12
    $region11: #{transformer_forward.3} parent=5 // pred_region
      %s686 = ssub.s32 %s30, 1
      // Predicated region
      $region13: #{transformer_forward.3} parent=11 // pred_check
        %p687 = pneg %p583
      $region14: #{transformer_forward.3} parent=11 // pred_check_branch
        %689 = sbr.rel (%p687) target = $region16
      $region15: #{transformer_forward.3} parent=11 // pred_region
        _
      $region16: #{transformer_forward.3} parent=11 // pred_fallthru
        _
      // Predicated region
      $region17: #{transformer_forward.3} parent=11 // pred_check
        %p690 = pneg %p604
      $region18: #{transformer_forward.3} parent=11 // pred_check_branch
        %692 = sbr.rel (%p690) target = $region20
      $region19: #{transformer_forward.3} parent=11 // pred_region
        _
      $region20: #{transformer_forward.3} parent=11 // pred_fallthru
        _
      // Predicated region
      $region21: #{transformer_forward.3} parent=11 // pred_check
        %p693 = pneg %p625
      $region22: #{transformer_forward.3} parent=11 // pred_check_branch
        %695 = sbr.rel (%p693) target = $region24
      $region23: #{transformer_forward.3} parent=11 // pred_region
        _
      $region24: #{transformer_forward.3} parent=11 // pred_fallthru
        _
      // Predicated region
      $region25: #{transformer_forward.3} parent=11 // pred_check
        %p696 = pneg %p646
      $region26: #{transformer_forward.3} parent=11 // pred_check_branch
        %698 = sbr.rel (%p696) target = $region28
      $region27: #{transformer_forward.3} parent=11 // pred_region
        _
      $region28: #{transformer_forward.3} parent=11 // pred_fallthru
        _
    $region12: #{transformer_forward.3} parent=5 // pred_fallthru
      _
    %p699 = scmp.lt.s32.totalorder %s30, 4
    // Predicated region
    $region29: #{transformer_forward.3} parent=5 // pred_check
      %p700 = pneg %p699
    $region30: #{transformer_forward.3} parent=5 // pred_check_branch
      %702 = sbr.rel (%p700) target = $region32
    $region31: #{transformer_forward.3} parent=5 // pred_region
      // Predicated region
      $region33: #{transformer_forward.3} parent=31 // pred_check
        %p703 = pneg %p62
      $region34: #{transformer_forward.3} parent=31 // pred_check_branch
        %705 = sbr.rel (%p703) target = $region36
      $region35: #{transformer_forward.3} parent=31 // pred_region
        %p706 = scmp.lt.s32.totalorder %s37, 1
        %s707 = scalar_select %p706, %s37, 1
        %s708 = smul.addr %s707, 8
        %s709 = scalar_lea.vmem %s0, %s708
      $region36: #{transformer_forward.3} parent=31 // pred_fallthru
        _
      // Predicated region
      $region37: #{transformer_forward.3} parent=31 // pred_check
        %p710 = pneg %p88
      $region38: #{transformer_forward.3} parent=31 // pred_check_branch
        %712 = sbr.rel (%p710) target = $region40
      $region39: #{transformer_forward.3} parent=31 // pred_region
        %p713 = scmp.lt.s32.totalorder %s37, 1
        %s714 = scalar_select %p713, %s37, 1
        %s715 = smul.addr %s714, 2
        %s716 = smul.addr %s715, 8
        %s717 = scalar_lea.vmem %s1, %s716
      $region40: #{transformer_forward.3} parent=31 // pred_fallthru
        _
      // Predicated region
      $region41: #{transformer_forward.3} parent=31 // pred_check
        %p718 = pneg %p114
      $region42: #{transformer_forward.3} parent=31 // pred_check_branch
        %720 = sbr.rel (%p718) target = $region44
      $region43: #{transformer_forward.3} parent=31 // pred_region
        %p721 = scmp.lt.s32.totalorder %s38, 1
        %s722 = scalar_select %p721, %s38, 1
        %s723 = smul.addr %s722, 4
        %s724 = smul.addr %s723, 8
        %s725 = scalar_lea.vmem %s2, %s724
      $region44: #{transformer_forward.3} parent=31 // pred_fallthru
        _
      // Predicated region
      $region45: #{transformer_forward.3} parent=31 // pred_check
        %p726 = pneg %p140
      $region46: #{transformer_forward.3} parent=31 // pred_check_branch
        %728 = sbr.rel (%p726) target = $region48
      $region47: #{transformer_forward.3} parent=31 // pred_region
        %p729 = scmp.lt.s32.totalorder %s38, 1
        %s730 = scalar_select %p729, %s38, 1
        %s731 = scalar_lea.vmem %s3, %s730
      $region48: #{transformer_forward.3} parent=31 // pred_fallthru
        _
      // Predicated region
      $region49: #{transformer_forward.3} parent=31 // pred_check
        %p732 = pneg %p166
      $region50: #{transformer_forward.3} parent=31 // pred_check_branch
        %734 = sbr.rel (%p732) target = $region52
      $region51: #{transformer_forward.3} parent=31 // pred_region
        %p735 = scmp.lt.s32.totalorder %s38, 1
        %s736 = scalar_select %p735, %s38, 1
        %s737 = smul.addr %s736, 4
        %s738 = smul.addr %s737, 8
        %s739 = scalar_lea.vmem %s4, %s738
      $region52: #{transformer_forward.3} parent=31 // pred_fallthru
        _
      // Predicated region
      $region53: #{transformer_forward.3} parent=31 // pred_check
        %p740 = pneg %p192
      $region54: #{transformer_forward.3} parent=31 // pred_check_branch
        %742 = sbr.rel (%p740) target = $region56
      $region55: #{transformer_forward.3} parent=31 // pred_region
        %p743 = scmp.lt.s32.totalorder %s38, 1
        %s744 = scalar_select %p743, %s38, 1
        %s745 = scalar_lea.vmem %s5, %s744
      $region56: #{transformer_forward.3} parent=31 // pred_fallthru
        _
      // Predicated region
      $region57: #{transformer_forward.3} parent=31 // pred_check
        %p746 = pneg %p218
      $region58: #{transformer_forward.3} parent=31 // pred_check_branch
        %748 = sbr.rel (%p746) target = $region60
      $region59: #{transformer_forward.3} parent=31 // pred_region
        %p749 = scmp.lt.s32.totalorder %s38, 1
        %s750 = scalar_select %p749, %s38, 1
        %s751 = scalar_lea.vmem %s6, %s750
      $region60: #{transformer_forward.3} parent=31 // pred_fallthru
        _
      // Predicated region
      $region61: #{transformer_forward.3} parent=31 // pred_check
        %p752 = pneg %p244
      $region62: #{transformer_forward.3} parent=31 // pred_check_branch
        %754 = sbr.rel (%p752) target = $region64
      $region63: #{transformer_forward.3} parent=31 // pred_region
        %p755 = scmp.lt.s32.totalorder %s38, 1
        %s756 = scalar_select %p755, %s38, 1
        %s757 = scalar_lea.vmem %s7, %s756
      $region64: #{transformer_forward.3} parent=31 // pred_fallthru
        _
      // Predicated region
      $region65: #{transformer_forward.3} parent=31 // pred_check
        %p758 = pneg %p270
      $region66: #{transformer_forward.3} parent=31 // pred_check_branch
        %760 = sbr.rel (%p758) target = $region68
      $region67: #{transformer_forward.3} parent=31 // pred_region
        %p761 = scmp.lt.s32.totalorder %s38, 1
        %s762 = scalar_select %p761, %s38, 1
        %s763 = smul.addr %s762, 4
        %s764 = smul.addr %s763, 8
        %s765 = scalar_lea.vmem %s8, %s764
      $region68: #{transformer_forward.3} parent=31 // pred_fallthru
        _
      // Predicated region
      $region69: #{transformer_forward.3} parent=31 // pred_check
        %p766 = pneg %p296
      $region70: #{transformer_forward.3} parent=31 // pred_check_branch
        %768 = sbr.rel (%p766) target = $region72
      $region71: #{transformer_forward.3} parent=31 // pred_region
        %p769 = scmp.lt.s32.totalorder %s38, 1
        %s770 = scalar_select %p769, %s38, 1
        %s771 = scalar_lea.vmem %s9, %s770
      $region72: #{transformer_forward.3} parent=31 // pred_fallthru
        _
      // Predicated region
      $region73: #{transformer_forward.3} parent=31 // pred_check
        %p772 = pneg %p322
      $region74: #{transformer_forward.3} parent=31 // pred_check_branch
        %774 = sbr.rel (%p772) target = $region76
      $region75: #{transformer_forward.3} parent=31 // pred_region
        %p775 = scmp.lt.s32.totalorder %s38, 1
        %s776 = scalar_select %p775, %s38, 1
        %s777 = smul.addr %s776, 4
        %s778 = smul.addr %s777, 8
        %s779 = scalar_lea.vmem %s10, %s778
      $region76: #{transformer_forward.3} parent=31 // pred_fallthru
        _
      // Predicated region
      $region77: #{transformer_forward.3} parent=31 // pred_check
        %p780 = pneg %p348
      $region78: #{transformer_forward.3} parent=31 // pred_check_branch
        %782 = sbr.rel (%p780) target = $region80
      $region79: #{transformer_forward.3} parent=31 // pred_region
        %p783 = scmp.lt.s32.totalorder %s38, 1
        %s784 = scalar_select %p783, %s38, 1
        %s785 = scalar_lea.vmem %s11, %s784
      $region80: #{transformer_forward.3} parent=31 // pred_fallthru
        _
      // Predicated region
      $region81: #{transformer_forward.3} parent=31 // pred_check
        %p786 = pneg %p374
      $region82: #{transformer_forward.3} parent=31 // pred_check_branch
        %788 = sbr.rel (%p786) target = $region84
      $region83: #{transformer_forward.3} parent=31 // pred_region
        %p789 = scmp.lt.s32.totalorder %s38, 1
        %s790 = scalar_select %p789, %s38, 1
        %s791 = scalar_lea.vmem %s12, %s790
      $region84: #{transformer_forward.3} parent=31 // pred_fallthru
        _
      // Predicated region
      $region85: #{transformer_forward.3} parent=31 // pred_check
        %p792 = pneg %p400
      $region86: #{transformer_forward.3} parent=31 // pred_check_branch
        %794 = sbr.rel (%p792) target = $region88
      $region87: #{transformer_forward.3} parent=31 // pred_region
        %p795 = scmp.lt.s32.totalorder %s38, 1
        %s796 = scalar_select %p795, %s38, 1
        %s797 = scalar_lea.vmem %s13, %s796
      $region88: #{transformer_forward.3} parent=31 // pred_fallthru
        _
      // Predicated region
      $region89: #{transformer_forward.3} parent=31 // pred_check
        %p798 = pneg %p426
      $region90: #{transformer_forward.3} parent=31 // pred_check_branch
        %800 = sbr.rel (%p798) target = $region92
      $region91: #{transformer_forward.3} parent=31 // pred_region
        %p801 = scmp.lt.s32.totalorder %s38, 1
        %s802 = scalar_select %p801, %s38, 1
        %s803 = smul.addr %s802, 4
        %s804 = smul.addr %s803, 8
        %s805 = scalar_lea.vmem %s14, %s804
      $region92: #{transformer_forward.3} parent=31 // pred_fallthru
        _
      // Predicated region
      $region93: #{transformer_forward.3} parent=31 // pred_check
        %p806 = pneg %p452
      $region94: #{transformer_forward.3} parent=31 // pred_check_branch
        %808 = sbr.rel (%p806) target = $region96
      $region95: #{transformer_forward.3} parent=31 // pred_region
        %p809 = scmp.lt.s32.totalorder %s38, 1
        %s810 = scalar_select %p809, %s38, 1
        %s811 = scalar_lea.vmem %s15, %s810
      $region96: #{transformer_forward.3} parent=31 // pred_fallthru
        _
      // Predicated region
      $region97: #{transformer_forward.3} parent=31 // pred_check
        %p812 = pneg %p478
      $region98: #{transformer_forward.3} parent=31 // pred_check_branch
        %814 = sbr.rel (%p812) target = $region100
      $region99: #{transformer_forward.3} parent=31 // pred_region
        %p815 = scmp.lt.s32.totalorder %s38, 1
        %s816 = scalar_select %p815, %s38, 1
        %s817 = smul.addr %s816, 16
        %s818 = smul.addr %s817, 8
        %s819 = scalar_lea.vmem %s16, %s818
      $region100: #{transformer_forward.3} parent=31 // pred_fallthru
        _
      // Predicated region
      $region101: #{transformer_forward.3} parent=31 // pred_check
        %p820 = pneg %p504
      $region102: #{transformer_forward.3} parent=31 // pred_check_branch
        %822 = sbr.rel (%p820) target = $region104
      $region103: #{transformer_forward.3} parent=31 // pred_region
        %p823 = scmp.lt.s32.totalorder %s38, 1
        %s824 = scalar_select %p823, %s38, 1
        %s825 = scalar_lea.vmem %s17, %s824
      $region104: #{transformer_forward.3} parent=31 // pred_fallthru
        _
      // Predicated region
      $region105: #{transformer_forward.3} parent=31 // pred_check
        %p826 = pneg %p530
      $region106: #{transformer_forward.3} parent=31 // pred_check_branch
        %828 = sbr.rel (%p826) target = $region108
      $region107: #{transformer_forward.3} parent=31 // pred_region
        %p829 = scmp.lt.s32.totalorder %s38, 1
        %s830 = scalar_select %p829, %s38, 1
        %s831 = scalar_lea.vmem %s18, %s830
      $region108: #{transformer_forward.3} parent=31 // pred_fallthru
        _
      // Predicated region
      $region109: #{transformer_forward.3} parent=31 // pred_check
        %p832 = pneg %p556
      $region110: #{transformer_forward.3} parent=31 // pred_check_branch
        %834 = sbr.rel (%p832) target = $region112
      $region111: #{transformer_forward.3} parent=31 // pred_region
        %p835 = scmp.lt.s32.totalorder %s38, 1
        %s836 = scalar_select %p835, %s38, 1
        %s837 = scalar_lea.vmem %s19, %s836
      $region112: #{transformer_forward.3} parent=31 // pred_fallthru
        _
    $region32: #{transformer_forward.3} parent=5 // pred_fallthru
      _
    %p838 = scmp.le.s32.totalorder 1, %s30
    %p839 = scmp.lt.s32.totalorder %s30, 5
    %p840 = pnand %p838, %p839
    %p841 = pneg %p840
    // Predicated region
    $region113: #{transformer_forward.3} parent=5 // pred_check
      _
    $region114: #{transformer_forward.3} parent=5 // pred_check_branch
      %843 = sbr.rel (%p840) target = $region116
    $region115: #{transformer_forward.3} parent=5 // pred_region
      %s844 = ssub.s32 %s30, 1
      %p845 = scmp.lt.s32.totalorder %s39, 1
      %s846 = scalar_select %p845, %s39, 1
      %s847 = smul.addr %s846, 8
      %s848 = scalar_lea.vmem %s0, %s847
      %p849 = pneg %p68
      %p850 = pneg %p65
      %p851 = scmp.lt.s32.totalorder %s39, 1
      %s852 = scalar_select %p851, %s39, 1
      %s853 = smul.addr %s852, 2
      %s854 = smul.addr %s853, 8
      %s855 = scalar_lea.vmem %s1, %s854
      %p856 = pneg %p94
      %p857 = pneg %p91
      %p858 = scmp.lt.s32.totalorder %s40, 1
      %s859 = scalar_select %p858, %s40, 1
      %s860 = smul.addr %s859, 4
      %s861 = smul.addr %s860, 8
      %s862 = scalar_lea.vmem %s2, %s861
      %p863 = pneg %p120
      %p864 = pneg %p117
      %p865 = scmp.lt.s32.totalorder %s40, 1
      %s866 = scalar_select %p865, %s40, 1
      %s867 = scalar_lea.vmem %s3, %s866
      %p868 = pneg %p146
      %p869 = pneg %p143
      %p870 = scmp.lt.s32.totalorder %s40, 1
      %s871 = scalar_select %p870, %s40, 1
      %s872 = smul.addr %s871, 4
      %s873 = smul.addr %s872, 8
      %s874 = scalar_lea.vmem %s4, %s873
      %p875 = pneg %p172
      %p876 = pneg %p169
      %p877 = scmp.lt.s32.totalorder %s40, 1
      %s878 = scalar_select %p877, %s40, 1
      %s879 = scalar_lea.vmem %s5, %s878
      %p880 = pneg %p198
      %p881 = pneg %p195
      %p882 = scmp.lt.s32.totalorder %s40, 1
      %s883 = scalar_select %p882, %s40, 1
      %s884 = scalar_lea.vmem %s6, %s883
      %p885 = pneg %p224
      %p886 = pneg %p221
      %p887 = scmp.lt.s32.totalorder %s40, 1
      %s888 = scalar_select %p887, %s40, 1
      %s889 = scalar_lea.vmem %s7, %s888
      %p890 = pneg %p250
      %p891 = pneg %p247
      %p892 = scmp.lt.s32.totalorder %s40, 1
      %s893 = scalar_select %p892, %s40, 1
      %s894 = smul.addr %s893, 4
      %s895 = smul.addr %s894, 8
      %s896 = scalar_lea.vmem %s8, %s895
      %p897 = pneg %p276
      %p898 = pneg %p273
      %p899 = scmp.lt.s32.totalorder %s40, 1
      %s900 = scalar_select %p899, %s40, 1
      %s901 = scalar_lea.vmem %s9, %s900
      %p902 = pneg %p302
      %p903 = pneg %p299
      %p904 = scmp.lt.s32.totalorder %s40, 1
      %s905 = scalar_select %p904, %s40, 1
      %s906 = smul.addr %s905, 4
      %s907 = smul.addr %s906, 8
      %s908 = scalar_lea.vmem %s10, %s907
      %p909 = pneg %p328
      %p910 = pneg %p325
      %p911 = scmp.lt.s32.totalorder %s40, 1
      %s912 = scalar_select %p911, %s40, 1
      %s913 = scalar_lea.vmem %s11, %s912
      %p914 = pneg %p354
      %p915 = pneg %p351
      %p916 = scmp.lt.s32.totalorder %s40, 1
      %s917 = scalar_select %p916, %s40, 1
      %s918 = scalar_lea.vmem %s12, %s917
      %p919 = pneg %p380
      %p920 = pneg %p377
      %p921 = scmp.lt.s32.totalorder %s40, 1
      %s922 = scalar_select %p921, %s40, 1
      %s923 = scalar_lea.vmem %s13, %s922
      %p924 = pneg %p406
      %p925 = pneg %p403
      %p926 = scmp.lt.s32.totalorder %s40, 1
      %s927 = scalar_select %p926, %s40, 1
      %s928 = smul.addr %s927, 4
      %s929 = smul.addr %s928, 8
      %s930 = scalar_lea.vmem %s14, %s929
      %p931 = pneg %p432
      %p932 = pneg %p429
      %p933 = scmp.lt.s32.totalorder %s40, 1
      %s934 = scalar_select %p933, %s40, 1
      %s935 = scalar_lea.vmem %s15, %s934
      %p936 = pneg %p458
      %p937 = pneg %p455
      %p938 = scmp.lt.s32.totalorder %s40, 1
      %s939 = scalar_select %p938, %s40, 1
      %s940 = smul.addr %s939, 16
      %s941 = smul.addr %s940, 8
      %s942 = scalar_lea.vmem %s16, %s941
      %p943 = pneg %p484
      %p944 = pneg %p481
      %p945 = scmp.lt.s32.totalorder %s40, 1
      %s946 = scalar_select %p945, %s40, 1
      %s947 = scalar_lea.vmem %s17, %s946
      %p948 = pneg %p510
      %p949 = pneg %p507
      %p950 = scmp.lt.s32.totalorder %s40, 1
      %s951 = scalar_select %p950, %s40, 1
      %s952 = scalar_lea.vmem %s18, %s951
      %p953 = pneg %p536
      %p954 = pneg %p533
      %p955 = scmp.lt.s32.totalorder %s40, 1
      %s956 = scalar_select %p955, %s40, 1
      %s957 = scalar_lea.vmem %s19, %s956
      %p958 = pneg %p562
      %p959 = pneg %p559
      %p960 = pneg %p583
      %p961 = pneg %p580
      %p962 = pneg %p604
      %p963 = pneg %p601
      %p964 = pneg %p625
      %p965 = pneg %p622
      %p966 = pneg %p646
      %p967 = pneg %p643
      %p968 = pneg %p672
      %p969 = pneg %p669
      %p970 = scmp.lt.s32.totalorder %s39, 1
      %s971 = scalar_select %p970, %s39, 1
      %s972 = smul.addr %s971, 8
      %s973 = scalar_lea.vmem %s24, %s972
      %p974 = scmp.lt.s32.totalorder %s39, 1
      %s975 = scalar_select %p974, %s39, 1
      %s976 = smul.addr %s975, 8
      %s977 = scalar_lea.vmem %s0, %s976
      %p978 = scmp.lt.s32.totalorder %s39, 1
      %s979 = scalar_select %p978, %s39, 1
      %s980 = smul.addr %s979, 2
      %s981 = smul.addr %s980, 8
      %s982 = scalar_lea.vmem %s1, %s981
      %p983 = scmp.lt.s32.totalorder %s40, 1
      %s984 = scalar_select %p983, %s40, 1
      %s985 = smul.addr %s984, 4
      %s986 = smul.addr %s985, 8
      %s987 = scalar_lea.vmem %s2, %s986
      %p988 = scmp.lt.s32.totalorder %s40, 1
      %s989 = scalar_select %p988, %s40, 1
      %s990 = scalar_lea.vmem %s3, %s989
      %p991 = scmp.lt.s32.totalorder %s40, 1
      %s992 = scalar_select %p991, %s40, 1
      %s993 = smul.addr %s992, 4
      %s994 = smul.addr %s993, 8
      %s995 = scalar_lea.vmem %s4, %s994
      %p996 = scmp.lt.s32.totalorder %s40, 1
      %s997 = scalar_select %p996, %s40, 1
      %s998 = scalar_lea.vmem %s5, %s997
      %p999 = scmp.lt.s32.totalorder %s40, 1
      %s1000 = scalar_select %p999, %s40, 1
      %s1001 = scalar_lea.vmem %s6, %s1000
      %p1002 = scmp.lt.s32.totalorder %s40, 1
      %s1003 = scalar_select %p1002, %s40, 1
      %s1004 = scalar_lea.vmem %s7, %s1003
      %p1005 = scmp.lt.s32.totalorder %s40, 1
      %s1006 = scalar_select %p1005, %s40, 1
      %s1007 = smul.addr %s1006, 4
      %s1008 = smul.addr %s1007, 8
      %s1009 = scalar_lea.vmem %s8, %s1008
      %p1010 = scmp.lt.s32.totalorder %s40, 1
      %s1011 = scalar_select %p1010, %s40, 1
      %s1012 = scalar_lea.vmem %s9, %s1011
      %p1013 = scmp.lt.s32.totalorder %s40, 1
      %s1014 = scalar_select %p1013, %s40, 1
      %s1015 = smul.addr %s1014, 4
      %s1016 = smul.addr %s1015, 8
      %s1017 = scalar_lea.vmem %s10, %s1016
      %p1018 = scmp.lt.s32.totalorder %s40, 1
      %s1019 = scalar_select %p1018, %s40, 1
      %s1020 = scalar_lea.vmem %s11, %s1019
      %p1021 = scmp.lt.s32.totalorder %s40, 1
      %s1022 = scalar_select %p1021, %s40, 1
      %s1023 = scalar_lea.vmem %s12, %s1022
      %p1024 = scmp.lt.s32.totalorder %s40, 1
      %s1025 = scalar_select %p1024, %s40, 1
      %s1026 = scalar_lea.vmem %s13, %s1025
      %p1027 = scmp.lt.s32.totalorder %s40, 1
      %s1028 = scalar_select %p1027, %s40, 1
      %s1029 = smul.addr %s1028, 4
      %s1030 = smul.addr %s1029, 8
      %s1031 = scalar_lea.vmem %s14, %s1030
      %p1032 = scmp.lt.s32.totalorder %s40, 1
      %s1033 = scalar_select %p1032, %s40, 1
      %s1034 = scalar_lea.vmem %s15, %s1033
      %p1035 = scmp.lt.s32.totalorder %s40, 1
      %s1036 = scalar_select %p1035, %s40, 1
      %s1037 = smul.addr %s1036, 16
      %s1038 = smul.addr %s1037, 8
      %s1039 = scalar_lea.vmem %s16, %s1038
      %p1040 = scmp.lt.s32.totalorder %s40, 1
      %s1041 = scalar_select %p1040, %s40, 1
      %s1042 = scalar_lea.vmem %s17, %s1041
      %p1043 = scmp.lt.s32.totalorder %s40, 1
      %s1044 = scalar_select %p1043, %s40, 1
      %s1045 = scalar_lea.vmem %s18, %s1044
      %p1046 = scmp.lt.s32.totalorder %s40, 1
      %s1047 = scalar_select %p1046, %s40, 1
      %s1048 = scalar_lea.vmem %s19, %s1047
      %p1049 = scmp.lt.s32.totalorder %s39, 1
      %s1050 = scalar_select %p1049, %s39, 1
      %s1051 = smul.addr %s1050, 8
      %s1052 = scalar_lea.vmem %s24, %s1051
      %p1054 = scmp.eq.s32.totalorder %s40, 0
      // Predicated region
      $region117: #{transformer_forward.3} parent=115 // pred_check
        %p1055 = pneg %p1054
      $region118: #{transformer_forward.3} parent=115 // pred_check_branch
        %1057 = sbr.rel (%p1055) target = $region120
      $region119: #{transformer_forward.3} parent=115 // pred_region
        %v1058 = vld [vmem:[%s977] sm:$0xff]
        %vm1059 = vcmask 261120
        %1060 = vst.msk [vmem:[#allocation2] sm:$0xff] %vm1059, %v1058
      $region120: #{transformer_forward.3} parent=115 // pred_fallthru
        _
      %v1061 = vld [vmem:[#allocation2] sm:$0xff]
      %v1062 = vld [vmem:[%s982] sm:$0xff]
      %v1063 = vld [vmem:[%s982 + $0x8] sm:$0x3]
      %v1064 = vlaneseq
      %v1065 = vshrl.u32 %v1064, 7
      %v1066 = vlaneseq
      %v1067 = vand.u32 %v1066, 127
      %vm1068 = vcmp.ge.s32.totalorder %v1065, %v1067
      %v1069 = vsel %vm1068, 0.0, -1e+09
      %v1070 = vld [vmem:[%s987] sm:$0xff]
      %v1071 = vld [vmem:[%s987 + $0x8] sm:$0xff]
      %v1072 = vld [vmem:[%s987 + $0x10] sm:$0xff]
      %v1073 = vld [vmem:[%s987 + $0x18] sm:$0xff]
      %v1074 = vld [vmem:[%s990] sm:$0x1]
      %v1075 = vld [vmem:[%s995] sm:$0xff]
      %v1076 = vld [vmem:[%s995 + $0x8] sm:$0xff]
      %v1077 = vld [vmem:[%s995 + $0x10] sm:$0xff]
      %v1078 = vld [vmem:[%s995 + $0x18] sm:$0xff]
      %v1079 = vld [vmem:[%s998] sm:$0x1]
      %v1080 = vpack.c.bf16 %v1061, %v1061
      %v1081 = vpack.c.bf16 %v1071, %v1070
      %v1082 = vpack.c.bf16 %v1073, %v1072
      %v1084 = vlaneseq
      %v1085 = vshrl.u32 %v1084, 7
      %v1086 = vsub.s32 0, %v1085
      %v1087 = vrot.slane %v1074, %v1086
      %vm1089 = vcmask 261120
      %v1091 = vsel %vm1089, %v1080, 0
      %1093 = vmatprep.subr.bf16.mxu0 0
      %1094 = vmatpush1.bf16.msra.mxu0 %v1081
      %1095 = vmatprep.subr.bf16.mxu0 0
      %1096 = vmatpush1.bf16.msra.mxu0 %v1082
      %1097 = vmatprep.subr.bf16.mxu0 0
      %1098 = vmatpush1.bf16.msra.mxu0 0
      %1099 = vmatprep.subr.bf16.mxu0 0
      %1100 = vmatpush1.bf16.msra.mxu0 0
      %1101 = vmatprep.subr.bf16.mxu0 0
      %1102 = vmatpush1.bf16.msra.mxu0 0
      %1103 = vmatprep.subr.bf16.mxu0 0
      %1104 = vmatpush1.bf16.msra.mxu0 0
      %1105 = vmatprep.subr.bf16.mxu0 0
      %1106 = vmatpush1.bf16.msra.mxu0 0
      %1107 = vmatprep.subr.bf16.mxu0 0
      %1108 = vmatpush1.bf16.msra.mxu0 0
      %1109 = vmatprep.subr.bf16.mxu0 0
      %1110 = vmatpush1.bf16.msra.mxu0 0
      %1111 = vmatprep.subr.bf16.mxu0 0
      %1112 = vmatpush1.bf16.msra.mxu0 0
      %1113 = vmatprep.subr.bf16.mxu0 0
      %1114 = vmatpush1.bf16.msra.mxu0 0
      %1115 = vmatprep.subr.bf16.mxu0 0
      %1116 = vmatpush1.bf16.msra.mxu0 0
      %1117 = vmatprep.subr.bf16.mxu0 0
      %1118 = vmatpush1.bf16.msra.mxu0 0
      %1119 = vmatprep.subr.bf16.mxu0 0
      %1120 = vmatpush1.bf16.msra.mxu0 0
      %1121 = vmatprep.subr.bf16.mxu0 0
      %1122 = vmatpush1.bf16.msra.mxu0 0
      %1123 = vmatprep.subr.bf16.mxu0 0
      %1124 = vmatpush1.bf16.msra.mxu0 0
      %1125 = vmatprep.mubr.bf16.mxu0 0
      %1126 = vmatmul.mubr.bf16.gmra.mrb[0].mxu0 %v1091
      %v1127 = vpop.f32.mrb[0].mxu0
      %v1128 = vadd.f32 %v1087, %v1127
      %v1129 = vpop.f32.mrb[0].mxu0
      %v1130 = vpop.f32.mrb[0].mxu0
      %v1131 = vpop.f32.mrb[0].mxu0
      %1132 = vdwg.mxu0
      %1134 = vrot.lane.b32.xlu0 %v1128, 120
      %v1135 = vpop.permute.xlu0 %1134
      %1137 = vrot.lane.b32.xlu0 %v1128, 112
      %v1138 = vpop.permute.xlu0 %1137
      %1140 = vrot.lane.b32.xlu0 %v1128, 104
      %v1141 = vpop.permute.xlu0 %1140
      %v1143 = vcombine.low %v1128, %v1138
      %v1144 = vcombine.high %v1128, %v1138
      %v1146 = vunpack.c.l.s4 1983009808
      %v1147 = vunpack.c.0.s8 %v1146
      %v1148 = vlaneseq
      %v1149 = vshrl.u32 %v1148, 7
      %v1150 = vsub.s32 %v1147, %v1149
      %v1151 = vrot.slane %v1143, %v1150
      %v1153 = vunpack.c.l.s4 1983009808
      %v1154 = vunpack.c.0.s8 %v1153
      %v1155 = vlaneseq
      %v1156 = vshrl.u32 %v1155, 7
      %v1157 = vsub.s32 %v1154, %v1156
      %v1158 = vrot.slane %v1144, %v1157
      %v1159 = vcombine.low %v1135, %v1141
      %v1160 = vcombine.high %v1135, %v1141
      %v1162 = vunpack.c.l.s4 1983009808
      %v1163 = vunpack.c.0.s8 %v1162
      %v1164 = vlaneseq
      %v1165 = vshrl.u32 %v1164, 7
      %v1166 = vsub.s32 %v1163, %v1165
      %v1167 = vrot.slane %v1159, %v1166
      %v1169 = vunpack.c.l.s4 1983009808
      %v1170 = vunpack.c.0.s8 %v1169
      %v1171 = vlaneseq
      %v1172 = vshrl.u32 %v1171, 7
      %v1173 = vsub.s32 %v1170, %v1172
      %v1174 = vrot.slane %v1160, %v1173
      %v1175 = vcombine.low %v1151, %v1167
      %v1176 = vcombine.high %v1151, %v1167
      %v1178 = vunpack.c.l.s4 1934713408
      %v1179 = vunpack.c.0.s8 %v1178
      %v1180 = vlaneseq
      %v1181 = vshrl.u32 %v1180, 7
      %v1182 = vsub.s32 %v1179, %v1181
      %v1183 = vrot.slane %v1175, %v1182
      %v1185 = vunpack.c.l.s4 1934713408
      %v1186 = vunpack.c.0.s8 %v1185
      %v1187 = vlaneseq
      %v1188 = vshrl.u32 %v1187, 7
      %v1189 = vsub.s32 %v1186, %v1188
      %v1190 = vrot.slane %v1176, %v1189
      %v1191 = vcombine.low %v1158, %v1174
      %v1192 = vcombine.high %v1158, %v1174
      %v1194 = vunpack.c.l.s4 1934713408
      %v1195 = vunpack.c.0.s8 %v1194
      %v1196 = vlaneseq
      %v1197 = vshrl.u32 %v1196, 7
      %v1198 = vsub.s32 %v1195, %v1197
      %v1199 = vrot.slane %v1191, %v1198
      %v1201 = vunpack.c.l.s4 1934713408
      %v1202 = vunpack.c.0.s8 %v1201
      %v1203 = vlaneseq
      %v1204 = vshrl.u32 %v1203, 7
      %v1205 = vsub.s32 %v1202, %v1204
      %v1206 = vrot.slane %v1192, %v1205
      %v1207 = vcombine.high %v1183, 0.0
      %v1208 = vcombine.high %v1190, 0.0
      %v1209 = vcombine.high %v1199, 0.0
      %v1210 = vcombine.high %v1206, 0.0
      %v1211 = vcombine.low %v1183, %v1190
      %v1213 = vunpack.c.l.s4 1983009808
      %v1214 = vunpack.c.0.s8 %v1213
      %v1215 = vlaneseq
      %v1216 = vshrl.u32 %v1215, 7
      %v1217 = vsub.s32 %v1214, %v1216
      %v1218 = vrot.slane %v1211, %v1217
      %v1219 = vcombine.low %v1207, %v1208
      %v1221 = vunpack.c.l.s4 1983009808
      %v1222 = vunpack.c.0.s8 %v1221
      %v1223 = vlaneseq
      %v1224 = vshrl.u32 %v1223, 7
      %v1225 = vsub.s32 %v1222, %v1224
      %v1226 = vrot.slane %v1219, %v1225
      %v1227 = vcombine.low %v1199, %v1206
      %v1229 = vunpack.c.l.s4 1983009808
      %v1230 = vunpack.c.0.s8 %v1229
      %v1231 = vlaneseq
      %v1232 = vshrl.u32 %v1231, 7
      %v1233 = vsub.s32 %v1230, %v1232
      %v1234 = vrot.slane %v1227, %v1233
      %v1235 = vcombine.low %v1209, %v1210
      %v1237 = vunpack.c.l.s4 1983009808
      %v1238 = vunpack.c.0.s8 %v1237
      %v1239 = vlaneseq
      %v1240 = vshrl.u32 %v1239, 7
      %v1241 = vsub.s32 %v1238, %v1240
      %v1242 = vrot.slane %v1235, %v1241
      %v1243 = vcombine.low %v1218, %v1226
      %v1244 = vcombine.high %v1218, %v1226
      %v1246 = vunpack.c.l.s4 1934713408
      %v1247 = vunpack.c.0.s8 %v1246
      %v1248 = vlaneseq
      %v1249 = vshrl.u32 %v1248, 7
      %v1250 = vsub.s32 %v1247, %v1249
      %v1251 = vrot.slane %v1243, %v1250
      %v1253 = vunpack.c.l.s4 1934713408
      %v1254 = vunpack.c.0.s8 %v1253
      %v1255 = vlaneseq
      %v1256 = vshrl.u32 %v1255, 7
      %v1257 = vsub.s32 %v1254, %v1256
      %v1258 = vrot.slane %v1244, %v1257
      %v1259 = vcombine.low %v1234, %v1242
      %v1260 = vcombine.high %v1234, %v1242
      %v1262 = vunpack.c.l.s4 1934713408
      %v1263 = vunpack.c.0.s8 %v1262
      %v1264 = vlaneseq
      %v1265 = vshrl.u32 %v1264, 7
      %v1266 = vsub.s32 %v1263, %v1265
      %v1267 = vrot.slane %v1259, %v1266
      %v1269 = vunpack.c.l.s4 1934713408
      %v1270 = vunpack.c.0.s8 %v1269
      %v1271 = vlaneseq
      %v1272 = vshrl.u32 %v1271, 7
      %v1273 = vsub.s32 %v1270, %v1272
      %v1274 = vrot.slane %v1260, %v1273
      %v1275 = vcombine.low %v1251, %v1267
      %v1276 = vcombine.high %v1251, %v1267
      %v1277 = vcombine.low %v1258, %v1274
      %v1278 = vcombine.high %v1258, %v1274
      %1279 = vrot.lane.b32.xlu0 %v1128, 96
      %v1280 = vpop.permute.xlu0 %1279
      %1281 = vrot.lane.b32.xlu0 %v1135, 96
      %v1282 = vpop.permute.xlu0 %1281
      %1283 = vrot.lane.b32.xlu0 %v1138, 96
      %v1284 = vpop.permute.xlu0 %1283
      %1285 = vrot.lane.b32.xlu0 %v1141, 96
      %v1286 = vpop.permute.xlu0 %1285
      %v1291 = vcombine.low %v1280, %v1284
      %v1292 = vcombine.high %v1280, %v1284
      %v1294 = vunpack.c.l.s4 1983009808
      %v1295 = vunpack.c.0.s8 %v1294
      %v1296 = vlaneseq
      %v1297 = vshrl.u32 %v1296, 7
      %v1298 = vsub.s32 %v1295, %v1297
      %v1299 = vrot.slane %v1291, %v1298
      %v1301 = vunpack.c.l.s4 1983009808
      %v1302 = vunpack.c.0.s8 %v1301
      %v1303 = vlaneseq
      %v1304 = vshrl.u32 %v1303, 7
      %v1305 = vsub.s32 %v1302, %v1304
      %v1306 = vrot.slane %v1292, %v1305
      %v1307 = vcombine.low %v1282, %v1286
      %v1308 = vcombine.high %v1282, %v1286
      %v1310 = vunpack.c.l.s4 1983009808
      %v1311 = vunpack.c.0.s8 %v1310
      %v1312 = vlaneseq
      %v1313 = vshrl.u32 %v1312, 7
      %v1314 = vsub.s32 %v1311, %v1313
      %v1315 = vrot.slane %v1307, %v1314
      %v1317 = vunpack.c.l.s4 1983009808
      %v1318 = vunpack.c.0.s8 %v1317
      %v1319 = vlaneseq
      %v1320 = vshrl.u32 %v1319, 7
      %v1321 = vsub.s32 %v1318, %v1320
      %v1322 = vrot.slane %v1308, %v1321
      %v1323 = vcombine.low %v1299, %v1315
      %v1324 = vcombine.high %v1299, %v1315
      %v1326 = vunpack.c.l.s4 1934713408
      %v1327 = vunpack.c.0.s8 %v1326
      %v1328 = vlaneseq
      %v1329 = vshrl.u32 %v1328, 7
      %v1330 = vsub.s32 %v1327, %v1329
      %v1331 = vrot.slane %v1323, %v1330
      %v1333 = vunpack.c.l.s4 1934713408
      %v1334 = vunpack.c.0.s8 %v1333
      %v1335 = vlaneseq
      %v1336 = vshrl.u32 %v1335, 7
      %v1337 = vsub.s32 %v1334, %v1336
      %v1338 = vrot.slane %v1324, %v1337
      %v1339 = vcombine.low %v1306, %v1322
      %v1340 = vcombine.high %v1306, %v1322
      %v1342 = vunpack.c.l.s4 1934713408
      %v1343 = vunpack.c.0.s8 %v1342
      %v1344 = vlaneseq
      %v1345 = vshrl.u32 %v1344, 7
      %v1346 = vsub.s32 %v1343, %v1345
      %v1347 = vrot.slane %v1339, %v1346
      %v1349 = vunpack.c.l.s4 1934713408
      %v1350 = vunpack.c.0.s8 %v1349
      %v1351 = vlaneseq
      %v1352 = vshrl.u32 %v1351, 7
      %v1353 = vsub.s32 %v1350, %v1352
      %v1354 = vrot.slane %v1340, %v1353
      %v1355 = vcombine.high %v1331, 0.0
      %v1356 = vcombine.high %v1338, 0.0
      %v1357 = vcombine.high %v1347, 0.0
      %v1358 = vcombine.high %v1354, 0.0
      %v1359 = vcombine.low %v1331, %v1338
      %v1361 = vunpack.c.l.s4 1983009808
      %v1362 = vunpack.c.0.s8 %v1361
      %v1363 = vlaneseq
      %v1364 = vshrl.u32 %v1363, 7
      %v1365 = vsub.s32 %v1362, %v1364
      %v1366 = vrot.slane %v1359, %v1365
      %v1367 = vcombine.low %v1355, %v1356
      %v1369 = vunpack.c.l.s4 1983009808
      %v1370 = vunpack.c.0.s8 %v1369
      %v1371 = vlaneseq
      %v1372 = vshrl.u32 %v1371, 7
      %v1373 = vsub.s32 %v1370, %v1372
      %v1374 = vrot.slane %v1367, %v1373
      %v1375 = vcombine.low %v1347, %v1354
      %v1377 = vunpack.c.l.s4 1983009808
      %v1378 = vunpack.c.0.s8 %v1377
      %v1379 = vlaneseq
      %v1380 = vshrl.u32 %v1379, 7
      %v1381 = vsub.s32 %v1378, %v1380
      %v1382 = vrot.slane %v1375, %v1381
      %v1383 = vcombine.low %v1357, %v1358
      %v1385 = vunpack.c.l.s4 1983009808
      %v1386 = vunpack.c.0.s8 %v1385
      %v1387 = vlaneseq
      %v1388 = vshrl.u32 %v1387, 7
      %v1389 = vsub.s32 %v1386, %v1388
      %v1390 = vrot.slane %v1383, %v1389
      %v1391 = vcombine.low %v1366, %v1374
      %v1392 = vcombine.high %v1366, %v1374
      %v1394 = vunpack.c.l.s4 1934713408
      %v1395 = vunpack.c.0.s8 %v1394
      %v1396 = vlaneseq
      %v1397 = vshrl.u32 %v1396, 7
      %v1398 = vsub.s32 %v1395, %v1397
      %v1399 = vrot.slane %v1391, %v1398
      %v1401 = vunpack.c.l.s4 1934713408
      %v1402 = vunpack.c.0.s8 %v1401
      %v1403 = vlaneseq
      %v1404 = vshrl.u32 %v1403, 7
      %v1405 = vsub.s32 %v1402, %v1404
      %v1406 = vrot.slane %v1392, %v1405
      %v1407 = vcombine.low %v1382, %v1390
      %v1408 = vcombine.high %v1382, %v1390
      %v1410 = vunpack.c.l.s4 1934713408
      %v1411 = vunpack.c.0.s8 %v1410
      %v1412 = vlaneseq
      %v1413 = vshrl.u32 %v1412, 7
      %v1414 = vsub.s32 %v1411, %v1413
      %v1415 = vrot.slane %v1407, %v1414
      %v1417 = vunpack.c.l.s4 1934713408
      %v1418 = vunpack.c.0.s8 %v1417
      %v1419 = vlaneseq
      %v1420 = vshrl.u32 %v1419, 7
      %v1421 = vsub.s32 %v1418, %v1420
      %v1422 = vrot.slane %v1408, %v1421
      %v1423 = vcombine.low %v1399, %v1415
      %v1424 = vcombine.high %v1399, %v1415
      %v1425 = vcombine.low %v1406, %v1422
      %v1426 = vcombine.high %v1406, %v1422
      %1427 = vrot.lane.b32.xlu0 %v1128, 64
      %v1428 = vpop.permute.xlu0 %1427
      %1429 = vrot.lane.b32.xlu0 %v1135, 64
      %v1430 = vpop.permute.xlu0 %1429
      %1431 = vrot.lane.b32.xlu0 %v1138, 64
      %v1432 = vpop.permute.xlu0 %1431
      %1433 = vrot.lane.b32.xlu0 %v1141, 64
      %v1434 = vpop.permute.xlu0 %1433
      %v1439 = vcombine.low %v1428, %v1432
      %v1440 = vcombine.high %v1428, %v1432
      %v1442 = vunpack.c.l.s4 1983009808
      %v1443 = vunpack.c.0.s8 %v1442
      %v1444 = vlaneseq
      %v1445 = vshrl.u32 %v1444, 7
      %v1446 = vsub.s32 %v1443, %v1445
      %v1447 = vrot.slane %v1439, %v1446
      %v1449 = vunpack.c.l.s4 1983009808
      %v1450 = vunpack.c.0.s8 %v1449
      %v1451 = vlaneseq
      %v1452 = vshrl.u32 %v1451, 7
      %v1453 = vsub.s32 %v1450, %v1452
      %v1454 = vrot.slane %v1440, %v1453
      %v1455 = vcombine.low %v1430, %v1434
      %v1456 = vcombine.high %v1430, %v1434
      %v1458 = vunpack.c.l.s4 1983009808
      %v1459 = vunpack.c.0.s8 %v1458
      %v1460 = vlaneseq
      %v1461 = vshrl.u32 %v1460, 7
      %v1462 = vsub.s32 %v1459, %v1461
      %v1463 = vrot.slane %v1455, %v1462
      %v1465 = vunpack.c.l.s4 1983009808
      %v1466 = vunpack.c.0.s8 %v1465
      %v1467 = vlaneseq
      %v1468 = vshrl.u32 %v1467, 7
      %v1469 = vsub.s32 %v1466, %v1468
      %v1470 = vrot.slane %v1456, %v1469
      %v1471 = vcombine.low %v1447, %v1463
      %v1472 = vcombine.high %v1447, %v1463
      %v1474 = vunpack.c.l.s4 1934713408
      %v1475 = vunpack.c.0.s8 %v1474
      %v1476 = vlaneseq
      %v1477 = vshrl.u32 %v1476, 7
      %v1478 = vsub.s32 %v1475, %v1477
      %v1479 = vrot.slane %v1471, %v1478
      %v1481 = vunpack.c.l.s4 1934713408
      %v1482 = vunpack.c.0.s8 %v1481
      %v1483 = vlaneseq
      %v1484 = vshrl.u32 %v1483, 7
      %v1485 = vsub.s32 %v1482, %v1484
      %v1486 = vrot.slane %v1472, %v1485
      %v1487 = vcombine.low %v1454, %v1470
      %v1488 = vcombine.high %v1454, %v1470
      %v1490 = vunpack.c.l.s4 1934713408
      %v1491 = vunpack.c.0.s8 %v1490
      %v1492 = vlaneseq
      %v1493 = vshrl.u32 %v1492, 7
      %v1494 = vsub.s32 %v1491, %v1493
      %v1495 = vrot.slane %v1487, %v1494
      %v1497 = vunpack.c.l.s4 1934713408
      %v1498 = vunpack.c.0.s8 %v1497
      %v1499 = vlaneseq
      %v1500 = vshrl.u32 %v1499, 7
      %v1501 = vsub.s32 %v1498, %v1500
      %v1502 = vrot.slane %v1488, %v1501
      %v1503 = vcombine.high %v1479, 0.0
      %v1504 = vcombine.high %v1486, 0.0
      %v1505 = vcombine.high %v1495, 0.0
      %v1506 = vcombine.high %v1502, 0.0
      %v1507 = vcombine.low %v1479, %v1486
      %v1509 = vunpack.c.l.s4 1983009808
      %v1510 = vunpack.c.0.s8 %v1509
      %v1511 = vlaneseq
      %v1512 = vshrl.u32 %v1511, 7
      %v1513 = vsub.s32 %v1510, %v1512
      %v1514 = vrot.slane %v1507, %v1513
      %v1515 = vcombine.low %v1503, %v1504
      %v1517 = vunpack.c.l.s4 1983009808
      %v1518 = vunpack.c.0.s8 %v1517
      %v1519 = vlaneseq
      %v1520 = vshrl.u32 %v1519, 7
      %v1521 = vsub.s32 %v1518, %v1520
      %v1522 = vrot.slane %v1515, %v1521
      %v1523 = vcombine.low %v1495, %v1502
      %v1525 = vunpack.c.l.s4 1983009808
      %v1526 = vunpack.c.0.s8 %v1525
      %v1527 = vlaneseq
      %v1528 = vshrl.u32 %v1527, 7
      %v1529 = vsub.s32 %v1526, %v1528
      %v1530 = vrot.slane %v1523, %v1529
      %v1531 = vcombine.low %v1505, %v1506
      %v1533 = vunpack.c.l.s4 1983009808
      %v1534 = vunpack.c.0.s8 %v1533
      %v1535 = vlaneseq
      %v1536 = vshrl.u32 %v1535, 7
      %v1537 = vsub.s32 %v1534, %v1536
      %v1538 = vrot.slane %v1531, %v1537
      %v1539 = vcombine.low %v1514, %v1522
      %v1540 = vcombine.high %v1514, %v1522
      %v1542 = vunpack.c.l.s4 1934713408
      %v1543 = vunpack.c.0.s8 %v1542
      %v1544 = vlaneseq
      %v1545 = vshrl.u32 %v1544, 7
      %v1546 = vsub.s32 %v1543, %v1545
      %v1547 = vrot.slane %v1539, %v1546
      %v1549 = vunpack.c.l.s4 1934713408
      %v1550 = vunpack.c.0.s8 %v1549
      %v1551 = vlaneseq
      %v1552 = vshrl.u32 %v1551, 7
      %v1553 = vsub.s32 %v1550, %v1552
      %v1554 = vrot.slane %v1540, %v1553
      %v1555 = vcombine.low %v1530, %v1538
      %v1556 = vcombine.high %v1530, %v1538
      %v1558 = vunpack.c.l.s4 1934713408
      %v1559 = vunpack.c.0.s8 %v1558
      %v1560 = vlaneseq
      %v1561 = vshrl.u32 %v1560, 7
      %v1562 = vsub.s32 %v1559, %v1561
      %v1563 = vrot.slane %v1555, %v1562
      %v1565 = vunpack.c.l.s4 1934713408
      %v1566 = vunpack.c.0.s8 %v1565
      %v1567 = vlaneseq
      %v1568 = vshrl.u32 %v1567, 7
      %v1569 = vsub.s32 %v1566, %v1568
      %v1570 = vrot.slane %v1556, %v1569
      %v1571 = vcombine.low %v1547, %v1563
      %v1572 = vcombine.high %v1547, %v1563
      %v1573 = vcombine.low %v1554, %v1570
      %v1574 = vcombine.high %v1554, %v1570
      %v1575 = vpack.c.bf16 %v1275, %v1275
      %v1576 = vpack.c.bf16 %v1276, %v1276
      %v1577 = vpack.c.bf16 %v1277, %v1277
      %v1578 = vpack.c.bf16 %v1278, %v1278
      %v1579 = vpack.c.bf16 %v1423, %v1423
      %v1580 = vpack.c.bf16 %v1424, %v1424
      %v1581 = vpack.c.bf16 %v1425, %v1425
      %v1582 = vpack.c.bf16 %v1426, %v1426
      %vm1583 = vcmask 64512
      %v1585 = vsel %vm1583, %v1575, 0
      %v1588 = vsel %vm1583, %v1579, 0
      %1590 = vmatprep.subr.bf16.mxu0 0
      %1591 = vmatpush1.bf16.xpose.msra.mxu0 %v1588
      %1592 = vmatprep.subr.bf16.mxu0 0
      %1593 = vmatpush1.bf16.xpose.msra.mxu0 0
      %1594 = vmatprep.subr.bf16.mxu0 0
      %1595 = vmatpush1.bf16.xpose.msra.mxu0 0
      %1596 = vmatprep.subr.bf16.mxu0 0
      %1597 = vmatpush1.bf16.xpose.msra.mxu0 0
      %1598 = vmatprep.subr.bf16.mxu0 0
      %1599 = vmatpush1.bf16.xpose.msra.mxu0 0
      %1600 = vmatprep.subr.bf16.mxu0 0
      %1601 = vmatpush1.bf16.xpose.msra.mxu0 0
      %1602 = vmatprep.subr.bf16.mxu0 0
      %1603 = vmatpush1.bf16.xpose.msra.mxu0 0
      %1604 = vmatprep.subr.bf16.mxu0 0
      %1605 = vmatpush1.bf16.xpose.msra.mxu0 0
      %1606 = vmatprep.subr.bf16.mxu0 0
      %1607 = vmatpush1.bf16.xpose.msra.mxu0 0
      %1608 = vmatprep.subr.bf16.mxu0 0
      %1609 = vmatpush1.bf16.xpose.msra.mxu0 0
      %1610 = vmatprep.subr.bf16.mxu0 0
      %1611 = vmatpush1.bf16.xpose.msra.mxu0 0
      %1612 = vmatprep.subr.bf16.mxu0 0
      %1613 = vmatpush1.bf16.xpose.msra.mxu0 0
      %1614 = vmatprep.subr.bf16.mxu0 0
      %1615 = vmatpush1.bf16.xpose.msra.mxu0 0
      %1616 = vmatprep.subr.bf16.mxu0 0
      %1617 = vmatpush1.bf16.xpose.msra.mxu0 0
      %1618 = vmatprep.subr.bf16.mxu0 0
      %1619 = vmatpush1.bf16.xpose.msra.mxu0 0
      %1620 = vmatprep.subr.bf16.mxu0 0
      %1621 = vmatpush1.bf16.xpose.msra.mxu0 0
      %1622 = vmatprep.mubr.bf16.mxu0 0
      %1623 = vmatmul.mubr.bf16.gmra.mrb[0].mxu0 %v1585
      %v1624 = vpop.f32.mrb[0].mxu0
      %v1625 = vadd.f32 0.0, %v1624
      %v1626 = vpop.f32.mrb[0].mxu0
      %v1627 = vpop.f32.mrb[0].mxu0
      %v1628 = vpop.f32.mrb[0].mxu0
      %1629 = vdwg.mxu0
      %v1631 = vsel %vm1583, %v1576, 0
      %v1634 = vsel %vm1583, %v1580, 0
      %1636 = vmatprep.subr.bf16.mxu0 0
      %1637 = vmatpush1.bf16.xpose.msra.mxu0 %v1634
      %1638 = vmatprep.subr.bf16.mxu0 0
      %1639 = vmatpush1.bf16.xpose.msra.mxu0 0
      %1640 = vmatprep.subr.bf16.mxu0 0
      %1641 = vmatpush1.bf16.xpose.msra.mxu0 0
      %1642 = vmatprep.subr.bf16.mxu0 0
      %1643 = vmatpush1.bf16.xpose.msra.mxu0 0
      %1644 = vmatprep.subr.bf16.mxu0 0
      %1645 = vmatpush1.bf16.xpose.msra.mxu0 0
      %1646 = vmatprep.subr.bf16.mxu0 0
      %1647 = vmatpush1.bf16.xpose.msra.mxu0 0
      %1648 = vmatprep.subr.bf16.mxu0 0
      %1649 = vmatpush1.bf16.xpose.msra.mxu0 0
      %1650 = vmatprep.subr.bf16.mxu0 0
      %1651 = vmatpush1.bf16.xpose.msra.mxu0 0
      %1652 = vmatprep.subr.bf16.mxu0 0
      %1653 = vmatpush1.bf16.xpose.msra.mxu0 0
      %1654 = vmatprep.subr.bf16.mxu0 0
      %1655 = vmatpush1.bf16.xpose.msra.mxu0 0
      %1656 = vmatprep.subr.bf16.mxu0 0
      %1657 = vmatpush1.bf16.xpose.msra.mxu0 0
      %1658 = vmatprep.subr.bf16.mxu0 0
      %1659 = vmatpush1.bf16.xpose.msra.mxu0 0
      %1660 = vmatprep.subr.bf16.mxu0 0
      %1661 = vmatpush1.bf16.xpose.msra.mxu0 0
      %1662 = vmatprep.subr.bf16.mxu0 0
      %1663 = vmatpush1.bf16.xpose.msra.mxu0 0
      %1664 = vmatprep.subr.bf16.mxu0 0
      %1665 = vmatpush1.bf16.xpose.msra.mxu0 0
      %1666 = vmatprep.subr.bf16.mxu0 0
      %1667 = vmatpush1.bf16.xpose.msra.mxu0 0
      %1668 = vmatprep.mubr.bf16.mxu0 0
      %1669 = vmatmul.mubr.bf16.gmra.mrb[0].mxu0 %v1631
      %v1670 = vpop.f32.mrb[0].mxu0
      %v1671 = vadd.f32 0.0, %v1670
      %v1672 = vpop.f32.mrb[0].mxu0
      %v1673 = vpop.f32.mrb[0].mxu0
      %v1674 = vpop.f32.mrb[0].mxu0
      %1675 = vdwg.mxu0
      %v1677 = vsel %vm1583, %v1577, 0
      %v1680 = vsel %vm1583, %v1581, 0
      %1682 = vmatprep.subr.bf16.mxu0 0
      %1683 = vmatpush1.bf16.xpose.msra.mxu0 %v1680
      %1684 = vmatprep.subr.bf16.mxu0 0
      %1685 = vmatpush1.bf16.xpose.msra.mxu0 0
      %1686 = vmatprep.subr.bf16.mxu0 0
      %1687 = vmatpush1.bf16.xpose.msra.mxu0 0
      %1688 = vmatprep.subr.bf16.mxu0 0
      %1689 = vmatpush1.bf16.xpose.msra.mxu0 0
      %1690 = vmatprep.subr.bf16.mxu0 0
      %1691 = vmatpush1.bf16.xpose.msra.mxu0 0
      %1692 = vmatprep.subr.bf16.mxu0 0
      %1693 = vmatpush1.bf16.xpose.msra.mxu0 0
      %1694 = vmatprep.subr.bf16.mxu0 0
      %1695 = vmatpush1.bf16.xpose.msra.mxu0 0
      %1696 = vmatprep.subr.bf16.mxu0 0
      %1697 = vmatpush1.bf16.xpose.msra.mxu0 0
      %1698 = vmatprep.subr.bf16.mxu0 0
      %1699 = vmatpush1.bf16.xpose.msra.mxu0 0
      %1700 = vmatprep.subr.bf16.mxu0 0
      %1701 = vmatpush1.bf16.xpose.msra.mxu0 0
      %1702 = vmatprep.subr.bf16.mxu0 0
      %1703 = vmatpush1.bf16.xpose.msra.mxu0 0
      %1704 = vmatprep.subr.bf16.mxu0 0
      %1705 = vmatpush1.bf16.xpose.msra.mxu0 0
      %1706 = vmatprep.subr.bf16.mxu0 0
      %1707 = vmatpush1.bf16.xpose.msra.mxu0 0
      %1708 = vmatprep.subr.bf16.mxu0 0
      %1709 = vmatpush1.bf16.xpose.msra.mxu0 0
      %1710 = vmatprep.subr.bf16.mxu0 0
      %1711 = vmatpush1.bf16.xpose.msra.mxu0 0
      %1712 = vmatprep.subr.bf16.mxu0 0
      %1713 = vmatpush1.bf16.xpose.msra.mxu0 0
      %1714 = vmatprep.mubr.bf16.mxu0 0
      %1715 = vmatmul.mubr.bf16.gmra.mrb[0].mxu0 %v1677
      %v1716 = vpop.f32.mrb[0].mxu0
      %v1717 = vadd.f32 0.0, %v1716
      %v1718 = vpop.f32.mrb[0].mxu0
      %v1719 = vpop.f32.mrb[0].mxu0
      %v1720 = vpop.f32.mrb[0].mxu0
      %1721 = vdwg.mxu0
      %v1723 = vsel %vm1583, %v1578, 0
      %v1726 = vsel %vm1583, %v1582, 0
      %1728 = vmatprep.subr.bf16.mxu0 0
      %1729 = vmatpush1.bf16.xpose.msra.mxu0 %v1726
      %1730 = vmatprep.subr.bf16.mxu0 0
      %1731 = vmatpush1.bf16.xpose.msra.mxu0 0
      %1732 = vmatprep.subr.bf16.mxu0 0
      %1733 = vmatpush1.bf16.xpose.msra.mxu0 0
      %1734 = vmatprep.subr.bf16.mxu0 0
      %1735 = vmatpush1.bf16.xpose.msra.mxu0 0
      %1736 = vmatprep.subr.bf16.mxu0 0
      %1737 = vmatpush1.bf16.xpose.msra.mxu0 0
      %1738 = vmatprep.subr.bf16.mxu0 0
      %1739 = vmatpush1.bf16.xpose.msra.mxu0 0
      %1740 = vmatprep.subr.bf16.mxu0 0
      %1741 = vmatpush1.bf16.xpose.msra.mxu0 0
      %1742 = vmatprep.subr.bf16.mxu0 0
      %1743 = vmatpush1.bf16.xpose.msra.mxu0 0
      %1744 = vmatprep.subr.bf16.mxu0 0
      %1745 = vmatpush1.bf16.xpose.msra.mxu0 0
      %1746 = vmatprep.subr.bf16.mxu0 0
      %1747 = vmatpush1.bf16.xpose.msra.mxu0 0
      %1748 = vmatprep.subr.bf16.mxu0 0
      %1749 = vmatpush1.bf16.xpose.msra.mxu0 0
      %1750 = vmatprep.subr.bf16.mxu0 0
      %1751 = vmatpush1.bf16.xpose.msra.mxu0 0
      %1752 = vmatprep.subr.bf16.mxu0 0
      %1753 = vmatpush1.bf16.xpose.msra.mxu0 0
      %1754 = vmatprep.subr.bf16.mxu0 0
      %1755 = vmatpush1.bf16.xpose.msra.mxu0 0
      %1756 = vmatprep.subr.bf16.mxu0 0
      %1757 = vmatpush1.bf16.xpose.msra.mxu0 0
      %1758 = vmatprep.subr.bf16.mxu0 0
      %1759 = vmatpush1.bf16.xpose.msra.mxu0 0
      %1760 = vmatprep.mubr.bf16.mxu0 0
      %1761 = vmatmul.mubr.bf16.gmra.mrb[0].mxu0 %v1723
      %v1762 = vpop.f32.mrb[0].mxu0
      %v1763 = vadd.f32 0.0, %v1762
      %v1764 = vpop.f32.mrb[0].mxu0
      %v1765 = vpop.f32.mrb[0].mxu0
      %v1766 = vpop.f32.mrb[0].mxu0
      %1767 = vdwg.mxu0
      %v1768 = vmul.f32 %v1625, 0.35355338
      %v1769 = vmul.f32 %v1671, 0.35355338
      %v1770 = vmul.f32 %v1717, 0.35355338
      %v1771 = vmul.f32 %v1763, 0.35355338
      %v1772 = vadd.f32 %v1768, %v1069
      %v1773 = vadd.f32 %v1769, %v1069
      %v1774 = vadd.f32 %v1770, %v1069
      %v1775 = vadd.f32 %v1771, %v1069
      %v1776 = vsel %vm1583, %v1772, -inf
      %1777 = vmax.xlane.f32.xlu0 %v1776
      %v1778 = vpop.xlane.xlu0 %1777
      %v1779 = vsel %vm1583, %v1773, -inf
      %1780 = vmax.xlane.f32.xlu0 %v1779
      %v1781 = vpop.xlane.xlu0 %1780
      %v1782 = vsel %vm1583, %v1774, -inf
      %1783 = vmax.xlane.f32.xlu0 %v1782
      %v1784 = vpop.xlane.xlu0 %1783
      %v1785 = vsel %vm1583, %v1775, -inf
      %1786 = vmax.xlane.f32.xlu0 %v1785
      %v1787 = vpop.xlane.xlu0 %1786
      %v1788 = vsub.f32 %v1772, %v1778
      %v1789 = vsub.f32 %v1773, %v1781
      %v1790 = vsub.f32 %v1774, %v1784
      %v1791 = vsub.f32 %v1775, %v1787
      %v1792 = vmul.f32 %v1788, 1.442695
      %v1793 = vpow.pop %v1792
      %v1794 = vmul.f32 %v1789, 1.442695
      %v1795 = vpow.pop %v1794
      %v1796 = vmul.f32 %v1790, 1.442695
      %v1797 = vpow.pop %v1796
      %v1798 = vmul.f32 %v1791, 1.442695
      %v1799 = vpow.pop %v1798
      %v1800 = vsel %vm1583, %v1793, 0.0
      %1801 = vadd.xlane.f32.xlu0 %v1800
      %v1802 = vpop.xlane.xlu0 %1801
      %v1803 = vsel %vm1583, %v1795, 0.0
      %1804 = vadd.xlane.f32.xlu0 %v1803
      %v1805 = vpop.xlane.xlu0 %1804
      %v1806 = vsel %vm1583, %v1797, 0.0
      %1807 = vadd.xlane.f32.xlu0 %v1806
      %v1808 = vpop.xlane.xlu0 %1807
      %v1809 = vsel %vm1583, %v1799, 0.0
      %1810 = vadd.xlane.f32.xlu0 %v1809
      %v1811 = vpop.xlane.xlu0 %1810
      %v1812 = vrcp.pop %v1802
      %v1813 = vrcp.pop %v1805
      %v1814 = vrcp.pop %v1808
      %v1815 = vrcp.pop %v1811
      %v1816 = vmul.f32 %v1793, %v1812
      %v1817 = vmul.f32 %v1795, %v1813
      %v1818 = vmul.f32 %v1797, %v1814
      %v1819 = vmul.f32 %v1799, %v1815
      %v1820 = vpack.c.bf16 %v1816, %v1816
      %v1821 = vpack.c.bf16 %v1817, %v1817
      %v1822 = vpack.c.bf16 %v1818, %v1818
      %v1823 = vpack.c.bf16 %v1819, %v1819
      %v1824 = vpack.c.bf16 %v1571, %v1571
      %v1825 = vpack.c.bf16 %v1572, %v1572
      %v1826 = vpack.c.bf16 %v1573, %v1573
      %v1827 = vpack.c.bf16 %v1574, %v1574
      %v1829 = vsel %vm1583, %v1820, 0
      %vm1831 = vcmask 1043456
      %v1833 = vsel %vm1831, %v1824, 0
      %1835 = vmatprep.subr.bf16.mxu0 0
      %1836 = vmatpush1.bf16.msra.mxu0 %v1833
      %1837 = vmatprep.subr.bf16.mxu0 0
      %1838 = vmatpush1.bf16.msra.mxu0 0
      %1839 = vmatprep.subr.bf16.mxu0 0
      %1840 = vmatpush1.bf16.msra.mxu0 0
      %1841 = vmatprep.subr.bf16.mxu0 0
      %1842 = vmatpush1.bf16.msra.mxu0 0
      %1843 = vmatprep.subr.bf16.mxu0 0
      %1844 = vmatpush1.bf16.msra.mxu0 0
      %1845 = vmatprep.subr.bf16.mxu0 0
      %1846 = vmatpush1.bf16.msra.mxu0 0
      %1847 = vmatprep.subr.bf16.mxu0 0
      %1848 = vmatpush1.bf16.msra.mxu0 0
      %1849 = vmatprep.subr.bf16.mxu0 0
      %1850 = vmatpush1.bf16.msra.mxu0 0
      %1851 = vmatprep.subr.bf16.mxu0 0
      %1852 = vmatpush1.bf16.msra.mxu0 0
      %1853 = vmatprep.subr.bf16.mxu0 0
      %1854 = vmatpush1.bf16.msra.mxu0 0
      %1855 = vmatprep.subr.bf16.mxu0 0
      %1856 = vmatpush1.bf16.msra.mxu0 0
      %1857 = vmatprep.subr.bf16.mxu0 0
      %1858 = vmatpush1.bf16.msra.mxu0 0
      %1859 = vmatprep.subr.bf16.mxu0 0
      %1860 = vmatpush1.bf16.msra.mxu0 0
      %1861 = vmatprep.subr.bf16.mxu0 0
      %1862 = vmatpush1.bf16.msra.mxu0 0
      %1863 = vmatprep.subr.bf16.mxu0 0
      %1864 = vmatpush1.bf16.msra.mxu0 0
      %1865 = vmatprep.subr.bf16.mxu0 0
      %1866 = vmatpush1.bf16.msra.mxu0 0
      %1867 = vmatprep.mubr.bf16.mxu0 0
      %1868 = vmatmul.mubr.bf16.gmra.mrb[0].mxu0 %v1829
      %v1869 = vpop.f32.mrb[0].mxu0
      %v1870 = vadd.f32 0.0, %v1869
      %v1871 = vpop.f32.mrb[0].mxu0
      %v1872 = vpop.f32.mrb[0].mxu0
      %v1873 = vpop.f32.mrb[0].mxu0
      %1874 = vdwg.mxu0
      %v1876 = vsel %vm1583, %v1821, 0
      %v1879 = vsel %vm1831, %v1825, 0
      %1881 = vmatprep.subr.bf16.mxu0 0
      %1882 = vmatpush1.bf16.msra.mxu0 %v1879
      %1883 = vmatprep.subr.bf16.mxu0 0
      %1884 = vmatpush1.bf16.msra.mxu0 0
      %1885 = vmatprep.subr.bf16.mxu0 0
      %1886 = vmatpush1.bf16.msra.mxu0 0
      %1887 = vmatprep.subr.bf16.mxu0 0
      %1888 = vmatpush1.bf16.msra.mxu0 0
      %1889 = vmatprep.subr.bf16.mxu0 0
      %1890 = vmatpush1.bf16.msra.mxu0 0
      %1891 = vmatprep.subr.bf16.mxu0 0
      %1892 = vmatpush1.bf16.msra.mxu0 0
      %1893 = vmatprep.subr.bf16.mxu0 0
      %1894 = vmatpush1.bf16.msra.mxu0 0
      %1895 = vmatprep.subr.bf16.mxu0 0
      %1896 = vmatpush1.bf16.msra.mxu0 0
      %1897 = vmatprep.subr.bf16.mxu0 0
      %1898 = vmatpush1.bf16.msra.mxu0 0
      %1899 = vmatprep.subr.bf16.mxu0 0
      %1900 = vmatpush1.bf16.msra.mxu0 0
      %1901 = vmatprep.subr.bf16.mxu0 0
      %1902 = vmatpush1.bf16.msra.mxu0 0
      %1903 = vmatprep.subr.bf16.mxu0 0
      %1904 = vmatpush1.bf16.msra.mxu0 0
      %1905 = vmatprep.subr.bf16.mxu0 0
      %1906 = vmatpush1.bf16.msra.mxu0 0
      %1907 = vmatprep.subr.bf16.mxu0 0
      %1908 = vmatpush1.bf16.msra.mxu0 0
      %1909 = vmatprep.subr.bf16.mxu0 0
      %1910 = vmatpush1.bf16.msra.mxu0 0
      %1911 = vmatprep.subr.bf16.mxu0 0
      %1912 = vmatpush1.bf16.msra.mxu0 0
      %1913 = vmatprep.mubr.bf16.mxu0 0
      %1914 = vmatmul.mubr.bf16.gmra.mrb[0].mxu0 %v1876
      %v1915 = vpop.f32.mrb[0].mxu0
      %v1916 = vadd.f32 0.0, %v1915
      %v1917 = vpop.f32.mrb[0].mxu0
      %v1918 = vpop.f32.mrb[0].mxu0
      %v1919 = vpop.f32.mrb[0].mxu0
      %1920 = vdwg.mxu0
      %v1922 = vsel %vm1583, %v1822, 0
      %v1925 = vsel %vm1831, %v1826, 0
      %1927 = vmatprep.subr.bf16.mxu0 0
      %1928 = vmatpush1.bf16.msra.mxu0 %v1925
      %1929 = vmatprep.subr.bf16.mxu0 0
      %1930 = vmatpush1.bf16.msra.mxu0 0
      %1931 = vmatprep.subr.bf16.mxu0 0
      %1932 = vmatpush1.bf16.msra.mxu0 0
      %1933 = vmatprep.subr.bf16.mxu0 0
      %1934 = vmatpush1.bf16.msra.mxu0 0
      %1935 = vmatprep.subr.bf16.mxu0 0
      %1936 = vmatpush1.bf16.msra.mxu0 0
      %1937 = vmatprep.subr.bf16.mxu0 0
      %1938 = vmatpush1.bf16.msra.mxu0 0
      %1939 = vmatprep.subr.bf16.mxu0 0
      %1940 = vmatpush1.bf16.msra.mxu0 0
      %1941 = vmatprep.subr.bf16.mxu0 0
      %1942 = vmatpush1.bf16.msra.mxu0 0
      %1943 = vmatprep.subr.bf16.mxu0 0
      %1944 = vmatpush1.bf16.msra.mxu0 0
      %1945 = vmatprep.subr.bf16.mxu0 0
      %1946 = vmatpush1.bf16.msra.mxu0 0
      %1947 = vmatprep.subr.bf16.mxu0 0
      %1948 = vmatpush1.bf16.msra.mxu0 0
      %1949 = vmatprep.subr.bf16.mxu0 0
      %1950 = vmatpush1.bf16.msra.mxu0 0
      %1951 = vmatprep.subr.bf16.mxu0 0
      %1952 = vmatpush1.bf16.msra.mxu0 0
      %1953 = vmatprep.subr.bf16.mxu0 0
      %1954 = vmatpush1.bf16.msra.mxu0 0
      %1955 = vmatprep.subr.bf16.mxu0 0
      %1956 = vmatpush1.bf16.msra.mxu0 0
      %1957 = vmatprep.subr.bf16.mxu0 0
      %1958 = vmatpush1.bf16.msra.mxu0 0
      %1959 = vmatprep.mubr.bf16.mxu0 0
      %1960 = vmatmul.mubr.bf16.gmra.mrb[0].mxu0 %v1922
      %v1961 = vpop.f32.mrb[0].mxu0
      %v1962 = vadd.f32 0.0, %v1961
      %v1963 = vpop.f32.mrb[0].mxu0
      %v1964 = vpop.f32.mrb[0].mxu0
      %v1965 = vpop.f32.mrb[0].mxu0
      %1966 = vdwg.mxu0
      %v1968 = vsel %vm1583, %v1823, 0
      %v1971 = vsel %vm1831, %v1827, 0
      %1973 = vmatprep.subr.bf16.mxu0 0
      %1974 = vmatpush1.bf16.msra.mxu0 %v1971
      %1975 = vmatprep.subr.bf16.mxu0 0
      %1976 = vmatpush1.bf16.msra.mxu0 0
      %1977 = vmatprep.subr.bf16.mxu0 0
      %1978 = vmatpush1.bf16.msra.mxu0 0
      %1979 = vmatprep.subr.bf16.mxu0 0
      %1980 = vmatpush1.bf16.msra.mxu0 0
      %1981 = vmatprep.subr.bf16.mxu0 0
      %1982 = vmatpush1.bf16.msra.mxu0 0
      %1983 = vmatprep.subr.bf16.mxu0 0
      %1984 = vmatpush1.bf16.msra.mxu0 0
      %1985 = vmatprep.subr.bf16.mxu0 0
      %1986 = vmatpush1.bf16.msra.mxu0 0
      %1987 = vmatprep.subr.bf16.mxu0 0
      %1988 = vmatpush1.bf16.msra.mxu0 0
      %1989 = vmatprep.subr.bf16.mxu0 0
      %1990 = vmatpush1.bf16.msra.mxu0 0
      %1991 = vmatprep.subr.bf16.mxu0 0
      %1992 = vmatpush1.bf16.msra.mxu0 0
      %1993 = vmatprep.subr.bf16.mxu0 0
      %1994 = vmatpush1.bf16.msra.mxu0 0
      %1995 = vmatprep.subr.bf16.mxu0 0
      %1996 = vmatpush1.bf16.msra.mxu0 0
      %1997 = vmatprep.subr.bf16.mxu0 0
      %1998 = vmatpush1.bf16.msra.mxu0 0
      %1999 = vmatprep.subr.bf16.mxu0 0
      %2000 = vmatpush1.bf16.msra.mxu0 0
      %2001 = vmatprep.subr.bf16.mxu0 0
      %2002 = vmatpush1.bf16.msra.mxu0 0
      %2003 = vmatprep.subr.bf16.mxu0 0
      %2004 = vmatpush1.bf16.msra.mxu0 0
      %2005 = vmatprep.mubr.bf16.mxu0 0
      %2006 = vmatmul.mubr.bf16.gmra.mrb[0].mxu0 %v1968
      %v2007 = vpop.f32.mrb[0].mxu0
      %v2008 = vadd.f32 0.0, %v2007
      %v2009 = vpop.f32.mrb[0].mxu0
      %v2010 = vpop.f32.mrb[0].mxu0
      %v2011 = vpop.f32.mrb[0].mxu0
      %2012 = vdwg.mxu0
      %v2013 = vcombine.low %v1870, %v1962
      %v2014 = vcombine.high %v1870, %v1962
      %v2016 = vunpack.c.l.s4 1983009808
      %v2017 = vunpack.c.0.s8 %v2016
      %v2018 = vlaneseq
      %v2019 = vshrl.u32 %v2018, 7
      %v2020 = vsub.s32 %v2017, %v2019
      %v2021 = vrot.slane %v2013, %v2020
      %v2023 = vunpack.c.l.s4 1983009808
      %v2024 = vunpack.c.0.s8 %v2023
      %v2025 = vlaneseq
      %v2026 = vshrl.u32 %v2025, 7
      %v2027 = vsub.s32 %v2024, %v2026
      %v2028 = vrot.slane %v2014, %v2027
      %v2029 = vcombine.low %v1916, %v2008
      %v2030 = vcombine.high %v1916, %v2008
      %v2032 = vunpack.c.l.s4 1983009808
      %v2033 = vunpack.c.0.s8 %v2032
      %v2034 = vlaneseq
      %v2035 = vshrl.u32 %v2034, 7
      %v2036 = vsub.s32 %v2033, %v2035
      %v2037 = vrot.slane %v2029, %v2036
      %v2039 = vunpack.c.l.s4 1983009808
      %v2040 = vunpack.c.0.s8 %v2039
      %v2041 = vlaneseq
      %v2042 = vshrl.u32 %v2041, 7
      %v2043 = vsub.s32 %v2040, %v2042
      %v2044 = vrot.slane %v2030, %v2043
      %v2045 = vcombine.low %v2021, %v2037
      %v2046 = vcombine.high %v2021, %v2037
      %v2048 = vunpack.c.l.s4 1934713408
      %v2049 = vunpack.c.0.s8 %v2048
      %v2050 = vlaneseq
      %v2051 = vshrl.u32 %v2050, 7
      %v2052 = vsub.s32 %v2049, %v2051
      %v2053 = vrot.slane %v2045, %v2052
      %v2055 = vunpack.c.l.s4 1934713408
      %v2056 = vunpack.c.0.s8 %v2055
      %v2057 = vlaneseq
      %v2058 = vshrl.u32 %v2057, 7
      %v2059 = vsub.s32 %v2056, %v2058
      %v2060 = vrot.slane %v2046, %v2059
      %v2061 = vcombine.low %v2028, %v2044
      %v2062 = vcombine.high %v2028, %v2044
      %v2064 = vunpack.c.l.s4 1934713408
      %v2065 = vunpack.c.0.s8 %v2064
      %v2066 = vlaneseq
      %v2067 = vshrl.u32 %v2066, 7
      %v2068 = vsub.s32 %v2065, %v2067
      %v2069 = vrot.slane %v2061, %v2068
      %v2071 = vunpack.c.l.s4 1934713408
      %v2072 = vunpack.c.0.s8 %v2071
      %v2073 = vlaneseq
      %v2074 = vshrl.u32 %v2073, 7
      %v2075 = vsub.s32 %v2072, %v2074
      %v2076 = vrot.slane %v2062, %v2075
      %v2077 = vcombine.high %v2053, 0.0
      %v2078 = vcombine.high %v2060, 0.0
      %v2079 = vcombine.high %v2069, 0.0
      %v2080 = vcombine.high %v2076, 0.0
      %v2081 = vcombine.low %v2053, %v2060
      %v2083 = vunpack.c.l.s4 1983009808
      %v2084 = vunpack.c.0.s8 %v2083
      %v2085 = vlaneseq
      %v2086 = vshrl.u32 %v2085, 7
      %v2087 = vsub.s32 %v2084, %v2086
      %v2088 = vrot.slane %v2081, %v2087
      %v2089 = vcombine.low %v2077, %v2078
      %v2091 = vunpack.c.l.s4 1983009808
      %v2092 = vunpack.c.0.s8 %v2091
      %v2093 = vlaneseq
      %v2094 = vshrl.u32 %v2093, 7
      %v2095 = vsub.s32 %v2092, %v2094
      %v2096 = vrot.slane %v2089, %v2095
      %v2097 = vcombine.low %v2069, %v2076
      %v2099 = vunpack.c.l.s4 1983009808
      %v2100 = vunpack.c.0.s8 %v2099
      %v2101 = vlaneseq
      %v2102 = vshrl.u32 %v2101, 7
      %v2103 = vsub.s32 %v2100, %v2102
      %v2104 = vrot.slane %v2097, %v2103
      %v2105 = vcombine.low %v2079, %v2080
      %v2107 = vunpack.c.l.s4 1983009808
      %v2108 = vunpack.c.0.s8 %v2107
      %v2109 = vlaneseq
      %v2110 = vshrl.u32 %v2109, 7
      %v2111 = vsub.s32 %v2108, %v2110
      %v2112 = vrot.slane %v2105, %v2111
      %v2113 = vcombine.low %v2088, %v2096
      %v2114 = vcombine.high %v2088, %v2096
      %v2116 = vunpack.c.l.s4 1934713408
      %v2117 = vunpack.c.0.s8 %v2116
      %v2118 = vlaneseq
      %v2119 = vshrl.u32 %v2118, 7
      %v2120 = vsub.s32 %v2117, %v2119
      %v2121 = vrot.slane %v2113, %v2120
      %v2123 = vunpack.c.l.s4 1934713408
      %v2124 = vunpack.c.0.s8 %v2123
      %v2125 = vlaneseq
      %v2126 = vshrl.u32 %v2125, 7
      %v2127 = vsub.s32 %v2124, %v2126
      %v2128 = vrot.slane %v2114, %v2127
      %v2129 = vcombine.low %v2104, %v2112
      %v2130 = vcombine.high %v2104, %v2112
      %v2132 = vunpack.c.l.s4 1934713408
      %v2133 = vunpack.c.0.s8 %v2132
      %v2134 = vlaneseq
      %v2135 = vshrl.u32 %v2134, 7
      %v2136 = vsub.s32 %v2133, %v2135
      %v2137 = vrot.slane %v2129, %v2136
      %v2139 = vunpack.c.l.s4 1934713408
      %v2140 = vunpack.c.0.s8 %v2139
      %v2141 = vlaneseq
      %v2142 = vshrl.u32 %v2141, 7
      %v2143 = vsub.s32 %v2140, %v2142
      %v2144 = vrot.slane %v2130, %v2143
      %v2145 = vcombine.low %v2121, %v2137
      %v2146 = vcombine.high %v2121, %v2137
      %v2147 = vcombine.low %v2128, %v2144
      %v2148 = vcombine.high %v2128, %v2144
      %2150 = vrot.lane.b32.xlu0 %v2146, 8
      %v2151 = vpop.permute.xlu0 %2150
      %2154 = vrot.lane.b32.xlu0 %v2147, 16
      %v2155 = vpop.permute.xlu0 %2154
      %2158 = vrot.lane.b32.xlu0 %v2148, 24
      %v2159 = vpop.permute.xlu0 %2158
      %v2161 = vsel %vm1583, %v2145, %v2151
      %vm2162 = vcmask 130048
      %v2163 = vsel %vm2162, %v2161, %v2155
      %vm2164 = vcmask 195584
      %v2165 = vsel %vm2164, %v2163, %v2159
      %v2166 = vpack.c.bf16 %v2165, %v2165
      %v2167 = vpack.c.bf16 %v1076, %v1075
      %v2168 = vpack.c.bf16 %v1078, %v1077
      %v2170 = vlaneseq
      %v2171 = vshrl.u32 %v2170, 7
      %v2172 = vsub.s32 0, %v2171
      %v2173 = vrot.slane %v1079, %v2172
      %v2176 = vsel %vm1089, %v2166, 0
      %2178 = vmatprep.subr.bf16.mxu0 0
      %2179 = vmatpush1.bf16.msra.mxu0 %v2167
      %2180 = vmatprep.subr.bf16.mxu0 0
      %2181 = vmatpush1.bf16.msra.mxu0 %v2168
      %2182 = vmatprep.subr.bf16.mxu0 0
      %2183 = vmatpush1.bf16.msra.mxu0 0
      %2184 = vmatprep.subr.bf16.mxu0 0
      %2185 = vmatpush1.bf16.msra.mxu0 0
      %2186 = vmatprep.subr.bf16.mxu0 0
      %2187 = vmatpush1.bf16.msra.mxu0 0
      %2188 = vmatprep.subr.bf16.mxu0 0
      %2189 = vmatpush1.bf16.msra.mxu0 0
      %2190 = vmatprep.subr.bf16.mxu0 0
      %2191 = vmatpush1.bf16.msra.mxu0 0
      %2192 = vmatprep.subr.bf16.mxu0 0
      %2193 = vmatpush1.bf16.msra.mxu0 0
      %2194 = vmatprep.subr.bf16.mxu0 0
      %2195 = vmatpush1.bf16.msra.mxu0 0
      %2196 = vmatprep.subr.bf16.mxu0 0
      %2197 = vmatpush1.bf16.msra.mxu0 0
      %2198 = vmatprep.subr.bf16.mxu0 0
      %2199 = vmatpush1.bf16.msra.mxu0 0
      %2200 = vmatprep.subr.bf16.mxu0 0
      %2201 = vmatpush1.bf16.msra.mxu0 0
      %2202 = vmatprep.subr.bf16.mxu0 0
      %2203 = vmatpush1.bf16.msra.mxu0 0
      %2204 = vmatprep.subr.bf16.mxu0 0
      %2205 = vmatpush1.bf16.msra.mxu0 0
      %2206 = vmatprep.subr.bf16.mxu0 0
      %2207 = vmatpush1.bf16.msra.mxu0 0
      %2208 = vmatprep.subr.bf16.mxu0 0
      %2209 = vmatpush1.bf16.msra.mxu0 0
      %2210 = vmatprep.mubr.bf16.mxu0 0
      %2211 = vmatmul.mubr.bf16.gmra.mrb[0].mxu0 %v2176
      %v2212 = vpop.f32.mrb[0].mxu0
      %v2213 = vadd.f32 %v2173, %v2212
      %v2214 = vpop.f32.mrb[0].mxu0
      %v2215 = vpop.f32.mrb[0].mxu0
      %v2216 = vpop.f32.mrb[0].mxu0
      %2217 = vdwg.mxu0
      %v2218 = vadd.f32 %v1061, %v2213
      %v2219 = vld [vmem:[%s1001] sm:$0x1]
      %v2220 = vld [vmem:[%s1004] sm:$0x1]
      %v2221 = vsel %vm1089, %v2218, 0.0
      %2222 = vadd.xlane.f32.xlu0 %v2221
      %v2223 = vpop.xlane.xlu0 %2222
      %v2224 = vrcp.pop 32.0
      %v2225 = vmul.f32 %v2223, %v2224
      %v2226 = vsub.f32 %v2218, %v2225
      %v2227 = vmul.f32 %v2226, %v2226
      %v2228 = vsel %vm1089, %v2227, 0.0
      %2229 = vadd.xlane.f32.xlu0 %v2228
      %v2230 = vpop.xlane.xlu0 %2229
      %v2231 = vmul.f32 %v2230, %v2224
      %v2232 = vadd.f32 %v2231, 1e-05
      %v2233 = vrsqrt.pop %v2232
      %v2234 = vmul.f32 %v2226, %v2233
      %v2236 = vlaneseq
      %v2237 = vshrl.u32 %v2236, 7
      %v2238 = vsub.s32 0, %v2237
      %v2239 = vrot.slane %v2219, %v2238
      %v2241 = vmul.f32 %v2234, %v2239
      %v2243 = vlaneseq
      %v2244 = vshrl.u32 %v2243, 7
      %v2245 = vsub.s32 0, %v2244
      %v2246 = vrot.slane %v2220, %v2245
      %v2248 = vadd.f32 %v2241, %v2246
      %v2249 = vld [vmem:[%s1009] sm:$0xff]
      %v2250 = vld [vmem:[%s1009 + $0x8] sm:$0xff]
      %v2251 = vld [vmem:[%s1009 + $0x10] sm:$0xff]
      %v2252 = vld [vmem:[%s1009 + $0x18] sm:$0xff]
      %v2253 = vld [vmem:[%s1012] sm:$0x1]
      %v2254 = vld [vmem:[%s1017] sm:$0xff]
      %v2255 = vld [vmem:[%s1017 + $0x8] sm:$0xff]
      %v2256 = vld [vmem:[%s1017 + $0x10] sm:$0xff]
      %v2257 = vld [vmem:[%s1017 + $0x18] sm:$0xff]
      %v2258 = vld [vmem:[%s1020] sm:$0x1]
      %v2259 = vpack.c.bf16 %v2248, %v2248
      %v2260 = vpack.c.bf16 %v2250, %v2249
      %v2261 = vpack.c.bf16 %v2252, %v2251
      %v2263 = vlaneseq
      %v2264 = vshrl.u32 %v2263, 7
      %v2265 = vsub.s32 0, %v2264
      %v2266 = vrot.slane %v2253, %v2265
      %v2269 = vsel %vm1089, %v2259, 0
      %2271 = vmatprep.subr.bf16.mxu0 0
      %2272 = vmatpush1.bf16.msra.mxu0 %v2260
      %2273 = vmatprep.subr.bf16.mxu0 0
      %2274 = vmatpush1.bf16.msra.mxu0 %v2261
      %2275 = vmatprep.subr.bf16.mxu0 0
      %2276 = vmatpush1.bf16.msra.mxu0 0
      %2277 = vmatprep.subr.bf16.mxu0 0
      %2278 = vmatpush1.bf16.msra.mxu0 0
      %2279 = vmatprep.subr.bf16.mxu0 0
      %2280 = vmatpush1.bf16.msra.mxu0 0
      %2281 = vmatprep.subr.bf16.mxu0 0
      %2282 = vmatpush1.bf16.msra.mxu0 0
      %2283 = vmatprep.subr.bf16.mxu0 0
      %2284 = vmatpush1.bf16.msra.mxu0 0
      %2285 = vmatprep.subr.bf16.mxu0 0
      %2286 = vmatpush1.bf16.msra.mxu0 0
      %2287 = vmatprep.subr.bf16.mxu0 0
      %2288 = vmatpush1.bf16.msra.mxu0 0
      %2289 = vmatprep.subr.bf16.mxu0 0
      %2290 = vmatpush1.bf16.msra.mxu0 0
      %2291 = vmatprep.subr.bf16.mxu0 0
      %2292 = vmatpush1.bf16.msra.mxu0 0
      %2293 = vmatprep.subr.bf16.mxu0 0
      %2294 = vmatpush1.bf16.msra.mxu0 0
      %2295 = vmatprep.subr.bf16.mxu0 0
      %2296 = vmatpush1.bf16.msra.mxu0 0
      %2297 = vmatprep.subr.bf16.mxu0 0
      %2298 = vmatpush1.bf16.msra.mxu0 0
      %2299 = vmatprep.subr.bf16.mxu0 0
      %2300 = vmatpush1.bf16.msra.mxu0 0
      %2301 = vmatprep.subr.bf16.mxu0 0
      %2302 = vmatpush1.bf16.msra.mxu0 0
      %2303 = vmatprep.mubr.bf16.mxu0 0
      %2304 = vmatmul.mubr.bf16.gmra.mrb[0].mxu0 %v2269
      %v2305 = vpop.f32.mrb[0].mxu0
      %v2306 = vadd.f32 %v2266, %v2305
      %v2307 = vpop.f32.mrb[0].mxu0
      %v2308 = vpop.f32.mrb[0].mxu0
      %v2309 = vpop.f32.mrb[0].mxu0
      %2310 = vdwg.mxu0
      %v2311 = vpack.c.bf16 %v1063, %v1062
      %2314 = vrot.lane.b32.xlu0 %v2260, 96
      %v2315 = vpop.permute.xlu0 %2314
      %2316 = vrot.lane.b32.xlu0 %v2261, 96
      %v2317 = vpop.permute.xlu0 %2316
      %2320 = vrot.lane.b32.xlu0 %v2266, 96
      %v2321 = vpop.permute.xlu0 %2320
      %v2324 = vsel %vm1089, %v2311, 0
      %2326 = vmatprep.subr.bf16.mxu0 0
      %2327 = vmatpush1.bf16.msra.mxu0 %v2315
      %2328 = vmatprep.subr.bf16.mxu0 0
      %2329 = vmatpush1.bf16.msra.mxu0 %v2317
      %2330 = vmatprep.subr.bf16.mxu0 0
      %2331 = vmatpush1.bf16.msra.mxu0 0
      %2332 = vmatprep.subr.bf16.mxu0 0
      %2333 = vmatpush1.bf16.msra.mxu0 0
      %2334 = vmatprep.subr.bf16.mxu0 0
      %2335 = vmatpush1.bf16.msra.mxu0 0
      %2336 = vmatprep.subr.bf16.mxu0 0
      %2337 = vmatpush1.bf16.msra.mxu0 0
      %2338 = vmatprep.subr.bf16.mxu0 0
      %2339 = vmatpush1.bf16.msra.mxu0 0
      %2340 = vmatprep.subr.bf16.mxu0 0
      %2341 = vmatpush1.bf16.msra.mxu0 0
      %2342 = vmatprep.subr.bf16.mxu0 0
      %2343 = vmatpush1.bf16.msra.mxu0 0
      %2344 = vmatprep.subr.bf16.mxu0 0
      %2345 = vmatpush1.bf16.msra.mxu0 0
      %2346 = vmatprep.subr.bf16.mxu0 0
      %2347 = vmatpush1.bf16.msra.mxu0 0
      %2348 = vmatprep.subr.bf16.mxu0 0
      %2349 = vmatpush1.bf16.msra.mxu0 0
      %2350 = vmatprep.subr.bf16.mxu0 0
      %2351 = vmatpush1.bf16.msra.mxu0 0
      %2352 = vmatprep.subr.bf16.mxu0 0
      %2353 = vmatpush1.bf16.msra.mxu0 0
      %2354 = vmatprep.subr.bf16.mxu0 0
      %2355 = vmatpush1.bf16.msra.mxu0 0
      %2356 = vmatprep.subr.bf16.mxu0 0
      %2357 = vmatpush1.bf16.msra.mxu0 0
      %2358 = vmatprep.mubr.bf16.mxu0 0
      %2359 = vmatmul.mubr.bf16.gmra.mrb[0].mxu0 %v2324
      %v2360 = vpop.f32.mrb[0].mxu0
      %v2361 = vadd.f32 %v2321, %v2360
      %v2362 = vpop.f32.mrb[0].mxu0
      %v2363 = vpop.f32.mrb[0].mxu0
      %v2364 = vadd.f32 %v2321, %v2363
      %v2365 = vpop.f32.mrb[0].mxu0
      %2366 = vdwg.mxu0
      %2368 = vrot.lane.b32.xlu0 %v2306, 120
      %v2369 = vpop.permute.xlu0 %2368
      %2371 = vrot.lane.b32.xlu0 %v2306, 112
      %v2372 = vpop.permute.xlu0 %2371
      %2374 = vrot.lane.b32.xlu0 %v2306, 104
      %v2375 = vpop.permute.xlu0 %2374
      %v2377 = vcombine.low %v2306, %v2372
      %v2378 = vcombine.high %v2306, %v2372
      %v2380 = vunpack.c.l.s4 1983009808
      %v2381 = vunpack.c.0.s8 %v2380
      %v2382 = vlaneseq
      %v2383 = vshrl.u32 %v2382, 7
      %v2384 = vsub.s32 %v2381, %v2383
      %v2385 = vrot.slane %v2377, %v2384
      %v2387 = vunpack.c.l.s4 1983009808
      %v2388 = vunpack.c.0.s8 %v2387
      %v2389 = vlaneseq
      %v2390 = vshrl.u32 %v2389, 7
      %v2391 = vsub.s32 %v2388, %v2390
      %v2392 = vrot.slane %v2378, %v2391
      %v2393 = vcombine.low %v2369, %v2375
      %v2394 = vcombine.high %v2369, %v2375
      %v2396 = vunpack.c.l.s4 1983009808
      %v2397 = vunpack.c.0.s8 %v2396
      %v2398 = vlaneseq
      %v2399 = vshrl.u32 %v2398, 7
      %v2400 = vsub.s32 %v2397, %v2399
      %v2401 = vrot.slane %v2393, %v2400
      %v2403 = vunpack.c.l.s4 1983009808
      %v2404 = vunpack.c.0.s8 %v2403
      %v2405 = vlaneseq
      %v2406 = vshrl.u32 %v2405, 7
      %v2407 = vsub.s32 %v2404, %v2406
      %v2408 = vrot.slane %v2394, %v2407
      %v2409 = vcombine.low %v2385, %v2401
      %v2410 = vcombine.high %v2385, %v2401
      %v2412 = vunpack.c.l.s4 1934713408
      %v2413 = vunpack.c.0.s8 %v2412
      %v2414 = vlaneseq
      %v2415 = vshrl.u32 %v2414, 7
      %v2416 = vsub.s32 %v2413, %v2415
      %v2417 = vrot.slane %v2409, %v2416
      %v2419 = vunpack.c.l.s4 1934713408
      %v2420 = vunpack.c.0.s8 %v2419
      %v2421 = vlaneseq
      %v2422 = vshrl.u32 %v2421, 7
      %v2423 = vsub.s32 %v2420, %v2422
      %v2424 = vrot.slane %v2410, %v2423
      %v2425 = vcombine.low %v2392, %v2408
      %v2426 = vcombine.high %v2392, %v2408
      %v2428 = vunpack.c.l.s4 1934713408
      %v2429 = vunpack.c.0.s8 %v2428
      %v2430 = vlaneseq
      %v2431 = vshrl.u32 %v2430, 7
      %v2432 = vsub.s32 %v2429, %v2431
      %v2433 = vrot.slane %v2425, %v2432
      %v2435 = vunpack.c.l.s4 1934713408
      %v2436 = vunpack.c.0.s8 %v2435
      %v2437 = vlaneseq
      %v2438 = vshrl.u32 %v2437, 7
      %v2439 = vsub.s32 %v2436, %v2438
      %v2440 = vrot.slane %v2426, %v2439
      %v2441 = vcombine.high %v2417, 0.0
      %v2442 = vcombine.high %v2424, 0.0
      %v2443 = vcombine.high %v2433, 0.0
      %v2444 = vcombine.high %v2440, 0.0
      %v2445 = vcombine.low %v2417, %v2424
      %v2447 = vunpack.c.l.s4 1983009808
      %v2448 = vunpack.c.0.s8 %v2447
      %v2449 = vlaneseq
      %v2450 = vshrl.u32 %v2449, 7
      %v2451 = vsub.s32 %v2448, %v2450
      %v2452 = vrot.slane %v2445, %v2451
      %v2453 = vcombine.low %v2441, %v2442
      %v2455 = vunpack.c.l.s4 1983009808
      %v2456 = vunpack.c.0.s8 %v2455
      %v2457 = vlaneseq
      %v2458 = vshrl.u32 %v2457, 7
      %v2459 = vsub.s32 %v2456, %v2458
      %v2460 = vrot.slane %v2453, %v2459
      %v2461 = vcombine.low %v2433, %v2440
      %v2463 = vunpack.c.l.s4 1983009808
      %v2464 = vunpack.c.0.s8 %v2463
      %v2465 = vlaneseq
      %v2466 = vshrl.u32 %v2465, 7
      %v2467 = vsub.s32 %v2464, %v2466
      %v2468 = vrot.slane %v2461, %v2467
      %v2469 = vcombine.low %v2443, %v2444
      %v2471 = vunpack.c.l.s4 1983009808
      %v2472 = vunpack.c.0.s8 %v2471
      %v2473 = vlaneseq
      %v2474 = vshrl.u32 %v2473, 7
      %v2475 = vsub.s32 %v2472, %v2474
      %v2476 = vrot.slane %v2469, %v2475
      %v2477 = vcombine.low %v2452, %v2460
      %v2478 = vcombine.high %v2452, %v2460
      %v2480 = vunpack.c.l.s4 1934713408
      %v2481 = vunpack.c.0.s8 %v2480
      %v2482 = vlaneseq
      %v2483 = vshrl.u32 %v2482, 7
      %v2484 = vsub.s32 %v2481, %v2483
      %v2485 = vrot.slane %v2477, %v2484
      %v2487 = vunpack.c.l.s4 1934713408
      %v2488 = vunpack.c.0.s8 %v2487
      %v2489 = vlaneseq
      %v2490 = vshrl.u32 %v2489, 7
      %v2491 = vsub.s32 %v2488, %v2490
      %v2492 = vrot.slane %v2478, %v2491
      %v2493 = vcombine.low %v2468, %v2476
      %v2494 = vcombine.high %v2468, %v2476
      %v2496 = vunpack.c.l.s4 1934713408
      %v2497 = vunpack.c.0.s8 %v2496
      %v2498 = vlaneseq
      %v2499 = vshrl.u32 %v2498, 7
      %v2500 = vsub.s32 %v2497, %v2499
      %v2501 = vrot.slane %v2493, %v2500
      %v2503 = vunpack.c.l.s4 1934713408
      %v2504 = vunpack.c.0.s8 %v2503
      %v2505 = vlaneseq
      %v2506 = vshrl.u32 %v2505, 7
      %v2507 = vsub.s32 %v2504, %v2506
      %v2508 = vrot.slane %v2494, %v2507
      %v2509 = vcombine.low %v2485, %v2501
      %v2510 = vcombine.high %v2485, %v2501
      %v2511 = vcombine.low %v2492, %v2508
      %v2512 = vcombine.high %v2492, %v2508
      %2515 = vrot.lane.b32.xlu0 %v2361, 120
      %v2516 = vpop.permute.xlu0 %2515
      %2517 = vrot.lane.b32.xlu0 %v2364, 120
      %v2518 = vpop.permute.xlu0 %2517
      %2521 = vrot.lane.b32.xlu0 %v2361, 112
      %v2522 = vpop.permute.xlu0 %2521
      %2523 = vrot.lane.b32.xlu0 %v2364, 112
      %v2524 = vpop.permute.xlu0 %2523
      %2527 = vrot.lane.b32.xlu0 %v2361, 104
      %v2528 = vpop.permute.xlu0 %2527
      %2529 = vrot.lane.b32.xlu0 %v2364, 104
      %v2530 = vpop.permute.xlu0 %2529
      %v2533 = vcombine.low %v2361, %v2522
      %v2534 = vcombine.high %v2361, %v2522
      %v2536 = vunpack.c.l.s4 1983009808
      %v2537 = vunpack.c.0.s8 %v2536
      %v2538 = vlaneseq
      %v2539 = vshrl.u32 %v2538, 7
      %v2540 = vsub.s32 %v2537, %v2539
      %v2541 = vrot.slane %v2533, %v2540
      %v2543 = vunpack.c.l.s4 1983009808
      %v2544 = vunpack.c.0.s8 %v2543
      %v2545 = vlaneseq
      %v2546 = vshrl.u32 %v2545, 7
      %v2547 = vsub.s32 %v2544, %v2546
      %v2548 = vrot.slane %v2534, %v2547
      %v2549 = vcombine.low %v2516, %v2528
      %v2550 = vcombine.high %v2516, %v2528
      %v2552 = vunpack.c.l.s4 1983009808
      %v2553 = vunpack.c.0.s8 %v2552
      %v2554 = vlaneseq
      %v2555 = vshrl.u32 %v2554, 7
      %v2556 = vsub.s32 %v2553, %v2555
      %v2557 = vrot.slane %v2549, %v2556
      %v2559 = vunpack.c.l.s4 1983009808
      %v2560 = vunpack.c.0.s8 %v2559
      %v2561 = vlaneseq
      %v2562 = vshrl.u32 %v2561, 7
      %v2563 = vsub.s32 %v2560, %v2562
      %v2564 = vrot.slane %v2550, %v2563
      %v2565 = vcombine.low %v2541, %v2557
      %v2566 = vcombine.high %v2541, %v2557
      %v2568 = vunpack.c.l.s4 1934713408
      %v2569 = vunpack.c.0.s8 %v2568
      %v2570 = vlaneseq
      %v2571 = vshrl.u32 %v2570, 7
      %v2572 = vsub.s32 %v2569, %v2571
      %v2573 = vrot.slane %v2565, %v2572
      %v2575 = vunpack.c.l.s4 1934713408
      %v2576 = vunpack.c.0.s8 %v2575
      %v2577 = vlaneseq
      %v2578 = vshrl.u32 %v2577, 7
      %v2579 = vsub.s32 %v2576, %v2578
      %v2580 = vrot.slane %v2566, %v2579
      %v2581 = vcombine.low %v2548, %v2564
      %v2582 = vcombine.high %v2548, %v2564
      %v2584 = vunpack.c.l.s4 1934713408
      %v2585 = vunpack.c.0.s8 %v2584
      %v2586 = vlaneseq
      %v2587 = vshrl.u32 %v2586, 7
      %v2588 = vsub.s32 %v2585, %v2587
      %v2589 = vrot.slane %v2581, %v2588
      %v2591 = vunpack.c.l.s4 1934713408
      %v2592 = vunpack.c.0.s8 %v2591
      %v2593 = vlaneseq
      %v2594 = vshrl.u32 %v2593, 7
      %v2595 = vsub.s32 %v2592, %v2594
      %v2596 = vrot.slane %v2582, %v2595
      %v2597 = vcombine.high %v2573, 0.0
      %v2598 = vcombine.high %v2580, 0.0
      %v2599 = vcombine.high %v2589, 0.0
      %v2600 = vcombine.high %v2596, 0.0
      %v2601 = vcombine.low %v2364, %v2524
      %v2603 = vunpack.c.l.s4 1983009808
      %v2604 = vunpack.c.0.s8 %v2603
      %v2605 = vlaneseq
      %v2606 = vshrl.u32 %v2605, 7
      %v2607 = vsub.s32 %v2604, %v2606
      %v2608 = vrot.slane %v2601, %v2607
      %v2609 = vcombine.low %v2518, %v2530
      %v2611 = vunpack.c.l.s4 1983009808
      %v2612 = vunpack.c.0.s8 %v2611
      %v2613 = vlaneseq
      %v2614 = vshrl.u32 %v2613, 7
      %v2615 = vsub.s32 %v2612, %v2614
      %v2616 = vrot.slane %v2609, %v2615
      %v2617 = vcombine.low %v2608, %v2616
      %v2619 = vunpack.c.l.s4 1934713408
      %v2620 = vunpack.c.0.s8 %v2619
      %v2621 = vlaneseq
      %v2622 = vshrl.u32 %v2621, 7
      %v2623 = vsub.s32 %v2620, %v2622
      %v2624 = vrot.slane %v2617, %v2623
      %v2625 = vcombine.low %v2573, %v2580
      %v2627 = vunpack.c.l.s4 1983009808
      %v2628 = vunpack.c.0.s8 %v2627
      %v2629 = vlaneseq
      %v2630 = vshrl.u32 %v2629, 7
      %v2631 = vsub.s32 %v2628, %v2630
      %v2632 = vrot.slane %v2625, %v2631
      %v2633 = vcombine.low %v2597, %v2598
      %v2635 = vunpack.c.l.s4 1983009808
      %v2636 = vunpack.c.0.s8 %v2635
      %v2637 = vlaneseq
      %v2638 = vshrl.u32 %v2637, 7
      %v2639 = vsub.s32 %v2636, %v2638
      %v2640 = vrot.slane %v2633, %v2639
      %v2641 = vcombine.low %v2589, %v2596
      %v2643 = vunpack.c.l.s4 1983009808
      %v2644 = vunpack.c.0.s8 %v2643
      %v2645 = vlaneseq
      %v2646 = vshrl.u32 %v2645, 7
      %v2647 = vsub.s32 %v2644, %v2646
      %v2648 = vrot.slane %v2641, %v2647
      %v2649 = vcombine.low %v2599, %v2600
      %v2651 = vunpack.c.l.s4 1983009808
      %v2652 = vunpack.c.0.s8 %v2651
      %v2653 = vlaneseq
      %v2654 = vshrl.u32 %v2653, 7
      %v2655 = vsub.s32 %v2652, %v2654
      %v2656 = vrot.slane %v2649, %v2655
      %v2657 = vcombine.low %v2632, %v2640
      %v2658 = vcombine.high %v2632, %v2640
      %v2660 = vunpack.c.l.s4 1934713408
      %v2661 = vunpack.c.0.s8 %v2660
      %v2662 = vlaneseq
      %v2663 = vshrl.u32 %v2662, 7
      %v2664 = vsub.s32 %v2661, %v2663
      %v2665 = vrot.slane %v2657, %v2664
      %v2667 = vunpack.c.l.s4 1934713408
      %v2668 = vunpack.c.0.s8 %v2667
      %v2669 = vlaneseq
      %v2670 = vshrl.u32 %v2669, 7
      %v2671 = vsub.s32 %v2668, %v2670
      %v2672 = vrot.slane %v2658, %v2671
      %v2673 = vcombine.low %v2648, %v2656
      %v2674 = vcombine.high %v2648, %v2656
      %v2676 = vunpack.c.l.s4 1934713408
      %v2677 = vunpack.c.0.s8 %v2676
      %v2678 = vlaneseq
      %v2679 = vshrl.u32 %v2678, 7
      %v2680 = vsub.s32 %v2677, %v2679
      %v2681 = vrot.slane %v2673, %v2680
      %v2683 = vunpack.c.l.s4 1934713408
      %v2684 = vunpack.c.0.s8 %v2683
      %v2685 = vlaneseq
      %v2686 = vshrl.u32 %v2685, 7
      %v2687 = vsub.s32 %v2684, %v2686
      %v2688 = vrot.slane %v2674, %v2687
      %v2689 = vcombine.low %v2665, %v2681
      %v2690 = vcombine.high %v2665, %v2681
      %v2691 = vcombine.low %v2672, %v2688
      %v2692 = vcombine.high %v2672, %v2688
      %v2694 = vunpack.c.l.s4 1983009808
      %v2695 = vunpack.c.0.s8 %v2694
      %v2696 = vlaneseq
      %v2697 = vshrl.u32 %v2696, 7
      %v2698 = vsub.s32 %v2695, %v2697
      %v2699 = vrot.slane %v2624, %v2698
      %v2700 = vcombine.high %v2624, 0.0
      %v2702 = vunpack.c.l.s4 1983009808
      %v2703 = vunpack.c.0.s8 %v2702
      %v2704 = vlaneseq
      %v2705 = vshrl.u32 %v2704, 7
      %v2706 = vsub.s32 %v2703, %v2705
      %v2707 = vrot.slane %v2700, %v2706
      %v2708 = vcombine.low %v2699, %v2707
      %v2709 = vcombine.high %v2699, %v2707
      %v2711 = vunpack.c.l.s4 1934713408
      %v2712 = vunpack.c.0.s8 %v2711
      %v2713 = vlaneseq
      %v2714 = vshrl.u32 %v2713, 7
      %v2715 = vsub.s32 %v2712, %v2714
      %v2716 = vrot.slane %v2708, %v2715
      %v2718 = vunpack.c.l.s4 1934713408
      %v2719 = vunpack.c.0.s8 %v2718
      %v2720 = vlaneseq
      %v2721 = vshrl.u32 %v2720, 7
      %v2722 = vsub.s32 %v2719, %v2721
      %v2723 = vrot.slane %v2709, %v2722
      %v2724 = vcombine.high %v2716, 0.0
      %v2725 = vcombine.high %v2723, 0.0
      %2726 = vrot.lane.b32.xlu0 %v2361, 96
      %v2727 = vpop.permute.xlu0 %2726
      %2728 = vrot.lane.b32.xlu0 %v2364, 96
      %v2729 = vpop.permute.xlu0 %2728
      %2730 = vrot.lane.b32.xlu0 %v2516, 96
      %v2731 = vpop.permute.xlu0 %2730
      %2732 = vrot.lane.b32.xlu0 %v2518, 96
      %v2733 = vpop.permute.xlu0 %2732
      %2734 = vrot.lane.b32.xlu0 %v2522, 96
      %v2735 = vpop.permute.xlu0 %2734
      %2736 = vrot.lane.b32.xlu0 %v2524, 96
      %v2737 = vpop.permute.xlu0 %2736
      %2738 = vrot.lane.b32.xlu0 %v2528, 96
      %v2739 = vpop.permute.xlu0 %2738
      %2740 = vrot.lane.b32.xlu0 %v2530, 96
      %v2741 = vpop.permute.xlu0 %2740
      %v2750 = vcombine.low %v2727, %v2735
      %v2751 = vcombine.high %v2727, %v2735
      %v2753 = vunpack.c.l.s4 1983009808
      %v2754 = vunpack.c.0.s8 %v2753
      %v2755 = vlaneseq
      %v2756 = vshrl.u32 %v2755, 7
      %v2757 = vsub.s32 %v2754, %v2756
      %v2758 = vrot.slane %v2750, %v2757
      %v2760 = vunpack.c.l.s4 1983009808
      %v2761 = vunpack.c.0.s8 %v2760
      %v2762 = vlaneseq
      %v2763 = vshrl.u32 %v2762, 7
      %v2764 = vsub.s32 %v2761, %v2763
      %v2765 = vrot.slane %v2751, %v2764
      %v2766 = vcombine.low %v2731, %v2739
      %v2767 = vcombine.high %v2731, %v2739
      %v2769 = vunpack.c.l.s4 1983009808
      %v2770 = vunpack.c.0.s8 %v2769
      %v2771 = vlaneseq
      %v2772 = vshrl.u32 %v2771, 7
      %v2773 = vsub.s32 %v2770, %v2772
      %v2774 = vrot.slane %v2766, %v2773
      %v2776 = vunpack.c.l.s4 1983009808
      %v2777 = vunpack.c.0.s8 %v2776
      %v2778 = vlaneseq
      %v2779 = vshrl.u32 %v2778, 7
      %v2780 = vsub.s32 %v2777, %v2779
      %v2781 = vrot.slane %v2767, %v2780
      %v2782 = vcombine.low %v2758, %v2774
      %v2783 = vcombine.high %v2758, %v2774
      %v2785 = vunpack.c.l.s4 1934713408
      %v2786 = vunpack.c.0.s8 %v2785
      %v2787 = vlaneseq
      %v2788 = vshrl.u32 %v2787, 7
      %v2789 = vsub.s32 %v2786, %v2788
      %v2790 = vrot.slane %v2782, %v2789
      %v2792 = vunpack.c.l.s4 1934713408
      %v2793 = vunpack.c.0.s8 %v2792
      %v2794 = vlaneseq
      %v2795 = vshrl.u32 %v2794, 7
      %v2796 = vsub.s32 %v2793, %v2795
      %v2797 = vrot.slane %v2783, %v2796
      %v2798 = vcombine.low %v2765, %v2781
      %v2799 = vcombine.high %v2765, %v2781
      %v2801 = vunpack.c.l.s4 1934713408
      %v2802 = vunpack.c.0.s8 %v2801
      %v2803 = vlaneseq
      %v2804 = vshrl.u32 %v2803, 7
      %v2805 = vsub.s32 %v2802, %v2804
      %v2806 = vrot.slane %v2798, %v2805
      %v2808 = vunpack.c.l.s4 1934713408
      %v2809 = vunpack.c.0.s8 %v2808
      %v2810 = vlaneseq
      %v2811 = vshrl.u32 %v2810, 7
      %v2812 = vsub.s32 %v2809, %v2811
      %v2813 = vrot.slane %v2799, %v2812
      %v2814 = vcombine.high %v2790, 0.0
      %v2815 = vcombine.high %v2797, 0.0
      %v2816 = vcombine.high %v2806, 0.0
      %v2817 = vcombine.high %v2813, 0.0
      %v2818 = vcombine.low %v2729, %v2737
      %v2820 = vunpack.c.l.s4 1983009808
      %v2821 = vunpack.c.0.s8 %v2820
      %v2822 = vlaneseq
      %v2823 = vshrl.u32 %v2822, 7
      %v2824 = vsub.s32 %v2821, %v2823
      %v2825 = vrot.slane %v2818, %v2824
      %v2826 = vcombine.low %v2733, %v2741
      %v2828 = vunpack.c.l.s4 1983009808
      %v2829 = vunpack.c.0.s8 %v2828
      %v2830 = vlaneseq
      %v2831 = vshrl.u32 %v2830, 7
      %v2832 = vsub.s32 %v2829, %v2831
      %v2833 = vrot.slane %v2826, %v2832
      %v2834 = vcombine.low %v2825, %v2833
      %v2836 = vunpack.c.l.s4 1934713408
      %v2837 = vunpack.c.0.s8 %v2836
      %v2838 = vlaneseq
      %v2839 = vshrl.u32 %v2838, 7
      %v2840 = vsub.s32 %v2837, %v2839
      %v2841 = vrot.slane %v2834, %v2840
      %v2842 = vcombine.low %v2790, %v2797
      %v2844 = vunpack.c.l.s4 1983009808
      %v2845 = vunpack.c.0.s8 %v2844
      %v2846 = vlaneseq
      %v2847 = vshrl.u32 %v2846, 7
      %v2848 = vsub.s32 %v2845, %v2847
      %v2849 = vrot.slane %v2842, %v2848
      %v2850 = vcombine.low %v2814, %v2815
      %v2852 = vunpack.c.l.s4 1983009808
      %v2853 = vunpack.c.0.s8 %v2852
      %v2854 = vlaneseq
      %v2855 = vshrl.u32 %v2854, 7
      %v2856 = vsub.s32 %v2853, %v2855
      %v2857 = vrot.slane %v2850, %v2856
      %v2858 = vcombine.low %v2806, %v2813
      %v2860 = vunpack.c.l.s4 1983009808
      %v2861 = vunpack.c.0.s8 %v2860
      %v2862 = vlaneseq
      %v2863 = vshrl.u32 %v2862, 7
      %v2864 = vsub.s32 %v2861, %v2863
      %v2865 = vrot.slane %v2858, %v2864
      %v2866 = vcombine.low %v2816, %v2817
      %v2868 = vunpack.c.l.s4 1983009808
      %v2869 = vunpack.c.0.s8 %v2868
      %v2870 = vlaneseq
      %v2871 = vshrl.u32 %v2870, 7
      %v2872 = vsub.s32 %v2869, %v2871
      %v2873 = vrot.slane %v2866, %v2872
      %v2874 = vcombine.low %v2849, %v2857
      %v2875 = vcombine.high %v2849, %v2857
      %v2877 = vunpack.c.l.s4 1934713408
      %v2878 = vunpack.c.0.s8 %v2877
      %v2879 = vlaneseq
      %v2880 = vshrl.u32 %v2879, 7
      %v2881 = vsub.s32 %v2878, %v2880
      %v2882 = vrot.slane %v2874, %v2881
      %v2884 = vunpack.c.l.s4 1934713408
      %v2885 = vunpack.c.0.s8 %v2884
      %v2886 = vlaneseq
      %v2887 = vshrl.u32 %v2886, 7
      %v2888 = vsub.s32 %v2885, %v2887
      %v2889 = vrot.slane %v2875, %v2888
      %v2890 = vcombine.low %v2865, %v2873
      %v2891 = vcombine.high %v2865, %v2873
      %v2893 = vunpack.c.l.s4 1934713408
      %v2894 = vunpack.c.0.s8 %v2893
      %v2895 = vlaneseq
      %v2896 = vshrl.u32 %v2895, 7
      %v2897 = vsub.s32 %v2894, %v2896
      %v2898 = vrot.slane %v2890, %v2897
      %v2900 = vunpack.c.l.s4 1934713408
      %v2901 = vunpack.c.0.s8 %v2900
      %v2902 = vlaneseq
      %v2903 = vshrl.u32 %v2902, 7
      %v2904 = vsub.s32 %v2901, %v2903
      %v2905 = vrot.slane %v2891, %v2904
      %v2906 = vcombine.low %v2882, %v2898
      %v2907 = vcombine.high %v2882, %v2898
      %v2908 = vcombine.low %v2889, %v2905
      %v2909 = vcombine.high %v2889, %v2905
      %v2911 = vunpack.c.l.s4 1983009808
      %v2912 = vunpack.c.0.s8 %v2911
      %v2913 = vlaneseq
      %v2914 = vshrl.u32 %v2913, 7
      %v2915 = vsub.s32 %v2912, %v2914
      %v2916 = vrot.slane %v2841, %v2915
      %v2917 = vcombine.high %v2841, 0.0
      %v2919 = vunpack.c.l.s4 1983009808
      %v2920 = vunpack.c.0.s8 %v2919
      %v2921 = vlaneseq
      %v2922 = vshrl.u32 %v2921, 7
      %v2923 = vsub.s32 %v2920, %v2922
      %v2924 = vrot.slane %v2917, %v2923
      %v2925 = vcombine.low %v2916, %v2924
      %v2926 = vcombine.high %v2916, %v2924
      %v2928 = vunpack.c.l.s4 1934713408
      %v2929 = vunpack.c.0.s8 %v2928
      %v2930 = vlaneseq
      %v2931 = vshrl.u32 %v2930, 7
      %v2932 = vsub.s32 %v2929, %v2931
      %v2933 = vrot.slane %v2925, %v2932
      %v2935 = vunpack.c.l.s4 1934713408
      %v2936 = vunpack.c.0.s8 %v2935
      %v2937 = vlaneseq
      %v2938 = vshrl.u32 %v2937, 7
      %v2939 = vsub.s32 %v2936, %v2938
      %v2940 = vrot.slane %v2926, %v2939
      %v2941 = vcombine.high %v2933, 0.0
      %v2942 = vcombine.high %v2940, 0.0
      %v2943 = vpack.c.bf16 %v2509, %v2509
      %v2944 = vpack.c.bf16 %v2510, %v2510
      %v2945 = vpack.c.bf16 %v2511, %v2511
      %v2946 = vpack.c.bf16 %v2512, %v2512
      %v2947 = vpack.c.bf16 %v2716, %v2689
      %v2948 = vpack.c.bf16 %v2724, %v2690
      %v2949 = vpack.c.bf16 %v2723, %v2691
      %v2950 = vpack.c.bf16 %v2725, %v2692
      %v2952 = vsel %vm1583, %v2943, 0
      %v2955 = vsel %vm1583, %v2947, 0
      %2957 = vmatprep.subr.bf16.mxu0 0
      %2958 = vmatpush1.bf16.xpose.msra.mxu0 %v2955
      %2959 = vmatprep.subr.bf16.mxu0 0
      %2960 = vmatpush1.bf16.xpose.msra.mxu0 0
      %2961 = vmatprep.subr.bf16.mxu0 0
      %2962 = vmatpush1.bf16.xpose.msra.mxu0 0
      %2963 = vmatprep.subr.bf16.mxu0 0
      %2964 = vmatpush1.bf16.xpose.msra.mxu0 0
      %2965 = vmatprep.subr.bf16.mxu0 0
      %2966 = vmatpush1.bf16.xpose.msra.mxu0 0
      %2967 = vmatprep.subr.bf16.mxu0 0
      %2968 = vmatpush1.bf16.xpose.msra.mxu0 0
      %2969 = vmatprep.subr.bf16.mxu0 0
      %2970 = vmatpush1.bf16.xpose.msra.mxu0 0
      %2971 = vmatprep.subr.bf16.mxu0 0
      %2972 = vmatpush1.bf16.xpose.msra.mxu0 0
      %2973 = vmatprep.subr.bf16.mxu0 0
      %2974 = vmatpush1.bf16.xpose.msra.mxu0 0
      %2975 = vmatprep.subr.bf16.mxu0 0
      %2976 = vmatpush1.bf16.xpose.msra.mxu0 0
      %2977 = vmatprep.subr.bf16.mxu0 0
      %2978 = vmatpush1.bf16.xpose.msra.mxu0 0
      %2979 = vmatprep.subr.bf16.mxu0 0
      %2980 = vmatpush1.bf16.xpose.msra.mxu0 0
      %2981 = vmatprep.subr.bf16.mxu0 0
      %2982 = vmatpush1.bf16.xpose.msra.mxu0 0
      %2983 = vmatprep.subr.bf16.mxu0 0
      %2984 = vmatpush1.bf16.xpose.msra.mxu0 0
      %2985 = vmatprep.subr.bf16.mxu0 0
      %2986 = vmatpush1.bf16.xpose.msra.mxu0 0
      %2987 = vmatprep.subr.bf16.mxu0 0
      %2988 = vmatpush1.bf16.xpose.msra.mxu0 0
      %2989 = vmatprep.mubr.bf16.mxu0 0
      %2990 = vmatmul.mubr.bf16.gmra.mrb[0].mxu0 %v2952
      %v2991 = vpop.f32.mrb[0].mxu0
      %v2992 = vadd.f32 0.0, %v2991
      %v2993 = vpop.f32.mrb[0].mxu0
      %v2994 = vpop.f32.mrb[0].mxu0
      %v2995 = vpop.f32.mrb[0].mxu0
      %2996 = vdwg.mxu0
      %v2998 = vsel %vm1583, %v2944, 0
      %v3001 = vsel %vm1583, %v2948, 0
      %3003 = vmatprep.subr.bf16.mxu0 0
      %3004 = vmatpush1.bf16.xpose.msra.mxu0 %v3001
      %3005 = vmatprep.subr.bf16.mxu0 0
      %3006 = vmatpush1.bf16.xpose.msra.mxu0 0
      %3007 = vmatprep.subr.bf16.mxu0 0
      %3008 = vmatpush1.bf16.xpose.msra.mxu0 0
      %3009 = vmatprep.subr.bf16.mxu0 0
      %3010 = vmatpush1.bf16.xpose.msra.mxu0 0
      %3011 = vmatprep.subr.bf16.mxu0 0
      %3012 = vmatpush1.bf16.xpose.msra.mxu0 0
      %3013 = vmatprep.subr.bf16.mxu0 0
      %3014 = vmatpush1.bf16.xpose.msra.mxu0 0
      %3015 = vmatprep.subr.bf16.mxu0 0
      %3016 = vmatpush1.bf16.xpose.msra.mxu0 0
      %3017 = vmatprep.subr.bf16.mxu0 0
      %3018 = vmatpush1.bf16.xpose.msra.mxu0 0
      %3019 = vmatprep.subr.bf16.mxu0 0
      %3020 = vmatpush1.bf16.xpose.msra.mxu0 0
      %3021 = vmatprep.subr.bf16.mxu0 0
      %3022 = vmatpush1.bf16.xpose.msra.mxu0 0
      %3023 = vmatprep.subr.bf16.mxu0 0
      %3024 = vmatpush1.bf16.xpose.msra.mxu0 0
      %3025 = vmatprep.subr.bf16.mxu0 0
      %3026 = vmatpush1.bf16.xpose.msra.mxu0 0
      %3027 = vmatprep.subr.bf16.mxu0 0
      %3028 = vmatpush1.bf16.xpose.msra.mxu0 0
      %3029 = vmatprep.subr.bf16.mxu0 0
      %3030 = vmatpush1.bf16.xpose.msra.mxu0 0
      %3031 = vmatprep.subr.bf16.mxu0 0
      %3032 = vmatpush1.bf16.xpose.msra.mxu0 0
      %3033 = vmatprep.subr.bf16.mxu0 0
      %3034 = vmatpush1.bf16.xpose.msra.mxu0 0
      %3035 = vmatprep.mubr.bf16.mxu0 0
      %3036 = vmatmul.mubr.bf16.gmra.mrb[0].mxu0 %v2998
      %v3037 = vpop.f32.mrb[0].mxu0
      %v3038 = vadd.f32 0.0, %v3037
      %v3039 = vpop.f32.mrb[0].mxu0
      %v3040 = vpop.f32.mrb[0].mxu0
      %v3041 = vpop.f32.mrb[0].mxu0
      %3042 = vdwg.mxu0
      %v3044 = vsel %vm1583, %v2945, 0
      %v3047 = vsel %vm1583, %v2949, 0
      %3049 = vmatprep.subr.bf16.mxu0 0
      %3050 = vmatpush1.bf16.xpose.msra.mxu0 %v3047
      %3051 = vmatprep.subr.bf16.mxu0 0
      %3052 = vmatpush1.bf16.xpose.msra.mxu0 0
      %3053 = vmatprep.subr.bf16.mxu0 0
      %3054 = vmatpush1.bf16.xpose.msra.mxu0 0
      %3055 = vmatprep.subr.bf16.mxu0 0
      %3056 = vmatpush1.bf16.xpose.msra.mxu0 0
      %3057 = vmatprep.subr.bf16.mxu0 0
      %3058 = vmatpush1.bf16.xpose.msra.mxu0 0
      %3059 = vmatprep.subr.bf16.mxu0 0
      %3060 = vmatpush1.bf16.xpose.msra.mxu0 0
      %3061 = vmatprep.subr.bf16.mxu0 0
      %3062 = vmatpush1.bf16.xpose.msra.mxu0 0
      %3063 = vmatprep.subr.bf16.mxu0 0
      %3064 = vmatpush1.bf16.xpose.msra.mxu0 0
      %3065 = vmatprep.subr.bf16.mxu0 0
      %3066 = vmatpush1.bf16.xpose.msra.mxu0 0
      %3067 = vmatprep.subr.bf16.mxu0 0
      %3068 = vmatpush1.bf16.xpose.msra.mxu0 0
      %3069 = vmatprep.subr.bf16.mxu0 0
      %3070 = vmatpush1.bf16.xpose.msra.mxu0 0
      %3071 = vmatprep.subr.bf16.mxu0 0
      %3072 = vmatpush1.bf16.xpose.msra.mxu0 0
      %3073 = vmatprep.subr.bf16.mxu0 0
      %3074 = vmatpush1.bf16.xpose.msra.mxu0 0
      %3075 = vmatprep.subr.bf16.mxu0 0
      %3076 = vmatpush1.bf16.xpose.msra.mxu0 0
      %3077 = vmatprep.subr.bf16.mxu0 0
      %3078 = vmatpush1.bf16.xpose.msra.mxu0 0
      %3079 = vmatprep.subr.bf16.mxu0 0
      %3080 = vmatpush1.bf16.xpose.msra.mxu0 0
      %3081 = vmatprep.mubr.bf16.mxu0 0
      %3082 = vmatmul.mubr.bf16.gmra.mrb[0].mxu0 %v3044
      %v3083 = vpop.f32.mrb[0].mxu0
      %v3084 = vadd.f32 0.0, %v3083
      %v3085 = vpop.f32.mrb[0].mxu0
      %v3086 = vpop.f32.mrb[0].mxu0
      %v3087 = vpop.f32.mrb[0].mxu0
      %3088 = vdwg.mxu0
      %v3090 = vsel %vm1583, %v2946, 0
      %v3093 = vsel %vm1583, %v2950, 0
      %3095 = vmatprep.subr.bf16.mxu0 0
      %3096 = vmatpush1.bf16.xpose.msra.mxu0 %v3093
      %3097 = vmatprep.subr.bf16.mxu0 0
      %3098 = vmatpush1.bf16.xpose.msra.mxu0 0
      %3099 = vmatprep.subr.bf16.mxu0 0
      %3100 = vmatpush1.bf16.xpose.msra.mxu0 0
      %3101 = vmatprep.subr.bf16.mxu0 0
      %3102 = vmatpush1.bf16.xpose.msra.mxu0 0
      %3103 = vmatprep.subr.bf16.mxu0 0
      %3104 = vmatpush1.bf16.xpose.msra.mxu0 0
      %3105 = vmatprep.subr.bf16.mxu0 0
      %3106 = vmatpush1.bf16.xpose.msra.mxu0 0
      %3107 = vmatprep.subr.bf16.mxu0 0
      %3108 = vmatpush1.bf16.xpose.msra.mxu0 0
      %3109 = vmatprep.subr.bf16.mxu0 0
      %3110 = vmatpush1.bf16.xpose.msra.mxu0 0
      %3111 = vmatprep.subr.bf16.mxu0 0
      %3112 = vmatpush1.bf16.xpose.msra.mxu0 0
      %3113 = vmatprep.subr.bf16.mxu0 0
      %3114 = vmatpush1.bf16.xpose.msra.mxu0 0
      %3115 = vmatprep.subr.bf16.mxu0 0
      %3116 = vmatpush1.bf16.xpose.msra.mxu0 0
      %3117 = vmatprep.subr.bf16.mxu0 0
      %3118 = vmatpush1.bf16.xpose.msra.mxu0 0
      %3119 = vmatprep.subr.bf16.mxu0 0
      %3120 = vmatpush1.bf16.xpose.msra.mxu0 0
      %3121 = vmatprep.subr.bf16.mxu0 0
      %3122 = vmatpush1.bf16.xpose.msra.mxu0 0
      %3123 = vmatprep.subr.bf16.mxu0 0
      %3124 = vmatpush1.bf16.xpose.msra.mxu0 0
      %3125 = vmatprep.subr.bf16.mxu0 0
      %3126 = vmatpush1.bf16.xpose.msra.mxu0 0
      %3127 = vmatprep.mubr.bf16.mxu0 0
      %3128 = vmatmul.mubr.bf16.gmra.mrb[0].mxu0 %v3090
      %v3129 = vpop.f32.mrb[0].mxu0
      %v3130 = vadd.f32 0.0, %v3129
      %v3131 = vpop.f32.mrb[0].mxu0
      %v3132 = vpop.f32.mrb[0].mxu0
      %v3133 = vpop.f32.mrb[0].mxu0
      %3134 = vdwg.mxu0
      %v3135 = vmul.f32 %v2992, 0.35355338
      %v3136 = vmul.f32 %v3038, 0.35355338
      %v3137 = vmul.f32 %v3084, 0.35355338
      %v3138 = vmul.f32 %v3130, 0.35355338
      %vm3139 = vcmask 80896
      %v3140 = vsel %vm3139, %v3135, -inf
      %3141 = vmax.xlane.f32.xlu0 %v3140
      %v3142 = vpop.xlane.xlu0 %3141
      %v3143 = vsel %vm3139, %v3136, -inf
      %3144 = vmax.xlane.f32.xlu0 %v3143
      %v3145 = vpop.xlane.xlu0 %3144
      %v3146 = vsel %vm3139, %v3137, -inf
      %3147 = vmax.xlane.f32.xlu0 %v3146
      %v3148 = vpop.xlane.xlu0 %3147
      %v3149 = vsel %vm3139, %v3138, -inf
      %3150 = vmax.xlane.f32.xlu0 %v3149
      %v3151 = vpop.xlane.xlu0 %3150
      %v3152 = vsub.f32 %v3135, %v3142
      %v3153 = vsub.f32 %v3136, %v3145
      %v3154 = vsub.f32 %v3137, %v3148
      %v3155 = vsub.f32 %v3138, %v3151
      %v3156 = vmul.f32 %v3152, 1.442695
      %v3157 = vpow.pop %v3156
      %v3158 = vmul.f32 %v3153, 1.442695
      %v3159 = vpow.pop %v3158
      %v3160 = vmul.f32 %v3154, 1.442695
      %v3161 = vpow.pop %v3160
      %v3162 = vmul.f32 %v3155, 1.442695
      %v3163 = vpow.pop %v3162
      %v3164 = vsel %vm3139, %v3157, 0.0
      %3165 = vadd.xlane.f32.xlu0 %v3164
      %v3166 = vpop.xlane.xlu0 %3165
      %v3167 = vsel %vm3139, %v3159, 0.0
      %3168 = vadd.xlane.f32.xlu0 %v3167
      %v3169 = vpop.xlane.xlu0 %3168
      %v3170 = vsel %vm3139, %v3161, 0.0
      %3171 = vadd.xlane.f32.xlu0 %v3170
      %v3172 = vpop.xlane.xlu0 %3171
      %v3173 = vsel %vm3139, %v3163, 0.0
      %3174 = vadd.xlane.f32.xlu0 %v3173
      %v3175 = vpop.xlane.xlu0 %3174
      %v3176 = vrcp.pop %v3166
      %v3177 = vrcp.pop %v3169
      %v3178 = vrcp.pop %v3172
      %v3179 = vrcp.pop %v3175
      %v3180 = vmul.f32 %v3157, %v3176
      %v3181 = vmul.f32 %v3159, %v3177
      %v3182 = vmul.f32 %v3161, %v3178
      %v3183 = vmul.f32 %v3163, %v3179
      %v3184 = vpack.c.bf16 %v3180, %v3180
      %v3185 = vpack.c.bf16 %v3181, %v3181
      %v3186 = vpack.c.bf16 %v3182, %v3182
      %v3187 = vpack.c.bf16 %v3183, %v3183
      %v3188 = vpack.c.bf16 %v2933, %v2906
      %v3189 = vpack.c.bf16 %v2941, %v2907
      %v3190 = vpack.c.bf16 %v2940, %v2908
      %v3191 = vpack.c.bf16 %v2942, %v2909
      %v3193 = vsel %vm3139, %v3184, 0
      %vm3195 = vcmask 1044480
      %v3197 = vsel %vm3195, %v3188, 0
      %3199 = vmatprep.subr.bf16.mxu0 0
      %3200 = vmatpush1.bf16.msra.mxu0 %v3197
      %3201 = vmatprep.subr.bf16.mxu0 0
      %3202 = vmatpush1.bf16.msra.mxu0 0
      %3203 = vmatprep.subr.bf16.mxu0 0
      %3204 = vmatpush1.bf16.msra.mxu0 0
      %3205 = vmatprep.subr.bf16.mxu0 0
      %3206 = vmatpush1.bf16.msra.mxu0 0
      %3207 = vmatprep.subr.bf16.mxu0 0
      %3208 = vmatpush1.bf16.msra.mxu0 0
      %3209 = vmatprep.subr.bf16.mxu0 0
      %3210 = vmatpush1.bf16.msra.mxu0 0
      %3211 = vmatprep.subr.bf16.mxu0 0
      %3212 = vmatpush1.bf16.msra.mxu0 0
      %3213 = vmatprep.subr.bf16.mxu0 0
      %3214 = vmatpush1.bf16.msra.mxu0 0
      %3215 = vmatprep.subr.bf16.mxu0 0
      %3216 = vmatpush1.bf16.msra.mxu0 0
      %3217 = vmatprep.subr.bf16.mxu0 0
      %3218 = vmatpush1.bf16.msra.mxu0 0
      %3219 = vmatprep.subr.bf16.mxu0 0
      %3220 = vmatpush1.bf16.msra.mxu0 0
      %3221 = vmatprep.subr.bf16.mxu0 0
      %3222 = vmatpush1.bf16.msra.mxu0 0
      %3223 = vmatprep.subr.bf16.mxu0 0
      %3224 = vmatpush1.bf16.msra.mxu0 0
      %3225 = vmatprep.subr.bf16.mxu0 0
      %3226 = vmatpush1.bf16.msra.mxu0 0
      %3227 = vmatprep.subr.bf16.mxu0 0
      %3228 = vmatpush1.bf16.msra.mxu0 0
      %3229 = vmatprep.subr.bf16.mxu0 0
      %3230 = vmatpush1.bf16.msra.mxu0 0
      %3231 = vmatprep.mubr.bf16.mxu0 0
      %3232 = vmatmul.mubr.bf16.gmra.mrb[0].mxu0 %v3193
      %v3233 = vpop.f32.mrb[0].mxu0
      %v3234 = vadd.f32 0.0, %v3233
      %v3235 = vpop.f32.mrb[0].mxu0
      %v3236 = vpop.f32.mrb[0].mxu0
      %v3237 = vpop.f32.mrb[0].mxu0
      %3238 = vdwg.mxu0
      %v3240 = vsel %vm3139, %v3185, 0
      %v3243 = vsel %vm3195, %v3189, 0
      %3245 = vmatprep.subr.bf16.mxu0 0
      %3246 = vmatpush1.bf16.msra.mxu0 %v3243
      %3247 = vmatprep.subr.bf16.mxu0 0
      %3248 = vmatpush1.bf16.msra.mxu0 0
      %3249 = vmatprep.subr.bf16.mxu0 0
      %3250 = vmatpush1.bf16.msra.mxu0 0
      %3251 = vmatprep.subr.bf16.mxu0 0
      %3252 = vmatpush1.bf16.msra.mxu0 0
      %3253 = vmatprep.subr.bf16.mxu0 0
      %3254 = vmatpush1.bf16.msra.mxu0 0
      %3255 = vmatprep.subr.bf16.mxu0 0
      %3256 = vmatpush1.bf16.msra.mxu0 0
      %3257 = vmatprep.subr.bf16.mxu0 0
      %3258 = vmatpush1.bf16.msra.mxu0 0
      %3259 = vmatprep.subr.bf16.mxu0 0
      %3260 = vmatpush1.bf16.msra.mxu0 0
      %3261 = vmatprep.subr.bf16.mxu0 0
      %3262 = vmatpush1.bf16.msra.mxu0 0
      %3263 = vmatprep.subr.bf16.mxu0 0
      %3264 = vmatpush1.bf16.msra.mxu0 0
      %3265 = vmatprep.subr.bf16.mxu0 0
      %3266 = vmatpush1.bf16.msra.mxu0 0
      %3267 = vmatprep.subr.bf16.mxu0 0
      %3268 = vmatpush1.bf16.msra.mxu0 0
      %3269 = vmatprep.subr.bf16.mxu0 0
      %3270 = vmatpush1.bf16.msra.mxu0 0
      %3271 = vmatprep.subr.bf16.mxu0 0
      %3272 = vmatpush1.bf16.msra.mxu0 0
      %3273 = vmatprep.subr.bf16.mxu0 0
      %3274 = vmatpush1.bf16.msra.mxu0 0
      %3275 = vmatprep.subr.bf16.mxu0 0
      %3276 = vmatpush1.bf16.msra.mxu0 0
      %3277 = vmatprep.mubr.bf16.mxu0 0
      %3278 = vmatmul.mubr.bf16.gmra.mrb[0].mxu0 %v3240
      %v3279 = vpop.f32.mrb[0].mxu0
      %v3280 = vadd.f32 0.0, %v3279
      %v3281 = vpop.f32.mrb[0].mxu0
      %v3282 = vpop.f32.mrb[0].mxu0
      %v3283 = vpop.f32.mrb[0].mxu0
      %3284 = vdwg.mxu0
      %v3286 = vsel %vm3139, %v3186, 0
      %v3289 = vsel %vm3195, %v3190, 0
      %3291 = vmatprep.subr.bf16.mxu0 0
      %3292 = vmatpush1.bf16.msra.mxu0 %v3289
      %3293 = vmatprep.subr.bf16.mxu0 0
      %3294 = vmatpush1.bf16.msra.mxu0 0
      %3295 = vmatprep.subr.bf16.mxu0 0
      %3296 = vmatpush1.bf16.msra.mxu0 0
      %3297 = vmatprep.subr.bf16.mxu0 0
      %3298 = vmatpush1.bf16.msra.mxu0 0
      %3299 = vmatprep.subr.bf16.mxu0 0
      %3300 = vmatpush1.bf16.msra.mxu0 0
      %3301 = vmatprep.subr.bf16.mxu0 0
      %3302 = vmatpush1.bf16.msra.mxu0 0
      %3303 = vmatprep.subr.bf16.mxu0 0
      %3304 = vmatpush1.bf16.msra.mxu0 0
      %3305 = vmatprep.subr.bf16.mxu0 0
      %3306 = vmatpush1.bf16.msra.mxu0 0
      %3307 = vmatprep.subr.bf16.mxu0 0
      %3308 = vmatpush1.bf16.msra.mxu0 0
      %3309 = vmatprep.subr.bf16.mxu0 0
      %3310 = vmatpush1.bf16.msra.mxu0 0
      %3311 = vmatprep.subr.bf16.mxu0 0
      %3312 = vmatpush1.bf16.msra.mxu0 0
      %3313 = vmatprep.subr.bf16.mxu0 0
      %3314 = vmatpush1.bf16.msra.mxu0 0
      %3315 = vmatprep.subr.bf16.mxu0 0
      %3316 = vmatpush1.bf16.msra.mxu0 0
      %3317 = vmatprep.subr.bf16.mxu0 0
      %3318 = vmatpush1.bf16.msra.mxu0 0
      %3319 = vmatprep.subr.bf16.mxu0 0
      %3320 = vmatpush1.bf16.msra.mxu0 0
      %3321 = vmatprep.subr.bf16.mxu0 0
      %3322 = vmatpush1.bf16.msra.mxu0 0
      %3323 = vmatprep.mubr.bf16.mxu0 0
      %3324 = vmatmul.mubr.bf16.gmra.mrb[0].mxu0 %v3286
      %v3325 = vpop.f32.mrb[0].mxu0
      %v3326 = vadd.f32 0.0, %v3325
      %v3327 = vpop.f32.mrb[0].mxu0
      %v3328 = vpop.f32.mrb[0].mxu0
      %v3329 = vpop.f32.mrb[0].mxu0
      %3330 = vdwg.mxu0
      %v3332 = vsel %vm3139, %v3187, 0
      %v3335 = vsel %vm3195, %v3191, 0
      %3337 = vmatprep.subr.bf16.mxu0 0
      %3338 = vmatpush1.bf16.msra.mxu0 %v3335
      %3339 = vmatprep.subr.bf16.mxu0 0
      %3340 = vmatpush1.bf16.msra.mxu0 0
      %3341 = vmatprep.subr.bf16.mxu0 0
      %3342 = vmatpush1.bf16.msra.mxu0 0
      %3343 = vmatprep.subr.bf16.mxu0 0
      %3344 = vmatpush1.bf16.msra.mxu0 0
      %3345 = vmatprep.subr.bf16.mxu0 0
      %3346 = vmatpush1.bf16.msra.mxu0 0
      %3347 = vmatprep.subr.bf16.mxu0 0
      %3348 = vmatpush1.bf16.msra.mxu0 0
      %3349 = vmatprep.subr.bf16.mxu0 0
      %3350 = vmatpush1.bf16.msra.mxu0 0
      %3351 = vmatprep.subr.bf16.mxu0 0
      %3352 = vmatpush1.bf16.msra.mxu0 0
      %3353 = vmatprep.subr.bf16.mxu0 0
      %3354 = vmatpush1.bf16.msra.mxu0 0
      %3355 = vmatprep.subr.bf16.mxu0 0
      %3356 = vmatpush1.bf16.msra.mxu0 0
      %3357 = vmatprep.subr.bf16.mxu0 0
      %3358 = vmatpush1.bf16.msra.mxu0 0
      %3359 = vmatprep.subr.bf16.mxu0 0
      %3360 = vmatpush1.bf16.msra.mxu0 0
      %3361 = vmatprep.subr.bf16.mxu0 0
      %3362 = vmatpush1.bf16.msra.mxu0 0
      %3363 = vmatprep.subr.bf16.mxu0 0
      %3364 = vmatpush1.bf16.msra.mxu0 0
      %3365 = vmatprep.subr.bf16.mxu0 0
      %3366 = vmatpush1.bf16.msra.mxu0 0
      %3367 = vmatprep.subr.bf16.mxu0 0
      %3368 = vmatpush1.bf16.msra.mxu0 0
      %3369 = vmatprep.mubr.bf16.mxu0 0
      %3370 = vmatmul.mubr.bf16.gmra.mrb[0].mxu0 %v3332
      %v3371 = vpop.f32.mrb[0].mxu0
      %v3372 = vadd.f32 0.0, %v3371
      %v3373 = vpop.f32.mrb[0].mxu0
      %v3374 = vpop.f32.mrb[0].mxu0
      %v3375 = vpop.f32.mrb[0].mxu0
      %3376 = vdwg.mxu0
      %v3377 = vcombine.low %v3234, %v3326
      %v3378 = vcombine.high %v3234, %v3326
      %v3380 = vunpack.c.l.s4 1983009808
      %v3381 = vunpack.c.0.s8 %v3380
      %v3382 = vlaneseq
      %v3383 = vshrl.u32 %v3382, 7
      %v3384 = vsub.s32 %v3381, %v3383
      %v3385 = vrot.slane %v3377, %v3384
      %v3387 = vunpack.c.l.s4 1983009808
      %v3388 = vunpack.c.0.s8 %v3387
      %v3389 = vlaneseq
      %v3390 = vshrl.u32 %v3389, 7
      %v3391 = vsub.s32 %v3388, %v3390
      %v3392 = vrot.slane %v3378, %v3391
      %v3393 = vcombine.low %v3280, %v3372
      %v3394 = vcombine.high %v3280, %v3372
      %v3396 = vunpack.c.l.s4 1983009808
      %v3397 = vunpack.c.0.s8 %v3396
      %v3398 = vlaneseq
      %v3399 = vshrl.u32 %v3398, 7
      %v3400 = vsub.s32 %v3397, %v3399
      %v3401 = vrot.slane %v3393, %v3400
      %v3403 = vunpack.c.l.s4 1983009808
      %v3404 = vunpack.c.0.s8 %v3403
      %v3405 = vlaneseq
      %v3406 = vshrl.u32 %v3405, 7
      %v3407 = vsub.s32 %v3404, %v3406
      %v3408 = vrot.slane %v3394, %v3407
      %v3409 = vcombine.low %v3385, %v3401
      %v3410 = vcombine.high %v3385, %v3401
      %v3412 = vunpack.c.l.s4 1934713408
      %v3413 = vunpack.c.0.s8 %v3412
      %v3414 = vlaneseq
      %v3415 = vshrl.u32 %v3414, 7
      %v3416 = vsub.s32 %v3413, %v3415
      %v3417 = vrot.slane %v3409, %v3416
      %v3419 = vunpack.c.l.s4 1934713408
      %v3420 = vunpack.c.0.s8 %v3419
      %v3421 = vlaneseq
      %v3422 = vshrl.u32 %v3421, 7
      %v3423 = vsub.s32 %v3420, %v3422
      %v3424 = vrot.slane %v3410, %v3423
      %v3425 = vcombine.low %v3392, %v3408
      %v3426 = vcombine.high %v3392, %v3408
      %v3428 = vunpack.c.l.s4 1934713408
      %v3429 = vunpack.c.0.s8 %v3428
      %v3430 = vlaneseq
      %v3431 = vshrl.u32 %v3430, 7
      %v3432 = vsub.s32 %v3429, %v3431
      %v3433 = vrot.slane %v3425, %v3432
      %v3435 = vunpack.c.l.s4 1934713408
      %v3436 = vunpack.c.0.s8 %v3435
      %v3437 = vlaneseq
      %v3438 = vshrl.u32 %v3437, 7
      %v3439 = vsub.s32 %v3436, %v3438
      %v3440 = vrot.slane %v3426, %v3439
      %v3441 = vcombine.high %v3417, 0.0
      %v3442 = vcombine.high %v3424, 0.0
      %v3443 = vcombine.high %v3433, 0.0
      %v3444 = vcombine.high %v3440, 0.0
      %v3445 = vcombine.low %v3417, %v3424
      %v3447 = vunpack.c.l.s4 1983009808
      %v3448 = vunpack.c.0.s8 %v3447
      %v3449 = vlaneseq
      %v3450 = vshrl.u32 %v3449, 7
      %v3451 = vsub.s32 %v3448, %v3450
      %v3452 = vrot.slane %v3445, %v3451
      %v3453 = vcombine.low %v3441, %v3442
      %v3455 = vunpack.c.l.s4 1983009808
      %v3456 = vunpack.c.0.s8 %v3455
      %v3457 = vlaneseq
      %v3458 = vshrl.u32 %v3457, 7
      %v3459 = vsub.s32 %v3456, %v3458
      %v3460 = vrot.slane %v3453, %v3459
      %v3461 = vcombine.low %v3433, %v3440
      %v3463 = vunpack.c.l.s4 1983009808
      %v3464 = vunpack.c.0.s8 %v3463
      %v3465 = vlaneseq
      %v3466 = vshrl.u32 %v3465, 7
      %v3467 = vsub.s32 %v3464, %v3466
      %v3468 = vrot.slane %v3461, %v3467
      %v3469 = vcombine.low %v3443, %v3444
      %v3471 = vunpack.c.l.s4 1983009808
      %v3472 = vunpack.c.0.s8 %v3471
      %v3473 = vlaneseq
      %v3474 = vshrl.u32 %v3473, 7
      %v3475 = vsub.s32 %v3472, %v3474
      %v3476 = vrot.slane %v3469, %v3475
      %v3477 = vcombine.low %v3452, %v3460
      %v3478 = vcombine.high %v3452, %v3460
      %v3480 = vunpack.c.l.s4 1934713408
      %v3481 = vunpack.c.0.s8 %v3480
      %v3482 = vlaneseq
      %v3483 = vshrl.u32 %v3482, 7
      %v3484 = vsub.s32 %v3481, %v3483
      %v3485 = vrot.slane %v3477, %v3484
      %v3487 = vunpack.c.l.s4 1934713408
      %v3488 = vunpack.c.0.s8 %v3487
      %v3489 = vlaneseq
      %v3490 = vshrl.u32 %v3489, 7
      %v3491 = vsub.s32 %v3488, %v3490
      %v3492 = vrot.slane %v3478, %v3491
      %v3493 = vcombine.low %v3468, %v3476
      %v3494 = vcombine.high %v3468, %v3476
      %v3496 = vunpack.c.l.s4 1934713408
      %v3497 = vunpack.c.0.s8 %v3496
      %v3498 = vlaneseq
      %v3499 = vshrl.u32 %v3498, 7
      %v3500 = vsub.s32 %v3497, %v3499
      %v3501 = vrot.slane %v3493, %v3500
      %v3503 = vunpack.c.l.s4 1934713408
      %v3504 = vunpack.c.0.s8 %v3503
      %v3505 = vlaneseq
      %v3506 = vshrl.u32 %v3505, 7
      %v3507 = vsub.s32 %v3504, %v3506
      %v3508 = vrot.slane %v3494, %v3507
      %v3509 = vcombine.low %v3485, %v3501
      %v3510 = vcombine.high %v3485, %v3501
      %v3511 = vcombine.low %v3492, %v3508
      %v3512 = vcombine.high %v3492, %v3508
      %3514 = vrot.lane.b32.xlu0 %v3510, 8
      %v3515 = vpop.permute.xlu0 %3514
      %3518 = vrot.lane.b32.xlu0 %v3511, 16
      %v3519 = vpop.permute.xlu0 %3518
      %3522 = vrot.lane.b32.xlu0 %v3512, 24
      %v3523 = vpop.permute.xlu0 %3522
      %v3525 = vsel %vm1583, %v3509, %v3515
      %v3526 = vsel %vm2162, %v3525, %v3519
      %v3527 = vsel %vm2164, %v3526, %v3523
      %v3528 = vpack.c.bf16 %v3527, %v3527
      %v3529 = vpack.c.bf16 %v2255, %v2254
      %v3530 = vpack.c.bf16 %v2257, %v2256
      %v3532 = vlaneseq
      %v3533 = vshrl.u32 %v3532, 7
      %v3534 = vsub.s32 0, %v3533
      %v3535 = vrot.slane %v2258, %v3534
      %v3538 = vsel %vm1089, %v3528, 0
      %3540 = vmatprep.subr.bf16.mxu0 0
      %3541 = vmatpush1.bf16.msra.mxu0 %v3529
      %3542 = vmatprep.subr.bf16.mxu0 0
      %3543 = vmatpush1.bf16.msra.mxu0 %v3530
      %3544 = vmatprep.subr.bf16.mxu0 0
      %3545 = vmatpush1.bf16.msra.mxu0 0
      %3546 = vmatprep.subr.bf16.mxu0 0
      %3547 = vmatpush1.bf16.msra.mxu0 0
      %3548 = vmatprep.subr.bf16.mxu0 0
      %3549 = vmatpush1.bf16.msra.mxu0 0
      %3550 = vmatprep.subr.bf16.mxu0 0
      %3551 = vmatpush1.bf16.msra.mxu0 0
      %3552 = vmatprep.subr.bf16.mxu0 0
      %3553 = vmatpush1.bf16.msra.mxu0 0
      %3554 = vmatprep.subr.bf16.mxu0 0
      %3555 = vmatpush1.bf16.msra.mxu0 0
      %3556 = vmatprep.subr.bf16.mxu0 0
      %3557 = vmatpush1.bf16.msra.mxu0 0
      %3558 = vmatprep.subr.bf16.mxu0 0
      %3559 = vmatpush1.bf16.msra.mxu0 0
      %3560 = vmatprep.subr.bf16.mxu0 0
      %3561 = vmatpush1.bf16.msra.mxu0 0
      %3562 = vmatprep.subr.bf16.mxu0 0
      %3563 = vmatpush1.bf16.msra.mxu0 0
      %3564 = vmatprep.subr.bf16.mxu0 0
      %3565 = vmatpush1.bf16.msra.mxu0 0
      %3566 = vmatprep.subr.bf16.mxu0 0
      %3567 = vmatpush1.bf16.msra.mxu0 0
      %3568 = vmatprep.subr.bf16.mxu0 0
      %3569 = vmatpush1.bf16.msra.mxu0 0
      %3570 = vmatprep.subr.bf16.mxu0 0
      %3571 = vmatpush1.bf16.msra.mxu0 0
      %3572 = vmatprep.mubr.bf16.mxu0 0
      %3573 = vmatmul.mubr.bf16.gmra.mrb[0].mxu0 %v3538
      %v3574 = vpop.f32.mrb[0].mxu0
      %v3575 = vadd.f32 %v3535, %v3574
      %v3576 = vpop.f32.mrb[0].mxu0
      %v3577 = vpop.f32.mrb[0].mxu0
      %v3578 = vpop.f32.mrb[0].mxu0
      %3579 = vdwg.mxu0
      %v3580 = vadd.f32 %v2248, %v3575
      %v3581 = vld [vmem:[%s1023] sm:$0x1]
      %v3582 = vld [vmem:[%s1026] sm:$0x1]
      %v3583 = vsel %vm1089, %v3580, 0.0
      %3584 = vadd.xlane.f32.xlu0 %v3583
      %v3585 = vpop.xlane.xlu0 %3584
      %v3586 = vmul.f32 %v3585, %v2224
      %v3587 = vsub.f32 %v3580, %v3586
      %v3588 = vmul.f32 %v3587, %v3587
      %v3589 = vsel %vm1089, %v3588, 0.0
      %3590 = vadd.xlane.f32.xlu0 %v3589
      %v3591 = vpop.xlane.xlu0 %3590
      %v3592 = vmul.f32 %v3591, %v2224
      %v3593 = vadd.f32 %v3592, 1e-05
      %v3594 = vrsqrt.pop %v3593
      %v3595 = vmul.f32 %v3587, %v3594
      %v3597 = vlaneseq
      %v3598 = vshrl.u32 %v3597, 7
      %v3599 = vsub.s32 0, %v3598
      %v3600 = vrot.slane %v3581, %v3599
      %v3602 = vmul.f32 %v3595, %v3600
      %v3604 = vlaneseq
      %v3605 = vshrl.u32 %v3604, 7
      %v3606 = vsub.s32 0, %v3605
      %v3607 = vrot.slane %v3582, %v3606
      %v3609 = vadd.f32 %v3602, %v3607
      %v3610 = vld [vmem:[%s1031] sm:$0xff]
      %v3611 = vld [vmem:[%s1031 + $0x8] sm:$0xff]
      %v3612 = vld [vmem:[%s1031 + $0x10] sm:$0xff]
      %v3613 = vld [vmem:[%s1031 + $0x18] sm:$0xff]
      %v3614 = vpack.c.bf16 %v3609, %v3609
      %v3615 = vpack.c.bf16 %v3611, %v3610
      %v3616 = vpack.c.bf16 %v3613, %v3612
      %v3617 = vld [vmem:[%s1034] sm:$0x1]
      %v3619 = vlaneseq
      %v3620 = vshrl.u32 %v3619, 7
      %v3621 = vsub.s32 0, %v3620
      %v3622 = vrot.slane %v3617, %v3621
      %v3625 = vsel %vm1089, %v3614, 0
      %3627 = vmatprep.subr.bf16.mxu0 0
      %3628 = vmatpush1.bf16.msra.mxu0 %v3615
      %3629 = vmatprep.subr.bf16.mxu0 0
      %3630 = vmatpush1.bf16.msra.mxu0 %v3616
      %3631 = vmatprep.subr.bf16.mxu0 0
      %3632 = vmatpush1.bf16.msra.mxu0 0
      %3633 = vmatprep.subr.bf16.mxu0 0
      %3634 = vmatpush1.bf16.msra.mxu0 0
      %3635 = vmatprep.subr.bf16.mxu0 0
      %3636 = vmatpush1.bf16.msra.mxu0 0
      %3637 = vmatprep.subr.bf16.mxu0 0
      %3638 = vmatpush1.bf16.msra.mxu0 0
      %3639 = vmatprep.subr.bf16.mxu0 0
      %3640 = vmatpush1.bf16.msra.mxu0 0
      %3641 = vmatprep.subr.bf16.mxu0 0
      %3642 = vmatpush1.bf16.msra.mxu0 0
      %3643 = vmatprep.subr.bf16.mxu0 0
      %3644 = vmatpush1.bf16.msra.mxu0 0
      %3645 = vmatprep.subr.bf16.mxu0 0
      %3646 = vmatpush1.bf16.msra.mxu0 0
      %3647 = vmatprep.subr.bf16.mxu0 0
      %3648 = vmatpush1.bf16.msra.mxu0 0
      %3649 = vmatprep.subr.bf16.mxu0 0
      %3650 = vmatpush1.bf16.msra.mxu0 0
      %3651 = vmatprep.subr.bf16.mxu0 0
      %3652 = vmatpush1.bf16.msra.mxu0 0
      %3653 = vmatprep.subr.bf16.mxu0 0
      %3654 = vmatpush1.bf16.msra.mxu0 0
      %3655 = vmatprep.subr.bf16.mxu0 0
      %3656 = vmatpush1.bf16.msra.mxu0 0
      %3657 = vmatprep.subr.bf16.mxu0 0
      %3658 = vmatpush1.bf16.msra.mxu0 0
      %3659 = vmatprep.mubr.bf16.mxu0 0
      %3660 = vmatmul.mubr.bf16.gmra.mrb[0].mxu0 %v3625
      %v3661 = vpop.f32.mrb[0].mxu0
      %v3662 = vadd.f32 %v3622, %v3661
      %v3663 = vpop.f32.mrb[0].mxu0
      %v3664 = vpop.f32.mrb[0].mxu0
      %v3665 = vpop.f32.mrb[0].mxu0
      %3666 = vdwg.mxu0
      %v3667 = vmax.f32 %v3662, 0.0
      %v3668 = vld [vmem:[%s1039] sm:$0xff]
      %v3669 = vld [vmem:[%s1039 + $0x8] sm:$0xff]
      %v3670 = vld [vmem:[%s1039 + $0x10] sm:$0xff]
      %v3671 = vld [vmem:[%s1039 + $0x18] sm:$0xff]
      %v3672 = vld [vmem:[%s1039 + $0x20] sm:$0xff]
      %v3673 = vld [vmem:[%s1039 + $0x28] sm:$0xff]
      %v3674 = vld [vmem:[%s1039 + $0x30] sm:$0xff]
      %v3675 = vld [vmem:[%s1039 + $0x38] sm:$0xff]
      %v3676 = vld [vmem:[%s1039 + $0x40] sm:$0xff]
      %v3677 = vld [vmem:[%s1039 + $0x48] sm:$0xff]
      %v3678 = vld [vmem:[%s1039 + $0x50] sm:$0xff]
      %v3679 = vld [vmem:[%s1039 + $0x58] sm:$0xff]
      %v3680 = vld [vmem:[%s1039 + $0x60] sm:$0xff]
      %v3681 = vld [vmem:[%s1039 + $0x68] sm:$0xff]
      %v3682 = vld [vmem:[%s1039 + $0x70] sm:$0xff]
      %v3683 = vld [vmem:[%s1039 + $0x78] sm:$0xff]
      %v3684 = vpack.c.bf16 %v3667, %v3667
      %v3685 = vpack.c.bf16 %v3669, %v3668
      %v3686 = vpack.c.bf16 %v3671, %v3670
      %v3687 = vpack.c.bf16 %v3673, %v3672
      %v3688 = vpack.c.bf16 %v3675, %v3674
      %v3689 = vpack.c.bf16 %v3677, %v3676
      %v3690 = vpack.c.bf16 %v3679, %v3678
      %v3691 = vpack.c.bf16 %v3681, %v3680
      %v3692 = vpack.c.bf16 %v3683, %v3682
      %v3693 = vld [vmem:[%s1042] sm:$0x1]
      %v3695 = vlaneseq
      %v3696 = vshrl.u32 %v3695, 7
      %v3697 = vsub.s32 0, %v3696
      %v3698 = vrot.slane %v3693, %v3697
      %3700 = vmatprep.subr.bf16.mxu0 0
      %3701 = vmatpush1.bf16.msra.mxu0 %v3685
      %3702 = vmatprep.subr.bf16.mxu0 0
      %3703 = vmatpush1.bf16.msra.mxu0 %v3686
      %3704 = vmatprep.subr.bf16.mxu0 0
      %3705 = vmatpush1.bf16.msra.mxu0 %v3687
      %3706 = vmatprep.subr.bf16.mxu0 0
      %3707 = vmatpush1.bf16.msra.mxu0 %v3688
      %3708 = vmatprep.subr.bf16.mxu0 0
      %3709 = vmatpush1.bf16.msra.mxu0 %v3689
      %3710 = vmatprep.subr.bf16.mxu0 0
      %3711 = vmatpush1.bf16.msra.mxu0 %v3690
      %3712 = vmatprep.subr.bf16.mxu0 0
      %3713 = vmatpush1.bf16.msra.mxu0 %v3691
      %3714 = vmatprep.subr.bf16.mxu0 0
      %3715 = vmatpush1.bf16.msra.mxu0 %v3692
      %3716 = vmatprep.subr.bf16.mxu0 0
      %3717 = vmatpush1.bf16.msra.mxu0 0
      %3718 = vmatprep.subr.bf16.mxu0 0
      %3719 = vmatpush1.bf16.msra.mxu0 0
      %3720 = vmatprep.subr.bf16.mxu0 0
      %3721 = vmatpush1.bf16.msra.mxu0 0
      %3722 = vmatprep.subr.bf16.mxu0 0
      %3723 = vmatpush1.bf16.msra.mxu0 0
      %3724 = vmatprep.subr.bf16.mxu0 0
      %3725 = vmatpush1.bf16.msra.mxu0 0
      %3726 = vmatprep.subr.bf16.mxu0 0
      %3727 = vmatpush1.bf16.msra.mxu0 0
      %3728 = vmatprep.subr.bf16.mxu0 0
      %3729 = vmatpush1.bf16.msra.mxu0 0
      %3730 = vmatprep.subr.bf16.mxu0 0
      %3731 = vmatpush1.bf16.msra.mxu0 0
      %3732 = vmatprep.mubr.bf16.mxu0 0
      %3733 = vmatmul.mubr.bf16.gmra.mrb[0].mxu0 %v3684
      %v3734 = vpop.f32.mrb[0].mxu0
      %v3735 = vadd.f32 %v3698, %v3734
      %v3736 = vpop.f32.mrb[0].mxu0
      %v3737 = vpop.f32.mrb[0].mxu0
      %v3738 = vpop.f32.mrb[0].mxu0
      %3739 = vdwg.mxu0
      %v3740 = vadd.f32 %v3609, %v3735
      %v3741 = vld [vmem:[%s1045] sm:$0x1]
      %v3742 = vld [vmem:[%s1048] sm:$0x1]
      %v3743 = vsel %vm1089, %v3740, 0.0
      %3744 = vadd.xlane.f32.xlu0 %v3743
      %v3745 = vpop.xlane.xlu0 %3744
      %v3746 = vmul.f32 %v3745, %v2224
      %v3747 = vsub.f32 %v3740, %v3746
      %v3748 = vmul.f32 %v3747, %v3747
      %v3749 = vsel %vm1089, %v3748, 0.0
      %3750 = vadd.xlane.f32.xlu0 %v3749
      %v3751 = vpop.xlane.xlu0 %3750
      %v3752 = vmul.f32 %v3751, %v2224
      %v3753 = vadd.f32 %v3752, 1e-05
      %v3754 = vrsqrt.pop %v3753
      %v3755 = vmul.f32 %v3747, %v3754
      %v3757 = vlaneseq
      %v3758 = vshrl.u32 %v3757, 7
      %v3759 = vsub.s32 0, %v3758
      %v3760 = vrot.slane %v3741, %v3759
      %v3762 = vmul.f32 %v3755, %v3760
      %v3764 = vlaneseq
      %v3765 = vshrl.u32 %v3764, 7
      %v3766 = vsub.s32 0, %v3765
      %v3767 = vrot.slane %v3742, %v3766
      %v3769 = vadd.f32 %v3762, %v3767
      %3770 = vst.msk [vmem:[#allocation2] sm:$0xff] %vm1089, %v3769
      %p3771 = scmp.eq.s32.totalorder %s40, 1
      // Predicated region
      $region121: #{transformer_forward.3} parent=115 // pred_check
        %p3772 = pneg %p3771
      $region122: #{transformer_forward.3} parent=115 // pred_check_branch
        %3774 = sbr.rel (%p3772) target = $region124
      $region123: #{transformer_forward.3} parent=115 // pred_region
        %v3775 = vld [vmem:[%s20] sm:$0x1]
        %v3776 = vld [vmem:[%s21] sm:$0x1]
        %v3777 = vsel %vm1089, %v3769, 0.0
        %3778 = vadd.xlane.f32.xlu0 %v3777
        %v3779 = vpop.xlane.xlu0 %3778
        %v3780 = vmul.f32 %v3779, %v2224
        %v3781 = vsub.f32 %v3769, %v3780
        %v3782 = vmul.f32 %v3781, %v3781
        %v3783 = vsel %vm1089, %v3782, 0.0
        %3784 = vadd.xlane.f32.xlu0 %v3783
        %v3785 = vpop.xlane.xlu0 %3784
        %v3786 = vmul.f32 %v3785, %v2224
        %v3787 = vadd.f32 %v3786, 1e-05
        %v3788 = vrsqrt.pop %v3787
        %v3789 = vmul.f32 %v3781, %v3788
        %v3791 = vlaneseq
        %v3792 = vshrl.u32 %v3791, 7
        %v3793 = vsub.s32 0, %v3792
        %v3794 = vrot.slane %v3775, %v3793
        %v3796 = vmul.f32 %v3789, %v3794
        %v3798 = vlaneseq
        %v3799 = vshrl.u32 %v3798, 7
        %v3800 = vsub.s32 0, %v3799
        %v3801 = vrot.slane %v3776, %v3800
        %v3803 = vadd.f32 %v3796, %v3801
        %v3804 = vld [vmem:[%s22] sm:$0xff]
        %v3805 = vld [vmem:[%s22 + $0x8] sm:$0xff]
        %v3806 = vld [vmem:[%s22 + $0x10] sm:$0xff]
        %v3807 = vld [vmem:[%s22 + $0x18] sm:$0xff]
        %v3808 = vpack.c.bf16 %v3803, %v3803
        %v3809 = vpack.c.bf16 %v3805, %v3804
        %v3810 = vpack.c.bf16 %v3807, %v3806
        %v3811 = vld [vmem:[%s23] sm:$0x1]
        %v3813 = vlaneseq
        %v3814 = vshrl.u32 %v3813, 7
        %v3815 = vsub.s32 0, %v3814
        %v3816 = vrot.slane %v3811, %v3815
        %v3819 = vsel %vm1089, %v3808, 0
        %3821 = vmatprep.subr.bf16.mxu0 0
        %3822 = vmatpush1.bf16.msra.mxu0 %v3809
        %3823 = vmatprep.subr.bf16.mxu0 0
        %3824 = vmatpush1.bf16.msra.mxu0 %v3810
        %3825 = vmatprep.subr.bf16.mxu0 0
        %3826 = vmatpush1.bf16.msra.mxu0 0
        %3827 = vmatprep.subr.bf16.mxu0 0
        %3828 = vmatpush1.bf16.msra.mxu0 0
        %3829 = vmatprep.subr.bf16.mxu0 0
        %3830 = vmatpush1.bf16.msra.mxu0 0
        %3831 = vmatprep.subr.bf16.mxu0 0
        %3832 = vmatpush1.bf16.msra.mxu0 0
        %3833 = vmatprep.subr.bf16.mxu0 0
        %3834 = vmatpush1.bf16.msra.mxu0 0
        %3835 = vmatprep.subr.bf16.mxu0 0
        %3836 = vmatpush1.bf16.msra.mxu0 0
        %3837 = vmatprep.subr.bf16.mxu0 0
        %3838 = vmatpush1.bf16.msra.mxu0 0
        %3839 = vmatprep.subr.bf16.mxu0 0
        %3840 = vmatpush1.bf16.msra.mxu0 0
        %3841 = vmatprep.subr.bf16.mxu0 0
        %3842 = vmatpush1.bf16.msra.mxu0 0
        %3843 = vmatprep.subr.bf16.mxu0 0
        %3844 = vmatpush1.bf16.msra.mxu0 0
        %3845 = vmatprep.subr.bf16.mxu0 0
        %3846 = vmatpush1.bf16.msra.mxu0 0
        %3847 = vmatprep.subr.bf16.mxu0 0
        %3848 = vmatpush1.bf16.msra.mxu0 0
        %3849 = vmatprep.subr.bf16.mxu0 0
        %3850 = vmatpush1.bf16.msra.mxu0 0
        %3851 = vmatprep.subr.bf16.mxu0 0
        %3852 = vmatpush1.bf16.msra.mxu0 0
        %3853 = vmatprep.mubr.bf16.mxu0 0
        %3854 = vmatmul.mubr.bf16.gmra.mrb[0].mxu0 %v3819
        %v3855 = vpop.f32.mrb[0].mxu0
        %v3856 = vadd.f32 %v3816, %v3855
        %v3857 = vpop.f32.mrb[0].mxu0
        %v3858 = vpop.f32.mrb[0].mxu0
        %v3859 = vpop.f32.mrb[0].mxu0
        %3860 = vdwg.mxu0
        %3861 = vst [vmem:[%s1052] sm:$0xff] %v3856
      $region124: #{transformer_forward.3} parent=115 // pred_fallthru
        _
      %p3862 = scmp.lt.s32.totalorder %s39, 1
      %s3863 = scalar_select %p3862, %s39, 1
      %s3864 = smul.addr %s3863, 8
      %s3865 = scalar_lea.vmem %s24, %s3864
      // Predicated region
      $region125: #{transformer_forward.3} parent=115 // pred_check
        %p3866 = pneg %p669
      $region126: #{transformer_forward.3} parent=115 // pred_check_branch
        %3868 = sbr.rel (%p3866) target = $region128
      $region127: #{transformer_forward.3} parent=115 // pred_region
        _
      $region128: #{transformer_forward.3} parent=115 // pred_fallthru
        _
    $region116: #{transformer_forward.3} parent=5 // pred_fallthru
      _
    %p3869 = scmp.le.s32.totalorder 2, %s30
    // Predicated region
    $region129: #{transformer_forward.3} parent=5 // pred_check
      %p3870 = pneg %p3869
    $region130: #{transformer_forward.3} parent=5 // pred_check_branch
      %3872 = sbr.rel (%p3870) target = $region132
    $region131: #{transformer_forward.3} parent=5 // pred_region
      %s3873 = ssub.s32 %s30, 2
      // Predicated region
      $region133: #{transformer_forward.3} parent=131 // pred_check
        %p3874 = pneg %p675
      $region134: #{transformer_forward.3} parent=131 // pred_check_branch
        %3876 = sbr.rel (%p3874) target = $region136
      $region135: #{transformer_forward.3} parent=131 // pred_region
        %p3877 = scmp.lt.s32.totalorder %s41, 1
        %s3878 = scalar_select %p3877, %s41, 1
        %s3879 = smul.addr %s3878, 8
        %s3880 = scalar_lea.vmem %s24, %s3879
      $region136: #{transformer_forward.3} parent=131 // pred_fallthru
        _
    $region132: #{transformer_forward.3} parent=5 // pred_fallthru
      _
  $region6: #{transformer_forward.3} parent=0 // loop_footer
    %s34 = sadd.s32 1, %s30
  $region7: #{transformer_forward.3} parent=0 // loop_footer_branch
    %29 = sbr.rel target = $region3
  $region8: #{transformer_forward.3} parent=0 // loop_exit
    _

</llo_original>
